<compile_context>
chip_gen: v5e
topology: v5e:2x2
jax: 0.10.0
libtpu: 0.0.40
codegen_flags: <defaults>
</compile_context>

<pallas_src>
import functools
import math

import jax
import jax.numpy as jnp
from jax.experimental import pallas as pl
from jax.experimental.pallas import tpu as pltpu


# ----------------------------------------------------------------------------
# Tiling helpers
# ----------------------------------------------------------------------------

# MXU-friendly tile preferences.  v6e/v7x MXU is 2x256^2 -> prefer 256-wide M/N tiles;
# v5e (4x128^2) is also fine with these.  Falls back to the full dim for small shapes.
# TODO(synk): pick per-generation tiles via pltpu.get_tpu_info() and re-budget for
#             v7x's 64 MiB VMEM when running at production d_model/dim_ff.
_TM, _TN, _TK = 256, 256, 512


def _tile(dim, pref):
    # Use the preferred MXU-aligned tile when it divides the dim; otherwise fall back
    # to the full dim so the (8,128)-or-full-dim BlockSpec rule is always satisfied.
    return pref if dim % pref == 0 else dim


# ----------------------------------------------------------------------------
# Pallas kernels
# ----------------------------------------------------------------------------

def _matmul_bias_kernel(x_ref, w_ref, b_ref, o_ref, acc_ref):
    """Tiled y = x @ w + b with f32 VMEM accumulator over the K grid axis."""
    @pl.when(pl.program_id(2) == 0)
    def _():
        acc_ref[...] = jnp.zeros_like(acc_ref)

    acc_ref[...] += jnp.dot(x_ref[...], w_ref[...], preferred_element_type=jnp.float32)

    @pl.when(pl.program_id(2) == pl.num_programs(2) - 1)
    def _():
        o_ref[...] = (acc_ref[...] + b_ref[...]).astype(o_ref.dtype)


def pallas_linear(x, w, bias):
    """y = x @ w + bias.  x: (..., Din), w: (Din, Dout), bias: (Dout,)."""
    lead = x.shape[:-1]
    din = x.shape[-1]
    dout = w.shape[1]
    x2 = x.reshape(-1, din)
    m = x2.shape[0]
    tm, tn, tk = _tile(m, _TM), _tile(dout, _TN), _tile(din, _TK)
    grid = (m // tm, dout // tn, din // tk)
    out = pl.pallas_call(
        _matmul_bias_kernel,
        grid=grid,
        in_specs=[
            pl.BlockSpec((tm, tk), lambda i, j, kk: (i, kk)),
            pl.BlockSpec((tk, tn), lambda i, j, kk: (kk, j)),
            pl.BlockSpec((1, tn), lambda i, j, kk: (0, j)),
        ],
        out_specs=pl.BlockSpec((tm, tn), lambda i, j, kk: (i, j)),
        out_shape=jax.ShapeDtypeStruct((m, dout), jnp.float32),
        scratch_shapes=[pltpu.VMEM((tm, tn), jnp.float32)],
        compiler_params=pltpu.CompilerParams(
            dimension_semantics=("parallel", "parallel", "arbitrary"),
            vmem_limit_bytes=64 * 1024 * 1024,
        ),
        cost_estimate=pl.CostEstimate(
            flops=2 * m * dout * din,
            transcendentals=0,
            bytes_accessed=4 * (m * din + din * dout + m * dout),
        ),
    )(x2, w, bias.reshape(1, dout))
    return out.reshape(*lead, dout)


def _attn_ln_core(q, k, v, res, wo, bo, g, beta, *, nhead, scale):
    """Per-batch: softmax(q k^T) v over all heads, out-proj, residual add, LayerNorm."""
    t, d = q.shape
    dh = d // nhead
    outs = []
    for h in range(nhead):                       # heads packed on the lane axis of one block
        qh = q[:, h * dh:(h + 1) * dh] * scale
        kh = k[:, h * dh:(h + 1) * dh]
        vh = v[:, h * dh:(h + 1) * dh]
        # q @ k^T via transposed-operand matmul (no explicit .T / XLU transpose)
        sc = jax.lax.dot_general(qh, kh, (((1,), (1,)), ((), ())),
                                 preferred_element_type=jnp.float32)     # (T, S)
        sc = sc - jnp.max(sc, axis=-1, keepdims=True)
        p = jnp.exp(sc)
        p = p * pl.reciprocal(jnp.sum(p, axis=-1, keepdims=True), approx=True)
        outs.append(jnp.dot(p, vh, preferred_element_type=jnp.float32))  # (T, Dh)
    attn = jnp.concatenate(outs, axis=-1)                                # (T, D)
    y = jnp.dot(attn, wo, preferred_element_type=jnp.float32) + bo + res
    mean = jnp.mean(y, axis=-1, keepdims=True)
    c = y - mean
    var = jnp.mean(c * c, axis=-1, keepdims=True)
    return (c * jax.lax.rsqrt(var + 1e-5)) * g + beta


def _self_mha_kernel(qkv_ref, res_ref, wo_ref, bo_ref, g_ref, b_ref, o_ref,
                     *, nhead, d_model, scale):
    t = qkv_ref.shape[0]
    qkv = qkv_ref[...].reshape(t, 3 * d_model)
    q = qkv[:, :d_model]
    k = qkv[:, d_model:2 * d_model]
    v = qkv[:, 2 * d_model:]
    res = res_ref[...].reshape(t, d_model)
    out = _attn_ln_core(q, k, v, res, wo_ref[...], bo_ref[...], g_ref[...], b_ref[...],
                        nhead=nhead, scale=scale)
    o_ref[...] = out.reshape(o_ref.shape).astype(o_ref.dtype)


def _cross_mha_kernel(q_ref, kv_ref, res_ref, wo_ref, bo_ref, g_ref, b_ref, o_ref,
                      *, nhead, d_model, scale):
    t = q_ref.shape[0]
    s = kv_ref.shape[0]
    q = q_ref[...].reshape(t, d_model)
    kv = kv_ref[...].reshape(s, 2 * d_model)
    k = kv[:, :d_model]
    v = kv[:, d_model:]
    res = res_ref[...].reshape(t, d_model)
    out = _attn_ln_core(q, k, v, res, wo_ref[...], bo_ref[...], g_ref[...], b_ref[...],
                        nhead=nhead, scale=scale)
    o_ref[...] = out.reshape(o_ref.shape).astype(o_ref.dtype)


def _ffn_ln_kernel(x_ref, w1_ref, b1_ref, w2_ref, b2_ref, g_ref, b_ref, o_ref):
    """y = LayerNorm(x + relu(x@W1+b1)@W2 + b2), activation='relu'."""
    x = x_ref[...]
    h = jnp.dot(x, w1_ref[...], preferred_element_type=jnp.float32) + b1_ref[...]
    h = jnp.maximum(h, 0.0)
    y = x + jnp.dot(h, w2_ref[...], preferred_element_type=jnp.float32) + b2_ref[...]
    mean = jnp.mean(y, axis=-1, keepdims=True)
    c = y - mean
    var = jnp.mean(c * c, axis=-1, keepdims=True)
    o_ref[...] = ((c * jax.lax.rsqrt(var + 1e-5)) * g_ref[...] + b_ref[...]).astype(o_ref.dtype)


def _ln_kernel(x_ref, g_ref, b_ref, o_ref):
    """LayerNorm only (no residual, no zero-tensor roundtrip)."""
    x = x_ref[...]
    mean = jnp.mean(x, axis=-1, keepdims=True)
    c = x - mean
    var = jnp.mean(c * c, axis=-1, keepdims=True)
    o_ref[...] = ((c * jax.lax.rsqrt(var + 1e-5)) * g_ref[...] + b_ref[...]).astype(o_ref.dtype)


# ----------------------------------------------------------------------------
# Fused blocks (host-side glue; no transposes, only free reshapes)
# ----------------------------------------------------------------------------

def self_attention_block(tgt, p, ln_g, ln_b, nhead):
    t, b, d = tgt.shape
    dh = d // nhead
    scale = 1.0 / math.sqrt(dh)
    qkv = pallas_linear(tgt, p["w_qkv"], p["b_qkv"])        # (T, B, 3D), fused QKV proj
    qkv4 = qkv.reshape(t, b, 1, 3 * d)                      # unit dim keeps last-two = full dims
    res4 = tgt.reshape(t, b, 1, d)
    out = pl.pallas_call(
        functools.partial(_self_mha_kernel, nhead=nhead, d_model=d, scale=scale),
        grid=(b,),
        in_specs=[
            pl.BlockSpec((t, 1, 1, 3 * d), lambda i: (0, i, 0, 0)),
            pl.BlockSpec((t, 1, 1, d), lambda i: (0, i, 0, 0)),
            pl.BlockSpec((d, d), lambda i: (0, 0)),
            pl.BlockSpec((1, d), lambda i: (0, 0)),
            pl.BlockSpec((1, d), lambda i: (0, 0)),
            pl.BlockSpec((1, d), lambda i: (0, 0)),
        ],
        out_specs=pl.BlockSpec((t, 1, 1, d), lambda i: (0, i, 0, 0)),
        out_shape=jax.ShapeDtypeStruct((t, b, 1, d), jnp.float32),
        compiler_params=pltpu.CompilerParams(dimension_semantics=("parallel",)),
        cost_estimate=pl.CostEstimate(
            flops=b * (nhead * 4 * t * t * dh + 2 * t * d * d),
            transcendentals=b * nhead * t * t,
            bytes_accessed=4 * (t * b * 3 * d + 2 * t * b * d + d * d + 3 * d),
        ),
    )(qkv4, res4, p["w_o"], p["b_o"].reshape(1, d), ln_g.reshape(1, d), ln_b.reshape(1, d))
    return out.reshape(t, b, d)


def cross_attention_block(tgt, memory, p, ln_g, ln_b, nhead):
    t, b, d = tgt.shape
    s = memory.shape[0]
    dh = d // nhead
    scale = 1.0 / math.sqrt(dh)
    q = pallas_linear(tgt, p["w_q"], p["b_q"])              # (T, B, D)
    kv = pallas_linear(memory, p["w_kv"], p["b_kv"])        # (S, B, 2D), fused KV proj
    q4 = q.reshape(t, b, 1, d)
    kv4 = kv.reshape(s, b, 1, 2 * d)
    res4 = tgt.reshape(t, b, 1, d)
    out = pl.pallas_call(
        functools.partial(_cross_mha_kernel, nhead=nhead, d_model=d, scale=scale),
        grid=(b,),
        in_specs=[
            pl.BlockSpec((t, 1, 1, d), lambda i: (0, i, 0, 0)),
            pl.BlockSpec((s, 1, 1, 2 * d), lambda i: (0, i, 0, 0)),
            pl.BlockSpec((t, 1, 1, d), lambda i: (0, i, 0, 0)),
            pl.BlockSpec((d, d), lambda i: (0, 0)),
            pl.BlockSpec((1, d), lambda i: (0, 0)),
            pl.BlockSpec((1, d), lambda i: (0, 0)),
            pl.BlockSpec((1, d), lambda i: (0, 0)),
        ],
        out_specs=pl.BlockSpec((t, 1, 1, d), lambda i: (0, i, 0, 0)),
        out_shape=jax.ShapeDtypeStruct((t, b, 1, d), jnp.float32),
        compiler_params=pltpu.CompilerParams(dimension_semantics=("parallel",)),
        cost_estimate=pl.CostEstimate(
            flops=b * (nhead * 4 * t * s * dh + 2 * t * d * d),
            transcendentals=b * nhead * t * s,
            bytes_accessed=4 * (t * b * d + s * b * 2 * d + 2 * t * b * d + d * d + 3 * d),
        ),
    )(q4, kv4, res4, p["w_o"], p["b_o"].reshape(1, d), ln_g.reshape(1, d), ln_b.reshape(1, d))
    return out.reshape(t, b, d)


def ffn_block(tgt, lp):
    t, b, d = tgt.shape
    f = lp["ff_w1"].shape[1]
    x2 = tgt.reshape(t * b, d)
    m = x2.shape[0]
    tm = _tile(m, _TM)
    out = pl.pallas_call(
        _ffn_ln_kernel,
        grid=(m // tm,),
        in_specs=[
            pl.BlockSpec((tm, d), lambda i: (i, 0)),
            pl.BlockSpec((d, f), lambda i: (0, 0)),
            pl.BlockSpec((1, f), lambda i: (0, 0)),
            pl.BlockSpec((f, d), lambda i: (0, 0)),
            pl.BlockSpec((1, d), lambda i: (0, 0)),
            pl.BlockSpec((1, d), lambda i: (0, 0)),
            pl.BlockSpec((1, d), lambda i: (0, 0)),
        ],
        out_specs=pl.BlockSpec((tm, d), lambda i: (i, 0)),
        out_shape=jax.ShapeDtypeStruct((m, d), jnp.float32),
        compiler_params=pltpu.CompilerParams(dimension_semantics=("parallel",)),
        cost_estimate=pl.CostEstimate(
            flops=4 * m * d * f,
            transcendentals=0,
            bytes_accessed=4 * (2 * m * d + 2 * d * f + f + d),
        ),
    )(x2, lp["ff_w1"], lp["ff_b1"].reshape(1, f), lp["ff_w2"], lp["ff_b2"].reshape(1, d),
      lp["ln3_g"].reshape(1, d), lp["ln3_b"].reshape(1, d))
    return out.reshape(t, b, d)


def pallas_layernorm(x, gamma, beta):
    lead = x.shape[:-1]
    d = x.shape[-1]
    x2 = x.reshape(-1, d)
    m = x2.shape[0]
    tm = _tile(m, _TM)
    out = pl.pallas_call(
        _ln_kernel,
        grid=(m // tm,),
        in_specs=[
            pl.BlockSpec((tm, d), lambda i: (i, 0)),
            pl.BlockSpec((1, d), lambda i: (0, 0)),
            pl.BlockSpec((1, d), lambda i: (0, 0)),
        ],
        out_specs=pl.BlockSpec((tm, d), lambda i: (i, 0)),
        out_shape=jax.ShapeDtypeStruct((m, d), jnp.float32),
        compiler_params=pltpu.CompilerParams(dimension_semantics=("parallel",)),
    )(x2, gamma.reshape(1, d), beta.reshape(1, d))
    return out.reshape(*lead, d)


# ----------------------------------------------------------------------------
# Transformer decoder built from the fused blocks
# ----------------------------------------------------------------------------

def decoder_layer(tgt, memory, lp, nhead):
    # TODO(synk): dropout is a no-op here (inference / p=0 semantics).
    tgt = self_attention_block(tgt, lp["self_attn"], lp["ln1_g"], lp["ln1_b"], nhead)
    tgt = cross_attention_block(tgt, memory, lp["cross_attn"], lp["ln2_g"], lp["ln2_b"], nhead)
    tgt = ffn_block(tgt, lp)
    return tgt


def transformer_decoder_wrapper_forward(params, tgt, memory,
                                        tgt_mask=None, memory_mask=None,
                                        tgt_key_padding_mask=None,
                                        memory_key_padding_mask=None,
                                        querypos_embed=None, patchpos_embed=None):
    """forward(tgt, memory, ...) -> (memory, output), mirroring TransformerDecoderWrapper."""
    # TODO(synk): optional attention masks / callable positional embeddings are None in
    # this synthetic setup and are not threaded into the fused attention kernels.
    output = tgt
    for lp in params["layers"]:
        output = decoder_layer(output, memory, lp, params["nhead"])
    # final decoder norm (nn.TransformerDecoder norm) -- LayerNorm only, no zero residual.
    output = pallas_layernorm(output, params["dec_norm_g"], params["dec_norm_b"])
    return memory, output


# ----------------------------------------------------------------------------
# Deterministic parameter init (xavier_uniform for dim>1, like _reset_parameters)
# ----------------------------------------------------------------------------

def _xavier(key, din, dout):
    bound = math.sqrt(6.0 / (din + dout))
    return jax.random.uniform(key, (din, dout), jnp.float32, -bound, bound)


def _init_self_attn(key, d):
    kq, kk, kv, ko = jax.random.split(key, 4)
    w_qkv = jnp.concatenate([_xavier(kq, d, d), _xavier(kk, d, d), _xavier(kv, d, d)], axis=1)
    return {"w_qkv": w_qkv, "b_qkv": jnp.zeros((3 * d,), jnp.float32),
            "w_o": _xavier(ko, d, d), "b_o": jnp.zeros((d,), jnp.float32)}


def _init_cross_attn(key, d):
    kq, kk, kv, ko = jax.random.split(key, 4)
    w_kv = jnp.concatenate([_xavier(kk, d, d), _xavier(kv, d, d)], axis=1)
    return {"w_q": _xavier(kq, d, d), "b_q": jnp.zeros((d,), jnp.float32),
            "w_kv": w_kv, "b_kv": jnp.zeros((2 * d,), jnp.float32),
            "w_o": _xavier(ko, d, d), "b_o": jnp.zeros((d,), jnp.float32)}


def init_params(key, d_model, nhead, dim_ff, num_layers):
    layers = []
    keys = jax.random.split(key, num_layers + 1)
    for li in range(num_layers):
        ks = jax.random.split(keys[li], 4)
        layers.append({
            "self_attn": _init_self_attn(ks[0], d_model),
            "cross_attn": _init_cross_attn(ks[1], d_model),
            "ff_w1": _xavier(ks[2], d_model, dim_ff), "ff_b1": jnp.zeros((dim_ff,), jnp.float32),
            "ff_w2": _xavier(ks[3], dim_ff, d_model), "ff_b2": jnp.zeros((d_model,), jnp.float32),
            "ln1_g": jnp.ones((d_model,), jnp.float32), "ln1_b": jnp.zeros((d_model,), jnp.float32),
            "ln2_g": jnp.ones((d_model,), jnp.float32), "ln2_b": jnp.zeros((d_model,), jnp.float32),
            "ln3_g": jnp.ones((d_model,), jnp.float32), "ln3_b": jnp.zeros((d_model,), jnp.float32),
        })
    # Wrapper's own nn.Linear(d_model*3, d_model): initialized per __init__ but UNUSED in forward.
    unused_w = _xavier(keys[num_layers], d_model * 3, d_model)
    return {
        "nhead": nhead,
        "layers": layers,
        "dec_norm_g": jnp.ones((d_model,), jnp.float32),
        "dec_norm_b": jnp.zeros((d_model,), jnp.float32),
        "wrapper_linear_w": unused_w,
        "wrapper_linear_b": jnp.zeros((d_model,), jnp.float32),
    }


# ----------------------------------------------------------------------------
# Demo
# ----------------------------------------------------------------------------

if __name__ == "__main__":
    d_model, nhead, dim_ff, num_layers = 32, 4, 64, 2
    T, S, B = 8, 16, 2

    key = jax.random.PRNGKey(0)
    k_tgt, k_mem, k_par = jax.random.split(key, 3)
    tgt = jax.random.normal(k_tgt, (T, B, d_model), jnp.float32)
    memory = jax.random.normal(k_mem, (S, B, d_model), jnp.float32)
    params = init_params(k_par, d_model, nhead, dim_ff, num_layers)

    fwd = jax.jit(functools.partial(transformer_decoder_wrapper_forward, params))
    mem_out, out = fwd(tgt, memory)
    jax.block_until_ready((mem_out, out))

    assert mem_out.shape == (S, B, d_model)
    assert out.shape == (T, B, d_model)
    assert bool(jnp.all(jnp.isfinite(out)))
    print("KERNEL_OK")
</pallas_src>

<mosaic_0001>
module attributes {stable_mosaic.version = 11 : i64} {
  func.func @_matmul_bias_kernel(%arg0: i32, %arg1: i32, %arg2: i32, %arg3: memref<16x32xf32, #tpu.memory_space<vmem>>, %arg4: memref<32x96xf32, #tpu.memory_space<vmem>>, %arg5: memref<1x96xf32, #tpu.memory_space<vmem>>, %arg6: memref<16x96xf32, #tpu.memory_space<vmem>>, %arg7: memref<16x96xf32, #tpu.memory_space<vmem>>) attributes {dimension_semantics = [#tpu.dimension_semantics<parallel>, #tpu.dimension_semantics<parallel>, #tpu.dimension_semantics<arbitrary>], iteration_bounds = array<i64: 1, 1, 1>, scalar_prefetch = 0 : i64, scratch_operands = 1 : i64, tpu.core_type = #tpu.core_type<tc>, window_params = [{transform_indices = @transform_0, window_bounds = array<i64: 16, 32>}, {transform_indices = @transform_1, window_bounds = array<i64: 32, 96>}, {transform_indices = @transform_2, window_bounds = array<i64: 1, 96>}, {transform_indices = @transform_3, window_bounds = array<i64: 16, 96>}]} {
    %c0_i32 = arith.constant 0 : i32
    %0 = arith.cmpi eq, %arg2, %c0_i32 : i32
    %1 = arith.extui %0 : i1 to i32
    %c0_i32_0 = arith.constant 0 : i32
    %2 = arith.cmpi ne, %1, %c0_i32_0 : i32
    scf.if %2 {
      %cst_10 = arith.constant 0.000000e+00 : f32
      %12 = vector.broadcast %cst_10 : f32 to vector<16x96xf32>
      %c0_11 = arith.constant 0 : index
      %c0_12 = arith.constant 0 : index
      %13 = vector.load %arg7[%c0_11, %c0_12] : memref<16x96xf32, #tpu.memory_space<vmem>>, vector<16x96xf32>
      tpu.vector_store %arg7[%c0_11, %c0_12], %12 {strides = array<i32>} : memref<16x96xf32, #tpu.memory_space<vmem>>, vector<16x96xf32>,
    } else {
    }
    %c0 = arith.constant 0 : index
    %c0_1 = arith.constant 0 : index
    %3 = vector.load %arg7[%c0, %c0_1] : memref<16x96xf32, #tpu.memory_space<vmem>>, vector<16x96xf32>
    %c0_2 = arith.constant 0 : index
    %c0_3 = arith.constant 0 : index
    %4 = vector.load %arg3[%c0_2, %c0_3] : memref<16x32xf32, #tpu.memory_space<vmem>>, vector<16x32xf32>
    %c0_4 = arith.constant 0 : index
    %c0_5 = arith.constant 0 : index
    %5 = vector.load %arg4[%c0_4, %c0_5] : memref<32x96xf32, #tpu.memory_space<vmem>>, vector<32x96xf32>
    %cst = arith.constant dense<0.000000e+00> : vector<16x96xf32>
    %6 = tpu.matmul %4, %5, %cst {dimension_numbers = #tpu.dot_dimension_numbers<[1], [0], [0], [1], [0, 0, 1, 1], [], []>} : vector<16x32xf32>, vector<32x96xf32>, vector<16x96xf32> -> vector<16x96xf32>
    %7 = arith.addf %3, %6 : vector<16x96xf32>
    %c0_6 = arith.constant 0 : index
    %c0_7 = arith.constant 0 : index
    %8 = vector.load %arg7[%c0_6, %c0_7] : memref<16x96xf32, #tpu.memory_space<vmem>>, vector<16x96xf32>
    tpu.vector_store %arg7[%c0_6, %c0_7], %7 {strides = array<i32>} : memref<16x96xf32, #tpu.memory_space<vmem>>, vector<16x96xf32>,
    %c0_i32_8 = arith.constant 0 : i32
    %9 = arith.cmpi eq, %arg2, %c0_i32_8 : i32
    %10 = arith.extui %9 : i1 to i32
    %c0_i32_9 = arith.constant 0 : i32
    %11 = arith.cmpi ne, %10, %c0_i32_9 : i32
    scf.if %11 {
      %c0_10 = arith.constant 0 : index
      %c0_11 = arith.constant 0 : index
      %12 = vector.load %arg7[%c0_10, %c0_11] : memref<16x96xf32, #tpu.memory_space<vmem>>, vector<16x96xf32>
      %c0_12 = arith.constant 0 : index
      %c0_13 = arith.constant 0 : index
      %13 = vector.load %arg5[%c0_12, %c0_13] : memref<1x96xf32, #tpu.memory_space<vmem>>, vector<1x96xf32>
      %14 = vector.broadcast %13 : vector<1x96xf32> to vector<16x96xf32>
      %15 = arith.addf %12, %14 : vector<16x96xf32>
      %c0_14 = arith.constant 0 : index
      %c0_15 = arith.constant 0 : index
      %16 = vector.load %arg6[%c0_14, %c0_15] : memref<16x96xf32, #tpu.memory_space<vmem>>, vector<16x96xf32>
      tpu.vector_store %arg6[%c0_14, %c0_15], %15 {strides = array<i32>} : memref<16x96xf32, #tpu.memory_space<vmem>>, vector<16x96xf32>,
    } else {
    }
    return
  }
  func.func @transform_0(%arg0: i32, %arg1: i32, %arg2: i32) -> (i32, i32) {
    %c0_i32 = arith.constant 0 : i32
    return %arg0, %arg2 : i32, i32
  }
  func.func @transform_1(%arg0: i32, %arg1: i32, %arg2: i32) -> (i32, i32) {
    %c0_i32 = arith.constant 0 : i32
    return %arg2, %arg1 : i32, i32
  }
  func.func @transform_2(%arg0: i32, %arg1: i32, %arg2: i32) -> (i32, i32) {
    %c0_i32 = arith.constant 0 : i32
    %c0_i32_0 = arith.constant 0 : i32
    return %c0_i32, %arg1 : i32, i32
  }
  func.func @transform_3(%arg0: i32, %arg1: i32, %arg2: i32) -> (i32, i32) {
    %c0_i32 = arith.constant 0 : i32
    return %arg0, %arg1 : i32, i32
  }
}

module attributes {stable_mosaic.version = 11 : i64} {
  func.func @_self_mha_kernel(%arg0: i32, %arg1: memref<8x1x1x96xf32, #tpu.memory_space<vmem>>, %arg2: memref<8x1x1x32xf32, #tpu.memory_space<vmem>>, %arg3: memref<32x32xf32, #tpu.memory_space<vmem>>, %arg4: memref<1x32xf32, #tpu.memory_space<vmem>>, %arg5: memref<1x32xf32, #tpu.memory_space<vmem>>, %arg6: memref<1x32xf32, #tpu.memory_space<vmem>>, %arg7: memref<8x1x1x32xf32, #tpu.memory_space<vmem>>) attributes {dimension_semantics = [#tpu.dimension_semantics<parallel>], iteration_bounds = array<i64: 2>, scalar_prefetch = 0 : i64, scratch_operands = 0 : i64, tpu.core_type = #tpu.core_type<tc>, window_params = [{transform_indices = @transform_0, window_bounds = array<i64: 8, 1, 1, 96>}, {transform_indices = @transform_1, window_bounds = array<i64: 8, 1, 1, 32>}, {pipeline_mode = #tpu.pipeline_mode<synchronous>, transform_indices = @transform_2, window_bounds = array<i64: 32, 32>}, {pipeline_mode = #tpu.pipeline_mode<synchronous>, transform_indices = @transform_3, window_bounds = array<i64: 1, 32>}, {pipeline_mode = #tpu.pipeline_mode<synchronous>, transform_indices = @transform_4, window_bounds = array<i64: 1, 32>}, {pipeline_mode = #tpu.pipeline_mode<synchronous>, transform_indices = @transform_5, window_bounds = array<i64: 1, 32>}, {transform_indices = @transform_6, window_bounds = array<i64: 8, 1, 1, 32>}]} {
    %c0 = arith.constant 0 : index
    %c0_0 = arith.constant 0 : index
    %c0_1 = arith.constant 0 : index
    %c0_2 = arith.constant 0 : index
    %0 = vector.load %arg1[%c0, %c0_0, %c0_1, %c0_2] : memref<8x1x1x96xf32, #tpu.memory_space<vmem>>, vector<8x1x1x96xf32>
    %1 = vector.shape_cast %0 : vector<8x1x1x96xf32> to vector<8x96xf32>
    %2 = vector.extract_strided_slice %1 {offsets = [0, 0], sizes = [8, 32], strides = [1, 1]} : vector<8x96xf32> to vector<8x32xf32>
    %3 = vector.extract_strided_slice %1 {offsets = [0, 32], sizes = [8, 32], strides = [1, 1]} : vector<8x96xf32> to vector<8x32xf32>
    %4 = vector.extract_strided_slice %1 {offsets = [0, 64], sizes = [8, 32], strides = [1, 1]} : vector<8x96xf32> to vector<8x32xf32>
    %c0_3 = arith.constant 0 : index
    %c0_4 = arith.constant 0 : index
    %c0_5 = arith.constant 0 : index
    %c0_6 = arith.constant 0 : index
    %5 = vector.load %arg2[%c0_3, %c0_4, %c0_5, %c0_6] : memref<8x1x1x32xf32, #tpu.memory_space<vmem>>, vector<8x1x1x32xf32>
    %6 = vector.shape_cast %5 : vector<8x1x1x32xf32> to vector<8x32xf32>
    %c0_7 = arith.constant 0 : index
    %c0_8 = arith.constant 0 : index
    %7 = vector.load %arg3[%c0_7, %c0_8] : memref<32x32xf32, #tpu.memory_space<vmem>>, vector<32x32xf32>
    %c0_9 = arith.constant 0 : index
    %c0_10 = arith.constant 0 : index
    %8 = vector.load %arg4[%c0_9, %c0_10] : memref<1x32xf32, #tpu.memory_space<vmem>>, vector<1x32xf32>
    %c0_11 = arith.constant 0 : index
    %c0_12 = arith.constant 0 : index
    %9 = vector.load %arg5[%c0_11, %c0_12] : memref<1x32xf32, #tpu.memory_space<vmem>>, vector<1x32xf32>
    %c0_13 = arith.constant 0 : index
    %c0_14 = arith.constant 0 : index
    %10 = vector.load %arg6[%c0_13, %c0_14] : memref<1x32xf32, #tpu.memory_space<vmem>>, vector<1x32xf32>
    %11 = vector.extract_strided_slice %2 {offsets = [0, 0], sizes = [8, 8], strides = [1, 1]} : vector<8x32xf32> to vector<8x8xf32>
    %cst = arith.constant 0.353553385 : f32
    %12 = vector.broadcast %cst : f32 to vector<8x8xf32>
    %13 = arith.mulf %11, %12 : vector<8x8xf32>
    %14 = vector.extract_strided_slice %3 {offsets = [0, 0], sizes = [8, 8], strides = [1, 1]} : vector<8x32xf32> to vector<8x8xf32>
    %15 = vector.extract_strided_slice %4 {offsets = [0, 0], sizes = [8, 8], strides = [1, 1]} : vector<8x32xf32> to vector<8x8xf32>
    %cst_15 = arith.constant dense<0.000000e+00> : vector<8x8xf32>
    %16 = tpu.matmul %13, %14, %cst_15 {dimension_numbers = #tpu.dot_dimension_numbers<[1], [1], [0], [0], [0, 0, 1, 0], [], []>} : vector<8x8xf32>, vector<8x8xf32>, vector<8x8xf32> -> vector<8x8xf32>
    %cst_16 = arith.constant dense<0xFF800000> : vector<8xf32>
    %17 = vector.multi_reduction <maximumf>, %16, %cst_16 [1] : vector<8x8xf32> to vector<8xf32>
    %18 = vector.shape_cast %17 : vector<8xf32> to vector<8x1xf32>
    %19 = vector.broadcast %18 : vector<8x1xf32> to vector<8x8xf32>
    %20 = arith.subf %16, %19 : vector<8x8xf32>
    %21 = math.exp %20 : vector<8x8xf32>
    %cst_17 = arith.constant dense<0.000000e+00> : vector<8xf32>
    %22 = vector.multi_reduction <add>, %21, %cst_17 [1] : vector<8x8xf32> to vector<8xf32>
    %23 = vector.shape_cast %22 : vector<8xf32> to vector<8x1xf32>
    %24 = tpu.reciprocal %23 {approx = true} : vector<8x1xf32> -> vector<8x1xf32>
    %25 = vector.broadcast %24 : vector<8x1xf32> to vector<8x8xf32>
    %26 = arith.mulf %21, %25 : vector<8x8xf32>
    %cst_18 = arith.constant dense<0.000000e+00> : vector<8x8xf32>
    %27 = tpu.matmul %26, %15, %cst_18 {dimension_numbers = #tpu.dot_dimension_numbers<[1], [0], [0], [1], [0, 0, 1, 1], [], []>} : vector<8x8xf32>, vector<8x8xf32>, vector<8x8xf32> -> vector<8x8xf32>
    %28 = vector.extract_strided_slice %2 {offsets = [0, 8], sizes = [8, 8], strides = [1, 1]} : vector<8x32xf32> to vector<8x8xf32>
    %cst_19 = arith.constant 0.353553385 : f32
    %29 = vector.broadcast %cst_19 : f32 to vector<8x8xf32>
    %30 = arith.mulf %28, %29 : vector<8x8xf32>
    %31 = vector.extract_strided_slice %3 {offsets = [0, 8], sizes = [8, 8], strides = [1, 1]} : vector<8x32xf32> to vector<8x8xf32>
    %32 = vector.extract_strided_slice %4 {offsets = [0, 8], sizes = [8, 8], strides = [1, 1]} : vector<8x32xf32> to vector<8x8xf32>
    %cst_20 = arith.constant dense<0.000000e+00> : vector<8x8xf32>
    %33 = tpu.matmul %30, %31, %cst_20 {dimension_numbers = #tpu.dot_dimension_numbers<[1], [1], [0], [0], [0, 0, 1, 0], [], []>} : vector<8x8xf32>, vector<8x8xf32>, vector<8x8xf32> -> vector<8x8xf32>
    %cst_21 = arith.constant dense<0xFF800000> : vector<8xf32>
    %34 = vector.multi_reduction <maximumf>, %33, %cst_21 [1] : vector<8x8xf32> to vector<8xf32>
    %35 = vector.shape_cast %34 : vector<8xf32> to vector<8x1xf32>
    %36 = vector.broadcast %35 : vector<8x1xf32> to vector<8x8xf32>
    %37 = arith.subf %33, %36 : vector<8x8xf32>
    %38 = math.exp %37 : vector<8x8xf32>
    %cst_22 = arith.constant dense<0.000000e+00> : vector<8xf32>
    %39 = vector.multi_reduction <add>, %38, %cst_22 [1] : vector<8x8xf32> to vector<8xf32>
    %40 = vector.shape_cast %39 : vector<8xf32> to vector<8x1xf32>
    %41 = tpu.reciprocal %40 {approx = true} : vector<8x1xf32> -> vector<8x1xf32>
    %42 = vector.broadcast %41 : vector<8x1xf32> to vector<8x8xf32>
    %43 = arith.mulf %38, %42 : vector<8x8xf32>
    %cst_23 = arith.constant dense<0.000000e+00> : vector<8x8xf32>
    %44 = tpu.matmul %43, %32, %cst_23 {dimension_numbers = #tpu.dot_dimension_numbers<[1], [0], [0], [1], [0, 0, 1, 1], [], []>} : vector<8x8xf32>, vector<8x8xf32>, vector<8x8xf32> -> vector<8x8xf32>
    %45 = vector.extract_strided_slice %2 {offsets = [0, 16], sizes = [8, 8], strides = [1, 1]} : vector<8x32xf32> to vector<8x8xf32>
    %cst_24 = arith.constant 0.353553385 : f32
    %46 = vector.broadcast %cst_24 : f32 to vector<8x8xf32>
    %47 = arith.mulf %45, %46 : vector<8x8xf32>
    %48 = vector.extract_strided_slice %3 {offsets = [0, 16], sizes = [8, 8], strides = [1, 1]} : vector<8x32xf32> to vector<8x8xf32>
    %49 = vector.extract_strided_slice %4 {offsets = [0, 16], sizes = [8, 8], strides = [1, 1]} : vector<8x32xf32> to vector<8x8xf32>
    %cst_25 = arith.constant dense<0.000000e+00> : vector<8x8xf32>
    %50 = tpu.matmul %47, %48, %cst_25 {dimension_numbers = #tpu.dot_dimension_numbers<[1], [1], [0], [0], [0, 0, 1, 0], [], []>} : vector<8x8xf32>, vector<8x8xf32>, vector<8x8xf32> -> vector<8x8xf32>
    %cst_26 = arith.constant dense<0xFF800000> : vector<8xf32>
    %51 = vector.multi_reduction <maximumf>, %50, %cst_26 [1] : vector<8x8xf32> to vector<8xf32>
    %52 = vector.shape_cast %51 : vector<8xf32> to vector<8x1xf32>
    %53 = vector.broadcast %52 : vector<8x1xf32> to vector<8x8xf32>
    %54 = arith.subf %50, %53 : vector<8x8xf32>
    %55 = math.exp %54 : vector<8x8xf32>
    %cst_27 = arith.constant dense<0.000000e+00> : vector<8xf32>
    %56 = vector.multi_reduction <add>, %55, %cst_27 [1] : vector<8x8xf32> to vector<8xf32>
    %57 = vector.shape_cast %56 : vector<8xf32> to vector<8x1xf32>
    %58 = tpu.reciprocal %57 {approx = true} : vector<8x1xf32> -> vector<8x1xf32>
    %59 = vector.broadcast %58 : vector<8x1xf32> to vector<8x8xf32>
    %60 = arith.mulf %55, %59 : vector<8x8xf32>
    %cst_28 = arith.constant dense<0.000000e+00> : vector<8x8xf32>
    %61 = tpu.matmul %60, %49, %cst_28 {dimension_numbers = #tpu.dot_dimension_numbers<[1], [0], [0], [1], [0, 0, 1, 1], [], []>} : vector<8x8xf32>, vector<8x8xf32>, vector<8x8xf32> -> vector<8x8xf32>
    %62 = vector.extract_strided_slice %2 {offsets = [0, 24], sizes = [8, 8], strides = [1, 1]} : vector<8x32xf32> to vector<8x8xf32>
    %cst_29 = arith.constant 0.353553385 : f32
    %63 = vector.broadcast %cst_29 : f32 to vector<8x8xf32>
    %64 = arith.mulf %62, %63 : vector<8x8xf32>
    %65 = vector.extract_strided_slice %3 {offsets = [0, 24], sizes = [8, 8], strides = [1, 1]} : vector<8x32xf32> to vector<8x8xf32>
    %66 = vector.extract_strided_slice %4 {offsets = [0, 24], sizes = [8, 8], strides = [1, 1]} : vector<8x32xf32> to vector<8x8xf32>
    %cst_30 = arith.constant dense<0.000000e+00> : vector<8x8xf32>
    %67 = tpu.matmul %64, %65, %cst_30 {dimension_numbers = #tpu.dot_dimension_numbers<[1], [1], [0], [0], [0, 0, 1, 0], [], []>} : vector<8x8xf32>, vector<8x8xf32>, vector<8x8xf32> -> vector<8x8xf32>
    %cst_31 = arith.constant dense<0xFF800000> : vector<8xf32>
    %68 = vector.multi_reduction <maximumf>, %67, %cst_31 [1] : vector<8x8xf32> to vector<8xf32>
    %69 = vector.shape_cast %68 : vector<8xf32> to vector<8x1xf32>
    %70 = vector.broadcast %69 : vector<8x1xf32> to vector<8x8xf32>
    %71 = arith.subf %67, %70 : vector<8x8xf32>
    %72 = math.exp %71 : vector<8x8xf32>
    %cst_32 = arith.constant dense<0.000000e+00> : vector<8xf32>
    %73 = vector.multi_reduction <add>, %72, %cst_32 [1] : vector<8x8xf32> to vector<8xf32>
    %74 = vector.shape_cast %73 : vector<8xf32> to vector<8x1xf32>
    %75 = tpu.reciprocal %74 {approx = true} : vector<8x1xf32> -> vector<8x1xf32>
    %76 = vector.broadcast %75 : vector<8x1xf32> to vector<8x8xf32>
    %77 = arith.mulf %72, %76 : vector<8x8xf32>
    %cst_33 = arith.constant dense<0.000000e+00> : vector<8x8xf32>
    %78 = tpu.matmul %77, %66, %cst_33 {dimension_numbers = #tpu.dot_dimension_numbers<[1], [0], [0], [1], [0, 0, 1, 1], [], []>} : vector<8x8xf32>, vector<8x8xf32>, vector<8x8xf32> -> vector<8x8xf32>
    %79 = tpu.concatenate %27, %44, %61, %78 in 1 : vector<8x8xf32>, vector<8x8xf32>, vector<8x8xf32>, vector<8x8xf32> -> vector<8x32xf32>
    %cst_34 = arith.constant dense<0.000000e+00> : vector<8x32xf32>
    %80 = tpu.matmul %79, %7, %cst_34 {dimension_numbers = #tpu.dot_dimension_numbers<[1], [0], [0], [1], [0, 0, 1, 1], [], []>} : vector<8x32xf32>, vector<32x32xf32>, vector<8x32xf32> -> vector<8x32xf32>
    %81 = vector.broadcast %8 : vector<1x32xf32> to vector<8x32xf32>
    %82 = arith.addf %80, %81 : vector<8x32xf32>
    %83 = arith.addf %82, %6 : vector<8x32xf32>
    %cst_35 = arith.constant dense<0.000000e+00> : vector<8xf32>
    %84 = vector.multi_reduction <add>, %83, %cst_35 [1] : vector<8x32xf32> to vector<8xf32>
    %85 = vector.shape_cast %84 : vector<8xf32> to vector<8x1xf32>
    %cst_36 = arith.constant 3.200000e+01 : f32
    %86 = vector.broadcast %cst_36 : f32 to vector<8x1xf32>
    %87 = arith.divf %85, %86 : vector<8x1xf32>
    %88 = vector.broadcast %87 : vector<8x1xf32> to vector<8x32xf32>
    %89 = arith.subf %83, %88 : vector<8x32xf32>
    %90 = arith.mulf %89, %89 : vector<8x32xf32>
    %cst_37 = arith.constant dense<0.000000e+00> : vector<8xf32>
    %91 = vector.multi_reduction <add>, %90, %cst_37 [1] : vector<8x32xf32> to vector<8xf32>
    %92 = vector.shape_cast %91 : vector<8xf32> to vector<8x1xf32>
    %cst_38 = arith.constant 3.200000e+01 : f32
    %93 = vector.broadcast %cst_38 : f32 to vector<8x1xf32>
    %94 = arith.divf %92, %93 : vector<8x1xf32>
    %cst_39 = arith.constant 9.99999974E-6 : f32
    %95 = vector.broadcast %cst_39 : f32 to vector<8x1xf32>
    %96 = arith.addf %94, %95 : vector<8x1xf32>
    %97 = math.rsqrt %96 : vector<8x1xf32>
    %98 = vector.broadcast %97 : vector<8x1xf32> to vector<8x32xf32>
    %99 = arith.mulf %89, %98 : vector<8x32xf32>
    %100 = vector.broadcast %9 : vector<1x32xf32> to vector<8x32xf32>
    %101 = arith.mulf %99, %100 : vector<8x32xf32>
    %102 = vector.broadcast %10 : vector<1x32xf32> to vector<8x32xf32>
    %103 = arith.addf %101, %102 : vector<8x32xf32>
    %104 = vector.shape_cast %103 : vector<8x32xf32> to vector<8x1x1x32xf32>
    %c0_40 = arith.constant 0 : index
    %c0_41 = arith.constant 0 : index
    %c0_42 = arith.constant 0 : index
    %c0_43 = arith.constant 0 : index
    %105 = vector.load %arg7[%c0_40, %c0_41, %c0_42, %c0_43] : memref<8x1x1x32xf32, #tpu.memory_space<vmem>>, vector<8x1x1x32xf32>
    tpu.vector_store %arg7[%c0_40, %c0_41, %c0_42, %c0_43], %104 {strides = array<i32>} : memref<8x1x1x32xf32, #tpu.memory_space<vmem>>, vector<8x1x1x32xf32>,
    return
  }
  func.func @transform_0(%arg0: i32) -> (i32, i32, i32, i32) {
    %c0_i32 = arith.constant 0 : i32
    %c0_i32_0 = arith.constant 0 : i32
    %c0_i32_1 = arith.constant 0 : i32
    %c0_i32_2 = arith.constant 0 : i32
    return %c0_i32, %arg0, %c0_i32_0, %c0_i32_1 : i32, i32, i32, i32
  }
  func.func @transform_1(%arg0: i32) -> (i32, i32, i32, i32) {
    %c0_i32 = arith.constant 0 : i32
    %c0_i32_0 = arith.constant 0 : i32
    %c0_i32_1 = arith.constant 0 : i32
    %c0_i32_2 = arith.constant 0 : i32
    return %c0_i32, %arg0, %c0_i32_0, %c0_i32_1 : i32, i32, i32, i32
  }
  func.func @transform_2(%arg0: i32) -> (i32, i32) {
    %c0_i32 = arith.constant 0 : i32
    %c0_i32_0 = arith.constant 0 : i32
    %c0_i32_1 = arith.constant 0 : i32
    return %c0_i32, %c0_i32_0 : i32, i32
  }
  func.func @transform_3(%arg0: i32) -> (i32, i32) {
    %c0_i32 = arith.constant 0 : i32
    %c0_i32_0 = arith.constant 0 : i32
    %c0_i32_1 = arith.constant 0 : i32
    return %c0_i32, %c0_i32_0 : i32, i32
  }
  func.func @transform_4(%arg0: i32) -> (i32, i32) {
    %c0_i32 = arith.constant 0 : i32
    %c0_i32_0 = arith.constant 0 : i32
    %c0_i32_1 = arith.constant 0 : i32
    return %c0_i32, %c0_i32_0 : i32, i32
  }
  func.func @transform_5(%arg0: i32) -> (i32, i32) {
    %c0_i32 = arith.constant 0 : i32
    %c0_i32_0 = arith.constant 0 : i32
    %c0_i32_1 = arith.constant 0 : i32
    return %c0_i32, %c0_i32_0 : i32, i32
  }
  func.func @transform_6(%arg0: i32) -> (i32, i32, i32, i32) {
    %c0_i32 = arith.constant 0 : i32
    %c0_i32_0 = arith.constant 0 : i32
    %c0_i32_1 = arith.constant 0 : i32
    %c0_i32_2 = arith.constant 0 : i32
    return %c0_i32, %arg0, %c0_i32_0, %c0_i32_1 : i32, i32, i32, i32
  }
}

module attributes {stable_mosaic.version = 11 : i64} {
  func.func @_matmul_bias_kernel(%arg0: i32, %arg1: i32, %arg2: i32, %arg3: memref<32x32xf32, #tpu.memory_space<vmem>>, %arg4: memref<32x64xf32, #tpu.memory_space<vmem>>, %arg5: memref<1x64xf32, #tpu.memory_space<vmem>>, %arg6: memref<32x64xf32, #tpu.memory_space<vmem>>, %arg7: memref<32x64xf32, #tpu.memory_space<vmem>>) attributes {dimension_semantics = [#tpu.dimension_semantics<parallel>, #tpu.dimension_semantics<parallel>, #tpu.dimension_semantics<arbitrary>], iteration_bounds = array<i64: 1, 1, 1>, scalar_prefetch = 0 : i64, scratch_operands = 1 : i64, tpu.core_type = #tpu.core_type<tc>, window_params = [{transform_indices = @transform_0, window_bounds = array<i64: 32, 32>}, {transform_indices = @transform_1, window_bounds = array<i64: 32, 64>}, {transform_indices = @transform_2, window_bounds = array<i64: 1, 64>}, {transform_indices = @transform_3, window_bounds = array<i64: 32, 64>}]} {
    %c0_i32 = arith.constant 0 : i32
    %0 = arith.cmpi eq, %arg2, %c0_i32 : i32
    %1 = arith.extui %0 : i1 to i32
    %c0_i32_0 = arith.constant 0 : i32
    %2 = arith.cmpi ne, %1, %c0_i32_0 : i32
    scf.if %2 {
      %cst_10 = arith.constant 0.000000e+00 : f32
      %12 = vector.broadcast %cst_10 : f32 to vector<32x64xf32>
      %c0_11 = arith.constant 0 : index
      %c0_12 = arith.constant 0 : index
      %13 = vector.load %arg7[%c0_11, %c0_12] : memref<32x64xf32, #tpu.memory_space<vmem>>, vector<32x64xf32>
      tpu.vector_store %arg7[%c0_11, %c0_12], %12 {strides = array<i32>} : memref<32x64xf32, #tpu.memory_space<vmem>>, vector<32x64xf32>,
    } else {
    }
    %c0 = arith.constant 0 : index
    %c0_1 = arith.constant 0 : index
    %3 = vector.load %arg7[%c0, %c0_1] : memref<32x64xf32, #tpu.memory_space<vmem>>, vector<32x64xf32>
    %c0_2 = arith.constant 0 : index
    %c0_3 = arith.constant 0 : index
    %4 = vector.load %arg3[%c0_2, %c0_3] : memref<32x32xf32, #tpu.memory_space<vmem>>, vector<32x32xf32>
    %c0_4 = arith.constant 0 : index
    %c0_5 = arith.constant 0 : index
    %5 = vector.load %arg4[%c0_4, %c0_5] : memref<32x64xf32, #tpu.memory_space<vmem>>, vector<32x64xf32>
    %cst = arith.constant dense<0.000000e+00> : vector<32x64xf32>
    %6 = tpu.matmul %4, %5, %cst {dimension_numbers = #tpu.dot_dimension_numbers<[1], [0], [0], [1], [0, 0, 1, 1], [], []>} : vector<32x32xf32>, vector<32x64xf32>, vector<32x64xf32> -> vector<32x64xf32>
    %7 = arith.addf %3, %6 : vector<32x64xf32>
    %c0_6 = arith.constant 0 : index
    %c0_7 = arith.constant 0 : index
    %8 = vector.load %arg7[%c0_6, %c0_7] : memref<32x64xf32, #tpu.memory_space<vmem>>, vector<32x64xf32>
    tpu.vector_store %arg7[%c0_6, %c0_7], %7 {strides = array<i32>} : memref<32x64xf32, #tpu.memory_space<vmem>>, vector<32x64xf32>,
    %c0_i32_8 = arith.constant 0 : i32
    %9 = arith.cmpi eq, %arg2, %c0_i32_8 : i32
    %10 = arith.extui %9 : i1 to i32
    %c0_i32_9 = arith.constant 0 : i32
    %11 = arith.cmpi ne, %10, %c0_i32_9 : i32
    scf.if %11 {
      %c0_10 = arith.constant 0 : index
      %c0_11 = arith.constant 0 : index
      %12 = vector.load %arg7[%c0_10, %c0_11] : memref<32x64xf32, #tpu.memory_space<vmem>>, vector<32x64xf32>
      %c0_12 = arith.constant 0 : index
      %c0_13 = arith.constant 0 : index
      %13 = vector.load %arg5[%c0_12, %c0_13] : memref<1x64xf32, #tpu.memory_space<vmem>>, vector<1x64xf32>
      %14 = vector.broadcast %13 : vector<1x64xf32> to vector<32x64xf32>
      %15 = arith.addf %12, %14 : vector<32x64xf32>
      %c0_14 = arith.constant 0 : index
      %c0_15 = arith.constant 0 : index
      %16 = vector.load %arg6[%c0_14, %c0_15] : memref<32x64xf32, #tpu.memory_space<vmem>>, vector<32x64xf32>
      tpu.vector_store %arg6[%c0_14, %c0_15], %15 {strides = array<i32>} : memref<32x64xf32, #tpu.memory_space<vmem>>, vector<32x64xf32>,
    } else {
    }
    return
  }
  func.func @transform_0(%arg0: i32, %arg1: i32, %arg2: i32) -> (i32, i32) {
    %c0_i32 = arith.constant 0 : i32
    return %arg0, %arg2 : i32, i32
  }
  func.func @transform_1(%arg0: i32, %arg1: i32, %arg2: i32) -> (i32, i32) {
    %c0_i32 = arith.constant 0 : i32
    return %arg2, %arg1 : i32, i32
  }
  func.func @transform_2(%arg0: i32, %arg1: i32, %arg2: i32) -> (i32, i32) {
    %c0_i32 = arith.constant 0 : i32
    %c0_i32_0 = arith.constant 0 : i32
    return %c0_i32, %arg1 : i32, i32
  }
  func.func @transform_3(%arg0: i32, %arg1: i32, %arg2: i32) -> (i32, i32) {
    %c0_i32 = arith.constant 0 : i32
    return %arg0, %arg1 : i32, i32
  }
}

module attributes {stable_mosaic.version = 11 : i64} {
  func.func @_matmul_bias_kernel(%arg0: i32, %arg1: i32, %arg2: i32, %arg3: memref<16x32xf32, #tpu.memory_space<vmem>>, %arg4: memref<32x32xf32, #tpu.memory_space<vmem>>, %arg5: memref<1x32xf32, #tpu.memory_space<vmem>>, %arg6: memref<16x32xf32, #tpu.memory_space<vmem>>, %arg7: memref<16x32xf32, #tpu.memory_space<vmem>>) attributes {dimension_semantics = [#tpu.dimension_semantics<parallel>, #tpu.dimension_semantics<parallel>, #tpu.dimension_semantics<arbitrary>], iteration_bounds = array<i64: 1, 1, 1>, scalar_prefetch = 0 : i64, scratch_operands = 1 : i64, tpu.core_type = #tpu.core_type<tc>, window_params = [{transform_indices = @transform_0, window_bounds = array<i64: 16, 32>}, {transform_indices = @transform_1, window_bounds = array<i64: 32, 32>}, {transform_indices = @transform_2, window_bounds = array<i64: 1, 32>}, {transform_indices = @transform_3, window_bounds = array<i64: 16, 32>}]} {
    %c0_i32 = arith.constant 0 : i32
    %0 = arith.cmpi eq, %arg2, %c0_i32 : i32
    %1 = arith.extui %0 : i1 to i32
    %c0_i32_0 = arith.constant 0 : i32
    %2 = arith.cmpi ne, %1, %c0_i32_0 : i32
    scf.if %2 {
      %cst_10 = arith.constant 0.000000e+00 : f32
      %12 = vector.broadcast %cst_10 : f32 to vector<16x32xf32>
      %c0_11 = arith.constant 0 : index
      %c0_12 = arith.constant 0 : index
      %13 = vector.load %arg7[%c0_11, %c0_12] : memref<16x32xf32, #tpu.memory_space<vmem>>, vector<16x32xf32>
      tpu.vector_store %arg7[%c0_11, %c0_12], %12 {strides = array<i32>} : memref<16x32xf32, #tpu.memory_space<vmem>>, vector<16x32xf32>,
    } else {
    }
    %c0 = arith.constant 0 : index
    %c0_1 = arith.constant 0 : index
    %3 = vector.load %arg7[%c0, %c0_1] : memref<16x32xf32, #tpu.memory_space<vmem>>, vector<16x32xf32>
    %c0_2 = arith.constant 0 : index
    %c0_3 = arith.constant 0 : index
    %4 = vector.load %arg3[%c0_2, %c0_3] : memref<16x32xf32, #tpu.memory_space<vmem>>, vector<16x32xf32>
    %c0_4 = arith.constant 0 : index
    %c0_5 = arith.constant 0 : index
    %5 = vector.load %arg4[%c0_4, %c0_5] : memref<32x32xf32, #tpu.memory_space<vmem>>, vector<32x32xf32>
    %cst = arith.constant dense<0.000000e+00> : vector<16x32xf32>
    %6 = tpu.matmul %4, %5, %cst {dimension_numbers = #tpu.dot_dimension_numbers<[1], [0], [0], [1], [0, 0, 1, 1], [], []>} : vector<16x32xf32>, vector<32x32xf32>, vector<16x32xf32> -> vector<16x32xf32>
    %7 = arith.addf %3, %6 : vector<16x32xf32>
    %c0_6 = arith.constant 0 : index
    %c0_7 = arith.constant 0 : index
    %8 = vector.load %arg7[%c0_6, %c0_7] : memref<16x32xf32, #tpu.memory_space<vmem>>, vector<16x32xf32>
    tpu.vector_store %arg7[%c0_6, %c0_7], %7 {strides = array<i32>} : memref<16x32xf32, #tpu.memory_space<vmem>>, vector<16x32xf32>,
    %c0_i32_8 = arith.constant 0 : i32
    %9 = arith.cmpi eq, %arg2, %c0_i32_8 : i32
    %10 = arith.extui %9 : i1 to i32
    %c0_i32_9 = arith.constant 0 : i32
    %11 = arith.cmpi ne, %10, %c0_i32_9 : i32
    scf.if %11 {
      %c0_10 = arith.constant 0 : index
      %c0_11 = arith.constant 0 : index
      %12 = vector.load %arg7[%c0_10, %c0_11] : memref<16x32xf32, #tpu.memory_space<vmem>>, vector<16x32xf32>
      %c0_12 = arith.constant 0 : index
      %c0_13 = arith.constant 0 : index
      %13 = vector.load %arg5[%c0_12, %c0_13] : memref<1x32xf32, #tpu.memory_space<vmem>>, vector<1x32xf32>
      %14 = vector.broadcast %13 : vector<1x32xf32> to vector<16x32xf32>
      %15 = arith.addf %12, %14 : vector<16x32xf32>
      %c0_14 = arith.constant 0 : index
      %c0_15 = arith.constant 0 : index
      %16 = vector.load %arg6[%c0_14, %c0_15] : memref<16x32xf32, #tpu.memory_space<vmem>>, vector<16x32xf32>
      tpu.vector_store %arg6[%c0_14, %c0_15], %15 {strides = array<i32>} : memref<16x32xf32, #tpu.memory_space<vmem>>, vector<16x32xf32>,
    } else {
    }
    return
  }
  func.func @transform_0(%arg0: i32, %arg1: i32, %arg2: i32) -> (i32, i32) {
    %c0_i32 = arith.constant 0 : i32
    return %arg0, %arg2 : i32, i32
  }
  func.func @transform_1(%arg0: i32, %arg1: i32, %arg2: i32) -> (i32, i32) {
    %c0_i32 = arith.constant 0 : i32
    return %arg2, %arg1 : i32, i32
  }
  func.func @transform_2(%arg0: i32, %arg1: i32, %arg2: i32) -> (i32, i32) {
    %c0_i32 = arith.constant 0 : i32
    %c0_i32_0 = arith.constant 0 : i32
    return %c0_i32, %arg1 : i32, i32
  }
  func.func @transform_3(%arg0: i32, %arg1: i32, %arg2: i32) -> (i32, i32) {
    %c0_i32 = arith.constant 0 : i32
    return %arg0, %arg1 : i32, i32
  }
}

module attributes {stable_mosaic.version = 11 : i64} {
  func.func @_matmul_bias_kernel(%arg0: i32, %arg1: i32, %arg2: i32, %arg3: memref<16x32xf32, #tpu.memory_space<vmem>>, %arg4: memref<32x96xf32, #tpu.memory_space<vmem>>, %arg5: memref<1x96xf32, #tpu.memory_space<vmem>>, %arg6: memref<16x96xf32, #tpu.memory_space<vmem>>, %arg7: memref<16x96xf32, #tpu.memory_space<vmem>>) attributes {dimension_semantics = [#tpu.dimension_semantics<parallel>, #tpu.dimension_semantics<parallel>, #tpu.dimension_semantics<arbitrary>], iteration_bounds = array<i64: 1, 1, 1>, scalar_prefetch = 0 : i64, scratch_operands = 1 : i64, tpu.core_type = #tpu.core_type<tc>, window_params = [{transform_indices = @transform_0, window_bounds = array<i64: 16, 32>}, {transform_indices = @transform_1, window_bounds = array<i64: 32, 96>}, {transform_indices = @transform_2, window_bounds = array<i64: 1, 96>}, {transform_indices = @transform_3, window_bounds = array<i64: 16, 96>}]} {
    %c0_i32 = arith.constant 0 : i32
    %0 = arith.cmpi eq, %arg2, %c0_i32 : i32
    %1 = arith.extui %0 : i1 to i32
    %c0_i32_0 = arith.constant 0 : i32
    %2 = arith.cmpi ne, %1, %c0_i32_0 : i32
    scf.if %2 {
      %cst_10 = arith.constant 0.000000e+00 : f32
      %12 = vector.broadcast %cst_10 : f32 to vector<16x96xf32>
      %c0_11 = arith.constant 0 : index
      %c0_12 = arith.constant 0 : index
      %13 = vector.load %arg7[%c0_11, %c0_12] : memref<16x96xf32, #tpu.memory_space<vmem>>, vector<16x96xf32>
      tpu.vector_store %arg7[%c0_11, %c0_12], %12 {strides = array<i32>} : memref<16x96xf32, #tpu.memory_space<vmem>>, vector<16x96xf32>,
    } else {
    }
    %c0 = arith.constant 0 : index
    %c0_1 = arith.constant 0 : index
    %3 = vector.load %arg7[%c0, %c0_1] : memref<16x96xf32, #tpu.memory_space<vmem>>, vector<16x96xf32>
    %c0_2 = arith.constant 0 : index
    %c0_3 = arith.constant 0 : index
    %4 = vector.load %arg3[%c0_2, %c0_3] : memref<16x32xf32, #tpu.memory_space<vmem>>, vector<16x32xf32>
    %c0_4 = arith.constant 0 : index
    %c0_5 = arith.constant 0 : index
    %5 = vector.load %arg4[%c0_4, %c0_5] : memref<32x96xf32, #tpu.memory_space<vmem>>, vector<32x96xf32>
    %cst = arith.constant dense<0.000000e+00> : vector<16x96xf32>
    %6 = tpu.matmul %4, %5, %cst {dimension_numbers = #tpu.dot_dimension_numbers<[1], [0], [0], [1], [0, 0, 1, 1], [], []>} : vector<16x32xf32>, vector<32x96xf32>, vector<16x96xf32> -> vector<16x96xf32>
    %7 = arith.addf %3, %6 : vector<16x96xf32>
    %c0_6 = arith.constant 0 : index
    %c0_7 = arith.constant 0 : index
    %8 = vector.load %arg7[%c0_6, %c0_7] : memref<16x96xf32, #tpu.memory_space<vmem>>, vector<16x96xf32>
    tpu.vector_store %arg7[%c0_6, %c0_7], %7 {strides = array<i32>} : memref<16x96xf32, #tpu.memory_space<vmem>>, vector<16x96xf32>,
    %c0_i32_8 = arith.constant 0 : i32
    %9 = arith.cmpi eq, %arg2, %c0_i32_8 : i32
    %10 = arith.extui %9 : i1 to i32
    %c0_i32_9 = arith.constant 0 : i32
    %11 = arith.cmpi ne, %10, %c0_i32_9 : i32
    scf.if %11 {
      %c0_10 = arith.constant 0 : index
      %c0_11 = arith.constant 0 : index
      %12 = vector.load %arg7[%c0_10, %c0_11] : memref<16x96xf32, #tpu.memory_space<vmem>>, vector<16x96xf32>
      %c0_12 = arith.constant 0 : index
      %c0_13 = arith.constant 0 : index
      %13 = vector.load %arg5[%c0_12, %c0_13] : memref<1x96xf32, #tpu.memory_space<vmem>>, vector<1x96xf32>
      %14 = vector.broadcast %13 : vector<1x96xf32> to vector<16x96xf32>
      %15 = arith.addf %12, %14 : vector<16x96xf32>
      %c0_14 = arith.constant 0 : index
      %c0_15 = arith.constant 0 : index
      %16 = vector.load %arg6[%c0_14, %c0_15] : memref<16x96xf32, #tpu.memory_space<vmem>>, vector<16x96xf32>
      tpu.vector_store %arg6[%c0_14, %c0_15], %15 {strides = array<i32>} : memref<16x96xf32, #tpu.memory_space<vmem>>, vector<16x96xf32>,
    } else {
    }
    return
  }
  func.func @transform_0(%arg0: i32, %arg1: i32, %arg2: i32) -> (i32, i32) {
    %c0_i32 = arith.constant 0 : i32
    return %arg0, %arg2 : i32, i32
  }
  func.func @transform_1(%arg0: i32, %arg1: i32, %arg2: i32) -> (i32, i32) {
    %c0_i32 = arith.constant 0 : i32
    return %arg2, %arg1 : i32, i32
  }
  func.func @transform_2(%arg0: i32, %arg1: i32, %arg2: i32) -> (i32, i32) {
    %c0_i32 = arith.constant 0 : i32
    %c0_i32_0 = arith.constant 0 : i32
    return %c0_i32, %arg1 : i32, i32
  }
  func.func @transform_3(%arg0: i32, %arg1: i32, %arg2: i32) -> (i32, i32) {
    %c0_i32 = arith.constant 0 : i32
    return %arg0, %arg1 : i32, i32
  }
}

module attributes {stable_mosaic.version = 11 : i64} {
  func.func @_ffn_ln_kernel(%arg0: i32, %arg1: memref<16x32xf32, #tpu.memory_space<vmem>>, %arg2: memref<32x64xf32, #tpu.memory_space<vmem>>, %arg3: memref<1x64xf32, #tpu.memory_space<vmem>>, %arg4: memref<64x32xf32, #tpu.memory_space<vmem>>, %arg5: memref<1x32xf32, #tpu.memory_space<vmem>>, %arg6: memref<1x32xf32, #tpu.memory_space<vmem>>, %arg7: memref<1x32xf32, #tpu.memory_space<vmem>>, %arg8: memref<16x32xf32, #tpu.memory_space<vmem>>) attributes {dimension_semantics = [#tpu.dimension_semantics<parallel>], iteration_bounds = array<i64: 1>, scalar_prefetch = 0 : i64, scratch_operands = 0 : i64, tpu.core_type = #tpu.core_type<tc>, window_params = [{transform_indices = @transform_0, window_bounds = array<i64: 16, 32>}, {pipeline_mode = #tpu.pipeline_mode<synchronous>, transform_indices = @transform_1, window_bounds = array<i64: 32, 64>}, {pipeline_mode = #tpu.pipeline_mode<synchronous>, transform_indices = @transform_2, window_bounds = array<i64: 1, 64>}, {pipeline_mode = #tpu.pipeline_mode<synchronous>, transform_indices = @transform_3, window_bounds = array<i64: 64, 32>}, {pipeline_mode = #tpu.pipeline_mode<synchronous>, transform_indices = @transform_4, window_bounds = array<i64: 1, 32>}, {pipeline_mode = #tpu.pipeline_mode<synchronous>, transform_indices = @transform_5, window_bounds = array<i64: 1, 32>}, {pipeline_mode = #tpu.pipeline_mode<synchronous>, transform_indices = @transform_6, window_bounds = array<i64: 1, 32>}, {transform_indices = @transform_7, window_bounds = array<i64: 16, 32>}]} {
    %c0 = arith.constant 0 : index
    %c0_0 = arith.constant 0 : index
    %0 = vector.load %arg1[%c0, %c0_0] : memref<16x32xf32, #tpu.memory_space<vmem>>, vector<16x32xf32>
    %c0_1 = arith.constant 0 : index
    %c0_2 = arith.constant 0 : index
    %1 = vector.load %arg2[%c0_1, %c0_2] : memref<32x64xf32, #tpu.memory_space<vmem>>, vector<32x64xf32>
    %cst = arith.constant dense<0.000000e+00> : vector<16x64xf32>
    %2 = tpu.matmul %0, %1, %cst {dimension_numbers = #tpu.dot_dimension_numbers<[1], [0], [0], [1], [0, 0, 1, 1], [], []>} : vector<16x32xf32>, vector<32x64xf32>, vector<16x64xf32> -> vector<16x64xf32>
    %c0_3 = arith.constant 0 : index
    %c0_4 = arith.constant 0 : index
    %3 = vector.load %arg3[%c0_3, %c0_4] : memref<1x64xf32, #tpu.memory_space<vmem>>, vector<1x64xf32>
    %4 = vector.broadcast %3 : vector<1x64xf32> to vector<16x64xf32>
    %5 = arith.addf %2, %4 : vector<16x64xf32>
    %cst_5 = arith.constant 0.000000e+00 : f32
    %6 = vector.broadcast %cst_5 : f32 to vector<16x64xf32>
    %7 = arith.maximumf %5, %6 : vector<16x64xf32>
    %c0_6 = arith.constant 0 : index
    %c0_7 = arith.constant 0 : index
    %8 = vector.load %arg4[%c0_6, %c0_7] : memref<64x32xf32, #tpu.memory_space<vmem>>, vector<64x32xf32>
    %cst_8 = arith.constant dense<0.000000e+00> : vector<16x32xf32>
    %9 = tpu.matmul %7, %8, %cst_8 {dimension_numbers = #tpu.dot_dimension_numbers<[1], [0], [0], [1], [0, 0, 1, 1], [], []>} : vector<16x64xf32>, vector<64x32xf32>, vector<16x32xf32> -> vector<16x32xf32>
    %10 = arith.addf %0, %9 : vector<16x32xf32>
    %c0_9 = arith.constant 0 : index
    %c0_10 = arith.constant 0 : index
    %11 = vector.load %arg5[%c0_9, %c0_10] : memref<1x32xf32, #tpu.memory_space<vmem>>, vector<1x32xf32>
    %12 = vector.broadcast %11 : vector<1x32xf32> to vector<16x32xf32>
    %13 = arith.addf %10, %12 : vector<16x32xf32>
    %cst_11 = arith.constant dense<0.000000e+00> : vector<16xf32>
    %14 = vector.multi_reduction <add>, %13, %cst_11 [1] : vector<16x32xf32> to vector<16xf32>
    %15 = vector.shape_cast %14 : vector<16xf32> to vector<16x1xf32>
    %cst_12 = arith.constant 3.200000e+01 : f32
    %16 = vector.broadcast %cst_12 : f32 to vector<16x1xf32>
    %17 = arith.divf %15, %16 : vector<16x1xf32>
    %18 = vector.broadcast %17 : vector<16x1xf32> to vector<16x32xf32>
    %19 = arith.subf %13, %18 : vector<16x32xf32>
    %20 = arith.mulf %19, %19 : vector<16x32xf32>
    %cst_13 = arith.constant dense<0.000000e+00> : vector<16xf32>
    %21 = vector.multi_reduction <add>, %20, %cst_13 [1] : vector<16x32xf32> to vector<16xf32>
    %22 = vector.shape_cast %21 : vector<16xf32> to vector<16x1xf32>
    %cst_14 = arith.constant 3.200000e+01 : f32
    %23 = vector.broadcast %cst_14 : f32 to vector<16x1xf32>
    %24 = arith.divf %22, %23 : vector<16x1xf32>
    %cst_15 = arith.constant 9.99999974E-6 : f32
    %25 = vector.broadcast %cst_15 : f32 to vector<16x1xf32>
    %26 = arith.addf %24, %25 : vector<16x1xf32>
    %27 = math.rsqrt %26 : vector<16x1xf32>
    %28 = vector.broadcast %27 : vector<16x1xf32> to vector<16x32xf32>
    %29 = arith.mulf %19, %28 : vector<16x32xf32>
    %c0_16 = arith.constant 0 : index
    %c0_17 = arith.constant 0 : index
    %30 = vector.load %arg6[%c0_16, %c0_17] : memref<1x32xf32, #tpu.memory_space<vmem>>, vector<1x32xf32>
    %31 = vector.broadcast %30 : vector<1x32xf32> to vector<16x32xf32>
    %32 = arith.mulf %29, %31 : vector<16x32xf32>
    %c0_18 = arith.constant 0 : index
    %c0_19 = arith.constant 0 : index
    %33 = vector.load %arg7[%c0_18, %c0_19] : memref<1x32xf32, #tpu.memory_space<vmem>>, vector<1x32xf32>
    %34 = vector.broadcast %33 : vector<1x32xf32> to vector<16x32xf32>
    %35 = arith.addf %32, %34 : vector<16x32xf32>
    %c0_20 = arith.constant 0 : index
    %c0_21 = arith.constant 0 : index
    %36 = vector.load %arg8[%c0_20, %c0_21] : memref<16x32xf32, #tpu.memory_space<vmem>>, vector<16x32xf32>
    tpu.vector_store %arg8[%c0_20, %c0_21], %35 {strides = array<i32>} : memref<16x32xf32, #tpu.memory_space<vmem>>, vector<16x32xf32>,
    return
  }
  func.func @transform_0(%arg0: i32) -> (i32, i32) {
    %c0_i32 = arith.constant 0 : i32
    %c0_i32_0 = arith.constant 0 : i32
    return %arg0, %c0_i32 : i32, i32
  }
  func.func @transform_1(%arg0: i32) -> (i32, i32) {
    %c0_i32 = arith.constant 0 : i32
    %c0_i32_0 = arith.constant 0 : i32
    %c0_i32_1 = arith.constant 0 : i32
    return %c0_i32, %c0_i32_0 : i32, i32
  }
  func.func @transform_2(%arg0: i32) -> (i32, i32) {
    %c0_i32 = arith.constant 0 : i32
    %c0_i32_0 = arith.constant 0 : i32
    %c0_i32_1 = arith.constant 0 : i32
    return %c0_i32, %c0_i32_0 : i32, i32
  }
  func.func @transform_3(%arg0: i32) -> (i32, i32) {
    %c0_i32 = arith.constant 0 : i32
    %c0_i32_0 = arith.constant 0 : i32
    %c0_i32_1 = arith.constant 0 : i32
    return %c0_i32, %c0_i32_0 : i32, i32
  }
  func.func @transform_4(%arg0: i32) -> (i32, i32) {
    %c0_i32 = arith.constant 0 : i32
    %c0_i32_0 = arith.constant 0 : i32
    %c0_i32_1 = arith.constant 0 : i32
    return %c0_i32, %c0_i32_0 : i32, i32
  }
  func.func @transform_5(%arg0: i32) -> (i32, i32) {
    %c0_i32 = arith.constant 0 : i32
    %c0_i32_0 = arith.constant 0 : i32
    %c0_i32_1 = arith.constant 0 : i32
    return %c0_i32, %c0_i32_0 : i32, i32
  }
  func.func @transform_6(%arg0: i32) -> (i32, i32) {
    %c0_i32 = arith.constant 0 : i32
    %c0_i32_0 = arith.constant 0 : i32
    %c0_i32_1 = arith.constant 0 : i32
    return %c0_i32, %c0_i32_0 : i32, i32
  }
  func.func @transform_7(%arg0: i32) -> (i32, i32) {
    %c0_i32 = arith.constant 0 : i32
    %c0_i32_0 = arith.constant 0 : i32
    return %arg0, %c0_i32 : i32, i32
  }
}

module attributes {stable_mosaic.version = 11 : i64} {
  func.func @_cross_mha_kernel(%arg0: i32, %arg1: memref<8x1x1x32xf32, #tpu.memory_space<vmem>>, %arg2: memref<16x1x1x64xf32, #tpu.memory_space<vmem>>, %arg3: memref<8x1x1x32xf32, #tpu.memory_space<vmem>>, %arg4: memref<32x32xf32, #tpu.memory_space<vmem>>, %arg5: memref<1x32xf32, #tpu.memory_space<vmem>>, %arg6: memref<1x32xf32, #tpu.memory_space<vmem>>, %arg7: memref<1x32xf32, #tpu.memory_space<vmem>>, %arg8: memref<8x1x1x32xf32, #tpu.memory_space<vmem>>) attributes {dimension_semantics = [#tpu.dimension_semantics<parallel>], iteration_bounds = array<i64: 2>, scalar_prefetch = 0 : i64, scratch_operands = 0 : i64, tpu.core_type = #tpu.core_type<tc>, window_params = [{transform_indices = @transform_0, window_bounds = array<i64: 8, 1, 1, 32>}, {transform_indices = @transform_1, window_bounds = array<i64: 16, 1, 1, 64>}, {transform_indices = @transform_2, window_bounds = array<i64: 8, 1, 1, 32>}, {pipeline_mode = #tpu.pipeline_mode<synchronous>, transform_indices = @transform_3, window_bounds = array<i64: 32, 32>}, {pipeline_mode = #tpu.pipeline_mode<synchronous>, transform_indices = @transform_4, window_bounds = array<i64: 1, 32>}, {pipeline_mode = #tpu.pipeline_mode<synchronous>, transform_indices = @transform_5, window_bounds = array<i64: 1, 32>}, {pipeline_mode = #tpu.pipeline_mode<synchronous>, transform_indices = @transform_6, window_bounds = array<i64: 1, 32>}, {transform_indices = @transform_7, window_bounds = array<i64: 8, 1, 1, 32>}]} {
    %c0 = arith.constant 0 : index
    %c0_0 = arith.constant 0 : index
    %c0_1 = arith.constant 0 : index
    %c0_2 = arith.constant 0 : index
    %0 = vector.load %arg1[%c0, %c0_0, %c0_1, %c0_2] : memref<8x1x1x32xf32, #tpu.memory_space<vmem>>, vector<8x1x1x32xf32>
    %1 = vector.shape_cast %0 : vector<8x1x1x32xf32> to vector<8x32xf32>
    %c0_3 = arith.constant 0 : index
    %c0_4 = arith.constant 0 : index
    %c0_5 = arith.constant 0 : index
    %c0_6 = arith.constant 0 : index
    %2 = vector.load %arg2[%c0_3, %c0_4, %c0_5, %c0_6] : memref<16x1x1x64xf32, #tpu.memory_space<vmem>>, vector<16x1x1x64xf32>
    %3 = vector.shape_cast %2 : vector<16x1x1x64xf32> to vector<16x64xf32>
    %4 = vector.extract_strided_slice %3 {offsets = [0, 0], sizes = [16, 32], strides = [1, 1]} : vector<16x64xf32> to vector<16x32xf32>
    %5 = vector.extract_strided_slice %3 {offsets = [0, 32], sizes = [16, 32], strides = [1, 1]} : vector<16x64xf32> to vector<16x32xf32>
    %c0_7 = arith.constant 0 : index
    %c0_8 = arith.constant 0 : index
    %c0_9 = arith.constant 0 : index
    %c0_10 = arith.constant 0 : index
    %6 = vector.load %arg3[%c0_7, %c0_8, %c0_9, %c0_10] : memref<8x1x1x32xf32, #tpu.memory_space<vmem>>, vector<8x1x1x32xf32>
    %7 = vector.shape_cast %6 : vector<8x1x1x32xf32> to vector<8x32xf32>
    %c0_11 = arith.constant 0 : index
    %c0_12 = arith.constant 0 : index
    %8 = vector.load %arg4[%c0_11, %c0_12] : memref<32x32xf32, #tpu.memory_space<vmem>>, vector<32x32xf32>
    %c0_13 = arith.constant 0 : index
    %c0_14 = arith.constant 0 : index
    %9 = vector.load %arg5[%c0_13, %c0_14] : memref<1x32xf32, #tpu.memory_space<vmem>>, vector<1x32xf32>
    %c0_15 = arith.constant 0 : index
    %c0_16 = arith.constant 0 : index
    %10 = vector.load %arg6[%c0_15, %c0_16] : memref<1x32xf32, #tpu.memory_space<vmem>>, vector<1x32xf32>
    %c0_17 = arith.constant 0 : index
    %c0_18 = arith.constant 0 : index
    %11 = vector.load %arg7[%c0_17, %c0_18] : memref<1x32xf32, #tpu.memory_space<vmem>>, vector<1x32xf32>
    %12 = vector.extract_strided_slice %1 {offsets = [0, 0], sizes = [8, 8], strides = [1, 1]} : vector<8x32xf32> to vector<8x8xf32>
    %cst = arith.constant 0.353553385 : f32
    %13 = vector.broadcast %cst : f32 to vector<8x8xf32>
    %14 = arith.mulf %12, %13 : vector<8x8xf32>
    %15 = vector.extract_strided_slice %4 {offsets = [0, 0], sizes = [16, 8], strides = [1, 1]} : vector<16x32xf32> to vector<16x8xf32>
    %16 = vector.extract_strided_slice %5 {offsets = [0, 0], sizes = [16, 8], strides = [1, 1]} : vector<16x32xf32> to vector<16x8xf32>
    %cst_19 = arith.constant dense<0.000000e+00> : vector<8x16xf32>
    %17 = tpu.matmul %14, %15, %cst_19 {dimension_numbers = #tpu.dot_dimension_numbers<[1], [1], [0], [0], [0, 0, 1, 0], [], []>} : vector<8x8xf32>, vector<16x8xf32>, vector<8x16xf32> -> vector<8x16xf32>
    %cst_20 = arith.constant dense<0xFF800000> : vector<8xf32>
    %18 = vector.multi_reduction <maximumf>, %17, %cst_20 [1] : vector<8x16xf32> to vector<8xf32>
    %19 = vector.shape_cast %18 : vector<8xf32> to vector<8x1xf32>
    %20 = vector.broadcast %19 : vector<8x1xf32> to vector<8x16xf32>
    %21 = arith.subf %17, %20 : vector<8x16xf32>
    %22 = math.exp %21 : vector<8x16xf32>
    %cst_21 = arith.constant dense<0.000000e+00> : vector<8xf32>
    %23 = vector.multi_reduction <add>, %22, %cst_21 [1] : vector<8x16xf32> to vector<8xf32>
    %24 = vector.shape_cast %23 : vector<8xf32> to vector<8x1xf32>
    %25 = tpu.reciprocal %24 {approx = true} : vector<8x1xf32> -> vector<8x1xf32>
    %26 = vector.broadcast %25 : vector<8x1xf32> to vector<8x16xf32>
    %27 = arith.mulf %22, %26 : vector<8x16xf32>
    %cst_22 = arith.constant dense<0.000000e+00> : vector<8x8xf32>
    %28 = tpu.matmul %27, %16, %cst_22 {dimension_numbers = #tpu.dot_dimension_numbers<[1], [0], [0], [1], [0, 0, 1, 1], [], []>} : vector<8x16xf32>, vector<16x8xf32>, vector<8x8xf32> -> vector<8x8xf32>
    %29 = vector.extract_strided_slice %1 {offsets = [0, 8], sizes = [8, 8], strides = [1, 1]} : vector<8x32xf32> to vector<8x8xf32>
    %cst_23 = arith.constant 0.353553385 : f32
    %30 = vector.broadcast %cst_23 : f32 to vector<8x8xf32>
    %31 = arith.mulf %29, %30 : vector<8x8xf32>
    %32 = vector.extract_strided_slice %4 {offsets = [0, 8], sizes = [16, 8], strides = [1, 1]} : vector<16x32xf32> to vector<16x8xf32>
    %33 = vector.extract_strided_slice %5 {offsets = [0, 8], sizes = [16, 8], strides = [1, 1]} : vector<16x32xf32> to vector<16x8xf32>
    %cst_24 = arith.constant dense<0.000000e+00> : vector<8x16xf32>
    %34 = tpu.matmul %31, %32, %cst_24 {dimension_numbers = #tpu.dot_dimension_numbers<[1], [1], [0], [0], [0, 0, 1, 0], [], []>} : vector<8x8xf32>, vector<16x8xf32>, vector<8x16xf32> -> vector<8x16xf32>
    %cst_25 = arith.constant dense<0xFF800000> : vector<8xf32>
    %35 = vector.multi_reduction <maximumf>, %34, %cst_25 [1] : vector<8x16xf32> to vector<8xf32>
    %36 = vector.shape_cast %35 : vector<8xf32> to vector<8x1xf32>
    %37 = vector.broadcast %36 : vector<8x1xf32> to vector<8x16xf32>
    %38 = arith.subf %34, %37 : vector<8x16xf32>
    %39 = math.exp %38 : vector<8x16xf32>
    %cst_26 = arith.constant dense<0.000000e+00> : vector<8xf32>
    %40 = vector.multi_reduction <add>, %39, %cst_26 [1] : vector<8x16xf32> to vector<8xf32>
    %41 = vector.shape_cast %40 : vector<8xf32> to vector<8x1xf32>
    %42 = tpu.reciprocal %41 {approx = true} : vector<8x1xf32> -> vector<8x1xf32>
    %43 = vector.broadcast %42 : vector<8x1xf32> to vector<8x16xf32>
    %44 = arith.mulf %39, %43 : vector<8x16xf32>
    %cst_27 = arith.constant dense<0.000000e+00> : vector<8x8xf32>
    %45 = tpu.matmul %44, %33, %cst_27 {dimension_numbers = #tpu.dot_dimension_numbers<[1], [0], [0], [1], [0, 0, 1, 1], [], []>} : vector<8x16xf32>, vector<16x8xf32>, vector<8x8xf32> -> vector<8x8xf32>
    %46 = vector.extract_strided_slice %1 {offsets = [0, 16], sizes = [8, 8], strides = [1, 1]} : vector<8x32xf32> to vector<8x8xf32>
    %cst_28 = arith.constant 0.353553385 : f32
    %47 = vector.broadcast %cst_28 : f32 to vector<8x8xf32>
    %48 = arith.mulf %46, %47 : vector<8x8xf32>
    %49 = vector.extract_strided_slice %4 {offsets = [0, 16], sizes = [16, 8], strides = [1, 1]} : vector<16x32xf32> to vector<16x8xf32>
    %50 = vector.extract_strided_slice %5 {offsets = [0, 16], sizes = [16, 8], strides = [1, 1]} : vector<16x32xf32> to vector<16x8xf32>
    %cst_29 = arith.constant dense<0.000000e+00> : vector<8x16xf32>
    %51 = tpu.matmul %48, %49, %cst_29 {dimension_numbers = #tpu.dot_dimension_numbers<[1], [1], [0], [0], [0, 0, 1, 0], [], []>} : vector<8x8xf32>, vector<16x8xf32>, vector<8x16xf32> -> vector<8x16xf32>
    %cst_30 = arith.constant dense<0xFF800000> : vector<8xf32>
    %52 = vector.multi_reduction <maximumf>, %51, %cst_30 [1] : vector<8x16xf32> to vector<8xf32>
    %53 = vector.shape_cast %52 : vector<8xf32> to vector<8x1xf32>
    %54 = vector.broadcast %53 : vector<8x1xf32> to vector<8x16xf32>
    %55 = arith.subf %51, %54 : vector<8x16xf32>
    %56 = math.exp %55 : vector<8x16xf32>
    %cst_31 = arith.constant dense<0.000000e+00> : vector<8xf32>
    %57 = vector.multi_reduction <add>, %56, %cst_31 [1] : vector<8x16xf32> to vector<8xf32>
    %58 = vector.shape_cast %57 : vector<8xf32> to vector<8x1xf32>
    %59 = tpu.reciprocal %58 {approx = true} : vector<8x1xf32> -> vector<8x1xf32>
    %60 = vector.broadcast %59 : vector<8x1xf32> to vector<8x16xf32>
    %61 = arith.mulf %56, %60 : vector<8x16xf32>
    %cst_32 = arith.constant dense<0.000000e+00> : vector<8x8xf32>
    %62 = tpu.matmul %61, %50, %cst_32 {dimension_numbers = #tpu.dot_dimension_numbers<[1], [0], [0], [1], [0, 0, 1, 1], [], []>} : vector<8x16xf32>, vector<16x8xf32>, vector<8x8xf32> -> vector<8x8xf32>
    %63 = vector.extract_strided_slice %1 {offsets = [0, 24], sizes = [8, 8], strides = [1, 1]} : vector<8x32xf32> to vector<8x8xf32>
    %cst_33 = arith.constant 0.353553385 : f32
    %64 = vector.broadcast %cst_33 : f32 to vector<8x8xf32>
    %65 = arith.mulf %63, %64 : vector<8x8xf32>
    %66 = vector.extract_strided_slice %4 {offsets = [0, 24], sizes = [16, 8], strides = [1, 1]} : vector<16x32xf32> to vector<16x8xf32>
    %67 = vector.extract_strided_slice %5 {offsets = [0, 24], sizes = [16, 8], strides = [1, 1]} : vector<16x32xf32> to vector<16x8xf32>
    %cst_34 = arith.constant dense<0.000000e+00> : vector<8x16xf32>
    %68 = tpu.matmul %65, %66, %cst_34 {dimension_numbers = #tpu.dot_dimension_numbers<[1], [1], [0], [0], [0, 0, 1, 0], [], []>} : vector<8x8xf32>, vector<16x8xf32>, vector<8x16xf32> -> vector<8x16xf32>
    %cst_35 = arith.constant dense<0xFF800000> : vector<8xf32>
    %69 = vector.multi_reduction <maximumf>, %68, %cst_35 [1] : vector<8x16xf32> to vector<8xf32>
    %70 = vector.shape_cast %69 : vector<8xf32> to vector<8x1xf32>
    %71 = vector.broadcast %70 : vector<8x1xf32> to vector<8x16xf32>
    %72 = arith.subf %68, %71 : vector<8x16xf32>
    %73 = math.exp %72 : vector<8x16xf32>
    %cst_36 = arith.constant dense<0.000000e+00> : vector<8xf32>
    %74 = vector.multi_reduction <add>, %73, %cst_36 [1] : vector<8x16xf32> to vector<8xf32>
    %75 = vector.shape_cast %74 : vector<8xf32> to vector<8x1xf32>
    %76 = tpu.reciprocal %75 {approx = true} : vector<8x1xf32> -> vector<8x1xf32>
    %77 = vector.broadcast %76 : vector<8x1xf32> to vector<8x16xf32>
    %78 = arith.mulf %73, %77 : vector<8x16xf32>
    %cst_37 = arith.constant dense<0.000000e+00> : vector<8x8xf32>
    %79 = tpu.matmul %78, %67, %cst_37 {dimension_numbers = #tpu.dot_dimension_numbers<[1], [0], [0], [1], [0, 0, 1, 1], [], []>} : vector<8x16xf32>, vector<16x8xf32>, vector<8x8xf32> -> vector<8x8xf32>
    %80 = tpu.concatenate %28, %45, %62, %79 in 1 : vector<8x8xf32>, vector<8x8xf32>, vector<8x8xf32>, vector<8x8xf32> -> vector<8x32xf32>
    %cst_38 = arith.constant dense<0.000000e+00> : vector<8x32xf32>
    %81 = tpu.matmul %80, %8, %cst_38 {dimension_numbers = #tpu.dot_dimension_numbers<[1], [0], [0], [1], [0, 0, 1, 1], [], []>} : vector<8x32xf32>, vector<32x32xf32>, vector<8x32xf32> -> vector<8x32xf32>
    %82 = vector.broadcast %9 : vector<1x32xf32> to vector<8x32xf32>
    %83 = arith.addf %81, %82 : vector<8x32xf32>
    %84 = arith.addf %83, %7 : vector<8x32xf32>
    %cst_39 = arith.constant dense<0.000000e+00> : vector<8xf32>
    %85 = vector.multi_reduction <add>, %84, %cst_39 [1] : vector<8x32xf32> to vector<8xf32>
    %86 = vector.shape_cast %85 : vector<8xf32> to vector<8x1xf32>
    %cst_40 = arith.constant 3.200000e+01 : f32
    %87 = vector.broadcast %cst_40 : f32 to vector<8x1xf32>
    %88 = arith.divf %86, %87 : vector<8x1xf32>
    %89 = vector.broadcast %88 : vector<8x1xf32> to vector<8x32xf32>
    %90 = arith.subf %84, %89 : vector<8x32xf32>
    %91 = arith.mulf %90, %90 : vector<8x32xf32>
    %cst_41 = arith.constant dense<0.000000e+00> : vector<8xf32>
    %92 = vector.multi_reduction <add>, %91, %cst_41 [1] : vector<8x32xf32> to vector<8xf32>
    %93 = vector.shape_cast %92 : vector<8xf32> to vector<8x1xf32>
    %cst_42 = arith.constant 3.200000e+01 : f32
    %94 = vector.broadcast %cst_42 : f32 to vector<8x1xf32>
    %95 = arith.divf %93, %94 : vector<8x1xf32>
    %cst_43 = arith.constant 9.99999974E-6 : f32
    %96 = vector.broadcast %cst_43 : f32 to vector<8x1xf32>
    %97 = arith.addf %95, %96 : vector<8x1xf32>
    %98 = math.rsqrt %97 : vector<8x1xf32>
    %99 = vector.broadcast %98 : vector<8x1xf32> to vector<8x32xf32>
    %100 = arith.mulf %90, %99 : vector<8x32xf32>
    %101 = vector.broadcast %10 : vector<1x32xf32> to vector<8x32xf32>
    %102 = arith.mulf %100, %101 : vector<8x32xf32>
    %103 = vector.broadcast %11 : vector<1x32xf32> to vector<8x32xf32>
    %104 = arith.addf %102, %103 : vector<8x32xf32>
    %105 = vector.shape_cast %104 : vector<8x32xf32> to vector<8x1x1x32xf32>
    %c0_44 = arith.constant 0 : index
    %c0_45 = arith.constant 0 : index
    %c0_46 = arith.constant 0 : index
    %c0_47 = arith.constant 0 : index
    %106 = vector.load %arg8[%c0_44, %c0_45, %c0_46, %c0_47] : memref<8x1x1x32xf32, #tpu.memory_space<vmem>>, vector<8x1x1x32xf32>
    tpu.vector_store %arg8[%c0_44, %c0_45, %c0_46, %c0_47], %105 {strides = array<i32>} : memref<8x1x1x32xf32, #tpu.memory_space<vmem>>, vector<8x1x1x32xf32>,
    return
  }
  func.func @transform_0(%arg0: i32) -> (i32, i32, i32, i32) {
    %c0_i32 = arith.constant 0 : i32
    %c0_i32_0 = arith.constant 0 : i32
    %c0_i32_1 = arith.constant 0 : i32
    %c0_i32_2 = arith.constant 0 : i32
    return %c0_i32, %arg0, %c0_i32_0, %c0_i32_1 : i32, i32, i32, i32
  }
  func.func @transform_1(%arg0: i32) -> (i32, i32, i32, i32) {
    %c0_i32 = arith.constant 0 : i32
    %c0_i32_0 = arith.constant 0 : i32
    %c0_i32_1 = arith.constant 0 : i32
    %c0_i32_2 = arith.constant 0 : i32
    return %c0_i32, %arg0, %c0_i32_0, %c0_i32_1 : i32, i32, i32, i32
  }
  func.func @transform_2(%arg0: i32) -> (i32, i32, i32, i32) {
    %c0_i32 = arith.constant 0 : i32
    %c0_i32_0 = arith.constant 0 : i32
    %c0_i32_1 = arith.constant 0 : i32
    %c0_i32_2 = arith.constant 0 : i32
    return %c0_i32, %arg0, %c0_i32_0, %c0_i32_1 : i32, i32, i32, i32
  }
  func.func @transform_3(%arg0: i32) -> (i32, i32) {
    %c0_i32 = arith.constant 0 : i32
    %c0_i32_0 = arith.constant 0 : i32
    %c0_i32_1 = arith.constant 0 : i32
    return %c0_i32, %c0_i32_0 : i32, i32
  }
  func.func @transform_4(%arg0: i32) -> (i32, i32) {
    %c0_i32 = arith.constant 0 : i32
    %c0_i32_0 = arith.constant 0 : i32
    %c0_i32_1 = arith.constant 0 : i32
    return %c0_i32, %c0_i32_0 : i32, i32
  }
  func.func @transform_5(%arg0: i32) -> (i32, i32) {
    %c0_i32 = arith.constant 0 : i32
    %c0_i32_0 = arith.constant 0 : i32
    %c0_i32_1 = arith.constant 0 : i32
    return %c0_i32, %c0_i32_0 : i32, i32
  }
  func.func @transform_6(%arg0: i32) -> (i32, i32) {
    %c0_i32 = arith.constant 0 : i32
    %c0_i32_0 = arith.constant 0 : i32
    %c0_i32_1 = arith.constant 0 : i32
    return %c0_i32, %c0_i32_0 : i32, i32
  }
  func.func @transform_7(%arg0: i32) -> (i32, i32, i32, i32) {
    %c0_i32 = arith.constant 0 : i32
    %c0_i32_0 = arith.constant 0 : i32
    %c0_i32_1 = arith.constant 0 : i32
    %c0_i32_2 = arith.constant 0 : i32
    return %c0_i32, %arg0, %c0_i32_0, %c0_i32_1 : i32, i32, i32, i32
  }
}

module attributes {stable_mosaic.version = 11 : i64} {
  func.func @_matmul_bias_kernel(%arg0: i32, %arg1: i32, %arg2: i32, %arg3: memref<16x32xf32, #tpu.memory_space<vmem>>, %arg4: memref<32x32xf32, #tpu.memory_space<vmem>>, %arg5: memref<1x32xf32, #tpu.memory_space<vmem>>, %arg6: memref<16x32xf32, #tpu.memory_space<vmem>>, %arg7: memref<16x32xf32, #tpu.memory_space<vmem>>) attributes {dimension_semantics = [#tpu.dimension_semantics<parallel>, #tpu.dimension_semantics<parallel>, #tpu.dimension_semantics<arbitrary>], iteration_bounds = array<i64: 1, 1, 1>, scalar_prefetch = 0 : i64, scratch_operands = 1 : i64, tpu.core_type = #tpu.core_type<tc>, window_params = [{transform_indices = @transform_0, window_bounds = array<i64: 16, 32>}, {transform_indices = @transform_1, window_bounds = array<i64: 32, 32>}, {transform_indices = @transform_2, window_bounds = array<i64: 1, 32>}, {transform_indices = @transform_3, window_bounds = array<i64: 16, 32>}]} {
    %c0_i32 = arith.constant 0 : i32
    %0 = arith.cmpi eq, %arg2, %c0_i32 : i32
    %1 = arith.extui %0 : i1 to i32
    %c0_i32_0 = arith.constant 0 : i32
    %2 = arith.cmpi ne, %1, %c0_i32_0 : i32
    scf.if %2 {
      %cst_10 = arith.constant 0.000000e+00 : f32
      %12 = vector.broadcast %cst_10 : f32 to vector<16x32xf32>
      %c0_11 = arith.constant 0 : index
      %c0_12 = arith.constant 0 : index
      %13 = vector.load %arg7[%c0_11, %c0_12] : memref<16x32xf32, #tpu.memory_space<vmem>>, vector<16x32xf32>
      tpu.vector_store %arg7[%c0_11, %c0_12], %12 {strides = array<i32>} : memref<16x32xf32, #tpu.memory_space<vmem>>, vector<16x32xf32>,
    } else {
    }
    %c0 = arith.constant 0 : index
    %c0_1 = arith.constant 0 : index
    %3 = vector.load %arg7[%c0, %c0_1] : memref<16x32xf32, #tpu.memory_space<vmem>>, vector<16x32xf32>
    %c0_2 = arith.constant 0 : index
    %c0_3 = arith.constant 0 : index
    %4 = vector.load %arg3[%c0_2, %c0_3] : memref<16x32xf32, #tpu.memory_space<vmem>>, vector<16x32xf32>
    %c0_4 = arith.constant 0 : index
    %c0_5 = arith.constant 0 : index
    %5 = vector.load %arg4[%c0_4, %c0_5] : memref<32x32xf32, #tpu.memory_space<vmem>>, vector<32x32xf32>
    %cst = arith.constant dense<0.000000e+00> : vector<16x32xf32>
    %6 = tpu.matmul %4, %5, %cst {dimension_numbers = #tpu.dot_dimension_numbers<[1], [0], [0], [1], [0, 0, 1, 1], [], []>} : vector<16x32xf32>, vector<32x32xf32>, vector<16x32xf32> -> vector<16x32xf32>
    %7 = arith.addf %3, %6 : vector<16x32xf32>
    %c0_6 = arith.constant 0 : index
    %c0_7 = arith.constant 0 : index
    %8 = vector.load %arg7[%c0_6, %c0_7] : memref<16x32xf32, #tpu.memory_space<vmem>>, vector<16x32xf32>
    tpu.vector_store %arg7[%c0_6, %c0_7], %7 {strides = array<i32>} : memref<16x32xf32, #tpu.memory_space<vmem>>, vector<16x32xf32>,
    %c0_i32_8 = arith.constant 0 : i32
    %9 = arith.cmpi eq, %arg2, %c0_i32_8 : i32
    %10 = arith.extui %9 : i1 to i32
    %c0_i32_9 = arith.constant 0 : i32
    %11 = arith.cmpi ne, %10, %c0_i32_9 : i32
    scf.if %11 {
      %c0_10 = arith.constant 0 : index
      %c0_11 = arith.constant 0 : index
      %12 = vector.load %arg7[%c0_10, %c0_11] : memref<16x32xf32, #tpu.memory_space<vmem>>, vector<16x32xf32>
      %c0_12 = arith.constant 0 : index
      %c0_13 = arith.constant 0 : index
      %13 = vector.load %arg5[%c0_12, %c0_13] : memref<1x32xf32, #tpu.memory_space<vmem>>, vector<1x32xf32>
      %14 = vector.broadcast %13 : vector<1x32xf32> to vector<16x32xf32>
      %15 = arith.addf %12, %14 : vector<16x32xf32>
      %c0_14 = arith.constant 0 : index
      %c0_15 = arith.constant 0 : index
      %16 = vector.load %arg6[%c0_14, %c0_15] : memref<16x32xf32, #tpu.memory_space<vmem>>, vector<16x32xf32>
      tpu.vector_store %arg6[%c0_14, %c0_15], %15 {strides = array<i32>} : memref<16x32xf32, #tpu.memory_space<vmem>>, vector<16x32xf32>,
    } else {
    }
    return
  }
  func.func @transform_0(%arg0: i32, %arg1: i32, %arg2: i32) -> (i32, i32) {
    %c0_i32 = arith.constant 0 : i32
    return %arg0, %arg2 : i32, i32
  }
  func.func @transform_1(%arg0: i32, %arg1: i32, %arg2: i32) -> (i32, i32) {
    %c0_i32 = arith.constant 0 : i32
    return %arg2, %arg1 : i32, i32
  }
  func.func @transform_2(%arg0: i32, %arg1: i32, %arg2: i32) -> (i32, i32) {
    %c0_i32 = arith.constant 0 : i32
    %c0_i32_0 = arith.constant 0 : i32
    return %c0_i32, %arg1 : i32, i32
  }
  func.func @transform_3(%arg0: i32, %arg1: i32, %arg2: i32) -> (i32, i32) {
    %c0_i32 = arith.constant 0 : i32
    return %arg0, %arg1 : i32, i32
  }
}

module attributes {stable_mosaic.version = 11 : i64} {
  func.func @_self_mha_kernel(%arg0: i32, %arg1: memref<8x1x1x96xf32, #tpu.memory_space<vmem>>, %arg2: memref<8x1x1x32xf32, #tpu.memory_space<vmem>>, %arg3: memref<32x32xf32, #tpu.memory_space<vmem>>, %arg4: memref<1x32xf32, #tpu.memory_space<vmem>>, %arg5: memref<1x32xf32, #tpu.memory_space<vmem>>, %arg6: memref<1x32xf32, #tpu.memory_space<vmem>>, %arg7: memref<8x1x1x32xf32, #tpu.memory_space<vmem>>) attributes {dimension_semantics = [#tpu.dimension_semantics<parallel>], iteration_bounds = array<i64: 2>, scalar_prefetch = 0 : i64, scratch_operands = 0 : i64, tpu.core_type = #tpu.core_type<tc>, window_params = [{transform_indices = @transform_0, window_bounds = array<i64: 8, 1, 1, 96>}, {transform_indices = @transform_1, window_bounds = array<i64: 8, 1, 1, 32>}, {pipeline_mode = #tpu.pipeline_mode<synchronous>, transform_indices = @transform_2, window_bounds = array<i64: 32, 32>}, {pipeline_mode = #tpu.pipeline_mode<synchronous>, transform_indices = @transform_3, window_bounds = array<i64: 1, 32>}, {pipeline_mode = #tpu.pipeline_mode<synchronous>, transform_indices = @transform_4, window_bounds = array<i64: 1, 32>}, {pipeline_mode = #tpu.pipeline_mode<synchronous>, transform_indices = @transform_5, window_bounds = array<i64: 1, 32>}, {transform_indices = @transform_6, window_bounds = array<i64: 8, 1, 1, 32>}]} {
    %c0 = arith.constant 0 : index
    %c0_0 = arith.constant 0 : index
    %c0_1 = arith.constant 0 : index
    %c0_2 = arith.constant 0 : index
    %0 = vector.load %arg1[%c0, %c0_0, %c0_1, %c0_2] : memref<8x1x1x96xf32, #tpu.memory_space<vmem>>, vector<8x1x1x96xf32>
    %1 = vector.shape_cast %0 : vector<8x1x1x96xf32> to vector<8x96xf32>
    %2 = vector.extract_strided_slice %1 {offsets = [0, 0], sizes = [8, 32], strides = [1, 1]} : vector<8x96xf32> to vector<8x32xf32>
    %3 = vector.extract_strided_slice %1 {offsets = [0, 32], sizes = [8, 32], strides = [1, 1]} : vector<8x96xf32> to vector<8x32xf32>
    %4 = vector.extract_strided_slice %1 {offsets = [0, 64], sizes = [8, 32], strides = [1, 1]} : vector<8x96xf32> to vector<8x32xf32>
    %c0_3 = arith.constant 0 : index
    %c0_4 = arith.constant 0 : index
    %c0_5 = arith.constant 0 : index
    %c0_6 = arith.constant 0 : index
    %5 = vector.load %arg2[%c0_3, %c0_4, %c0_5, %c0_6] : memref<8x1x1x32xf32, #tpu.memory_space<vmem>>, vector<8x1x1x32xf32>
    %6 = vector.shape_cast %5 : vector<8x1x1x32xf32> to vector<8x32xf32>
    %c0_7 = arith.constant 0 : index
    %c0_8 = arith.constant 0 : index
    %7 = vector.load %arg3[%c0_7, %c0_8] : memref<32x32xf32, #tpu.memory_space<vmem>>, vector<32x32xf32>
    %c0_9 = arith.constant 0 : index
    %c0_10 = arith.constant 0 : index
    %8 = vector.load %arg4[%c0_9, %c0_10] : memref<1x32xf32, #tpu.memory_space<vmem>>, vector<1x32xf32>
    %c0_11 = arith.constant 0 : index
    %c0_12 = arith.constant 0 : index
    %9 = vector.load %arg5[%c0_11, %c0_12] : memref<1x32xf32, #tpu.memory_space<vmem>>, vector<1x32xf32>
    %c0_13 = arith.constant 0 : index
    %c0_14 = arith.constant 0 : index
    %10 = vector.load %arg6[%c0_13, %c0_14] : memref<1x32xf32, #tpu.memory_space<vmem>>, vector<1x32xf32>
    %11 = vector.extract_strided_slice %2 {offsets = [0, 0], sizes = [8, 8], strides = [1, 1]} : vector<8x32xf32> to vector<8x8xf32>
    %cst = arith.constant 0.353553385 : f32
    %12 = vector.broadcast %cst : f32 to vector<8x8xf32>
    %13 = arith.mulf %11, %12 : vector<8x8xf32>
    %14 = vector.extract_strided_slice %3 {offsets = [0, 0], sizes = [8, 8], strides = [1, 1]} : vector<8x32xf32> to vector<8x8xf32>
    %15 = vector.extract_strided_slice %4 {offsets = [0, 0], sizes = [8, 8], strides = [1, 1]} : vector<8x32xf32> to vector<8x8xf32>
    %cst_15 = arith.constant dense<0.000000e+00> : vector<8x8xf32>
    %16 = tpu.matmul %13, %14, %cst_15 {dimension_numbers = #tpu.dot_dimension_numbers<[1], [1], [0], [0], [0, 0, 1, 0], [], []>} : vector<8x8xf32>, vector<8x8xf32>, vector<8x8xf32> -> vector<8x8xf32>
    %cst_16 = arith.constant dense<0xFF800000> : vector<8xf32>
    %17 = vector.multi_reduction <maximumf>, %16, %cst_16 [1] : vector<8x8xf32> to vector<8xf32>
    %18 = vector.shape_cast %17 : vector<8xf32> to vector<8x1xf32>
    %19 = vector.broadcast %18 : vector<8x1xf32> to vector<8x8xf32>
    %20 = arith.subf %16, %19 : vector<8x8xf32>
    %21 = math.exp %20 : vector<8x8xf32>
    %cst_17 = arith.constant dense<0.000000e+00> : vector<8xf32>
    %22 = vector.multi_reduction <add>, %21, %cst_17 [1] : vector<8x8xf32> to vector<8xf32>
    %23 = vector.shape_cast %22 : vector<8xf32> to vector<8x1xf32>
    %24 = tpu.reciprocal %23 {approx = true} : vector<8x1xf32> -> vector<8x1xf32>
    %25 = vector.broadcast %24 : vector<8x1xf32> to vector<8x8xf32>
    %26 = arith.mulf %21, %25 : vector<8x8xf32>
    %cst_18 = arith.constant dense<0.000000e+00> : vector<8x8xf32>
    %27 = tpu.matmul %26, %15, %cst_18 {dimension_numbers = #tpu.dot_dimension_numbers<[1], [0], [0], [1], [0, 0, 1, 1], [], []>} : vector<8x8xf32>, vector<8x8xf32>, vector<8x8xf32> -> vector<8x8xf32>
    %28 = vector.extract_strided_slice %2 {offsets = [0, 8], sizes = [8, 8], strides = [1, 1]} : vector<8x32xf32> to vector<8x8xf32>
    %cst_19 = arith.constant 0.353553385 : f32
    %29 = vector.broadcast %cst_19 : f32 to vector<8x8xf32>
    %30 = arith.mulf %28, %29 : vector<8x8xf32>
    %31 = vector.extract_strided_slice %3 {offsets = [0, 8], sizes = [8, 8], strides = [1, 1]} : vector<8x32xf32> to vector<8x8xf32>
    %32 = vector.extract_strided_slice %4 {offsets = [0, 8], sizes = [8, 8], strides = [1, 1]} : vector<8x32xf32> to vector<8x8xf32>
    %cst_20 = arith.constant dense<0.000000e+00> : vector<8x8xf32>
    %33 = tpu.matmul %30, %31, %cst_20 {dimension_numbers = #tpu.dot_dimension_numbers<[1], [1], [0], [0], [0, 0, 1, 0], [], []>} : vector<8x8xf32>, vector<8x8xf32>, vector<8x8xf32> -> vector<8x8xf32>
    %cst_21 = arith.constant dense<0xFF800000> : vector<8xf32>
    %34 = vector.multi_reduction <maximumf>, %33, %cst_21 [1] : vector<8x8xf32> to vector<8xf32>
    %35 = vector.shape_cast %34 : vector<8xf32> to vector<8x1xf32>
    %36 = vector.broadcast %35 : vector<8x1xf32> to vector<8x8xf32>
    %37 = arith.subf %33, %36 : vector<8x8xf32>
    %38 = math.exp %37 : vector<8x8xf32>
    %cst_22 = arith.constant dense<0.000000e+00> : vector<8xf32>
    %39 = vector.multi_reduction <add>, %38, %cst_22 [1] : vector<8x8xf32> to vector<8xf32>
    %40 = vector.shape_cast %39 : vector<8xf32> to vector<8x1xf32>
    %41 = tpu.reciprocal %40 {approx = true} : vector<8x1xf32> -> vector<8x1xf32>
    %42 = vector.broadcast %41 : vector<8x1xf32> to vector<8x8xf32>
    %43 = arith.mulf %38, %42 : vector<8x8xf32>
    %cst_23 = arith.constant dense<0.000000e+00> : vector<8x8xf32>
    %44 = tpu.matmul %43, %32, %cst_23 {dimension_numbers = #tpu.dot_dimension_numbers<[1], [0], [0], [1], [0, 0, 1, 1], [], []>} : vector<8x8xf32>, vector<8x8xf32>, vector<8x8xf32> -> vector<8x8xf32>
    %45 = vector.extract_strided_slice %2 {offsets = [0, 16], sizes = [8, 8], strides = [1, 1]} : vector<8x32xf32> to vector<8x8xf32>
    %cst_24 = arith.constant 0.353553385 : f32
    %46 = vector.broadcast %cst_24 : f32 to vector<8x8xf32>
    %47 = arith.mulf %45, %46 : vector<8x8xf32>
    %48 = vector.extract_strided_slice %3 {offsets = [0, 16], sizes = [8, 8], strides = [1, 1]} : vector<8x32xf32> to vector<8x8xf32>
    %49 = vector.extract_strided_slice %4 {offsets = [0, 16], sizes = [8, 8], strides = [1, 1]} : vector<8x32xf32> to vector<8x8xf32>
    %cst_25 = arith.constant dense<0.000000e+00> : vector<8x8xf32>
    %50 = tpu.matmul %47, %48, %cst_25 {dimension_numbers = #tpu.dot_dimension_numbers<[1], [1], [0], [0], [0, 0, 1, 0], [], []>} : vector<8x8xf32>, vector<8x8xf32>, vector<8x8xf32> -> vector<8x8xf32>
    %cst_26 = arith.constant dense<0xFF800000> : vector<8xf32>
    %51 = vector.multi_reduction <maximumf>, %50, %cst_26 [1] : vector<8x8xf32> to vector<8xf32>
    %52 = vector.shape_cast %51 : vector<8xf32> to vector<8x1xf32>
    %53 = vector.broadcast %52 : vector<8x1xf32> to vector<8x8xf32>
    %54 = arith.subf %50, %53 : vector<8x8xf32>
    %55 = math.exp %54 : vector<8x8xf32>
    %cst_27 = arith.constant dense<0.000000e+00> : vector<8xf32>
    %56 = vector.multi_reduction <add>, %55, %cst_27 [1] : vector<8x8xf32> to vector<8xf32>
    %57 = vector.shape_cast %56 : vector<8xf32> to vector<8x1xf32>
    %58 = tpu.reciprocal %57 {approx = true} : vector<8x1xf32> -> vector<8x1xf32>
    %59 = vector.broadcast %58 : vector<8x1xf32> to vector<8x8xf32>
    %60 = arith.mulf %55, %59 : vector<8x8xf32>
    %cst_28 = arith.constant dense<0.000000e+00> : vector<8x8xf32>
    %61 = tpu.matmul %60, %49, %cst_28 {dimension_numbers = #tpu.dot_dimension_numbers<[1], [0], [0], [1], [0, 0, 1, 1], [], []>} : vector<8x8xf32>, vector<8x8xf32>, vector<8x8xf32> -> vector<8x8xf32>
    %62 = vector.extract_strided_slice %2 {offsets = [0, 24], sizes = [8, 8], strides = [1, 1]} : vector<8x32xf32> to vector<8x8xf32>
    %cst_29 = arith.constant 0.353553385 : f32
    %63 = vector.broadcast %cst_29 : f32 to vector<8x8xf32>
    %64 = arith.mulf %62, %63 : vector<8x8xf32>
    %65 = vector.extract_strided_slice %3 {offsets = [0, 24], sizes = [8, 8], strides = [1, 1]} : vector<8x32xf32> to vector<8x8xf32>
    %66 = vector.extract_strided_slice %4 {offsets = [0, 24], sizes = [8, 8], strides = [1, 1]} : vector<8x32xf32> to vector<8x8xf32>
    %cst_30 = arith.constant dense<0.000000e+00> : vector<8x8xf32>
    %67 = tpu.matmul %64, %65, %cst_30 {dimension_numbers = #tpu.dot_dimension_numbers<[1], [1], [0], [0], [0, 0, 1, 0], [], []>} : vector<8x8xf32>, vector<8x8xf32>, vector<8x8xf32> -> vector<8x8xf32>
    %cst_31 = arith.constant dense<0xFF800000> : vector<8xf32>
    %68 = vector.multi_reduction <maximumf>, %67, %cst_31 [1] : vector<8x8xf32> to vector<8xf32>
    %69 = vector.shape_cast %68 : vector<8xf32> to vector<8x1xf32>
    %70 = vector.broadcast %69 : vector<8x1xf32> to vector<8x8xf32>
    %71 = arith.subf %67, %70 : vector<8x8xf32>
    %72 = math.exp %71 : vector<8x8xf32>
    %cst_32 = arith.constant dense<0.000000e+00> : vector<8xf32>
    %73 = vector.multi_reduction <add>, %72, %cst_32 [1] : vector<8x8xf32> to vector<8xf32>
    %74 = vector.shape_cast %73 : vector<8xf32> to vector<8x1xf32>
    %75 = tpu.reciprocal %74 {approx = true} : vector<8x1xf32> -> vector<8x1xf32>
    %76 = vector.broadcast %75 : vector<8x1xf32> to vector<8x8xf32>
    %77 = arith.mulf %72, %76 : vector<8x8xf32>
    %cst_33 = arith.constant dense<0.000000e+00> : vector<8x8xf32>
    %78 = tpu.matmul %77, %66, %cst_33 {dimension_numbers = #tpu.dot_dimension_numbers<[1], [0], [0], [1], [0, 0, 1, 1], [], []>} : vector<8x8xf32>, vector<8x8xf32>, vector<8x8xf32> -> vector<8x8xf32>
    %79 = tpu.concatenate %27, %44, %61, %78 in 1 : vector<8x8xf32>, vector<8x8xf32>, vector<8x8xf32>, vector<8x8xf32> -> vector<8x32xf32>
    %cst_34 = arith.constant dense<0.000000e+00> : vector<8x32xf32>
    %80 = tpu.matmul %79, %7, %cst_34 {dimension_numbers = #tpu.dot_dimension_numbers<[1], [0], [0], [1], [0, 0, 1, 1], [], []>} : vector<8x32xf32>, vector<32x32xf32>, vector<8x32xf32> -> vector<8x32xf32>
    %81 = vector.broadcast %8 : vector<1x32xf32> to vector<8x32xf32>
    %82 = arith.addf %80, %81 : vector<8x32xf32>
    %83 = arith.addf %82, %6 : vector<8x32xf32>
    %cst_35 = arith.constant dense<0.000000e+00> : vector<8xf32>
    %84 = vector.multi_reduction <add>, %83, %cst_35 [1] : vector<8x32xf32> to vector<8xf32>
    %85 = vector.shape_cast %84 : vector<8xf32> to vector<8x1xf32>
    %cst_36 = arith.constant 3.200000e+01 : f32
    %86 = vector.broadcast %cst_36 : f32 to vector<8x1xf32>
    %87 = arith.divf %85, %86 : vector<8x1xf32>
    %88 = vector.broadcast %87 : vector<8x1xf32> to vector<8x32xf32>
    %89 = arith.subf %83, %88 : vector<8x32xf32>
    %90 = arith.mulf %89, %89 : vector<8x32xf32>
    %cst_37 = arith.constant dense<0.000000e+00> : vector<8xf32>
    %91 = vector.multi_reduction <add>, %90, %cst_37 [1] : vector<8x32xf32> to vector<8xf32>
    %92 = vector.shape_cast %91 : vector<8xf32> to vector<8x1xf32>
    %cst_38 = arith.constant 3.200000e+01 : f32
    %93 = vector.broadcast %cst_38 : f32 to vector<8x1xf32>
    %94 = arith.divf %92, %93 : vector<8x1xf32>
    %cst_39 = arith.constant 9.99999974E-6 : f32
    %95 = vector.broadcast %cst_39 : f32 to vector<8x1xf32>
    %96 = arith.addf %94, %95 : vector<8x1xf32>
    %97 = math.rsqrt %96 : vector<8x1xf32>
    %98 = vector.broadcast %97 : vector<8x1xf32> to vector<8x32xf32>
    %99 = arith.mulf %89, %98 : vector<8x32xf32>
    %100 = vector.broadcast %9 : vector<1x32xf32> to vector<8x32xf32>
    %101 = arith.mulf %99, %100 : vector<8x32xf32>
    %102 = vector.broadcast %10 : vector<1x32xf32> to vector<8x32xf32>
    %103 = arith.addf %101, %102 : vector<8x32xf32>
    %104 = vector.shape_cast %103 : vector<8x32xf32> to vector<8x1x1x32xf32>
    %c0_40 = arith.constant 0 : index
    %c0_41 = arith.constant 0 : index
    %c0_42 = arith.constant 0 : index
    %c0_43 = arith.constant 0 : index
    %105 = vector.load %arg7[%c0_40, %c0_41, %c0_42, %c0_43] : memref<8x1x1x32xf32, #tpu.memory_space<vmem>>, vector<8x1x1x32xf32>
    tpu.vector_store %arg7[%c0_40, %c0_41, %c0_42, %c0_43], %104 {strides = array<i32>} : memref<8x1x1x32xf32, #tpu.memory_space<vmem>>, vector<8x1x1x32xf32>,
    return
  }
  func.func @transform_0(%arg0: i32) -> (i32, i32, i32, i32) {
    %c0_i32 = arith.constant 0 : i32
    %c0_i32_0 = arith.constant 0 : i32
    %c0_i32_1 = arith.constant 0 : i32
    %c0_i32_2 = arith.constant 0 : i32
    return %c0_i32, %arg0, %c0_i32_0, %c0_i32_1 : i32, i32, i32, i32
  }
  func.func @transform_1(%arg0: i32) -> (i32, i32, i32, i32) {
    %c0_i32 = arith.constant 0 : i32
    %c0_i32_0 = arith.constant 0 : i32
    %c0_i32_1 = arith.constant 0 : i32
    %c0_i32_2 = arith.constant 0 : i32
    return %c0_i32, %arg0, %c0_i32_0, %c0_i32_1 : i32, i32, i32, i32
  }
  func.func @transform_2(%arg0: i32) -> (i32, i32) {
    %c0_i32 = arith.constant 0 : i32
    %c0_i32_0 = arith.constant 0 : i32
    %c0_i32_1 = arith.constant 0 : i32
    return %c0_i32, %c0_i32_0 : i32, i32
  }
  func.func @transform_3(%arg0: i32) -> (i32, i32) {
    %c0_i32 = arith.constant 0 : i32
    %c0_i32_0 = arith.constant 0 : i32
    %c0_i32_1 = arith.constant 0 : i32
    return %c0_i32, %c0_i32_0 : i32, i32
  }
  func.func @transform_4(%arg0: i32) -> (i32, i32) {
    %c0_i32 = arith.constant 0 : i32
    %c0_i32_0 = arith.constant 0 : i32
    %c0_i32_1 = arith.constant 0 : i32
    return %c0_i32, %c0_i32_0 : i32, i32
  }
  func.func @transform_5(%arg0: i32) -> (i32, i32) {
    %c0_i32 = arith.constant 0 : i32
    %c0_i32_0 = arith.constant 0 : i32
    %c0_i32_1 = arith.constant 0 : i32
    return %c0_i32, %c0_i32_0 : i32, i32
  }
  func.func @transform_6(%arg0: i32) -> (i32, i32, i32, i32) {
    %c0_i32 = arith.constant 0 : i32
    %c0_i32_0 = arith.constant 0 : i32
    %c0_i32_1 = arith.constant 0 : i32
    %c0_i32_2 = arith.constant 0 : i32
    return %c0_i32, %arg0, %c0_i32_0, %c0_i32_1 : i32, i32, i32, i32
  }
}

module attributes {stable_mosaic.version = 11 : i64} {
  func.func @_matmul_bias_kernel(%arg0: i32, %arg1: i32, %arg2: i32, %arg3: memref<32x32xf32, #tpu.memory_space<vmem>>, %arg4: memref<32x64xf32, #tpu.memory_space<vmem>>, %arg5: memref<1x64xf32, #tpu.memory_space<vmem>>, %arg6: memref<32x64xf32, #tpu.memory_space<vmem>>, %arg7: memref<32x64xf32, #tpu.memory_space<vmem>>) attributes {dimension_semantics = [#tpu.dimension_semantics<parallel>, #tpu.dimension_semantics<parallel>, #tpu.dimension_semantics<arbitrary>], iteration_bounds = array<i64: 1, 1, 1>, scalar_prefetch = 0 : i64, scratch_operands = 1 : i64, tpu.core_type = #tpu.core_type<tc>, window_params = [{transform_indices = @transform_0, window_bounds = array<i64: 32, 32>}, {transform_indices = @transform_1, window_bounds = array<i64: 32, 64>}, {transform_indices = @transform_2, window_bounds = array<i64: 1, 64>}, {transform_indices = @transform_3, window_bounds = array<i64: 32, 64>}]} {
    %c0_i32 = arith.constant 0 : i32
    %0 = arith.cmpi eq, %arg2, %c0_i32 : i32
    %1 = arith.extui %0 : i1 to i32
    %c0_i32_0 = arith.constant 0 : i32
    %2 = arith.cmpi ne, %1, %c0_i32_0 : i32
    scf.if %2 {
      %cst_10 = arith.constant 0.000000e+00 : f32
      %12 = vector.broadcast %cst_10 : f32 to vector<32x64xf32>
      %c0_11 = arith.constant 0 : index
      %c0_12 = arith.constant 0 : index
      %13 = vector.load %arg7[%c0_11, %c0_12] : memref<32x64xf32, #tpu.memory_space<vmem>>, vector<32x64xf32>
      tpu.vector_store %arg7[%c0_11, %c0_12], %12 {strides = array<i32>} : memref<32x64xf32, #tpu.memory_space<vmem>>, vector<32x64xf32>,
    } else {
    }
    %c0 = arith.constant 0 : index
    %c0_1 = arith.constant 0 : index
    %3 = vector.load %arg7[%c0, %c0_1] : memref<32x64xf32, #tpu.memory_space<vmem>>, vector<32x64xf32>
    %c0_2 = arith.constant 0 : index
    %c0_3 = arith.constant 0 : index
    %4 = vector.load %arg3[%c0_2, %c0_3] : memref<32x32xf32, #tpu.memory_space<vmem>>, vector<32x32xf32>
    %c0_4 = arith.constant 0 : index
    %c0_5 = arith.constant 0 : index
    %5 = vector.load %arg4[%c0_4, %c0_5] : memref<32x64xf32, #tpu.memory_space<vmem>>, vector<32x64xf32>
    %cst = arith.constant dense<0.000000e+00> : vector<32x64xf32>
    %6 = tpu.matmul %4, %5, %cst {dimension_numbers = #tpu.dot_dimension_numbers<[1], [0], [0], [1], [0, 0, 1, 1], [], []>} : vector<32x32xf32>, vector<32x64xf32>, vector<32x64xf32> -> vector<32x64xf32>
    %7 = arith.addf %3, %6 : vector<32x64xf32>
    %c0_6 = arith.constant 0 : index
    %c0_7 = arith.constant 0 : index
    %8 = vector.load %arg7[%c0_6, %c0_7] : memref<32x64xf32, #tpu.memory_space<vmem>>, vector<32x64xf32>
    tpu.vector_store %arg7[%c0_6, %c0_7], %7 {strides = array<i32>} : memref<32x64xf32, #tpu.memory_space<vmem>>, vector<32x64xf32>,
    %c0_i32_8 = arith.constant 0 : i32
    %9 = arith.cmpi eq, %arg2, %c0_i32_8 : i32
    %10 = arith.extui %9 : i1 to i32
    %c0_i32_9 = arith.constant 0 : i32
    %11 = arith.cmpi ne, %10, %c0_i32_9 : i32
    scf.if %11 {
      %c0_10 = arith.constant 0 : index
      %c0_11 = arith.constant 0 : index
      %12 = vector.load %arg7[%c0_10, %c0_11] : memref<32x64xf32, #tpu.memory_space<vmem>>, vector<32x64xf32>
      %c0_12 = arith.constant 0 : index
      %c0_13 = arith.constant 0 : index
      %13 = vector.load %arg5[%c0_12, %c0_13] : memref<1x64xf32, #tpu.memory_space<vmem>>, vector<1x64xf32>
      %14 = vector.broadcast %13 : vector<1x64xf32> to vector<32x64xf32>
      %15 = arith.addf %12, %14 : vector<32x64xf32>
      %c0_14 = arith.constant 0 : index
      %c0_15 = arith.constant 0 : index
      %16 = vector.load %arg6[%c0_14, %c0_15] : memref<32x64xf32, #tpu.memory_space<vmem>>, vector<32x64xf32>
      tpu.vector_store %arg6[%c0_14, %c0_15], %15 {strides = array<i32>} : memref<32x64xf32, #tpu.memory_space<vmem>>, vector<32x64xf32>,
    } else {
    }
    return
  }
  func.func @transform_0(%arg0: i32, %arg1: i32, %arg2: i32) -> (i32, i32) {
    %c0_i32 = arith.constant 0 : i32
    return %arg0, %arg2 : i32, i32
  }
  func.func @transform_1(%arg0: i32, %arg1: i32, %arg2: i32) -> (i32, i32) {
    %c0_i32 = arith.constant 0 : i32
    return %arg2, %arg1 : i32, i32
  }
  func.func @transform_2(%arg0: i32, %arg1: i32, %arg2: i32) -> (i32, i32) {
    %c0_i32 = arith.constant 0 : i32
    %c0_i32_0 = arith.constant 0 : i32
    return %c0_i32, %arg1 : i32, i32
  }
  func.func @transform_3(%arg0: i32, %arg1: i32, %arg2: i32) -> (i32, i32) {
    %c0_i32 = arith.constant 0 : i32
    return %arg0, %arg1 : i32, i32
  }
}

module attributes {stable_mosaic.version = 11 : i64} {
  func.func @_cross_mha_kernel(%arg0: i32, %arg1: memref<8x1x1x32xf32, #tpu.memory_space<vmem>>, %arg2: memref<16x1x1x64xf32, #tpu.memory_space<vmem>>, %arg3: memref<8x1x1x32xf32, #tpu.memory_space<vmem>>, %arg4: memref<32x32xf32, #tpu.memory_space<vmem>>, %arg5: memref<1x32xf32, #tpu.memory_space<vmem>>, %arg6: memref<1x32xf32, #tpu.memory_space<vmem>>, %arg7: memref<1x32xf32, #tpu.memory_space<vmem>>, %arg8: memref<8x1x1x32xf32, #tpu.memory_space<vmem>>) attributes {dimension_semantics = [#tpu.dimension_semantics<parallel>], iteration_bounds = array<i64: 2>, scalar_prefetch = 0 : i64, scratch_operands = 0 : i64, tpu.core_type = #tpu.core_type<tc>, window_params = [{transform_indices = @transform_0, window_bounds = array<i64: 8, 1, 1, 32>}, {transform_indices = @transform_1, window_bounds = array<i64: 16, 1, 1, 64>}, {transform_indices = @transform_2, window_bounds = array<i64: 8, 1, 1, 32>}, {pipeline_mode = #tpu.pipeline_mode<synchronous>, transform_indices = @transform_3, window_bounds = array<i64: 32, 32>}, {pipeline_mode = #tpu.pipeline_mode<synchronous>, transform_indices = @transform_4, window_bounds = array<i64: 1, 32>}, {pipeline_mode = #tpu.pipeline_mode<synchronous>, transform_indices = @transform_5, window_bounds = array<i64: 1, 32>}, {pipeline_mode = #tpu.pipeline_mode<synchronous>, transform_indices = @transform_6, window_bounds = array<i64: 1, 32>}, {transform_indices = @transform_7, window_bounds = array<i64: 8, 1, 1, 32>}]} {
    %c0 = arith.constant 0 : index
    %c0_0 = arith.constant 0 : index
    %c0_1 = arith.constant 0 : index
    %c0_2 = arith.constant 0 : index
    %0 = vector.load %arg1[%c0, %c0_0, %c0_1, %c0_2] : memref<8x1x1x32xf32, #tpu.memory_space<vmem>>, vector<8x1x1x32xf32>
    %1 = vector.shape_cast %0 : vector<8x1x1x32xf32> to vector<8x32xf32>
    %c0_3 = arith.constant 0 : index
    %c0_4 = arith.constant 0 : index
    %c0_5 = arith.constant 0 : index
    %c0_6 = arith.constant 0 : index
    %2 = vector.load %arg2[%c0_3, %c0_4, %c0_5, %c0_6] : memref<16x1x1x64xf32, #tpu.memory_space<vmem>>, vector<16x1x1x64xf32>
    %3 = vector.shape_cast %2 : vector<16x1x1x64xf32> to vector<16x64xf32>
    %4 = vector.extract_strided_slice %3 {offsets = [0, 0], sizes = [16, 32], strides = [1, 1]} : vector<16x64xf32> to vector<16x32xf32>
    %5 = vector.extract_strided_slice %3 {offsets = [0, 32], sizes = [16, 32], strides = [1, 1]} : vector<16x64xf32> to vector<16x32xf32>
    %c0_7 = arith.constant 0 : index
    %c0_8 = arith.constant 0 : index
    %c0_9 = arith.constant 0 : index
    %c0_10 = arith.constant 0 : index
    %6 = vector.load %arg3[%c0_7, %c0_8, %c0_9, %c0_10] : memref<8x1x1x32xf32, #tpu.memory_space<vmem>>, vector<8x1x1x32xf32>
    %7 = vector.shape_cast %6 : vector<8x1x1x32xf32> to vector<8x32xf32>
    %c0_11 = arith.constant 0 : index
    %c0_12 = arith.constant 0 : index
    %8 = vector.load %arg4[%c0_11, %c0_12] : memref<32x32xf32, #tpu.memory_space<vmem>>, vector<32x32xf32>
    %c0_13 = arith.constant 0 : index
    %c0_14 = arith.constant 0 : index
    %9 = vector.load %arg5[%c0_13, %c0_14] : memref<1x32xf32, #tpu.memory_space<vmem>>, vector<1x32xf32>
    %c0_15 = arith.constant 0 : index
    %c0_16 = arith.constant 0 : index
    %10 = vector.load %arg6[%c0_15, %c0_16] : memref<1x32xf32, #tpu.memory_space<vmem>>, vector<1x32xf32>
    %c0_17 = arith.constant 0 : index
    %c0_18 = arith.constant 0 : index
    %11 = vector.load %arg7[%c0_17, %c0_18] : memref<1x32xf32, #tpu.memory_space<vmem>>, vector<1x32xf32>
    %12 = vector.extract_strided_slice %1 {offsets = [0, 0], sizes = [8, 8], strides = [1, 1]} : vector<8x32xf32> to vector<8x8xf32>
    %cst = arith.constant 0.353553385 : f32
    %13 = vector.broadcast %cst : f32 to vector<8x8xf32>
    %14 = arith.mulf %12, %13 : vector<8x8xf32>
    %15 = vector.extract_strided_slice %4 {offsets = [0, 0], sizes = [16, 8], strides = [1, 1]} : vector<16x32xf32> to vector<16x8xf32>
    %16 = vector.extract_strided_slice %5 {offsets = [0, 0], sizes = [16, 8], strides = [1, 1]} : vector<16x32xf32> to vector<16x8xf32>
    %cst_19 = arith.constant dense<0.000000e+00> : vector<8x16xf32>
    %17 = tpu.matmul %14, %15, %cst_19 {dimension_numbers = #tpu.dot_dimension_numbers<[1], [1], [0], [0], [0, 0, 1, 0], [], []>} : vector<8x8xf32>, vector<16x8xf32>, vector<8x16xf32> -> vector<8x16xf32>
    %cst_20 = arith.constant dense<0xFF800000> : vector<8xf32>
    %18 = vector.multi_reduction <maximumf>, %17, %cst_20 [1] : vector<8x16xf32> to vector<8xf32>
    %19 = vector.shape_cast %18 : vector<8xf32> to vector<8x1xf32>
    %20 = vector.broadcast %19 : vector<8x1xf32> to vector<8x16xf32>
    %21 = arith.subf %17, %20 : vector<8x16xf32>
    %22 = math.exp %21 : vector<8x16xf32>
    %cst_21 = arith.constant dense<0.000000e+00> : vector<8xf32>
    %23 = vector.multi_reduction <add>, %22, %cst_21 [1] : vector<8x16xf32> to vector<8xf32>
    %24 = vector.shape_cast %23 : vector<8xf32> to vector<8x1xf32>
    %25 = tpu.reciprocal %24 {approx = true} : vector<8x1xf32> -> vector<8x1xf32>
    %26 = vector.broadcast %25 : vector<8x1xf32> to vector<8x16xf32>
    %27 = arith.mulf %22, %26 : vector<8x16xf32>
    %cst_22 = arith.constant dense<0.000000e+00> : vector<8x8xf32>
    %28 = tpu.matmul %27, %16, %cst_22 {dimension_numbers = #tpu.dot_dimension_numbers<[1], [0], [0], [1], [0, 0, 1, 1], [], []>} : vector<8x16xf32>, vector<16x8xf32>, vector<8x8xf32> -> vector<8x8xf32>
    %29 = vector.extract_strided_slice %1 {offsets = [0, 8], sizes = [8, 8], strides = [1, 1]} : vector<8x32xf32> to vector<8x8xf32>
    %cst_23 = arith.constant 0.353553385 : f32
    %30 = vector.broadcast %cst_23 : f32 to vector<8x8xf32>
    %31 = arith.mulf %29, %30 : vector<8x8xf32>
    %32 = vector.extract_strided_slice %4 {offsets = [0, 8], sizes = [16, 8], strides = [1, 1]} : vector<16x32xf32> to vector<16x8xf32>
    %33 = vector.extract_strided_slice %5 {offsets = [0, 8], sizes = [16, 8], strides = [1, 1]} : vector<16x32xf32> to vector<16x8xf32>
    %cst_24 = arith.constant dense<0.000000e+00> : vector<8x16xf32>
    %34 = tpu.matmul %31, %32, %cst_24 {dimension_numbers = #tpu.dot_dimension_numbers<[1], [1], [0], [0], [0, 0, 1, 0], [], []>} : vector<8x8xf32>, vector<16x8xf32>, vector<8x16xf32> -> vector<8x16xf32>
    %cst_25 = arith.constant dense<0xFF800000> : vector<8xf32>
    %35 = vector.multi_reduction <maximumf>, %34, %cst_25 [1] : vector<8x16xf32> to vector<8xf32>
    %36 = vector.shape_cast %35 : vector<8xf32> to vector<8x1xf32>
    %37 = vector.broadcast %36 : vector<8x1xf32> to vector<8x16xf32>
    %38 = arith.subf %34, %37 : vector<8x16xf32>
    %39 = math.exp %38 : vector<8x16xf32>
    %cst_26 = arith.constant dense<0.000000e+00> : vector<8xf32>
    %40 = vector.multi_reduction <add>, %39, %cst_26 [1] : vector<8x16xf32> to vector<8xf32>
    %41 = vector.shape_cast %40 : vector<8xf32> to vector<8x1xf32>
    %42 = tpu.reciprocal %41 {approx = true} : vector<8x1xf32> -> vector<8x1xf32>
    %43 = vector.broadcast %42 : vector<8x1xf32> to vector<8x16xf32>
    %44 = arith.mulf %39, %43 : vector<8x16xf32>
    %cst_27 = arith.constant dense<0.000000e+00> : vector<8x8xf32>
    %45 = tpu.matmul %44, %33, %cst_27 {dimension_numbers = #tpu.dot_dimension_numbers<[1], [0], [0], [1], [0, 0, 1, 1], [], []>} : vector<8x16xf32>, vector<16x8xf32>, vector<8x8xf32> -> vector<8x8xf32>
    %46 = vector.extract_strided_slice %1 {offsets = [0, 16], sizes = [8, 8], strides = [1, 1]} : vector<8x32xf32> to vector<8x8xf32>
    %cst_28 = arith.constant 0.353553385 : f32
    %47 = vector.broadcast %cst_28 : f32 to vector<8x8xf32>
    %48 = arith.mulf %46, %47 : vector<8x8xf32>
    %49 = vector.extract_strided_slice %4 {offsets = [0, 16], sizes = [16, 8], strides = [1, 1]} : vector<16x32xf32> to vector<16x8xf32>
    %50 = vector.extract_strided_slice %5 {offsets = [0, 16], sizes = [16, 8], strides = [1, 1]} : vector<16x32xf32> to vector<16x8xf32>
    %cst_29 = arith.constant dense<0.000000e+00> : vector<8x16xf32>
    %51 = tpu.matmul %48, %49, %cst_29 {dimension_numbers = #tpu.dot_dimension_numbers<[1], [1], [0], [0], [0, 0, 1, 0], [], []>} : vector<8x8xf32>, vector<16x8xf32>, vector<8x16xf32> -> vector<8x16xf32>
    %cst_30 = arith.constant dense<0xFF800000> : vector<8xf32>
    %52 = vector.multi_reduction <maximumf>, %51, %cst_30 [1] : vector<8x16xf32> to vector<8xf32>
    %53 = vector.shape_cast %52 : vector<8xf32> to vector<8x1xf32>
    %54 = vector.broadcast %53 : vector<8x1xf32> to vector<8x16xf32>
    %55 = arith.subf %51, %54 : vector<8x16xf32>
    %56 = math.exp %55 : vector<8x16xf32>
    %cst_31 = arith.constant dense<0.000000e+00> : vector<8xf32>
    %57 = vector.multi_reduction <add>, %56, %cst_31 [1] : vector<8x16xf32> to vector<8xf32>
    %58 = vector.shape_cast %57 : vector<8xf32> to vector<8x1xf32>
    %59 = tpu.reciprocal %58 {approx = true} : vector<8x1xf32> -> vector<8x1xf32>
    %60 = vector.broadcast %59 : vector<8x1xf32> to vector<8x16xf32>
    %61 = arith.mulf %56, %60 : vector<8x16xf32>
    %cst_32 = arith.constant dense<0.000000e+00> : vector<8x8xf32>
    %62 = tpu.matmul %61, %50, %cst_32 {dimension_numbers = #tpu.dot_dimension_numbers<[1], [0], [0], [1], [0, 0, 1, 1], [], []>} : vector<8x16xf32>, vector<16x8xf32>, vector<8x8xf32> -> vector<8x8xf32>
    %63 = vector.extract_strided_slice %1 {offsets = [0, 24], sizes = [8, 8], strides = [1, 1]} : vector<8x32xf32> to vector<8x8xf32>
    %cst_33 = arith.constant 0.353553385 : f32
    %64 = vector.broadcast %cst_33 : f32 to vector<8x8xf32>
    %65 = arith.mulf %63, %64 : vector<8x8xf32>
    %66 = vector.extract_strided_slice %4 {offsets = [0, 24], sizes = [16, 8], strides = [1, 1]} : vector<16x32xf32> to vector<16x8xf32>
    %67 = vector.extract_strided_slice %5 {offsets = [0, 24], sizes = [16, 8], strides = [1, 1]} : vector<16x32xf32> to vector<16x8xf32>
    %cst_34 = arith.constant dense<0.000000e+00> : vector<8x16xf32>
    %68 = tpu.matmul %65, %66, %cst_34 {dimension_numbers = #tpu.dot_dimension_numbers<[1], [1], [0], [0], [0, 0, 1, 0], [], []>} : vector<8x8xf32>, vector<16x8xf32>, vector<8x16xf32> -> vector<8x16xf32>
    %cst_35 = arith.constant dense<0xFF800000> : vector<8xf32>
    %69 = vector.multi_reduction <maximumf>, %68, %cst_35 [1] : vector<8x16xf32> to vector<8xf32>
    %70 = vector.shape_cast %69 : vector<8xf32> to vector<8x1xf32>
    %71 = vector.broadcast %70 : vector<8x1xf32> to vector<8x16xf32>
    %72 = arith.subf %68, %71 : vector<8x16xf32>
    %73 = math.exp %72 : vector<8x16xf32>
    %cst_36 = arith.constant dense<0.000000e+00> : vector<8xf32>
    %74 = vector.multi_reduction <add>, %73, %cst_36 [1] : vector<8x16xf32> to vector<8xf32>
    %75 = vector.shape_cast %74 : vector<8xf32> to vector<8x1xf32>
    %76 = tpu.reciprocal %75 {approx = true} : vector<8x1xf32> -> vector<8x1xf32>
    %77 = vector.broadcast %76 : vector<8x1xf32> to vector<8x16xf32>
    %78 = arith.mulf %73, %77 : vector<8x16xf32>
    %cst_37 = arith.constant dense<0.000000e+00> : vector<8x8xf32>
    %79 = tpu.matmul %78, %67, %cst_37 {dimension_numbers = #tpu.dot_dimension_numbers<[1], [0], [0], [1], [0, 0, 1, 1], [], []>} : vector<8x16xf32>, vector<16x8xf32>, vector<8x8xf32> -> vector<8x8xf32>
    %80 = tpu.concatenate %28, %45, %62, %79 in 1 : vector<8x8xf32>, vector<8x8xf32>, vector<8x8xf32>, vector<8x8xf32> -> vector<8x32xf32>
    %cst_38 = arith.constant dense<0.000000e+00> : vector<8x32xf32>
    %81 = tpu.matmul %80, %8, %cst_38 {dimension_numbers = #tpu.dot_dimension_numbers<[1], [0], [0], [1], [0, 0, 1, 1], [], []>} : vector<8x32xf32>, vector<32x32xf32>, vector<8x32xf32> -> vector<8x32xf32>
    %82 = vector.broadcast %9 : vector<1x32xf32> to vector<8x32xf32>
    %83 = arith.addf %81, %82 : vector<8x32xf32>
    %84 = arith.addf %83, %7 : vector<8x32xf32>
    %cst_39 = arith.constant dense<0.000000e+00> : vector<8xf32>
    %85 = vector.multi_reduction <add>, %84, %cst_39 [1] : vector<8x32xf32> to vector<8xf32>
    %86 = vector.shape_cast %85 : vector<8xf32> to vector<8x1xf32>
    %cst_40 = arith.constant 3.200000e+01 : f32
    %87 = vector.broadcast %cst_40 : f32 to vector<8x1xf32>
    %88 = arith.divf %86, %87 : vector<8x1xf32>
    %89 = vector.broadcast %88 : vector<8x1xf32> to vector<8x32xf32>
    %90 = arith.subf %84, %89 : vector<8x32xf32>
    %91 = arith.mulf %90, %90 : vector<8x32xf32>
    %cst_41 = arith.constant dense<0.000000e+00> : vector<8xf32>
    %92 = vector.multi_reduction <add>, %91, %cst_41 [1] : vector<8x32xf32> to vector<8xf32>
    %93 = vector.shape_cast %92 : vector<8xf32> to vector<8x1xf32>
    %cst_42 = arith.constant 3.200000e+01 : f32
    %94 = vector.broadcast %cst_42 : f32 to vector<8x1xf32>
    %95 = arith.divf %93, %94 : vector<8x1xf32>
    %cst_43 = arith.constant 9.99999974E-6 : f32
    %96 = vector.broadcast %cst_43 : f32 to vector<8x1xf32>
    %97 = arith.addf %95, %96 : vector<8x1xf32>
    %98 = math.rsqrt %97 : vector<8x1xf32>
    %99 = vector.broadcast %98 : vector<8x1xf32> to vector<8x32xf32>
    %100 = arith.mulf %90, %99 : vector<8x32xf32>
    %101 = vector.broadcast %10 : vector<1x32xf32> to vector<8x32xf32>
    %102 = arith.mulf %100, %101 : vector<8x32xf32>
    %103 = vector.broadcast %11 : vector<1x32xf32> to vector<8x32xf32>
    %104 = arith.addf %102, %103 : vector<8x32xf32>
    %105 = vector.shape_cast %104 : vector<8x32xf32> to vector<8x1x1x32xf32>
    %c0_44 = arith.constant 0 : index
    %c0_45 = arith.constant 0 : index
    %c0_46 = arith.constant 0 : index
    %c0_47 = arith.constant 0 : index
    %106 = vector.load %arg8[%c0_44, %c0_45, %c0_46, %c0_47] : memref<8x1x1x32xf32, #tpu.memory_space<vmem>>, vector<8x1x1x32xf32>
    tpu.vector_store %arg8[%c0_44, %c0_45, %c0_46, %c0_47], %105 {strides = array<i32>} : memref<8x1x1x32xf32, #tpu.memory_space<vmem>>, vector<8x1x1x32xf32>,
    return
  }
  func.func @transform_0(%arg0: i32) -> (i32, i32, i32, i32) {
    %c0_i32 = arith.constant 0 : i32
    %c0_i32_0 = arith.constant 0 : i32
    %c0_i32_1 = arith.constant 0 : i32
    %c0_i32_2 = arith.constant 0 : i32
    return %c0_i32, %arg0, %c0_i32_0, %c0_i32_1 : i32, i32, i32, i32
  }
  func.func @transform_1(%arg0: i32) -> (i32, i32, i32, i32) {
    %c0_i32 = arith.constant 0 : i32
    %c0_i32_0 = arith.constant 0 : i32
    %c0_i32_1 = arith.constant 0 : i32
    %c0_i32_2 = arith.constant 0 : i32
    return %c0_i32, %arg0, %c0_i32_0, %c0_i32_1 : i32, i32, i32, i32
  }
  func.func @transform_2(%arg0: i32) -> (i32, i32, i32, i32) {
    %c0_i32 = arith.constant 0 : i32
    %c0_i32_0 = arith.constant 0 : i32
    %c0_i32_1 = arith.constant 0 : i32
    %c0_i32_2 = arith.constant 0 : i32
    return %c0_i32, %arg0, %c0_i32_0, %c0_i32_1 : i32, i32, i32, i32
  }
  func.func @transform_3(%arg0: i32) -> (i32, i32) {
    %c0_i32 = arith.constant 0 : i32
    %c0_i32_0 = arith.constant 0 : i32
    %c0_i32_1 = arith.constant 0 : i32
    return %c0_i32, %c0_i32_0 : i32, i32
  }
  func.func @transform_4(%arg0: i32) -> (i32, i32) {
    %c0_i32 = arith.constant 0 : i32
    %c0_i32_0 = arith.constant 0 : i32
    %c0_i32_1 = arith.constant 0 : i32
    return %c0_i32, %c0_i32_0 : i32, i32
  }
  func.func @transform_5(%arg0: i32) -> (i32, i32) {
    %c0_i32 = arith.constant 0 : i32
    %c0_i32_0 = arith.constant 0 : i32
    %c0_i32_1 = arith.constant 0 : i32
    return %c0_i32, %c0_i32_0 : i32, i32
  }
  func.func @transform_6(%arg0: i32) -> (i32, i32) {
    %c0_i32 = arith.constant 0 : i32
    %c0_i32_0 = arith.constant 0 : i32
    %c0_i32_1 = arith.constant 0 : i32
    return %c0_i32, %c0_i32_0 : i32, i32
  }
  func.func @transform_7(%arg0: i32) -> (i32, i32, i32, i32) {
    %c0_i32 = arith.constant 0 : i32
    %c0_i32_0 = arith.constant 0 : i32
    %c0_i32_1 = arith.constant 0 : i32
    %c0_i32_2 = arith.constant 0 : i32
    return %c0_i32, %arg0, %c0_i32_0, %c0_i32_1 : i32, i32, i32, i32
  }
}

module attributes {stable_mosaic.version = 11 : i64} {
  func.func @_ffn_ln_kernel(%arg0: i32, %arg1: memref<16x32xf32, #tpu.memory_space<vmem>>, %arg2: memref<32x64xf32, #tpu.memory_space<vmem>>, %arg3: memref<1x64xf32, #tpu.memory_space<vmem>>, %arg4: memref<64x32xf32, #tpu.memory_space<vmem>>, %arg5: memref<1x32xf32, #tpu.memory_space<vmem>>, %arg6: memref<1x32xf32, #tpu.memory_space<vmem>>, %arg7: memref<1x32xf32, #tpu.memory_space<vmem>>, %arg8: memref<16x32xf32, #tpu.memory_space<vmem>>) attributes {dimension_semantics = [#tpu.dimension_semantics<parallel>], iteration_bounds = array<i64: 1>, scalar_prefetch = 0 : i64, scratch_operands = 0 : i64, tpu.core_type = #tpu.core_type<tc>, window_params = [{transform_indices = @transform_0, window_bounds = array<i64: 16, 32>}, {pipeline_mode = #tpu.pipeline_mode<synchronous>, transform_indices = @transform_1, window_bounds = array<i64: 32, 64>}, {pipeline_mode = #tpu.pipeline_mode<synchronous>, transform_indices = @transform_2, window_bounds = array<i64: 1, 64>}, {pipeline_mode = #tpu.pipeline_mode<synchronous>, transform_indices = @transform_3, window_bounds = array<i64: 64, 32>}, {pipeline_mode = #tpu.pipeline_mode<synchronous>, transform_indices = @transform_4, window_bounds = array<i64: 1, 32>}, {pipeline_mode = #tpu.pipeline_mode<synchronous>, transform_indices = @transform_5, window_bounds = array<i64: 1, 32>}, {pipeline_mode = #tpu.pipeline_mode<synchronous>, transform_indices = @transform_6, window_bounds = array<i64: 1, 32>}, {transform_indices = @transform_7, window_bounds = array<i64: 16, 32>}]} {
    %c0 = arith.constant 0 : index
    %c0_0 = arith.constant 0 : index
    %0 = vector.load %arg1[%c0, %c0_0] : memref<16x32xf32, #tpu.memory_space<vmem>>, vector<16x32xf32>
    %c0_1 = arith.constant 0 : index
    %c0_2 = arith.constant 0 : index
    %1 = vector.load %arg2[%c0_1, %c0_2] : memref<32x64xf32, #tpu.memory_space<vmem>>, vector<32x64xf32>
    %cst = arith.constant dense<0.000000e+00> : vector<16x64xf32>
    %2 = tpu.matmul %0, %1, %cst {dimension_numbers = #tpu.dot_dimension_numbers<[1], [0], [0], [1], [0, 0, 1, 1], [], []>} : vector<16x32xf32>, vector<32x64xf32>, vector<16x64xf32> -> vector<16x64xf32>
    %c0_3 = arith.constant 0 : index
    %c0_4 = arith.constant 0 : index
    %3 = vector.load %arg3[%c0_3, %c0_4] : memref<1x64xf32, #tpu.memory_space<vmem>>, vector<1x64xf32>
    %4 = vector.broadcast %3 : vector<1x64xf32> to vector<16x64xf32>
    %5 = arith.addf %2, %4 : vector<16x64xf32>
    %cst_5 = arith.constant 0.000000e+00 : f32
    %6 = vector.broadcast %cst_5 : f32 to vector<16x64xf32>
    %7 = arith.maximumf %5, %6 : vector<16x64xf32>
    %c0_6 = arith.constant 0 : index
    %c0_7 = arith.constant 0 : index
    %8 = vector.load %arg4[%c0_6, %c0_7] : memref<64x32xf32, #tpu.memory_space<vmem>>, vector<64x32xf32>
    %cst_8 = arith.constant dense<0.000000e+00> : vector<16x32xf32>
    %9 = tpu.matmul %7, %8, %cst_8 {dimension_numbers = #tpu.dot_dimension_numbers<[1], [0], [0], [1], [0, 0, 1, 1], [], []>} : vector<16x64xf32>, vector<64x32xf32>, vector<16x32xf32> -> vector<16x32xf32>
    %10 = arith.addf %0, %9 : vector<16x32xf32>
    %c0_9 = arith.constant 0 : index
    %c0_10 = arith.constant 0 : index
    %11 = vector.load %arg5[%c0_9, %c0_10] : memref<1x32xf32, #tpu.memory_space<vmem>>, vector<1x32xf32>
    %12 = vector.broadcast %11 : vector<1x32xf32> to vector<16x32xf32>
    %13 = arith.addf %10, %12 : vector<16x32xf32>
    %cst_11 = arith.constant dense<0.000000e+00> : vector<16xf32>
    %14 = vector.multi_reduction <add>, %13, %cst_11 [1] : vector<16x32xf32> to vector<16xf32>
    %15 = vector.shape_cast %14 : vector<16xf32> to vector<16x1xf32>
    %cst_12 = arith.constant 3.200000e+01 : f32
    %16 = vector.broadcast %cst_12 : f32 to vector<16x1xf32>
    %17 = arith.divf %15, %16 : vector<16x1xf32>
    %18 = vector.broadcast %17 : vector<16x1xf32> to vector<16x32xf32>
    %19 = arith.subf %13, %18 : vector<16x32xf32>
    %20 = arith.mulf %19, %19 : vector<16x32xf32>
    %cst_13 = arith.constant dense<0.000000e+00> : vector<16xf32>
    %21 = vector.multi_reduction <add>, %20, %cst_13 [1] : vector<16x32xf32> to vector<16xf32>
    %22 = vector.shape_cast %21 : vector<16xf32> to vector<16x1xf32>
    %cst_14 = arith.constant 3.200000e+01 : f32
    %23 = vector.broadcast %cst_14 : f32 to vector<16x1xf32>
    %24 = arith.divf %22, %23 : vector<16x1xf32>
    %cst_15 = arith.constant 9.99999974E-6 : f32
    %25 = vector.broadcast %cst_15 : f32 to vector<16x1xf32>
    %26 = arith.addf %24, %25 : vector<16x1xf32>
    %27 = math.rsqrt %26 : vector<16x1xf32>
    %28 = vector.broadcast %27 : vector<16x1xf32> to vector<16x32xf32>
    %29 = arith.mulf %19, %28 : vector<16x32xf32>
    %c0_16 = arith.constant 0 : index
    %c0_17 = arith.constant 0 : index
    %30 = vector.load %arg6[%c0_16, %c0_17] : memref<1x32xf32, #tpu.memory_space<vmem>>, vector<1x32xf32>
    %31 = vector.broadcast %30 : vector<1x32xf32> to vector<16x32xf32>
    %32 = arith.mulf %29, %31 : vector<16x32xf32>
    %c0_18 = arith.constant 0 : index
    %c0_19 = arith.constant 0 : index
    %33 = vector.load %arg7[%c0_18, %c0_19] : memref<1x32xf32, #tpu.memory_space<vmem>>, vector<1x32xf32>
    %34 = vector.broadcast %33 : vector<1x32xf32> to vector<16x32xf32>
    %35 = arith.addf %32, %34 : vector<16x32xf32>
    %c0_20 = arith.constant 0 : index
    %c0_21 = arith.constant 0 : index
    %36 = vector.load %arg8[%c0_20, %c0_21] : memref<16x32xf32, #tpu.memory_space<vmem>>, vector<16x32xf32>
    tpu.vector_store %arg8[%c0_20, %c0_21], %35 {strides = array<i32>} : memref<16x32xf32, #tpu.memory_space<vmem>>, vector<16x32xf32>,
    return
  }
  func.func @transform_0(%arg0: i32) -> (i32, i32) {
    %c0_i32 = arith.constant 0 : i32
    %c0_i32_0 = arith.constant 0 : i32
    return %arg0, %c0_i32 : i32, i32
  }
  func.func @transform_1(%arg0: i32) -> (i32, i32) {
    %c0_i32 = arith.constant 0 : i32
    %c0_i32_0 = arith.constant 0 : i32
    %c0_i32_1 = arith.constant 0 : i32
    return %c0_i32, %c0_i32_0 : i32, i32
  }
  func.func @transform_2(%arg0: i32) -> (i32, i32) {
    %c0_i32 = arith.constant 0 : i32
    %c0_i32_0 = arith.constant 0 : i32
    %c0_i32_1 = arith.constant 0 : i32
    return %c0_i32, %c0_i32_0 : i32, i32
  }
  func.func @transform_3(%arg0: i32) -> (i32, i32) {
    %c0_i32 = arith.constant 0 : i32
    %c0_i32_0 = arith.constant 0 : i32
    %c0_i32_1 = arith.constant 0 : i32
    return %c0_i32, %c0_i32_0 : i32, i32
  }
  func.func @transform_4(%arg0: i32) -> (i32, i32) {
    %c0_i32 = arith.constant 0 : i32
    %c0_i32_0 = arith.constant 0 : i32
    %c0_i32_1 = arith.constant 0 : i32
    return %c0_i32, %c0_i32_0 : i32, i32
  }
  func.func @transform_5(%arg0: i32) -> (i32, i32) {
    %c0_i32 = arith.constant 0 : i32
    %c0_i32_0 = arith.constant 0 : i32
    %c0_i32_1 = arith.constant 0 : i32
    return %c0_i32, %c0_i32_0 : i32, i32
  }
  func.func @transform_6(%arg0: i32) -> (i32, i32) {
    %c0_i32 = arith.constant 0 : i32
    %c0_i32_0 = arith.constant 0 : i32
    %c0_i32_1 = arith.constant 0 : i32
    return %c0_i32, %c0_i32_0 : i32, i32
  }
  func.func @transform_7(%arg0: i32) -> (i32, i32) {
    %c0_i32 = arith.constant 0 : i32
    %c0_i32_0 = arith.constant 0 : i32
    return %arg0, %c0_i32 : i32, i32
  }
}

module attributes {stable_mosaic.version = 11 : i64} {
  func.func @_ln_kernel(%arg0: i32, %arg1: memref<16x32xf32, #tpu.memory_space<vmem>>, %arg2: memref<1x32xf32, #tpu.memory_space<vmem>>, %arg3: memref<1x32xf32, #tpu.memory_space<vmem>>, %arg4: memref<16x32xf32, #tpu.memory_space<vmem>>) attributes {dimension_semantics = [#tpu.dimension_semantics<parallel>], iteration_bounds = array<i64: 1>, scalar_prefetch = 0 : i64, scratch_operands = 0 : i64, tpu.core_type = #tpu.core_type<tc>, window_params = [{transform_indices = @transform_0, window_bounds = array<i64: 16, 32>}, {pipeline_mode = #tpu.pipeline_mode<synchronous>, transform_indices = @transform_1, window_bounds = array<i64: 1, 32>}, {pipeline_mode = #tpu.pipeline_mode<synchronous>, transform_indices = @transform_2, window_bounds = array<i64: 1, 32>}, {transform_indices = @transform_3, window_bounds = array<i64: 16, 32>}]} {
    %c0 = arith.constant 0 : index
    %c0_0 = arith.constant 0 : index
    %0 = vector.load %arg1[%c0, %c0_0] : memref<16x32xf32, #tpu.memory_space<vmem>>, vector<16x32xf32>
    %cst = arith.constant dense<0.000000e+00> : vector<16xf32>
    %1 = vector.multi_reduction <add>, %0, %cst [1] : vector<16x32xf32> to vector<16xf32>
    %2 = vector.shape_cast %1 : vector<16xf32> to vector<16x1xf32>
    %cst_1 = arith.constant 3.200000e+01 : f32
    %3 = vector.broadcast %cst_1 : f32 to vector<16x1xf32>
    %4 = arith.divf %2, %3 : vector<16x1xf32>
    %5 = vector.broadcast %4 : vector<16x1xf32> to vector<16x32xf32>
    %6 = arith.subf %0, %5 : vector<16x32xf32>
    %7 = arith.mulf %6, %6 : vector<16x32xf32>
    %cst_2 = arith.constant dense<0.000000e+00> : vector<16xf32>
    %8 = vector.multi_reduction <add>, %7, %cst_2 [1] : vector<16x32xf32> to vector<16xf32>
    %9 = vector.shape_cast %8 : vector<16xf32> to vector<16x1xf32>
    %cst_3 = arith.constant 3.200000e+01 : f32
    %10 = vector.broadcast %cst_3 : f32 to vector<16x1xf32>
    %11 = arith.divf %9, %10 : vector<16x1xf32>
    %cst_4 = arith.constant 9.99999974E-6 : f32
    %12 = vector.broadcast %cst_4 : f32 to vector<16x1xf32>
    %13 = arith.addf %11, %12 : vector<16x1xf32>
    %14 = math.rsqrt %13 : vector<16x1xf32>
    %15 = vector.broadcast %14 : vector<16x1xf32> to vector<16x32xf32>
    %16 = arith.mulf %6, %15 : vector<16x32xf32>
    %c0_5 = arith.constant 0 : index
    %c0_6 = arith.constant 0 : index
    %17 = vector.load %arg2[%c0_5, %c0_6] : memref<1x32xf32, #tpu.memory_space<vmem>>, vector<1x32xf32>
    %18 = vector.broadcast %17 : vector<1x32xf32> to vector<16x32xf32>
    %19 = arith.mulf %16, %18 : vector<16x32xf32>
    %c0_7 = arith.constant 0 : index
    %c0_8 = arith.constant 0 : index
    %20 = vector.load %arg3[%c0_7, %c0_8] : memref<1x32xf32, #tpu.memory_space<vmem>>, vector<1x32xf32>
    %21 = vector.broadcast %20 : vector<1x32xf32> to vector<16x32xf32>
    %22 = arith.addf %19, %21 : vector<16x32xf32>
    %c0_9 = arith.constant 0 : index
    %c0_10 = arith.constant 0 : index
    %23 = vector.load %arg4[%c0_9, %c0_10] : memref<16x32xf32, #tpu.memory_space<vmem>>, vector<16x32xf32>
    tpu.vector_store %arg4[%c0_9, %c0_10], %22 {strides = array<i32>} : memref<16x32xf32, #tpu.memory_space<vmem>>, vector<16x32xf32>,
    return
  }
  func.func @transform_0(%arg0: i32) -> (i32, i32) {
    %c0_i32 = arith.constant 0 : i32
    %c0_i32_0 = arith.constant 0 : i32
    return %arg0, %c0_i32 : i32, i32
  }
  func.func @transform_1(%arg0: i32) -> (i32, i32) {
    %c0_i32 = arith.constant 0 : i32
    %c0_i32_0 = arith.constant 0 : i32
    %c0_i32_1 = arith.constant 0 : i32
    return %c0_i32, %c0_i32_0 : i32, i32
  }
  func.func @transform_2(%arg0: i32) -> (i32, i32) {
    %c0_i32 = arith.constant 0 : i32
    %c0_i32_0 = arith.constant 0 : i32
    %c0_i32_1 = arith.constant 0 : i32
    return %c0_i32, %c0_i32_0 : i32, i32
  }
  func.func @transform_3(%arg0: i32) -> (i32, i32) {
    %c0_i32 = arith.constant 0 : i32
    %c0_i32_0 = arith.constant 0 : i32
    return %arg0, %c0_i32 : i32, i32
  }
}

</mosaic_0001>

<llo_original>
// kernel: transformer_decoder_wrapper_forward.16
$region0: #{transformer_decoder_wrapper_forward.16}
  #allocation0 [shape = 'u32[]', space=smem, size = 0x4, offset = 0x4, fixed_abs, tag = 'smem constant byte address 0x4 - core index']
  #allocation1 [shape = 'u32[72,128]{1,0:T(1,128)}', space=vmem, size = 0x9000, scoped, tag = 'internal scratch']
  #allocation2 [shape = 'f32[32,64]{1,0:T(8,128)}', space=vmem, size = 0x4000, scoped, tag = 'scratch operand']
  %s0 = inlined_call_operand.vmem [shape: f32[32,32], index: 0, kind: input, shape index: {}]
  %s1 = inlined_call_operand.hbm [shape: f32[32,64], index: 1, kind: input, shape index: {}]
  %s2 = inlined_call_operand.vmem [shape: f32[1,64], index: 2, kind: input, shape index: {}]
  %s3 = inlined_call_operand.vmem [shape: f32[32,64], index: 3, kind: output, shape index: {}]
  %s4 = sld [smem:[#allocation0]]
  $region34: #{transformer_decoder_wrapper_forward.16} parent=0
    _
  %s6 = ssub.s32 1, %s4
  %s7 = scalar_select 0, %s6, %s4
  $region1: #{transformer_decoder_wrapper_forward.16} parent=0
    #allocation3 [shape = 'u8[16384]{0}', space=vmem, size = 0x4000, scoped, tag = 'input window, operand 1, single buffered']
    #allocation4 [shape = 's32[1]{0}', space=sflag, size = 0x4, scoped, tag = 'scoped memory for transformer_decoder_wrapper_forward.16']
    %8 = vsyncpa [#allocation4], 0
    // Predicated region
    $region2: #{transformer_decoder_wrapper_forward.16} parent=1 // pred_check
      _
    $region3: #{transformer_decoder_wrapper_forward.16} parent=1 // pred_check_branch
      %10 = sbr.rel (0) target = $region5
    $region4: #{transformer_decoder_wrapper_forward.16} parent=1 // pred_region
      _
    $region5: #{transformer_decoder_wrapper_forward.16} parent=1 // pred_fallthru
      _
    // Predicated region
    $region6: #{transformer_decoder_wrapper_forward.16} parent=1 // pred_check
      _
    $region7: #{transformer_decoder_wrapper_forward.16} parent=1 // pred_check_branch
      %12 = sbr.rel (0) target = $region9
    $region8: #{transformer_decoder_wrapper_forward.16} parent=1 // pred_region
      %14 = vsyncadd [#allocation4], 0
      %s15 = sshll.u32 %s1, 4
      %s16 = int_to_ptr.hbm [resolvable:$true] %s15
      %s17 = sshll.u32 [#allocation3], 4
      %s18 = int_to_ptr.vmem [resolvable:$true] %s17
      %23 = dma.hbm_to_vmem [thread:$0]  %s16, 512, %s18, [#allocation4], 128, 128, 8
    $region9: #{transformer_decoder_wrapper_forward.16} parent=1 // pred_fallthru
      _
    // Predicated region
    $region10: #{transformer_decoder_wrapper_forward.16} parent=1 // pred_check
      _
    $region11: #{transformer_decoder_wrapper_forward.16} parent=1 // pred_check_branch
      %25 = sbr.rel (0) target = $region13
    $region12: #{transformer_decoder_wrapper_forward.16} parent=1 // pred_region
      _
    $region13: #{transformer_decoder_wrapper_forward.16} parent=1 // pred_fallthru
      _
    // Predicated region
    $region14: #{transformer_decoder_wrapper_forward.16} parent=1 // pred_check
      _
    $region15: #{transformer_decoder_wrapper_forward.16} parent=1 // pred_check_branch
      %27 = sbr.rel (0) target = $region17
    $region16: #{transformer_decoder_wrapper_forward.16} parent=1 // pred_region
      %29 = dma.done [#allocation4], 512
    $region17: #{transformer_decoder_wrapper_forward.16} parent=1 // pred_fallthru
      _
    %p30 = scmp.eq.s32.totalorder 0, 0
    // Predicated region
    $region18: #{transformer_decoder_wrapper_forward.16} parent=1 // pred_check
      %p31 = pneg %p30
    $region19: #{transformer_decoder_wrapper_forward.16} parent=1 // pred_check_branch
      %33 = sbr.rel (%p31) target = $region21
    $region20: #{transformer_decoder_wrapper_forward.16} parent=1 // pred_region
      %vm34 = vcmask 523264
      %35 = vst.msk [vmem:[#allocation2] sm:$0xff] %vm34, 0.0
      %36 = vst.msk [vmem:[#allocation2 + $0x8] sm:$0xff] %vm34, 0.0
      %37 = vst.msk [vmem:[#allocation2 + $0x10] sm:$0xff] %vm34, 0.0
      %38 = vst.msk [vmem:[#allocation2 + $0x18] sm:$0xff] %vm34, 0.0
    $region21: #{transformer_decoder_wrapper_forward.16} parent=1 // pred_fallthru
      _
    %v39 = vld [vmem:[#allocation2] sm:$0xff]
    %v40 = vld [vmem:[#allocation2 + $0x8] sm:$0xff]
    %v41 = vld [vmem:[#allocation2 + $0x10] sm:$0xff]
    %v42 = vld [vmem:[#allocation2 + $0x18] sm:$0xff]
    %v43 = vld [vmem:[%s0] sm:$0xff]
    %v44 = vld [vmem:[%s0 + $0x8] sm:$0xff]
    %v45 = vld [vmem:[%s0 + $0x10] sm:$0xff]
    %v46 = vld [vmem:[%s0 + $0x18] sm:$0xff]
    %v47 = vld [vmem:[#allocation3] sm:$0xff]
    %v48 = vld [vmem:[#allocation3 + $0x8] sm:$0xff]
    %v49 = vld [vmem:[#allocation3 + $0x10] sm:$0xff]
    %v50 = vld [vmem:[#allocation3 + $0x18] sm:$0xff]
    %vm51 = vcmask 261120
    %v53 = vsel %vm51, %v43, 0
    %v56 = vsel %vm51, %v44, 0
    %v59 = vsel %vm51, %v45, 0
    %v62 = vsel %vm51, %v46, 0
    %64 = vmatpush.msra.mxu0 0.0
    %65 = vmatpush.msra.mxu0 0.0
    %66 = vmatpush.msra.mxu0 0.0
    %67 = vmatpush.msra.mxu0 0.0
    %68 = vmatpush.msra.mxu0 0.0
    %69 = vmatpush.msra.mxu0 0.0
    %70 = vmatpush.msra.mxu0 0.0
    %71 = vmatpush.msra.mxu0 0.0
    %72 = vmatpush.msra.mxu0 0.0
    %73 = vmatpush.msra.mxu0 0.0
    %74 = vmatpush.msra.mxu0 0.0
    %75 = vmatpush.msra.mxu0 0.0
    %76 = vmatpush.msra.mxu0 %v50
    %77 = vmatpush.msra.mxu0 %v49
    %78 = vmatpush.msra.mxu0 %v48
    %79 = vmatpush.msra.mxu0 %v47
    %80 = vmatmul.f32.gmra.mxu0 %v53
    %v81 = vpop.f32.mrf.mxu0
    %v82 = vadd.f32 0.0, %v81
    %83 = vmatmul.f32.gmra.mxu0 %v56
    %v84 = vpop.f32.mrf.mxu0
    %v85 = vadd.f32 0.0, %v84
    %86 = vmatmul.f32.gmra.mxu0 %v59
    %v87 = vpop.f32.mrf.mxu0
    %v88 = vadd.f32 0.0, %v87
    %89 = vmatmul.f32.gmra.mxu0 %v62
    %v90 = vpop.f32.mrf.mxu0
    %v91 = vadd.f32 0.0, %v90
    %92 = vdwg.mxu0
    %v93 = vadd.f32 %v39, %v82
    %v94 = vadd.f32 %v40, %v85
    %v95 = vadd.f32 %v41, %v88
    %v96 = vadd.f32 %v42, %v91
    %vm97 = vcmask 523264
    %98 = vst.msk [vmem:[#allocation2] sm:$0xff] %vm97, %v93
    %99 = vst.msk [vmem:[#allocation2 + $0x8] sm:$0xff] %vm97, %v94
    %100 = vst.msk [vmem:[#allocation2 + $0x10] sm:$0xff] %vm97, %v95
    %101 = vst.msk [vmem:[#allocation2 + $0x18] sm:$0xff] %vm97, %v96
    // Predicated region
    $region22: #{transformer_decoder_wrapper_forward.16} parent=1 // pred_check
      %p102 = pneg %p30
    $region23: #{transformer_decoder_wrapper_forward.16} parent=1 // pred_check_branch
      %104 = sbr.rel (%p102) target = $region25
    $region24: #{transformer_decoder_wrapper_forward.16} parent=1 // pred_region
      %v105 = vld [vmem:[#allocation2] sm:$0xff]
      %v106 = vld [vmem:[#allocation2 + $0x8] sm:$0xff]
      %v107 = vld [vmem:[#allocation2 + $0x10] sm:$0xff]
      %v108 = vld [vmem:[#allocation2 + $0x18] sm:$0xff]
      %v109 = vld [vmem:[%s2] sm:$0x1]
      %v111 = vperm.slane %v109, 0
      %v113 = vadd.f32 %v105, %v111
      %v114 = vadd.f32 %v106, %v111
      %v115 = vadd.f32 %v107, %v111
      %v116 = vadd.f32 %v108, %v111
      %117 = vst.msk [vmem:[%s3] sm:$0xff] %vm97, %v113
      %118 = vst.msk [vmem:[%s3 + $0x8] sm:$0xff] %vm97, %v114
      %119 = vst.msk [vmem:[%s3 + $0x10] sm:$0xff] %vm97, %v115
      %120 = vst.msk [vmem:[%s3 + $0x18] sm:$0xff] %vm97, %v116
    $region25: #{transformer_decoder_wrapper_forward.16} parent=1 // pred_fallthru
      _
    // Predicated region
    $region26: #{transformer_decoder_wrapper_forward.16} parent=1 // pred_check
      _
    $region27: #{transformer_decoder_wrapper_forward.16} parent=1 // pred_check_branch
      %122 = sbr.rel (0) target = $region29
    $region28: #{transformer_decoder_wrapper_forward.16} parent=1 // pred_region
      _
    $region29: #{transformer_decoder_wrapper_forward.16} parent=1 // pred_fallthru
      _
    // Predicated region
    $region30: #{transformer_decoder_wrapper_forward.16} parent=1 // pred_check
      _
    $region31: #{transformer_decoder_wrapper_forward.16} parent=1 // pred_check_branch
      %124 = sbr.rel (0) target = $region33
    $region32: #{transformer_decoder_wrapper_forward.16} parent=1 // pred_region
      _
    $region33: #{transformer_decoder_wrapper_forward.16} parent=1 // pred_fallthru
      _
    %125 = vsyncpa [#allocation4], 1

// kernel: transformer_decoder_wrapper_forward.13
$region0: #{transformer_decoder_wrapper_forward.13}
  #allocation0 [shape = 'u32[]', space=smem, size = 0x4, offset = 0x4, fixed_abs, tag = 'smem constant byte address 0x4 - core index']
  #allocation1 [shape = 'u32[72,128]{1,0:T(1,128)}', space=vmem, size = 0x9000, scoped, tag = 'internal scratch']
  #allocation2 [shape = 'f32[16,96]{1,0:T(8,128)}', space=vmem, size = 0x2000, scoped, tag = 'scratch operand']
  %s0 = inlined_call_operand.hbm [shape: f32[16,32], index: 0, kind: input, shape index: {}]
  %s1 = inlined_call_operand.hbm [shape: f32[32,96], index: 1, kind: input, shape index: {}]
  %s2 = inlined_call_operand.vmem [shape: f32[1,96], index: 2, kind: input, shape index: {}]
  %s3 = inlined_call_operand.vmem [shape: f32[16,96], index: 3, kind: output, shape index: {}]
  %s4 = sld [smem:[#allocation0]]
  $region38: #{transformer_decoder_wrapper_forward.13} parent=0
    _
  %s6 = ssub.s32 1, %s4
  %s7 = scalar_select 0, %s6, %s4
  $region1: #{transformer_decoder_wrapper_forward.13} parent=0
    #allocation3 [shape = 'u8[8192]{0}', space=vmem, size = 0x2000, scoped, tag = 'input window, operand 0, single buffered']
    #allocation4 [shape = 's32[1]{0}', space=sflag, size = 0x4, scoped, tag = 'scoped memory for transformer_decoder_wrapper_forward.13']
    #allocation5 [shape = 'u8[16384]{0}', space=vmem, size = 0x4000, scoped, tag = 'input window, operand 1, single buffered']
    #allocation6 [shape = 's32[1]{0}', space=sflag, size = 0x4, scoped, tag = 'scoped memory for transformer_decoder_wrapper_forward.13']
    %8 = vsyncpa [#allocation4], 0
    %9 = vsyncpa [#allocation6], 0
    // Predicated region
    $region2: #{transformer_decoder_wrapper_forward.13} parent=1 // pred_check
      _
    $region3: #{transformer_decoder_wrapper_forward.13} parent=1 // pred_check_branch
      %11 = sbr.rel (0) target = $region5
    $region4: #{transformer_decoder_wrapper_forward.13} parent=1 // pred_region
      %13 = vsyncadd [#allocation4], 0
      %s14 = sshll.u32 %s0, 4
      %s15 = int_to_ptr.hbm [resolvable:$true] %s14
      %s16 = sshll.u32 [#allocation3], 4
      %s17 = int_to_ptr.vmem [resolvable:$true] %s16
      %22 = dma.hbm_to_vmem [thread:$0]  %s15, 256, %s17, [#allocation4], 128, 128, 8
    $region5: #{transformer_decoder_wrapper_forward.13} parent=1 // pred_fallthru
      _
    // Predicated region
    $region6: #{transformer_decoder_wrapper_forward.13} parent=1 // pred_check
      _
    $region7: #{transformer_decoder_wrapper_forward.13} parent=1 // pred_check_branch
      %24 = sbr.rel (0) target = $region9
    $region8: #{transformer_decoder_wrapper_forward.13} parent=1 // pred_region
      %26 = vsyncadd [#allocation6], 0
      %s27 = sshll.u32 %s1, 4
      %s28 = int_to_ptr.hbm [resolvable:$true] %s27
      %s29 = sshll.u32 [#allocation5], 4
      %s30 = int_to_ptr.vmem [resolvable:$true] %s29
      %35 = dma.hbm_to_vmem [thread:$0]  %s28, 512, %s30, [#allocation6], 128, 128, 8
    $region9: #{transformer_decoder_wrapper_forward.13} parent=1 // pred_fallthru
      _
    // Predicated region
    $region10: #{transformer_decoder_wrapper_forward.13} parent=1 // pred_check
      _
    $region11: #{transformer_decoder_wrapper_forward.13} parent=1 // pred_check_branch
      %37 = sbr.rel (0) target = $region13
    $region12: #{transformer_decoder_wrapper_forward.13} parent=1 // pred_region
      _
    $region13: #{transformer_decoder_wrapper_forward.13} parent=1 // pred_fallthru
      _
    // Predicated region
    $region14: #{transformer_decoder_wrapper_forward.13} parent=1 // pred_check
      _
    $region15: #{transformer_decoder_wrapper_forward.13} parent=1 // pred_check_branch
      %39 = sbr.rel (0) target = $region17
    $region16: #{transformer_decoder_wrapper_forward.13} parent=1 // pred_region
      %41 = dma.done [#allocation4], 256
    $region17: #{transformer_decoder_wrapper_forward.13} parent=1 // pred_fallthru
      _
    // Predicated region
    $region18: #{transformer_decoder_wrapper_forward.13} parent=1 // pred_check
      _
    $region19: #{transformer_decoder_wrapper_forward.13} parent=1 // pred_check_branch
      %43 = sbr.rel (0) target = $region21
    $region20: #{transformer_decoder_wrapper_forward.13} parent=1 // pred_region
      %45 = dma.done [#allocation6], 512
    $region21: #{transformer_decoder_wrapper_forward.13} parent=1 // pred_fallthru
      _
    %p46 = scmp.eq.s32.totalorder 0, 0
    // Predicated region
    $region22: #{transformer_decoder_wrapper_forward.13} parent=1 // pred_check
      %p47 = pneg %p46
    $region23: #{transformer_decoder_wrapper_forward.13} parent=1 // pred_check_branch
      %49 = sbr.rel (%p47) target = $region25
    $region24: #{transformer_decoder_wrapper_forward.13} parent=1 // pred_region
      %vm50 = vcmask 785408
      %51 = vst.msk [vmem:[#allocation2] sm:$0xff] %vm50, 0.0
      %52 = vst.msk [vmem:[#allocation2 + $0x8] sm:$0xff] %vm50, 0.0
    $region25: #{transformer_decoder_wrapper_forward.13} parent=1 // pred_fallthru
      _
    %v53 = vld [vmem:[#allocation2] sm:$0xff]
    %v54 = vld [vmem:[#allocation2 + $0x8] sm:$0xff]
    %v55 = vld [vmem:[#allocation3] sm:$0xff]
    %v56 = vld [vmem:[#allocation3 + $0x8] sm:$0xff]
    %v57 = vld [vmem:[#allocation5] sm:$0xff]
    %v58 = vld [vmem:[#allocation5 + $0x8] sm:$0xff]
    %v59 = vld [vmem:[#allocation5 + $0x10] sm:$0xff]
    %v60 = vld [vmem:[#allocation5 + $0x18] sm:$0xff]
    %vm61 = vcmask 261120
    %v63 = vsel %vm61, %v55, 0
    %v66 = vsel %vm61, %v56, 0
    %68 = vmatpush.msra.mxu0 0.0
    %69 = vmatpush.msra.mxu0 0.0
    %70 = vmatpush.msra.mxu0 0.0
    %71 = vmatpush.msra.mxu0 0.0
    %72 = vmatpush.msra.mxu0 0.0
    %73 = vmatpush.msra.mxu0 0.0
    %74 = vmatpush.msra.mxu0 0.0
    %75 = vmatpush.msra.mxu0 0.0
    %76 = vmatpush.msra.mxu0 0.0
    %77 = vmatpush.msra.mxu0 0.0
    %78 = vmatpush.msra.mxu0 0.0
    %79 = vmatpush.msra.mxu0 0.0
    %80 = vmatpush.msra.mxu0 %v60
    %81 = vmatpush.msra.mxu0 %v59
    %82 = vmatpush.msra.mxu0 %v58
    %83 = vmatpush.msra.mxu0 %v57
    %84 = vmatmul.f32.gmra.mxu0 %v63
    %v85 = vpop.f32.mrf.mxu0
    %v86 = vadd.f32 0.0, %v85
    %87 = vmatmul.f32.gmra.mxu0 %v66
    %v88 = vpop.f32.mrf.mxu0
    %v89 = vadd.f32 0.0, %v88
    %90 = vdwg.mxu0
    %v91 = vadd.f32 %v53, %v86
    %v92 = vadd.f32 %v54, %v89
    %vm93 = vcmask 785408
    %94 = vst.msk [vmem:[#allocation2] sm:$0xff] %vm93, %v91
    %95 = vst.msk [vmem:[#allocation2 + $0x8] sm:$0xff] %vm93, %v92
    // Predicated region
    $region26: #{transformer_decoder_wrapper_forward.13} parent=1 // pred_check
      %p96 = pneg %p46
    $region27: #{transformer_decoder_wrapper_forward.13} parent=1 // pred_check_branch
      %98 = sbr.rel (%p96) target = $region29
    $region28: #{transformer_decoder_wrapper_forward.13} parent=1 // pred_region
      %v99 = vld [vmem:[#allocation2] sm:$0xff]
      %v100 = vld [vmem:[#allocation2 + $0x8] sm:$0xff]
      %v101 = vld [vmem:[%s2] sm:$0x1]
      %v103 = vperm.slane %v101, 0
      %v105 = vadd.f32 %v99, %v103
      %v106 = vadd.f32 %v100, %v103
      %107 = vst.msk [vmem:[%s3] sm:$0xff] %vm93, %v105
      %108 = vst.msk [vmem:[%s3 + $0x8] sm:$0xff] %vm93, %v106
    $region29: #{transformer_decoder_wrapper_forward.13} parent=1 // pred_fallthru
      _
    // Predicated region
    $region30: #{transformer_decoder_wrapper_forward.13} parent=1 // pred_check
      _
    $region31: #{transformer_decoder_wrapper_forward.13} parent=1 // pred_check_branch
      %110 = sbr.rel (0) target = $region33
    $region32: #{transformer_decoder_wrapper_forward.13} parent=1 // pred_region
      _
    $region33: #{transformer_decoder_wrapper_forward.13} parent=1 // pred_fallthru
      _
    // Predicated region
    $region34: #{transformer_decoder_wrapper_forward.13} parent=1 // pred_check
      _
    $region35: #{transformer_decoder_wrapper_forward.13} parent=1 // pred_check_branch
      %112 = sbr.rel (0) target = $region37
    $region36: #{transformer_decoder_wrapper_forward.13} parent=1 // pred_region
      _
    $region37: #{transformer_decoder_wrapper_forward.13} parent=1 // pred_fallthru
      _
    %113 = vsyncpa [#allocation4], 1
    %114 = vsyncpa [#allocation6], 1

// kernel: transformer_decoder_wrapper_forward.15
$region0: #{transformer_decoder_wrapper_forward.15}
  #allocation0 [shape = 'u32[]', space=smem, size = 0x4, offset = 0x4, fixed_abs, tag = 'smem constant byte address 0x4 - core index']
  #allocation1 [shape = 'u32[72,128]{1,0:T(1,128)}', space=vmem, size = 0x9000, scoped, tag = 'internal scratch']
  #allocation2 [shape = 'f32[16,32]{1,0:T(8,128)}', space=vmem, size = 0x2000, scoped, tag = 'scratch operand']
  %s0 = inlined_call_operand.vmem [shape: f32[16,32], index: 0, kind: input, shape index: {}]
  %s1 = inlined_call_operand.hbm [shape: f32[32,32], index: 1, kind: input, shape index: {}]
  %s2 = inlined_call_operand.vmem [shape: f32[1,32], index: 2, kind: input, shape index: {}]
  %s3 = inlined_call_operand.vmem [shape: f32[16,32], index: 3, kind: output, shape index: {}]
  %s4 = sld [smem:[#allocation0]]
  $region34: #{transformer_decoder_wrapper_forward.15} parent=0
    _
  %s6 = ssub.s32 1, %s4
  %s7 = scalar_select 0, %s6, %s4
  $region1: #{transformer_decoder_wrapper_forward.15} parent=0
    #allocation3 [shape = 'u8[16384]{0}', space=vmem, size = 0x4000, scoped, tag = 'input window, operand 1, single buffered']
    #allocation4 [shape = 's32[1]{0}', space=sflag, size = 0x4, scoped, tag = 'scoped memory for transformer_decoder_wrapper_forward.15']
    %8 = vsyncpa [#allocation4], 0
    // Predicated region
    $region2: #{transformer_decoder_wrapper_forward.15} parent=1 // pred_check
      _
    $region3: #{transformer_decoder_wrapper_forward.15} parent=1 // pred_check_branch
      %10 = sbr.rel (0) target = $region5
    $region4: #{transformer_decoder_wrapper_forward.15} parent=1 // pred_region
      _
    $region5: #{transformer_decoder_wrapper_forward.15} parent=1 // pred_fallthru
      _
    // Predicated region
    $region6: #{transformer_decoder_wrapper_forward.15} parent=1 // pred_check
      _
    $region7: #{transformer_decoder_wrapper_forward.15} parent=1 // pred_check_branch
      %12 = sbr.rel (0) target = $region9
    $region8: #{transformer_decoder_wrapper_forward.15} parent=1 // pred_region
      %14 = vsyncadd [#allocation4], 0
      %s15 = sshll.u32 %s1, 4
      %s16 = int_to_ptr.hbm [resolvable:$true] %s15
      %s17 = sshll.u32 [#allocation3], 4
      %s18 = int_to_ptr.vmem [resolvable:$true] %s17
      %23 = dma.hbm_to_vmem [thread:$0]  %s16, 512, %s18, [#allocation4], 128, 128, 8
    $region9: #{transformer_decoder_wrapper_forward.15} parent=1 // pred_fallthru
      _
    // Predicated region
    $region10: #{transformer_decoder_wrapper_forward.15} parent=1 // pred_check
      _
    $region11: #{transformer_decoder_wrapper_forward.15} parent=1 // pred_check_branch
      %25 = sbr.rel (0) target = $region13
    $region12: #{transformer_decoder_wrapper_forward.15} parent=1 // pred_region
      _
    $region13: #{transformer_decoder_wrapper_forward.15} parent=1 // pred_fallthru
      _
    // Predicated region
    $region14: #{transformer_decoder_wrapper_forward.15} parent=1 // pred_check
      _
    $region15: #{transformer_decoder_wrapper_forward.15} parent=1 // pred_check_branch
      %27 = sbr.rel (0) target = $region17
    $region16: #{transformer_decoder_wrapper_forward.15} parent=1 // pred_region
      %29 = dma.done [#allocation4], 512
    $region17: #{transformer_decoder_wrapper_forward.15} parent=1 // pred_fallthru
      _
    %p30 = scmp.eq.s32.totalorder 0, 0
    // Predicated region
    $region18: #{transformer_decoder_wrapper_forward.15} parent=1 // pred_check
      %p31 = pneg %p30
    $region19: #{transformer_decoder_wrapper_forward.15} parent=1 // pred_check_branch
      %33 = sbr.rel (%p31) target = $region21
    $region20: #{transformer_decoder_wrapper_forward.15} parent=1 // pred_region
      %vm34 = vcmask 261120
      %35 = vst.msk [vmem:[#allocation2] sm:$0xff] %vm34, 0.0
      %36 = vst.msk [vmem:[#allocation2 + $0x8] sm:$0xff] %vm34, 0.0
    $region21: #{transformer_decoder_wrapper_forward.15} parent=1 // pred_fallthru
      _
    %v37 = vld [vmem:[#allocation2] sm:$0xff]
    %v38 = vld [vmem:[#allocation2 + $0x8] sm:$0xff]
    %v39 = vld [vmem:[%s0] sm:$0xff]
    %v40 = vld [vmem:[%s0 + $0x8] sm:$0xff]
    %v41 = vld [vmem:[#allocation3] sm:$0xff]
    %v42 = vld [vmem:[#allocation3 + $0x8] sm:$0xff]
    %v43 = vld [vmem:[#allocation3 + $0x10] sm:$0xff]
    %v44 = vld [vmem:[#allocation3 + $0x18] sm:$0xff]
    %vm45 = vcmask 261120
    %v47 = vsel %vm45, %v39, 0
    %v50 = vsel %vm45, %v40, 0
    %52 = vmatpush.msra.mxu0 0.0
    %53 = vmatpush.msra.mxu0 0.0
    %54 = vmatpush.msra.mxu0 0.0
    %55 = vmatpush.msra.mxu0 0.0
    %56 = vmatpush.msra.mxu0 0.0
    %57 = vmatpush.msra.mxu0 0.0
    %58 = vmatpush.msra.mxu0 0.0
    %59 = vmatpush.msra.mxu0 0.0
    %60 = vmatpush.msra.mxu0 0.0
    %61 = vmatpush.msra.mxu0 0.0
    %62 = vmatpush.msra.mxu0 0.0
    %63 = vmatpush.msra.mxu0 0.0
    %64 = vmatpush.msra.mxu0 %v44
    %65 = vmatpush.msra.mxu0 %v43
    %66 = vmatpush.msra.mxu0 %v42
    %67 = vmatpush.msra.mxu0 %v41
    %68 = vmatmul.f32.gmra.mxu0 %v47
    %v69 = vpop.f32.mrf.mxu0
    %v70 = vadd.f32 0.0, %v69
    %71 = vmatmul.f32.gmra.mxu0 %v50
    %v72 = vpop.f32.mrf.mxu0
    %v73 = vadd.f32 0.0, %v72
    %74 = vdwg.mxu0
    %v75 = vadd.f32 %v37, %v70
    %v76 = vadd.f32 %v38, %v73
    %77 = vst.msk [vmem:[#allocation2] sm:$0xff] %vm45, %v75
    %78 = vst.msk [vmem:[#allocation2 + $0x8] sm:$0xff] %vm45, %v76
    // Predicated region
    $region22: #{transformer_decoder_wrapper_forward.15} parent=1 // pred_check
      %p79 = pneg %p30
    $region23: #{transformer_decoder_wrapper_forward.15} parent=1 // pred_check_branch
      %81 = sbr.rel (%p79) target = $region25
    $region24: #{transformer_decoder_wrapper_forward.15} parent=1 // pred_region
      %v82 = vld [vmem:[#allocation2] sm:$0xff]
      %v83 = vld [vmem:[#allocation2 + $0x8] sm:$0xff]
      %v84 = vld [vmem:[%s2] sm:$0x1]
      %v86 = vperm.slane %v84, 0
      %v88 = vadd.f32 %v82, %v86
      %v89 = vadd.f32 %v83, %v86
      %90 = vst.msk [vmem:[%s3] sm:$0xff] %vm45, %v88
      %91 = vst.msk [vmem:[%s3 + $0x8] sm:$0xff] %vm45, %v89
    $region25: #{transformer_decoder_wrapper_forward.15} parent=1 // pred_fallthru
      _
    // Predicated region
    $region26: #{transformer_decoder_wrapper_forward.15} parent=1 // pred_check
      _
    $region27: #{transformer_decoder_wrapper_forward.15} parent=1 // pred_check_branch
      %93 = sbr.rel (0) target = $region29
    $region28: #{transformer_decoder_wrapper_forward.15} parent=1 // pred_region
      _
    $region29: #{transformer_decoder_wrapper_forward.15} parent=1 // pred_fallthru
      _
    // Predicated region
    $region30: #{transformer_decoder_wrapper_forward.15} parent=1 // pred_check
      _
    $region31: #{transformer_decoder_wrapper_forward.15} parent=1 // pred_check_branch
      %95 = sbr.rel (0) target = $region33
    $region32: #{transformer_decoder_wrapper_forward.15} parent=1 // pred_region
      _
    $region33: #{transformer_decoder_wrapper_forward.15} parent=1 // pred_fallthru
      _
    %96 = vsyncpa [#allocation4], 1

// kernel: transformer_decoder_wrapper_forward.14
$region0: #{transformer_decoder_wrapper_forward.14}
  #allocation0 [shape = 'u32[]', space=smem, size = 0x4, offset = 0x4, fixed_abs, tag = 'smem constant byte address 0x4 - core index']
  #allocation1 [shape = 'u32[72,128]{1,0:T(1,128)}', space=vmem, size = 0x9000, scoped, tag = 'internal scratch']
  %s0 = inlined_call_operand.vmem [shape: f32[8,2,1,96], index: 0, kind: input, shape index: {}]
  %s1 = inlined_call_operand.vmem [shape: f32[8,2,1,32], index: 1, kind: input, shape index: {}]
  %s2 = inlined_call_operand.hbm [shape: f32[32,32], index: 2, kind: input, shape index: {}]
  %s3 = inlined_call_operand.vmem [shape: f32[1,32], index: 3, kind: input, shape index: {}, may-alias: {3,5}]
  %s4 = inlined_call_operand.vmem [shape: f32[1,32], index: 4, kind: input, shape index: {}]
  %s5 = inlined_call_operand.vmem [shape: f32[1,32], index: 5, kind: input, shape index: {}, may-alias: {3,5}]
  %s6 = inlined_call_operand.vmem [shape: f32[8,2,1,32], index: 6, kind: output, shape index: {}]
  %s7 = sld [smem:[#allocation0]]
  $region180: #{transformer_decoder_wrapper_forward.14} parent=0
    _
  %s9 = ssub.s32 1, %s7
  %s10 = scalar_select 0, %s9, %s7
  $region1: #{transformer_decoder_wrapper_forward.14} parent=0
    #allocation2 [shape = 'u8[8192]{0}', space=vmem, size = 0x2000, scoped, tag = 'input window, operand 0']
    #allocation3 [shape = 'u8[8192]{0}', space=vmem, size = 0x2000, scoped, tag = 'input window, operand 1']
    #allocation4 [shape = 'u8[16384]{0}', space=vmem, size = 0x4000, scoped, tag = 'input window, operand 2, single buffered']
    #allocation5 [shape = 's32[2]{0}', space=sflag, size = 0x8, scoped, tag = 'scoped memory for transformer_decoder_wrapper_forward.14']
    #allocation6 [shape = 'u8[8192]{0}', space=vmem, size = 0x2000, scoped, tag = 'output window, operand 0']
    %11 = vsyncpa [#allocation5], 0
    loop: start=0, step=1, limit=4
    $region2: #{transformer_decoder_wrapper_forward.14} parent=1 // loop_pre_header
      _
    $region3: #{transformer_decoder_wrapper_forward.14} parent=1 // loop_header
      %s13 = sphi 0, %s17
      %p14 = scmp.ge.s32.totalorder %s13, 4
      %s23 = sphi 0, %s25
      %s26 = sphi 0, %s23
      %s27 = sphi 0, %s26
      %s43 = sphi 0, %s27
      %s49 = sphi 0, %s51
      %s52 = sphi 0, %s49
      %s53 = sphi 0, %s52
      %s69 = sphi 0, %s53
      %s73 = sphi 0, %s73
      %s75 = sphi 0, %s73
      %s76 = sphi 0, %s75
      %s90 = sphi 0, %s76
      %s94 = sphi 0, %s94
      %s96 = sphi 0, %s94
      %s97 = sphi 0, %s96
      %s111 = sphi 0, %s97
      %s115 = sphi 0, %s115
      %s117 = sphi 0, %s115
      %s118 = sphi 0, %s117
      %s132 = sphi 0, %s118
      %s136 = sphi 0, %s136
      %s138 = sphi 0, %s136
      %s139 = sphi 0, %s138
      %s153 = sphi 0, %s139
      %s159 = sphi 0, %s161
      %s162 = sphi 0, %s159
      %s163 = sphi 0, %s162
      %s179 = sphi 0, %s163
    $region4: #{transformer_decoder_wrapper_forward.14} parent=1 // loop_header_branch
      %16 = sbr.rel (%p14) target = $region8
    $region5: #{transformer_decoder_wrapper_forward.14} parent=1 // loop_body
      %s18 = ssub.s32 %s13, 1
      %s19 = ssub.s32 %s13, 2
      %s20 = sadd.s32 %s13, 1
      %s21 = ssub.s32 %s13, %s20
      %p22 = scmp.eq.s32.totalorder %s21, 0
      %s24 = sadd.s32 %s23, 1
      %s25 = scalar_select %p22, %s23, %s24
      %p28 = pneg %p22
      %p29 = scmp.eq.s32.totalorder %s13, 1
      %p30 = por %p28, %p29
      %p31 = scmp.ne.s32.totalorder %s23, %s26
      %p32 = scmp.eq.s32.totalorder %s13, 0
      %p33 = por %p31, %p32
      %p34 = scmp.ne.s32.totalorder %s23, %s26
      %p35 = scmp.eq.s32.totalorder %s18, 1
      %p36 = por %p34, %p35
      %p37 = scmp.ne.s32.totalorder %s26, %s27
      %p38 = scmp.eq.s32.totalorder %s18, 0
      %p39 = por %p37, %p38
      %p40 = scmp.ne.s32.totalorder %s26, %s27
      %p41 = scmp.eq.s32.totalorder %s19, 1
      %p42 = por %p40, %p41
      %p44 = scmp.ne.s32.totalorder %s27, %s43
      %p45 = scmp.eq.s32.totalorder %s19, 0
      %p46 = por %p44, %p45
      %s47 = ssub.s32 %s13, %s20
      %p48 = scmp.eq.s32.totalorder %s47, 0
      %s50 = sadd.s32 %s49, 1
      %s51 = scalar_select %p48, %s49, %s50
      %p54 = pneg %p48
      %p55 = scmp.eq.s32.totalorder %s13, 1
      %p56 = por %p54, %p55
      %p57 = scmp.ne.s32.totalorder %s49, %s52
      %p58 = scmp.eq.s32.totalorder %s13, 0
      %p59 = por %p57, %p58
      %p60 = scmp.ne.s32.totalorder %s49, %s52
      %p61 = scmp.eq.s32.totalorder %s18, 1
      %p62 = por %p60, %p61
      %p63 = scmp.ne.s32.totalorder %s52, %s53
      %p64 = scmp.eq.s32.totalorder %s18, 0
      %p65 = por %p63, %p64
      %p66 = scmp.ne.s32.totalorder %s52, %s53
      %p67 = scmp.eq.s32.totalorder %s19, 1
      %p68 = por %p66, %p67
      %p70 = scmp.ne.s32.totalorder %s53, %s69
      %p71 = scmp.eq.s32.totalorder %s19, 0
      %p72 = por %p70, %p71
      %s74 = sadd.s32 %s73, 1
      %p77 = scmp.eq.s32.totalorder %s13, 1
      %p78 = scmp.ne.s32.totalorder %s73, %s75
      %p79 = scmp.eq.s32.totalorder %s13, 0
      %p80 = por %p78, %p79
      %p81 = scmp.ne.s32.totalorder %s73, %s75
      %p82 = scmp.eq.s32.totalorder %s18, 1
      %p83 = por %p81, %p82
      %p84 = scmp.ne.s32.totalorder %s75, %s76
      %p85 = scmp.eq.s32.totalorder %s18, 0
      %p86 = por %p84, %p85
      %p87 = scmp.ne.s32.totalorder %s75, %s76
      %p88 = scmp.eq.s32.totalorder %s19, 1
      %p89 = por %p87, %p88
      %p91 = scmp.ne.s32.totalorder %s76, %s90
      %p92 = scmp.eq.s32.totalorder %s19, 0
      %p93 = por %p91, %p92
      %s95 = sadd.s32 %s94, 1
      %p98 = scmp.eq.s32.totalorder %s13, 1
      %p99 = scmp.ne.s32.totalorder %s94, %s96
      %p100 = scmp.eq.s32.totalorder %s13, 0
      %p101 = por %p99, %p100
      %p102 = scmp.ne.s32.totalorder %s94, %s96
      %p103 = scmp.eq.s32.totalorder %s18, 1
      %p104 = por %p102, %p103
      %p105 = scmp.ne.s32.totalorder %s96, %s97
      %p106 = scmp.eq.s32.totalorder %s18, 0
      %p107 = por %p105, %p106
      %p108 = scmp.ne.s32.totalorder %s96, %s97
      %p109 = scmp.eq.s32.totalorder %s19, 1
      %p110 = por %p108, %p109
      %p112 = scmp.ne.s32.totalorder %s97, %s111
      %p113 = scmp.eq.s32.totalorder %s19, 0
      %p114 = por %p112, %p113
      %s116 = sadd.s32 %s115, 1
      %p119 = scmp.eq.s32.totalorder %s13, 1
      %p120 = scmp.ne.s32.totalorder %s115, %s117
      %p121 = scmp.eq.s32.totalorder %s13, 0
      %p122 = por %p120, %p121
      %p123 = scmp.ne.s32.totalorder %s115, %s117
      %p124 = scmp.eq.s32.totalorder %s18, 1
      %p125 = por %p123, %p124
      %p126 = scmp.ne.s32.totalorder %s117, %s118
      %p127 = scmp.eq.s32.totalorder %s18, 0
      %p128 = por %p126, %p127
      %p129 = scmp.ne.s32.totalorder %s117, %s118
      %p130 = scmp.eq.s32.totalorder %s19, 1
      %p131 = por %p129, %p130
      %p133 = scmp.ne.s32.totalorder %s118, %s132
      %p134 = scmp.eq.s32.totalorder %s19, 0
      %p135 = por %p133, %p134
      %s137 = sadd.s32 %s136, 1
      %p140 = scmp.eq.s32.totalorder %s13, 1
      %p141 = scmp.ne.s32.totalorder %s136, %s138
      %p142 = scmp.eq.s32.totalorder %s13, 0
      %p143 = por %p141, %p142
      %p144 = scmp.ne.s32.totalorder %s136, %s138
      %p145 = scmp.eq.s32.totalorder %s18, 1
      %p146 = por %p144, %p145
      %p147 = scmp.ne.s32.totalorder %s138, %s139
      %p148 = scmp.eq.s32.totalorder %s18, 0
      %p149 = por %p147, %p148
      %p150 = scmp.ne.s32.totalorder %s138, %s139
      %p151 = scmp.eq.s32.totalorder %s19, 1
      %p152 = por %p150, %p151
      %p154 = scmp.ne.s32.totalorder %s139, %s153
      %p155 = scmp.eq.s32.totalorder %s19, 0
      %p156 = por %p154, %p155
      %s157 = ssub.s32 %s13, %s20
      %p158 = scmp.eq.s32.totalorder %s157, 0
      %s160 = sadd.s32 %s159, 1
      %s161 = scalar_select %p158, %s159, %s160
      %p164 = pneg %p158
      %p165 = scmp.eq.s32.totalorder %s13, 1
      %p166 = por %p164, %p165
      %p167 = scmp.ne.s32.totalorder %s159, %s162
      %p168 = scmp.eq.s32.totalorder %s13, 0
      %p169 = por %p167, %p168
      %p170 = scmp.ne.s32.totalorder %s159, %s162
      %p171 = scmp.eq.s32.totalorder %s18, 1
      %p172 = por %p170, %p171
      %p173 = scmp.ne.s32.totalorder %s162, %s163
      %p174 = scmp.eq.s32.totalorder %s18, 0
      %p175 = por %p173, %p174
      %p176 = scmp.ne.s32.totalorder %s162, %s163
      %p177 = scmp.eq.s32.totalorder %s19, 1
      %p178 = por %p176, %p177
      %p180 = scmp.ne.s32.totalorder %s163, %s179
      %p181 = scmp.eq.s32.totalorder %s19, 0
      %p182 = por %p180, %p181
      %p183 = scmp.le.s32.totalorder 1, %s13
      %p184 = scmp.lt.s32.totalorder %s13, 3
      %p185 = pnand %p183, %p184
      %p186 = pneg %p185
      // Predicated region
      $region9: #{transformer_decoder_wrapper_forward.14} parent=5 // pred_check
        _
      $region10: #{transformer_decoder_wrapper_forward.14} parent=5 // pred_check_branch
        %188 = sbr.rel (%p185) target = $region12
      $region11: #{transformer_decoder_wrapper_forward.14} parent=5 // pred_region
        %s189 = ssub.s32 %s13, 1
        // Predicated region
        $region13: #{transformer_decoder_wrapper_forward.14} parent=11 // pred_check
          %p190 = pneg %p86
        $region14: #{transformer_decoder_wrapper_forward.14} parent=11 // pred_check_branch
          %192 = sbr.rel (%p190) target = $region16
        $region15: #{transformer_decoder_wrapper_forward.14} parent=11 // pred_region
          %194 = vsyncadd [#allocation5], 0
          %s195 = sshll.u32 %s2, 4
          %s196 = int_to_ptr.hbm [resolvable:$true] %s195
          %s197 = sshll.u32 [#allocation4], 4
          %s198 = int_to_ptr.vmem [resolvable:$true] %s197
          %203 = dma.hbm_to_vmem [thread:$0]  %s196, 512, %s198, [#allocation5], 128, 128, 8
        $region16: #{transformer_decoder_wrapper_forward.14} parent=11 // pred_fallthru
          _
        // Predicated region
        $region17: #{transformer_decoder_wrapper_forward.14} parent=11 // pred_check
          %p204 = pneg %p107
        $region18: #{transformer_decoder_wrapper_forward.14} parent=11 // pred_check_branch
          %206 = sbr.rel (%p204) target = $region20
        $region19: #{transformer_decoder_wrapper_forward.14} parent=11 // pred_region
          _
        $region20: #{transformer_decoder_wrapper_forward.14} parent=11 // pred_fallthru
          _
        // Predicated region
        $region21: #{transformer_decoder_wrapper_forward.14} parent=11 // pred_check
          %p207 = pneg %p128
        $region22: #{transformer_decoder_wrapper_forward.14} parent=11 // pred_check_branch
          %209 = sbr.rel (%p207) target = $region24
        $region23: #{transformer_decoder_wrapper_forward.14} parent=11 // pred_region
          _
        $region24: #{transformer_decoder_wrapper_forward.14} parent=11 // pred_fallthru
          _
        // Predicated region
        $region25: #{transformer_decoder_wrapper_forward.14} parent=11 // pred_check
          %p210 = pneg %p149
        $region26: #{transformer_decoder_wrapper_forward.14} parent=11 // pred_check_branch
          %212 = sbr.rel (%p210) target = $region28
        $region27: #{transformer_decoder_wrapper_forward.14} parent=11 // pred_region
          _
        $region28: #{transformer_decoder_wrapper_forward.14} parent=11 // pred_fallthru
          _
      $region12: #{transformer_decoder_wrapper_forward.14} parent=5 // pred_fallthru
        _
      %p213 = scmp.lt.s32.totalorder %s13, 2
      // Predicated region
      $region29: #{transformer_decoder_wrapper_forward.14} parent=5 // pred_check
        %p214 = pneg %p213
      $region30: #{transformer_decoder_wrapper_forward.14} parent=5 // pred_check_branch
        %216 = sbr.rel (%p214) target = $region32
      $region31: #{transformer_decoder_wrapper_forward.14} parent=5 // pred_region
        // Predicated region
        $region33: #{transformer_decoder_wrapper_forward.14} parent=31 // pred_check
          %p217 = pneg %p33
        $region34: #{transformer_decoder_wrapper_forward.14} parent=31 // pred_check_branch
          %219 = sbr.rel (%p217) target = $region36
        $region35: #{transformer_decoder_wrapper_forward.14} parent=31 // pred_region
          %s220 = sand.u32 %s23, 1
          %s221 = sand.u32 %s23, 1
          %s222 = smul.addr %s221, 8
          %s223 = scalar_lea.vmem [#allocation2], %s222
          %s224 = scalar_lea.vmem %s0, %s13
          // Predicated region
          $region37: #{transformer_decoder_wrapper_forward.14} parent=35 // pred_check
            _
          $region38: #{transformer_decoder_wrapper_forward.14} parent=35 // pred_check_branch
            %226 = sbr.rel (0) target = $region40
          $region39: #{transformer_decoder_wrapper_forward.14} parent=35 // pred_region
            // Predicated region
            $region41: #{transformer_decoder_wrapper_forward.14} parent=39 // pred_check
              _
            $region42: #{transformer_decoder_wrapper_forward.14} parent=39 // pred_check_branch
              %228 = sbr.rel target = $region44
            $region43: #{transformer_decoder_wrapper_forward.14} parent=39 // pred_region
              // Predicated region
              $region56: #{transformer_decoder_wrapper_forward.14} parent=43 // pred_check
                _
              $region57: #{transformer_decoder_wrapper_forward.14} parent=43 // pred_check_branch
                %258 = sbr.rel (0) target = $region59
              $region58: #{transformer_decoder_wrapper_forward.14} parent=43 // pred_region
                loop: start=0, step=1, limit=1
                $region60: #{transformer_decoder_wrapper_forward.14} parent=58 // loop_pre_header
                  _
                $region61: #{transformer_decoder_wrapper_forward.14} parent=58 // loop_header
                  %s260 = sphi 0, %s264
                  %p261 = scmp.ge.s32.totalorder %s260, 1
                  %s265 = sphi %s224, %s224
                  %s266 = sphi %s223, %s223
                $region62: #{transformer_decoder_wrapper_forward.14} parent=58 // loop_header_branch
                  %263 = sbr.rel (%p261) target = $region66
                $region63: #{transformer_decoder_wrapper_forward.14} parent=58 // loop_body
                  _
                $region64: #{transformer_decoder_wrapper_forward.14} parent=58 // loop_footer
                  %s264 = sadd.s32 1, %s260
                $region65: #{transformer_decoder_wrapper_forward.14} parent=58 // loop_footer_branch
                  %259 = sbr.rel target = $region61
                $region66: #{transformer_decoder_wrapper_forward.14} parent=58 // loop_exit
                  _
                %s268 = ssub.s32 2, 1
                loop: start=0, step=1, limit=1
                $region67: #{transformer_decoder_wrapper_forward.14} parent=58 // loop_pre_header
                  _
                $region68: #{transformer_decoder_wrapper_forward.14} parent=58 // loop_header
                  %s270 = sphi 0, %s274
                  %p271 = scmp.ge.s32.totalorder %s270, 1
                  %s275 = sphi %s224, %s224
                  %s276 = sphi %s223, %s223
                $region69: #{transformer_decoder_wrapper_forward.14} parent=58 // loop_header_branch
                  %273 = sbr.rel (%p271) target = $region73
                $region70: #{transformer_decoder_wrapper_forward.14} parent=58 // loop_body
                  %v277 = vld [vmem:[%s275] sm:%s268]
                  %278 = vst [vmem:[%s276] sm:%s268] %v277
                  %v279 = vld [vmem:[%s275 + $0x2] sm:%s268]
                  %280 = vst [vmem:[%s276 + $0x1] sm:%s268] %v279
                  %v281 = vld [vmem:[%s275 + $0x4] sm:%s268]
                  %282 = vst [vmem:[%s276 + $0x2] sm:%s268] %v281
                  %v283 = vld [vmem:[%s275 + $0x6] sm:%s268]
                  %284 = vst [vmem:[%s276 + $0x3] sm:%s268] %v283
                  %v285 = vld [vmem:[%s275 + $0x8] sm:%s268]
                  %286 = vst [vmem:[%s276 + $0x4] sm:%s268] %v285
                  %v287 = vld [vmem:[%s275 + $0xa] sm:%s268]
                  %288 = vst [vmem:[%s276 + $0x5] sm:%s268] %v287
                  %v289 = vld [vmem:[%s275 + $0xc] sm:%s268]
                  %290 = vst [vmem:[%s276 + $0x6] sm:%s268] %v289
                  %v291 = vld [vmem:[%s275 + $0xe] sm:%s268]
                  %292 = vst [vmem:[%s276 + $0x7] sm:%s268] %v291
                $region71: #{transformer_decoder_wrapper_forward.14} parent=58 // loop_footer
                  %s274 = sadd.s32 1, %s270
                $region72: #{transformer_decoder_wrapper_forward.14} parent=58 // loop_footer_branch
                  %269 = sbr.rel target = $region68
                $region73: #{transformer_decoder_wrapper_forward.14} parent=58 // loop_exit
                  _
              $region59: #{transformer_decoder_wrapper_forward.14} parent=43 // pred_fallthru
                _
            $region44: #{transformer_decoder_wrapper_forward.14} parent=39 // pred_fallthru
              _
            // Predicated region
            $region45: #{transformer_decoder_wrapper_forward.14} parent=39 // pred_check
              _
            $region46: #{transformer_decoder_wrapper_forward.14} parent=39 // pred_check_branch
              %230 = sbr.rel (0) target = $region48
            $region47: #{transformer_decoder_wrapper_forward.14} parent=39 // pred_region
              %s232 = ssub.s32 2, 1
              loop: start=0, step=1, limit=1
              $region49: #{transformer_decoder_wrapper_forward.14} parent=47 // loop_pre_header
                _
              $region50: #{transformer_decoder_wrapper_forward.14} parent=47 // loop_header
                %s234 = sphi 0, %s238
                %p235 = scmp.ge.s32.totalorder %s234, 1
                %s239 = sphi %s224, %s224
                %s240 = sphi %s223, %s223
              $region51: #{transformer_decoder_wrapper_forward.14} parent=47 // loop_header_branch
                %237 = sbr.rel (%p235) target = $region55
              $region52: #{transformer_decoder_wrapper_forward.14} parent=47 // loop_body
                %v241 = vld [vmem:[%s239] sm:%s232]
                %242 = vst [vmem:[%s240] sm:%s232] %v241
                %v243 = vld [vmem:[%s239 + $0x2] sm:%s232]
                %244 = vst [vmem:[%s240 + $0x1] sm:%s232] %v243
                %v245 = vld [vmem:[%s239 + $0x4] sm:%s232]
                %246 = vst [vmem:[%s240 + $0x2] sm:%s232] %v245
                %v247 = vld [vmem:[%s239 + $0x6] sm:%s232]
                %248 = vst [vmem:[%s240 + $0x3] sm:%s232] %v247
                %v249 = vld [vmem:[%s239 + $0x8] sm:%s232]
                %250 = vst [vmem:[%s240 + $0x4] sm:%s232] %v249
                %v251 = vld [vmem:[%s239 + $0xa] sm:%s232]
                %252 = vst [vmem:[%s240 + $0x5] sm:%s232] %v251
                %v253 = vld [vmem:[%s239 + $0xc] sm:%s232]
                %254 = vst [vmem:[%s240 + $0x6] sm:%s232] %v253
                %v255 = vld [vmem:[%s239 + $0xe] sm:%s232]
                %256 = vst [vmem:[%s240 + $0x7] sm:%s232] %v255
              $region53: #{transformer_decoder_wrapper_forward.14} parent=47 // loop_footer
                %s238 = sadd.s32 1, %s234
              $region54: #{transformer_decoder_wrapper_forward.14} parent=47 // loop_footer_branch
                %233 = sbr.rel target = $region50
              $region55: #{transformer_decoder_wrapper_forward.14} parent=47 // loop_exit
                _
            $region48: #{transformer_decoder_wrapper_forward.14} parent=39 // pred_fallthru
              _
          $region40: #{transformer_decoder_wrapper_forward.14} parent=35 // pred_fallthru
            _
          %293 = vnop
        $region36: #{transformer_decoder_wrapper_forward.14} parent=31 // pred_fallthru
          _
        // Predicated region
        $region74: #{transformer_decoder_wrapper_forward.14} parent=31 // pred_check
          %p294 = pneg %p59
        $region75: #{transformer_decoder_wrapper_forward.14} parent=31 // pred_check_branch
          %296 = sbr.rel (%p294) target = $region77
        $region76: #{transformer_decoder_wrapper_forward.14} parent=31 // pred_region
          %s297 = sand.u32 %s49, 1
          %s298 = sand.u32 %s49, 1
          %s299 = smul.addr %s298, 8
          %s300 = scalar_lea.vmem [#allocation3], %s299
          %s301 = scalar_lea.vmem %s1, %s13
          // Predicated region
          $region78: #{transformer_decoder_wrapper_forward.14} parent=76 // pred_check
            _
          $region79: #{transformer_decoder_wrapper_forward.14} parent=76 // pred_check_branch
            %303 = sbr.rel (0) target = $region81
          $region80: #{transformer_decoder_wrapper_forward.14} parent=76 // pred_region
            // Predicated region
            $region82: #{transformer_decoder_wrapper_forward.14} parent=80 // pred_check
              _
            $region83: #{transformer_decoder_wrapper_forward.14} parent=80 // pred_check_branch
              %305 = sbr.rel target = $region85
            $region84: #{transformer_decoder_wrapper_forward.14} parent=80 // pred_region
              // Predicated region
              $region97: #{transformer_decoder_wrapper_forward.14} parent=84 // pred_check
                _
              $region98: #{transformer_decoder_wrapper_forward.14} parent=84 // pred_check_branch
                %335 = sbr.rel (0) target = $region100
              $region99: #{transformer_decoder_wrapper_forward.14} parent=84 // pred_region
                loop: start=0, step=1, limit=1
                $region101: #{transformer_decoder_wrapper_forward.14} parent=99 // loop_pre_header
                  _
                $region102: #{transformer_decoder_wrapper_forward.14} parent=99 // loop_header
                  %s337 = sphi 0, %s341
                  %p338 = scmp.ge.s32.totalorder %s337, 1
                  %s342 = sphi %s301, %s301
                  %s343 = sphi %s300, %s300
                $region103: #{transformer_decoder_wrapper_forward.14} parent=99 // loop_header_branch
                  %340 = sbr.rel (%p338) target = $region107
                $region104: #{transformer_decoder_wrapper_forward.14} parent=99 // loop_body
                  _
                $region105: #{transformer_decoder_wrapper_forward.14} parent=99 // loop_footer
                  %s341 = sadd.s32 1, %s337
                $region106: #{transformer_decoder_wrapper_forward.14} parent=99 // loop_footer_branch
                  %336 = sbr.rel target = $region102
                $region107: #{transformer_decoder_wrapper_forward.14} parent=99 // loop_exit
                  _
                %s345 = ssub.s32 2, 1
                loop: start=0, step=1, limit=1
                $region108: #{transformer_decoder_wrapper_forward.14} parent=99 // loop_pre_header
                  _
                $region109: #{transformer_decoder_wrapper_forward.14} parent=99 // loop_header
                  %s347 = sphi 0, %s351
                  %p348 = scmp.ge.s32.totalorder %s347, 1
                  %s352 = sphi %s301, %s301
                  %s353 = sphi %s300, %s300
                $region110: #{transformer_decoder_wrapper_forward.14} parent=99 // loop_header_branch
                  %350 = sbr.rel (%p348) target = $region114
                $region111: #{transformer_decoder_wrapper_forward.14} parent=99 // loop_body
                  %v354 = vld [vmem:[%s352] sm:%s345]
                  %355 = vst [vmem:[%s353] sm:%s345] %v354
                  %v356 = vld [vmem:[%s352 + $0x2] sm:%s345]
                  %357 = vst [vmem:[%s353 + $0x1] sm:%s345] %v356
                  %v358 = vld [vmem:[%s352 + $0x4] sm:%s345]
                  %359 = vst [vmem:[%s353 + $0x2] sm:%s345] %v358
                  %v360 = vld [vmem:[%s352 + $0x6] sm:%s345]
                  %361 = vst [vmem:[%s353 + $0x3] sm:%s345] %v360
                  %v362 = vld [vmem:[%s352 + $0x8] sm:%s345]
                  %363 = vst [vmem:[%s353 + $0x4] sm:%s345] %v362
                  %v364 = vld [vmem:[%s352 + $0xa] sm:%s345]
                  %365 = vst [vmem:[%s353 + $0x5] sm:%s345] %v364
                  %v366 = vld [vmem:[%s352 + $0xc] sm:%s345]
                  %367 = vst [vmem:[%s353 + $0x6] sm:%s345] %v366
                  %v368 = vld [vmem:[%s352 + $0xe] sm:%s345]
                  %369 = vst [vmem:[%s353 + $0x7] sm:%s345] %v368
                $region112: #{transformer_decoder_wrapper_forward.14} parent=99 // loop_footer
                  %s351 = sadd.s32 1, %s347
                $region113: #{transformer_decoder_wrapper_forward.14} parent=99 // loop_footer_branch
                  %346 = sbr.rel target = $region109
                $region114: #{transformer_decoder_wrapper_forward.14} parent=99 // loop_exit
                  _
              $region100: #{transformer_decoder_wrapper_forward.14} parent=84 // pred_fallthru
                _
            $region85: #{transformer_decoder_wrapper_forward.14} parent=80 // pred_fallthru
              _
            // Predicated region
            $region86: #{transformer_decoder_wrapper_forward.14} parent=80 // pred_check
              _
            $region87: #{transformer_decoder_wrapper_forward.14} parent=80 // pred_check_branch
              %307 = sbr.rel (0) target = $region89
            $region88: #{transformer_decoder_wrapper_forward.14} parent=80 // pred_region
              %s309 = ssub.s32 2, 1
              loop: start=0, step=1, limit=1
              $region90: #{transformer_decoder_wrapper_forward.14} parent=88 // loop_pre_header
                _
              $region91: #{transformer_decoder_wrapper_forward.14} parent=88 // loop_header
                %s311 = sphi 0, %s315
                %p312 = scmp.ge.s32.totalorder %s311, 1
                %s316 = sphi %s301, %s301
                %s317 = sphi %s300, %s300
              $region92: #{transformer_decoder_wrapper_forward.14} parent=88 // loop_header_branch
                %314 = sbr.rel (%p312) target = $region96
              $region93: #{transformer_decoder_wrapper_forward.14} parent=88 // loop_body
                %v318 = vld [vmem:[%s316] sm:%s309]
                %319 = vst [vmem:[%s317] sm:%s309] %v318
                %v320 = vld [vmem:[%s316 + $0x2] sm:%s309]
                %321 = vst [vmem:[%s317 + $0x1] sm:%s309] %v320
                %v322 = vld [vmem:[%s316 + $0x4] sm:%s309]
                %323 = vst [vmem:[%s317 + $0x2] sm:%s309] %v322
                %v324 = vld [vmem:[%s316 + $0x6] sm:%s309]
                %325 = vst [vmem:[%s317 + $0x3] sm:%s309] %v324
                %v326 = vld [vmem:[%s316 + $0x8] sm:%s309]
                %327 = vst [vmem:[%s317 + $0x4] sm:%s309] %v326
                %v328 = vld [vmem:[%s316 + $0xa] sm:%s309]
                %329 = vst [vmem:[%s317 + $0x5] sm:%s309] %v328
                %v330 = vld [vmem:[%s316 + $0xc] sm:%s309]
                %331 = vst [vmem:[%s317 + $0x6] sm:%s309] %v330
                %v332 = vld [vmem:[%s316 + $0xe] sm:%s309]
                %333 = vst [vmem:[%s317 + $0x7] sm:%s309] %v332
              $region94: #{transformer_decoder_wrapper_forward.14} parent=88 // loop_footer
                %s315 = sadd.s32 1, %s311
              $region95: #{transformer_decoder_wrapper_forward.14} parent=88 // loop_footer_branch
                %310 = sbr.rel target = $region91
              $region96: #{transformer_decoder_wrapper_forward.14} parent=88 // loop_exit
                _
            $region89: #{transformer_decoder_wrapper_forward.14} parent=80 // pred_fallthru
              _
          $region81: #{transformer_decoder_wrapper_forward.14} parent=76 // pred_fallthru
            _
          %370 = vnop
        $region77: #{transformer_decoder_wrapper_forward.14} parent=31 // pred_fallthru
          _
      $region32: #{transformer_decoder_wrapper_forward.14} parent=5 // pred_fallthru
        _
      %p371 = scmp.le.s32.totalorder 1, %s13
      %p372 = scmp.lt.s32.totalorder %s13, 3
      %p373 = pnand %p371, %p372
      %p374 = pneg %p373
      // Predicated region
      $region115: #{transformer_decoder_wrapper_forward.14} parent=5 // pred_check
        _
      $region116: #{transformer_decoder_wrapper_forward.14} parent=5 // pred_check_branch
        %376 = sbr.rel (%p373) target = $region118
      $region117: #{transformer_decoder_wrapper_forward.14} parent=5 // pred_region
        %s377 = ssub.s32 %s13, 1
        %s378 = sand.u32 %s26, 1
        %s379 = sand.u32 %s26, 1
        %s380 = smul.addr %s379, 8
        %s381 = scalar_lea.vmem [#allocation2], %s380
        // Predicated region
        $region119: #{transformer_decoder_wrapper_forward.14} parent=117 // pred_check
          %p382 = pneg %p39
        $region120: #{transformer_decoder_wrapper_forward.14} parent=117 // pred_check_branch
          %384 = sbr.rel (%p382) target = $region122
        $region121: #{transformer_decoder_wrapper_forward.14} parent=117 // pred_region
          _
        $region122: #{transformer_decoder_wrapper_forward.14} parent=117 // pred_fallthru
          _
        %s385 = sand.u32 %s52, 1
        %s386 = sand.u32 %s52, 1
        %s387 = smul.addr %s386, 8
        %s388 = scalar_lea.vmem [#allocation3], %s387
        // Predicated region
        $region123: #{transformer_decoder_wrapper_forward.14} parent=117 // pred_check
          %p389 = pneg %p65
        $region124: #{transformer_decoder_wrapper_forward.14} parent=117 // pred_check_branch
          %391 = sbr.rel (%p389) target = $region126
        $region125: #{transformer_decoder_wrapper_forward.14} parent=117 // pred_region
          _
        $region126: #{transformer_decoder_wrapper_forward.14} parent=117 // pred_fallthru
          _
        // Predicated region
        $region127: #{transformer_decoder_wrapper_forward.14} parent=117 // pred_check
          %p392 = pneg %p86
        $region128: #{transformer_decoder_wrapper_forward.14} parent=117 // pred_check_branch
          %394 = sbr.rel (%p392) target = $region130
        $region129: #{transformer_decoder_wrapper_forward.14} parent=117 // pred_region
          %396 = dma.done [#allocation5], 512
        $region130: #{transformer_decoder_wrapper_forward.14} parent=117 // pred_fallthru
          _
        %s397 = sand.u32 %s26, 1
        %s398 = sand.u32 %s26, 1
        %s399 = smul.addr %s398, 8
        %s400 = scalar_lea.vmem [#allocation2], %s399
        %p401 = pneg %p39
        %p402 = pneg %p36
        %s403 = sand.u32 %s52, 1
        %s404 = sand.u32 %s52, 1
        %s405 = smul.addr %s404, 8
        %s406 = scalar_lea.vmem [#allocation3], %s405
        %p407 = pneg %p65
        %p408 = pneg %p62
        %p409 = pneg %p86
        %p410 = pneg %p83
        %p411 = pneg %p107
        %p412 = pneg %p104
        %p413 = pneg %p128
        %p414 = pneg %p125
        %p415 = pneg %p149
        %p416 = pneg %p146
        %p417 = pneg %p175
        %p418 = pneg %p172
        %s419 = sand.u32 %s162, 1
        %s420 = sand.u32 %s162, 1
        %s421 = smul.addr %s420, 8
        %s422 = scalar_lea.vmem [#allocation6], %s421
        %v423 = vld [vmem:[%s381] sm:$0x1]
        %v424 = vld [vmem:[%s381 + $0x1] sm:$0x1]
        %v425 = vld [vmem:[%s381 + $0x2] sm:$0x1]
        %v426 = vld [vmem:[%s381 + $0x3] sm:$0x1]
        %v427 = vld [vmem:[%s381 + $0x4] sm:$0x1]
        %v428 = vld [vmem:[%s381 + $0x5] sm:$0x1]
        %v429 = vld [vmem:[%s381 + $0x6] sm:$0x1]
        %v430 = vld [vmem:[%s381 + $0x7] sm:$0x1]
        %v431 = vld [vmem:[%s388] sm:$0x1]
        %v432 = vld [vmem:[%s388 + $0x1] sm:$0x1]
        %v433 = vld [vmem:[%s388 + $0x2] sm:$0x1]
        %v434 = vld [vmem:[%s388 + $0x3] sm:$0x1]
        %v435 = vld [vmem:[%s388 + $0x4] sm:$0x1]
        %v436 = vld [vmem:[%s388 + $0x5] sm:$0x1]
        %v437 = vld [vmem:[%s388 + $0x6] sm:$0x1]
        %v438 = vld [vmem:[%s388 + $0x7] sm:$0x1]
        %v439 = vld [vmem:[#allocation4] sm:$0xff]
        %v440 = vld [vmem:[#allocation4 + $0x8] sm:$0xff]
        %v441 = vld [vmem:[#allocation4 + $0x10] sm:$0xff]
        %v442 = vld [vmem:[#allocation4 + $0x18] sm:$0xff]
        %v443 = vld [vmem:[%s3] sm:$0x1]
        %v444 = vld [vmem:[%s4] sm:$0x1]
        %v445 = vld [vmem:[%s5] sm:$0x1]
        %v446 = vmul.f32 %v423, 0.35355338
        %v447 = vmul.f32 %v424, 0.35355338
        %v448 = vmul.f32 %v425, 0.35355338
        %v449 = vmul.f32 %v426, 0.35355338
        %v450 = vmul.f32 %v427, 0.35355338
        %v451 = vmul.f32 %v428, 0.35355338
        %v452 = vmul.f32 %v429, 0.35355338
        %v453 = vmul.f32 %v430, 0.35355338
        %462 = vst [vmem:[#allocation1] ss:$9 sm:$0xff] %v446
        %s463 = scalar_lea.vmem [#allocation1], 1
        %464 = vst [vmem:[%s463] ss:$9 sm:$0xff] %v447
        %s465 = scalar_lea.vmem [#allocation1], 2
        %466 = vst [vmem:[%s465] ss:$9 sm:$0xff] %v448
        %s467 = scalar_lea.vmem [#allocation1], 3
        %468 = vst [vmem:[%s467] ss:$9 sm:$0xff] %v449
        %s469 = scalar_lea.vmem [#allocation1], 4
        %470 = vst [vmem:[%s469] ss:$9 sm:$0xff] %v450
        %s471 = scalar_lea.vmem [#allocation1], 5
        %472 = vst [vmem:[%s471] ss:$9 sm:$0xff] %v451
        %s473 = scalar_lea.vmem [#allocation1], 6
        %474 = vst [vmem:[%s473] ss:$9 sm:$0xff] %v452
        %s475 = scalar_lea.vmem [#allocation1], 7
        %476 = vst [vmem:[%s475] ss:$9 sm:$0xff] %v453
        %v477 = vld [vmem:[#allocation1] sm:$0xff]
        %486 = vst [vmem:[#allocation1] ss:$9 sm:$0xff] %v423
        %s487 = scalar_lea.vmem [#allocation1], 1
        %488 = vst [vmem:[%s487] ss:$9 sm:$0xff] %v424
        %s489 = scalar_lea.vmem [#allocation1], 2
        %490 = vst [vmem:[%s489] ss:$9 sm:$0xff] %v425
        %s491 = scalar_lea.vmem [#allocation1], 3
        %492 = vst [vmem:[%s491] ss:$9 sm:$0xff] %v426
        %s493 = scalar_lea.vmem [#allocation1], 4
        %494 = vst [vmem:[%s493] ss:$9 sm:$0xff] %v427
        %s495 = scalar_lea.vmem [#allocation1], 5
        %496 = vst [vmem:[%s495] ss:$9 sm:$0xff] %v428
        %s497 = scalar_lea.vmem [#allocation1], 6
        %498 = vst [vmem:[%s497] ss:$9 sm:$0xff] %v429
        %s499 = scalar_lea.vmem [#allocation1], 7
        %500 = vst [vmem:[%s499] ss:$9 sm:$0xff] %v430
        %v501 = vld [vmem:[#allocation1] sm:$0xff]
        %502 = vrot.lane.b32.xlu0 %v501, 96
        %v503 = vpop.permute.xlu0 %502
        %vm504 = vcmask 64512
        %v505 = vsel %vm504, %v477, 0
        %v507 = vsel %vm504, %v503, 0
        %509 = vmatpush.xpose.msra.mxu0 0.0
        %510 = vmatpush.xpose.msra.mxu0 0.0
        %511 = vmatpush.xpose.msra.mxu0 0.0
        %512 = vmatpush.xpose.msra.mxu0 0.0
        %513 = vmatpush.xpose.msra.mxu0 0.0
        %514 = vmatpush.xpose.msra.mxu0 0.0
        %515 = vmatpush.xpose.msra.mxu0 0.0
        %516 = vmatpush.xpose.msra.mxu0 0.0
        %517 = vmatpush.xpose.msra.mxu0 0.0
        %518 = vmatpush.xpose.msra.mxu0 0.0
        %519 = vmatpush.xpose.msra.mxu0 0.0
        %520 = vmatpush.xpose.msra.mxu0 0.0
        %521 = vmatpush.xpose.msra.mxu0 0.0
        %522 = vmatpush.xpose.msra.mxu0 0.0
        %523 = vmatpush.xpose.msra.mxu0 0.0
        %524 = vmatpush.xpose.msra.mxu0 %v507
        %525 = vmatmul.f32.gmra.mxu0 %v505
        %v526 = vpop.f32.mrf.mxu0
        %v527 = vadd.f32 0.0, %v526
        %528 = vdwg.mxu0
        %v529 = vsel %vm504, %v527, -inf
        %530 = vmax.xlane.f32.xlu0 %v529
        %v531 = vpop.xlane.xlu0 %530
        %v532 = vsub.f32 %v527, %v531
        %v533 = vmul.f32 %v532, 1.442695
        %v534 = vpow.pop %v533
        %v535 = vsel %vm504, %v534, 0.0
        %536 = vadd.xlane.f32.xlu0 %v535
        %v537 = vpop.xlane.xlu0 %536
        %v538 = vrcp.pop %v537
        %v539 = vmul.f32 %v534, %v538
        %540 = vst [vmem:[#allocation1] ss:$9 sm:$0xff] %v423
        %s541 = scalar_lea.vmem [#allocation1], 1
        %542 = vst [vmem:[%s541] ss:$9 sm:$0xff] %v424
        %s543 = scalar_lea.vmem [#allocation1], 2
        %544 = vst [vmem:[%s543] ss:$9 sm:$0xff] %v425
        %s545 = scalar_lea.vmem [#allocation1], 3
        %546 = vst [vmem:[%s545] ss:$9 sm:$0xff] %v426
        %s547 = scalar_lea.vmem [#allocation1], 4
        %548 = vst [vmem:[%s547] ss:$9 sm:$0xff] %v427
        %s549 = scalar_lea.vmem [#allocation1], 5
        %550 = vst [vmem:[%s549] ss:$9 sm:$0xff] %v428
        %s551 = scalar_lea.vmem [#allocation1], 6
        %552 = vst [vmem:[%s551] ss:$9 sm:$0xff] %v429
        %s553 = scalar_lea.vmem [#allocation1], 7
        %554 = vst [vmem:[%s553] ss:$9 sm:$0xff] %v430
        %v555 = vld [vmem:[#allocation1] sm:$0xff]
        %556 = vrot.lane.b32.xlu0 %v555, 64
        %v557 = vpop.permute.xlu0 %556
        %v560 = vsel %vm504, %v539, 0
        %562 = vmatpush.msra.mxu0 0.0
        %563 = vmatpush.msra.mxu0 0.0
        %564 = vmatpush.msra.mxu0 0.0
        %565 = vmatpush.msra.mxu0 0.0
        %566 = vmatpush.msra.mxu0 0.0
        %567 = vmatpush.msra.mxu0 0.0
        %568 = vmatpush.msra.mxu0 0.0
        %569 = vmatpush.msra.mxu0 0.0
        %570 = vmatpush.msra.mxu0 0.0
        %571 = vmatpush.msra.mxu0 0.0
        %572 = vmatpush.msra.mxu0 0.0
        %573 = vmatpush.msra.mxu0 0.0
        %574 = vmatpush.msra.mxu0 0.0
        %575 = vmatpush.msra.mxu0 0.0
        %576 = vmatpush.msra.mxu0 0.0
        %577 = vmatpush.msra.mxu0 %v557
        %578 = vmatmul.f32.gmra.mxu0 %v560
        %v579 = vpop.f32.mrf.mxu0
        %v580 = vadd.f32 0.0, %v579
        %581 = vdwg.mxu0
        %582 = vst [vmem:[#allocation1] ss:$9 sm:$0xff] %v446
        %s583 = scalar_lea.vmem [#allocation1], 1
        %584 = vst [vmem:[%s583] ss:$9 sm:$0xff] %v447
        %s585 = scalar_lea.vmem [#allocation1], 2
        %586 = vst [vmem:[%s585] ss:$9 sm:$0xff] %v448
        %s587 = scalar_lea.vmem [#allocation1], 3
        %588 = vst [vmem:[%s587] ss:$9 sm:$0xff] %v449
        %s589 = scalar_lea.vmem [#allocation1], 4
        %590 = vst [vmem:[%s589] ss:$9 sm:$0xff] %v450
        %s591 = scalar_lea.vmem [#allocation1], 5
        %592 = vst [vmem:[%s591] ss:$9 sm:$0xff] %v451
        %s593 = scalar_lea.vmem [#allocation1], 6
        %594 = vst [vmem:[%s593] ss:$9 sm:$0xff] %v452
        %s595 = scalar_lea.vmem [#allocation1], 7
        %596 = vst [vmem:[%s595] ss:$9 sm:$0xff] %v453
        %v597 = vld [vmem:[#allocation1] sm:$0xff]
        %598 = vrot.lane.b32.xlu0 %v597, 120
        %v599 = vpop.permute.xlu0 %598
        %600 = vst [vmem:[#allocation1] ss:$9 sm:$0xff] %v423
        %s601 = scalar_lea.vmem [#allocation1], 1
        %602 = vst [vmem:[%s601] ss:$9 sm:$0xff] %v424
        %s603 = scalar_lea.vmem [#allocation1], 2
        %604 = vst [vmem:[%s603] ss:$9 sm:$0xff] %v425
        %s605 = scalar_lea.vmem [#allocation1], 3
        %606 = vst [vmem:[%s605] ss:$9 sm:$0xff] %v426
        %s607 = scalar_lea.vmem [#allocation1], 4
        %608 = vst [vmem:[%s607] ss:$9 sm:$0xff] %v427
        %s609 = scalar_lea.vmem [#allocation1], 5
        %610 = vst [vmem:[%s609] ss:$9 sm:$0xff] %v428
        %s611 = scalar_lea.vmem [#allocation1], 6
        %612 = vst [vmem:[%s611] ss:$9 sm:$0xff] %v429
        %s613 = scalar_lea.vmem [#allocation1], 7
        %614 = vst [vmem:[%s613] ss:$9 sm:$0xff] %v430
        %v615 = vld [vmem:[#allocation1] sm:$0xff]
        %616 = vrot.lane.b32.xlu0 %v615, 88
        %v617 = vpop.permute.xlu0 %616
        %v618 = vsel %vm504, %v599, 0
        %v620 = vsel %vm504, %v617, 0
        %622 = vmatpush.xpose.msra.mxu0 0.0
        %623 = vmatpush.xpose.msra.mxu0 0.0
        %624 = vmatpush.xpose.msra.mxu0 0.0
        %625 = vmatpush.xpose.msra.mxu0 0.0
        %626 = vmatpush.xpose.msra.mxu0 0.0
        %627 = vmatpush.xpose.msra.mxu0 0.0
        %628 = vmatpush.xpose.msra.mxu0 0.0
        %629 = vmatpush.xpose.msra.mxu0 0.0
        %630 = vmatpush.xpose.msra.mxu0 0.0
        %631 = vmatpush.xpose.msra.mxu0 0.0
        %632 = vmatpush.xpose.msra.mxu0 0.0
        %633 = vmatpush.xpose.msra.mxu0 0.0
        %634 = vmatpush.xpose.msra.mxu0 0.0
        %635 = vmatpush.xpose.msra.mxu0 0.0
        %636 = vmatpush.xpose.msra.mxu0 0.0
        %637 = vmatpush.xpose.msra.mxu0 %v620
        %638 = vmatmul.f32.gmra.mxu0 %v618
        %v639 = vpop.f32.mrf.mxu0
        %v640 = vadd.f32 0.0, %v639
        %641 = vdwg.mxu0
        %v642 = vsel %vm504, %v640, -inf
        %643 = vmax.xlane.f32.xlu0 %v642
        %v644 = vpop.xlane.xlu0 %643
        %v645 = vsub.f32 %v640, %v644
        %v646 = vmul.f32 %v645, 1.442695
        %v647 = vpow.pop %v646
        %v648 = vsel %vm504, %v647, 0.0
        %649 = vadd.xlane.f32.xlu0 %v648
        %v650 = vpop.xlane.xlu0 %649
        %v651 = vrcp.pop %v650
        %v652 = vmul.f32 %v647, %v651
        %653 = vst [vmem:[#allocation1] ss:$9 sm:$0xff] %v423
        %s654 = scalar_lea.vmem [#allocation1], 1
        %655 = vst [vmem:[%s654] ss:$9 sm:$0xff] %v424
        %s656 = scalar_lea.vmem [#allocation1], 2
        %657 = vst [vmem:[%s656] ss:$9 sm:$0xff] %v425
        %s658 = scalar_lea.vmem [#allocation1], 3
        %659 = vst [vmem:[%s658] ss:$9 sm:$0xff] %v426
        %s660 = scalar_lea.vmem [#allocation1], 4
        %661 = vst [vmem:[%s660] ss:$9 sm:$0xff] %v427
        %s662 = scalar_lea.vmem [#allocation1], 5
        %663 = vst [vmem:[%s662] ss:$9 sm:$0xff] %v428
        %s664 = scalar_lea.vmem [#allocation1], 6
        %665 = vst [vmem:[%s664] ss:$9 sm:$0xff] %v429
        %s666 = scalar_lea.vmem [#allocation1], 7
        %667 = vst [vmem:[%s666] ss:$9 sm:$0xff] %v430
        %v668 = vld [vmem:[#allocation1] sm:$0xff]
        %669 = vrot.lane.b32.xlu0 %v668, 56
        %v670 = vpop.permute.xlu0 %669
        %v673 = vsel %vm504, %v652, 0
        %675 = vmatpush.msra.mxu0 0.0
        %676 = vmatpush.msra.mxu0 0.0
        %677 = vmatpush.msra.mxu0 0.0
        %678 = vmatpush.msra.mxu0 0.0
        %679 = vmatpush.msra.mxu0 0.0
        %680 = vmatpush.msra.mxu0 0.0
        %681 = vmatpush.msra.mxu0 0.0
        %682 = vmatpush.msra.mxu0 0.0
        %683 = vmatpush.msra.mxu0 0.0
        %684 = vmatpush.msra.mxu0 0.0
        %685 = vmatpush.msra.mxu0 0.0
        %686 = vmatpush.msra.mxu0 0.0
        %687 = vmatpush.msra.mxu0 0.0
        %688 = vmatpush.msra.mxu0 0.0
        %689 = vmatpush.msra.mxu0 0.0
        %690 = vmatpush.msra.mxu0 %v670
        %691 = vmatmul.f32.gmra.mxu0 %v673
        %v692 = vpop.f32.mrf.mxu0
        %v693 = vadd.f32 0.0, %v692
        %694 = vdwg.mxu0
        %695 = vst [vmem:[#allocation1] ss:$9 sm:$0xff] %v446
        %s696 = scalar_lea.vmem [#allocation1], 1
        %697 = vst [vmem:[%s696] ss:$9 sm:$0xff] %v447
        %s698 = scalar_lea.vmem [#allocation1], 2
        %699 = vst [vmem:[%s698] ss:$9 sm:$0xff] %v448
        %s700 = scalar_lea.vmem [#allocation1], 3
        %701 = vst [vmem:[%s700] ss:$9 sm:$0xff] %v449
        %s702 = scalar_lea.vmem [#allocation1], 4
        %703 = vst [vmem:[%s702] ss:$9 sm:$0xff] %v450
        %s704 = scalar_lea.vmem [#allocation1], 5
        %705 = vst [vmem:[%s704] ss:$9 sm:$0xff] %v451
        %s706 = scalar_lea.vmem [#allocation1], 6
        %707 = vst [vmem:[%s706] ss:$9 sm:$0xff] %v452
        %s708 = scalar_lea.vmem [#allocation1], 7
        %709 = vst [vmem:[%s708] ss:$9 sm:$0xff] %v453
        %v710 = vld [vmem:[#allocation1] sm:$0xff]
        %711 = vrot.lane.b32.xlu0 %v710, 112
        %v712 = vpop.permute.xlu0 %711
        %713 = vst [vmem:[#allocation1] ss:$9 sm:$0xff] %v423
        %s714 = scalar_lea.vmem [#allocation1], 1
        %715 = vst [vmem:[%s714] ss:$9 sm:$0xff] %v424
        %s716 = scalar_lea.vmem [#allocation1], 2
        %717 = vst [vmem:[%s716] ss:$9 sm:$0xff] %v425
        %s718 = scalar_lea.vmem [#allocation1], 3
        %719 = vst [vmem:[%s718] ss:$9 sm:$0xff] %v426
        %s720 = scalar_lea.vmem [#allocation1], 4
        %721 = vst [vmem:[%s720] ss:$9 sm:$0xff] %v427
        %s722 = scalar_lea.vmem [#allocation1], 5
        %723 = vst [vmem:[%s722] ss:$9 sm:$0xff] %v428
        %s724 = scalar_lea.vmem [#allocation1], 6
        %725 = vst [vmem:[%s724] ss:$9 sm:$0xff] %v429
        %s726 = scalar_lea.vmem [#allocation1], 7
        %727 = vst [vmem:[%s726] ss:$9 sm:$0xff] %v430
        %v728 = vld [vmem:[#allocation1] sm:$0xff]
        %729 = vrot.lane.b32.xlu0 %v728, 80
        %v730 = vpop.permute.xlu0 %729
        %v731 = vsel %vm504, %v712, 0
        %v733 = vsel %vm504, %v730, 0
        %735 = vmatpush.xpose.msra.mxu0 0.0
        %736 = vmatpush.xpose.msra.mxu0 0.0
        %737 = vmatpush.xpose.msra.mxu0 0.0
        %738 = vmatpush.xpose.msra.mxu0 0.0
        %739 = vmatpush.xpose.msra.mxu0 0.0
        %740 = vmatpush.xpose.msra.mxu0 0.0
        %741 = vmatpush.xpose.msra.mxu0 0.0
        %742 = vmatpush.xpose.msra.mxu0 0.0
        %743 = vmatpush.xpose.msra.mxu0 0.0
        %744 = vmatpush.xpose.msra.mxu0 0.0
        %745 = vmatpush.xpose.msra.mxu0 0.0
        %746 = vmatpush.xpose.msra.mxu0 0.0
        %747 = vmatpush.xpose.msra.mxu0 0.0
        %748 = vmatpush.xpose.msra.mxu0 0.0
        %749 = vmatpush.xpose.msra.mxu0 0.0
        %750 = vmatpush.xpose.msra.mxu0 %v733
        %751 = vmatmul.f32.gmra.mxu0 %v731
        %v752 = vpop.f32.mrf.mxu0
        %v753 = vadd.f32 0.0, %v752
        %754 = vdwg.mxu0
        %v755 = vsel %vm504, %v753, -inf
        %756 = vmax.xlane.f32.xlu0 %v755
        %v757 = vpop.xlane.xlu0 %756
        %v758 = vsub.f32 %v753, %v757
        %v759 = vmul.f32 %v758, 1.442695
        %v760 = vpow.pop %v759
        %v761 = vsel %vm504, %v760, 0.0
        %762 = vadd.xlane.f32.xlu0 %v761
        %v763 = vpop.xlane.xlu0 %762
        %v764 = vrcp.pop %v763
        %v765 = vmul.f32 %v760, %v764
        %766 = vst [vmem:[#allocation1] ss:$9 sm:$0xff] %v423
        %s767 = scalar_lea.vmem [#allocation1], 1
        %768 = vst [vmem:[%s767] ss:$9 sm:$0xff] %v424
        %s769 = scalar_lea.vmem [#allocation1], 2
        %770 = vst [vmem:[%s769] ss:$9 sm:$0xff] %v425
        %s771 = scalar_lea.vmem [#allocation1], 3
        %772 = vst [vmem:[%s771] ss:$9 sm:$0xff] %v426
        %s773 = scalar_lea.vmem [#allocation1], 4
        %774 = vst [vmem:[%s773] ss:$9 sm:$0xff] %v427
        %s775 = scalar_lea.vmem [#allocation1], 5
        %776 = vst [vmem:[%s775] ss:$9 sm:$0xff] %v428
        %s777 = scalar_lea.vmem [#allocation1], 6
        %778 = vst [vmem:[%s777] ss:$9 sm:$0xff] %v429
        %s779 = scalar_lea.vmem [#allocation1], 7
        %780 = vst [vmem:[%s779] ss:$9 sm:$0xff] %v430
        %v781 = vld [vmem:[#allocation1] sm:$0xff]
        %782 = vrot.lane.b32.xlu0 %v781, 48
        %v783 = vpop.permute.xlu0 %782
        %v786 = vsel %vm504, %v765, 0
        %788 = vmatpush.msra.mxu0 0.0
        %789 = vmatpush.msra.mxu0 0.0
        %790 = vmatpush.msra.mxu0 0.0
        %791 = vmatpush.msra.mxu0 0.0
        %792 = vmatpush.msra.mxu0 0.0
        %793 = vmatpush.msra.mxu0 0.0
        %794 = vmatpush.msra.mxu0 0.0
        %795 = vmatpush.msra.mxu0 0.0
        %796 = vmatpush.msra.mxu0 0.0
        %797 = vmatpush.msra.mxu0 0.0
        %798 = vmatpush.msra.mxu0 0.0
        %799 = vmatpush.msra.mxu0 0.0
        %800 = vmatpush.msra.mxu0 0.0
        %801 = vmatpush.msra.mxu0 0.0
        %802 = vmatpush.msra.mxu0 0.0
        %803 = vmatpush.msra.mxu0 %v783
        %804 = vmatmul.f32.gmra.mxu0 %v786
        %v805 = vpop.f32.mrf.mxu0
        %v806 = vadd.f32 0.0, %v805
        %807 = vdwg.mxu0
        %808 = vst [vmem:[#allocation1] ss:$9 sm:$0xff] %v446
        %s809 = scalar_lea.vmem [#allocation1], 1
        %810 = vst [vmem:[%s809] ss:$9 sm:$0xff] %v447
        %s811 = scalar_lea.vmem [#allocation1], 2
        %812 = vst [vmem:[%s811] ss:$9 sm:$0xff] %v448
        %s813 = scalar_lea.vmem [#allocation1], 3
        %814 = vst [vmem:[%s813] ss:$9 sm:$0xff] %v449
        %s815 = scalar_lea.vmem [#allocation1], 4
        %816 = vst [vmem:[%s815] ss:$9 sm:$0xff] %v450
        %s817 = scalar_lea.vmem [#allocation1], 5
        %818 = vst [vmem:[%s817] ss:$9 sm:$0xff] %v451
        %s819 = scalar_lea.vmem [#allocation1], 6
        %820 = vst [vmem:[%s819] ss:$9 sm:$0xff] %v452
        %s821 = scalar_lea.vmem [#allocation1], 7
        %822 = vst [vmem:[%s821] ss:$9 sm:$0xff] %v453
        %v823 = vld [vmem:[#allocation1] sm:$0xff]
        %824 = vrot.lane.b32.xlu0 %v823, 104
        %v825 = vpop.permute.xlu0 %824
        %826 = vst [vmem:[#allocation1] ss:$9 sm:$0xff] %v423
        %s827 = scalar_lea.vmem [#allocation1], 1
        %828 = vst [vmem:[%s827] ss:$9 sm:$0xff] %v424
        %s829 = scalar_lea.vmem [#allocation1], 2
        %830 = vst [vmem:[%s829] ss:$9 sm:$0xff] %v425
        %s831 = scalar_lea.vmem [#allocation1], 3
        %832 = vst [vmem:[%s831] ss:$9 sm:$0xff] %v426
        %s833 = scalar_lea.vmem [#allocation1], 4
        %834 = vst [vmem:[%s833] ss:$9 sm:$0xff] %v427
        %s835 = scalar_lea.vmem [#allocation1], 5
        %836 = vst [vmem:[%s835] ss:$9 sm:$0xff] %v428
        %s837 = scalar_lea.vmem [#allocation1], 6
        %838 = vst [vmem:[%s837] ss:$9 sm:$0xff] %v429
        %s839 = scalar_lea.vmem [#allocation1], 7
        %840 = vst [vmem:[%s839] ss:$9 sm:$0xff] %v430
        %v841 = vld [vmem:[#allocation1] sm:$0xff]
        %842 = vrot.lane.b32.xlu0 %v841, 72
        %v843 = vpop.permute.xlu0 %842
        %v844 = vsel %vm504, %v825, 0
        %v846 = vsel %vm504, %v843, 0
        %848 = vmatpush.xpose.msra.mxu0 0.0
        %849 = vmatpush.xpose.msra.mxu0 0.0
        %850 = vmatpush.xpose.msra.mxu0 0.0
        %851 = vmatpush.xpose.msra.mxu0 0.0
        %852 = vmatpush.xpose.msra.mxu0 0.0
        %853 = vmatpush.xpose.msra.mxu0 0.0
        %854 = vmatpush.xpose.msra.mxu0 0.0
        %855 = vmatpush.xpose.msra.mxu0 0.0
        %856 = vmatpush.xpose.msra.mxu0 0.0
        %857 = vmatpush.xpose.msra.mxu0 0.0
        %858 = vmatpush.xpose.msra.mxu0 0.0
        %859 = vmatpush.xpose.msra.mxu0 0.0
        %860 = vmatpush.xpose.msra.mxu0 0.0
        %861 = vmatpush.xpose.msra.mxu0 0.0
        %862 = vmatpush.xpose.msra.mxu0 0.0
        %863 = vmatpush.xpose.msra.mxu0 %v846
        %864 = vmatmul.f32.gmra.mxu0 %v844
        %v865 = vpop.f32.mrf.mxu0
        %v866 = vadd.f32 0.0, %v865
        %867 = vdwg.mxu0
        %v868 = vsel %vm504, %v866, -inf
        %869 = vmax.xlane.f32.xlu0 %v868
        %v870 = vpop.xlane.xlu0 %869
        %v871 = vsub.f32 %v866, %v870
        %v872 = vmul.f32 %v871, 1.442695
        %v873 = vpow.pop %v872
        %v874 = vsel %vm504, %v873, 0.0
        %875 = vadd.xlane.f32.xlu0 %v874
        %v876 = vpop.xlane.xlu0 %875
        %v877 = vrcp.pop %v876
        %v878 = vmul.f32 %v873, %v877
        %879 = vst [vmem:[#allocation1] ss:$9 sm:$0xff] %v423
        %s880 = scalar_lea.vmem [#allocation1], 1
        %881 = vst [vmem:[%s880] ss:$9 sm:$0xff] %v424
        %s882 = scalar_lea.vmem [#allocation1], 2
        %883 = vst [vmem:[%s882] ss:$9 sm:$0xff] %v425
        %s884 = scalar_lea.vmem [#allocation1], 3
        %885 = vst [vmem:[%s884] ss:$9 sm:$0xff] %v426
        %s886 = scalar_lea.vmem [#allocation1], 4
        %887 = vst [vmem:[%s886] ss:$9 sm:$0xff] %v427
        %s888 = scalar_lea.vmem [#allocation1], 5
        %889 = vst [vmem:[%s888] ss:$9 sm:$0xff] %v428
        %s890 = scalar_lea.vmem [#allocation1], 6
        %891 = vst [vmem:[%s890] ss:$9 sm:$0xff] %v429
        %s892 = scalar_lea.vmem [#allocation1], 7
        %893 = vst [vmem:[%s892] ss:$9 sm:$0xff] %v430
        %v894 = vld [vmem:[#allocation1] sm:$0xff]
        %895 = vrot.lane.b32.xlu0 %v894, 40
        %v896 = vpop.permute.xlu0 %895
        %v899 = vsel %vm504, %v878, 0
        %901 = vmatpush.msra.mxu0 0.0
        %902 = vmatpush.msra.mxu0 0.0
        %903 = vmatpush.msra.mxu0 0.0
        %904 = vmatpush.msra.mxu0 0.0
        %905 = vmatpush.msra.mxu0 0.0
        %906 = vmatpush.msra.mxu0 0.0
        %907 = vmatpush.msra.mxu0 0.0
        %908 = vmatpush.msra.mxu0 0.0
        %909 = vmatpush.msra.mxu0 0.0
        %910 = vmatpush.msra.mxu0 0.0
        %911 = vmatpush.msra.mxu0 0.0
        %912 = vmatpush.msra.mxu0 0.0
        %913 = vmatpush.msra.mxu0 0.0
        %914 = vmatpush.msra.mxu0 0.0
        %915 = vmatpush.msra.mxu0 0.0
        %916 = vmatpush.msra.mxu0 %v896
        %917 = vmatmul.f32.gmra.mxu0 %v899
        %v918 = vpop.f32.mrf.mxu0
        %v919 = vadd.f32 0.0, %v918
        %920 = vdwg.mxu0
        %922 = vrot.lane.b32.xlu0 %v693, 8
        %v923 = vpop.permute.xlu0 %922
        %926 = vrot.lane.b32.xlu0 %v806, 16
        %v927 = vpop.permute.xlu0 %926
        %930 = vrot.lane.b32.xlu0 %v919, 24
        %v931 = vpop.permute.xlu0 %930
        %v933 = vsel %vm504, %v580, %v923
        %vm934 = vcmask 130048
        %v935 = vsel %vm934, %v933, %v927
        %vm936 = vcmask 195584
        %v937 = vsel %vm936, %v935, %v931
        %v939 = vperm.slane %v443, 0
        %vm941 = vcmask 261120
        %v943 = vsel %vm941, %v937, 0
        %945 = vmatpush.msra.mxu0 0.0
        %946 = vmatpush.msra.mxu0 0.0
        %947 = vmatpush.msra.mxu0 0.0
        %948 = vmatpush.msra.mxu0 0.0
        %949 = vmatpush.msra.mxu0 0.0
        %950 = vmatpush.msra.mxu0 0.0
        %951 = vmatpush.msra.mxu0 0.0
        %952 = vmatpush.msra.mxu0 0.0
        %953 = vmatpush.msra.mxu0 0.0
        %954 = vmatpush.msra.mxu0 0.0
        %955 = vmatpush.msra.mxu0 0.0
        %956 = vmatpush.msra.mxu0 0.0
        %957 = vmatpush.msra.mxu0 %v442
        %958 = vmatpush.msra.mxu0 %v441
        %959 = vmatpush.msra.mxu0 %v440
        %960 = vmatpush.msra.mxu0 %v439
        %961 = vmatmul.f32.gmra.mxu0 %v943
        %v962 = vpop.f32.mrf.mxu0
        %v963 = vadd.f32 %v939, %v962
        %964 = vdwg.mxu0
        %973 = vst [vmem:[#allocation1] ss:$9 sm:$0xff] %v431
        %s974 = scalar_lea.vmem [#allocation1], 1
        %975 = vst [vmem:[%s974] ss:$9 sm:$0xff] %v432
        %s976 = scalar_lea.vmem [#allocation1], 2
        %977 = vst [vmem:[%s976] ss:$9 sm:$0xff] %v433
        %s978 = scalar_lea.vmem [#allocation1], 3
        %979 = vst [vmem:[%s978] ss:$9 sm:$0xff] %v434
        %s980 = scalar_lea.vmem [#allocation1], 4
        %981 = vst [vmem:[%s980] ss:$9 sm:$0xff] %v435
        %s982 = scalar_lea.vmem [#allocation1], 5
        %983 = vst [vmem:[%s982] ss:$9 sm:$0xff] %v436
        %s984 = scalar_lea.vmem [#allocation1], 6
        %985 = vst [vmem:[%s984] ss:$9 sm:$0xff] %v437
        %s986 = scalar_lea.vmem [#allocation1], 7
        %987 = vst [vmem:[%s986] ss:$9 sm:$0xff] %v438
        %v988 = vld [vmem:[#allocation1] sm:$0xff]
        %v990 = vadd.f32 %v963, %v988
        %v991 = vsel %vm941, %v990, 0.0
        %992 = vadd.xlane.f32.xlu0 %v991
        %v993 = vpop.xlane.xlu0 %992
        %v994 = vrcp.pop 32.0
        %v995 = vmul.f32 32.0, %v994
        %v996 = vsub.f32 1.0, %v995
        %v997 = vmul.f32 %v994, %v996
        %v998 = vadd.f32 %v994, %v997
        %vm999 = vweird.f32 %v994
        %v1000 = vsel %vm999, %v994, %v998
        %v1001 = vmul.f32 %v993, %v1000
        %v1002 = vsub.f32 %v990, %v1001
        %v1003 = vmul.f32 %v1002, %v1002
        %v1004 = vsel %vm941, %v1003, 0.0
        %1005 = vadd.xlane.f32.xlu0 %v1004
        %v1006 = vpop.xlane.xlu0 %1005
        %v1007 = vmul.f32 %v1006, %v1000
        %v1008 = vadd.f32 %v1007, 1e-05
        %v1009 = vrsqrt.pop %v1008
        %v1010 = vmul.f32 %v1009, %v1008
        %v1011 = vmul.f32 %v1010, %v1009
        %v1012 = vmul.f32 0.5, %v1011
        %v1013 = vsub.f32 1.5, %v1012
        %v1014 = vmul.f32 %v1009, %v1013
        %vm1015 = vweird.f32 %v1008
        %vm1016 = vweird.f32 %v1009
        %vm1017 = vmor %vm1015, %vm1016
        %v1018 = vsel %vm1017, %v1009, %v1014
        %v1019 = vmul.f32 %v1002, %v1018
        %v1021 = vperm.slane %v444, 0
        %v1023 = vmul.f32 %v1019, %v1021
        %v1025 = vperm.slane %v445, 0
        %v1027 = vadd.f32 %v1023, %v1025
        %v1029 = vrot.slane %v1027, 1
        %v1030 = vrot.slane %v1027, 2
        %v1031 = vrot.slane %v1027, 3
        %v1032 = vrot.slane %v1027, 4
        %v1033 = vrot.slane %v1027, 5
        %v1034 = vrot.slane %v1027, 6
        %v1035 = vrot.slane %v1027, 7
        %vm1043 = vcmask 253952
        %1044 = vst.msk [vmem:[%s422] sm:$0x1] %vm1043, %v1027
        %1045 = vst.msk [vmem:[%s422 + $0x1] sm:$0x1] %vm1043, %v1029
        %1046 = vst.msk [vmem:[%s422 + $0x2] sm:$0x1] %vm1043, %v1030
        %1047 = vst.msk [vmem:[%s422 + $0x3] sm:$0x1] %vm1043, %v1031
        %1048 = vst.msk [vmem:[%s422 + $0x4] sm:$0x1] %vm1043, %v1032
        %1049 = vst.msk [vmem:[%s422 + $0x5] sm:$0x1] %vm1043, %v1033
        %1050 = vst.msk [vmem:[%s422 + $0x6] sm:$0x1] %vm1043, %v1034
        %1051 = vst.msk [vmem:[%s422 + $0x7] sm:$0x1] %vm1043, %v1035
        %s1052 = sand.u32 %s162, 1
        %s1053 = sand.u32 %s162, 1
        %s1054 = smul.addr %s1053, 8
        %s1055 = scalar_lea.vmem [#allocation6], %s1054
        // Predicated region
        $region131: #{transformer_decoder_wrapper_forward.14} parent=117 // pred_check
          %p1056 = pneg %p172
        $region132: #{transformer_decoder_wrapper_forward.14} parent=117 // pred_check_branch
          %1058 = sbr.rel (%p1056) target = $region134
        $region133: #{transformer_decoder_wrapper_forward.14} parent=117 // pred_region
          %s1059 = scalar_lea.vmem %s6, %s18
          // Predicated region
          $region135: #{transformer_decoder_wrapper_forward.14} parent=133 // pred_check
            _
          $region136: #{transformer_decoder_wrapper_forward.14} parent=133 // pred_check_branch
            %1061 = sbr.rel (0) target = $region138
          $region137: #{transformer_decoder_wrapper_forward.14} parent=133 // pred_region
            // Predicated region
            $region139: #{transformer_decoder_wrapper_forward.14} parent=137 // pred_check
              _
            $region140: #{transformer_decoder_wrapper_forward.14} parent=137 // pred_check_branch
              %1063 = sbr.rel target = $region142
            $region141: #{transformer_decoder_wrapper_forward.14} parent=137 // pred_region
              // Predicated region
              $region154: #{transformer_decoder_wrapper_forward.14} parent=141 // pred_check
                _
              $region155: #{transformer_decoder_wrapper_forward.14} parent=141 // pred_check_branch
                %1093 = sbr.rel (0) target = $region157
              $region156: #{transformer_decoder_wrapper_forward.14} parent=141 // pred_region
                loop: start=0, step=1, limit=1
                $region158: #{transformer_decoder_wrapper_forward.14} parent=156 // loop_pre_header
                  _
                $region159: #{transformer_decoder_wrapper_forward.14} parent=156 // loop_header
                  %s1095 = sphi 0, %s1099
                  %p1096 = scmp.ge.s32.totalorder %s1095, 1
                  %s1100 = sphi %s1055, %s1055
                  %s1101 = sphi %s1059, %s1059
                $region160: #{transformer_decoder_wrapper_forward.14} parent=156 // loop_header_branch
                  %1098 = sbr.rel (%p1096) target = $region164
                $region161: #{transformer_decoder_wrapper_forward.14} parent=156 // loop_body
                  _
                $region162: #{transformer_decoder_wrapper_forward.14} parent=156 // loop_footer
                  %s1099 = sadd.s32 1, %s1095
                $region163: #{transformer_decoder_wrapper_forward.14} parent=156 // loop_footer_branch
                  %1094 = sbr.rel target = $region159
                $region164: #{transformer_decoder_wrapper_forward.14} parent=156 // loop_exit
                  _
                %s1103 = ssub.s32 2, 1
                loop: start=0, step=1, limit=1
                $region165: #{transformer_decoder_wrapper_forward.14} parent=156 // loop_pre_header
                  _
                $region166: #{transformer_decoder_wrapper_forward.14} parent=156 // loop_header
                  %s1105 = sphi 0, %s1109
                  %p1106 = scmp.ge.s32.totalorder %s1105, 1
                  %s1110 = sphi %s1055, %s1055
                  %s1111 = sphi %s1059, %s1059
                $region167: #{transformer_decoder_wrapper_forward.14} parent=156 // loop_header_branch
                  %1108 = sbr.rel (%p1106) target = $region171
                $region168: #{transformer_decoder_wrapper_forward.14} parent=156 // loop_body
                  %v1112 = vld [vmem:[%s1110] sm:%s1103]
                  %1113 = vst [vmem:[%s1111] sm:%s1103] %v1112
                  %v1114 = vld [vmem:[%s1110 + $0x1] sm:%s1103]
                  %1115 = vst [vmem:[%s1111 + $0x2] sm:%s1103] %v1114
                  %v1116 = vld [vmem:[%s1110 + $0x2] sm:%s1103]
                  %1117 = vst [vmem:[%s1111 + $0x4] sm:%s1103] %v1116
                  %v1118 = vld [vmem:[%s1110 + $0x3] sm:%s1103]
                  %1119 = vst [vmem:[%s1111 + $0x6] sm:%s1103] %v1118
                  %v1120 = vld [vmem:[%s1110 + $0x4] sm:%s1103]
                  %1121 = vst [vmem:[%s1111 + $0x8] sm:%s1103] %v1120
                  %v1122 = vld [vmem:[%s1110 + $0x5] sm:%s1103]
                  %1123 = vst [vmem:[%s1111 + $0xa] sm:%s1103] %v1122
                  %v1124 = vld [vmem:[%s1110 + $0x6] sm:%s1103]
                  %1125 = vst [vmem:[%s1111 + $0xc] sm:%s1103] %v1124
                  %v1126 = vld [vmem:[%s1110 + $0x7] sm:%s1103]
                  %1127 = vst [vmem:[%s1111 + $0xe] sm:%s1103] %v1126
                $region169: #{transformer_decoder_wrapper_forward.14} parent=156 // loop_footer
                  %s1109 = sadd.s32 1, %s1105
                $region170: #{transformer_decoder_wrapper_forward.14} parent=156 // loop_footer_branch
                  %1104 = sbr.rel target = $region166
                $region171: #{transformer_decoder_wrapper_forward.14} parent=156 // loop_exit
                  _
              $region157: #{transformer_decoder_wrapper_forward.14} parent=141 // pred_fallthru
                _
            $region142: #{transformer_decoder_wrapper_forward.14} parent=137 // pred_fallthru
              _
            // Predicated region
            $region143: #{transformer_decoder_wrapper_forward.14} parent=137 // pred_check
              _
            $region144: #{transformer_decoder_wrapper_forward.14} parent=137 // pred_check_branch
              %1065 = sbr.rel (0) target = $region146
            $region145: #{transformer_decoder_wrapper_forward.14} parent=137 // pred_region
              %s1067 = ssub.s32 2, 1
              loop: start=0, step=1, limit=1
              $region147: #{transformer_decoder_wrapper_forward.14} parent=145 // loop_pre_header
                _
              $region148: #{transformer_decoder_wrapper_forward.14} parent=145 // loop_header
                %s1069 = sphi 0, %s1073
                %p1070 = scmp.ge.s32.totalorder %s1069, 1
                %s1074 = sphi %s1055, %s1055
                %s1075 = sphi %s1059, %s1059
              $region149: #{transformer_decoder_wrapper_forward.14} parent=145 // loop_header_branch
                %1072 = sbr.rel (%p1070) target = $region153
              $region150: #{transformer_decoder_wrapper_forward.14} parent=145 // loop_body
                %v1076 = vld [vmem:[%s1074] sm:%s1067]
                %1077 = vst [vmem:[%s1075] sm:%s1067] %v1076
                %v1078 = vld [vmem:[%s1074 + $0x1] sm:%s1067]
                %1079 = vst [vmem:[%s1075 + $0x2] sm:%s1067] %v1078
                %v1080 = vld [vmem:[%s1074 + $0x2] sm:%s1067]
                %1081 = vst [vmem:[%s1075 + $0x4] sm:%s1067] %v1080
                %v1082 = vld [vmem:[%s1074 + $0x3] sm:%s1067]
                %1083 = vst [vmem:[%s1075 + $0x6] sm:%s1067] %v1082
                %v1084 = vld [vmem:[%s1074 + $0x4] sm:%s1067]
                %1085 = vst [vmem:[%s1075 + $0x8] sm:%s1067] %v1084
                %v1086 = vld [vmem:[%s1074 + $0x5] sm:%s1067]
                %1087 = vst [vmem:[%s1075 + $0xa] sm:%s1067] %v1086
                %v1088 = vld [vmem:[%s1074 + $0x6] sm:%s1067]
                %1089 = vst [vmem:[%s1075 + $0xc] sm:%s1067] %v1088
                %v1090 = vld [vmem:[%s1074 + $0x7] sm:%s1067]
                %1091 = vst [vmem:[%s1075 + $0xe] sm:%s1067] %v1090
              $region151: #{transformer_decoder_wrapper_forward.14} parent=145 // loop_footer
                %s1073 = sadd.s32 1, %s1069
              $region152: #{transformer_decoder_wrapper_forward.14} parent=145 // loop_footer_branch
                %1068 = sbr.rel target = $region148
              $region153: #{transformer_decoder_wrapper_forward.14} parent=145 // loop_exit
                _
            $region146: #{transformer_decoder_wrapper_forward.14} parent=137 // pred_fallthru
              _
          $region138: #{transformer_decoder_wrapper_forward.14} parent=133 // pred_fallthru
            _
          %1128 = vnop
        $region134: #{transformer_decoder_wrapper_forward.14} parent=117 // pred_fallthru
          _
      $region118: #{transformer_decoder_wrapper_forward.14} parent=5 // pred_fallthru
        _
      %p1129 = scmp.le.s32.totalorder 2, %s13
      // Predicated region
      $region172: #{transformer_decoder_wrapper_forward.14} parent=5 // pred_check
        %p1130 = pneg %p1129
      $region173: #{transformer_decoder_wrapper_forward.14} parent=5 // pred_check_branch
        %1132 = sbr.rel (%p1130) target = $region175
      $region174: #{transformer_decoder_wrapper_forward.14} parent=5 // pred_region
        %s1133 = ssub.s32 %s13, 2
        // Predicated region
        $region176: #{transformer_decoder_wrapper_forward.14} parent=174 // pred_check
          %p1134 = pneg %p178
        $region177: #{transformer_decoder_wrapper_forward.14} parent=174 // pred_check_branch
          %1136 = sbr.rel (%p1134) target = $region179
        $region178: #{transformer_decoder_wrapper_forward.14} parent=174 // pred_region
          %s1137 = sand.u32 %s163, 1
          %s1138 = sand.u32 %s163, 1
          %s1139 = smul.addr %s1138, 8
          %s1140 = scalar_lea.vmem [#allocation6], %s1139
        $region179: #{transformer_decoder_wrapper_forward.14} parent=174 // pred_fallthru
          _
      $region175: #{transformer_decoder_wrapper_forward.14} parent=5 // pred_fallthru
        _
    $region6: #{transformer_decoder_wrapper_forward.14} parent=1 // loop_footer
      %s17 = sadd.s32 1, %s13
    $region7: #{transformer_decoder_wrapper_forward.14} parent=1 // loop_footer_branch
      %12 = sbr.rel target = $region3
    $region8: #{transformer_decoder_wrapper_forward.14} parent=1 // loop_exit
      _
    %1141 = vsyncpa [#allocation5], 1
    %s1142 = scalar_lea.sflag [#allocation5], 1
    %1143 = vsyncpa %s1142, 1

// kernel: transformer_decoder_wrapper_forward.19
$region0: #{transformer_decoder_wrapper_forward.19}
  #allocation0 [shape = 'u32[]', space=smem, size = 0x4, offset = 0x4, fixed_abs, tag = 'smem constant byte address 0x4 - core index']
  #allocation1 [shape = 'u32[72,128]{1,0:T(1,128)}', space=vmem, size = 0x9000, scoped, tag = 'internal scratch']
  #allocation2 [shape = 'f32[16,96]{1,0:T(8,128)}', space=vmem, size = 0x2000, scoped, tag = 'scratch operand']
  %s0 = inlined_call_operand.vmem [shape: f32[16,32], index: 0, kind: input, shape index: {}]
  %s1 = inlined_call_operand.vmem [shape: f32[32,96], index: 1, kind: input, shape index: {}]
  %s2 = inlined_call_operand.vmem [shape: f32[1,96], index: 2, kind: input, shape index: {}]
  %s3 = inlined_call_operand.vmem [shape: f32[16,96], index: 3, kind: output, shape index: {}]
  %s4 = sld [smem:[#allocation0]]
  $region30: #{transformer_decoder_wrapper_forward.19} parent=0
    _
  %s6 = ssub.s32 1, %s4
  %s7 = scalar_select 0, %s6, %s4
  // Predicated region
  $region2: #{transformer_decoder_wrapper_forward.19} parent=0 // pred_check
    _
  $region3: #{transformer_decoder_wrapper_forward.19} parent=0 // pred_check_branch
    %9 = sbr.rel (0) target = $region5
  $region4: #{transformer_decoder_wrapper_forward.19} parent=0 // pred_region
    _
  $region5: #{transformer_decoder_wrapper_forward.19} parent=0 // pred_fallthru
    _
  // Predicated region
  $region6: #{transformer_decoder_wrapper_forward.19} parent=0 // pred_check
    _
  $region7: #{transformer_decoder_wrapper_forward.19} parent=0 // pred_check_branch
    %11 = sbr.rel (0) target = $region9
  $region8: #{transformer_decoder_wrapper_forward.19} parent=0 // pred_region
    _
  $region9: #{transformer_decoder_wrapper_forward.19} parent=0 // pred_fallthru
    _
  // Predicated region
  $region10: #{transformer_decoder_wrapper_forward.19} parent=0 // pred_check
    _
  $region11: #{transformer_decoder_wrapper_forward.19} parent=0 // pred_check_branch
    %13 = sbr.rel (0) target = $region13
  $region12: #{transformer_decoder_wrapper_forward.19} parent=0 // pred_region
    _
  $region13: #{transformer_decoder_wrapper_forward.19} parent=0 // pred_fallthru
    _
  %p14 = scmp.eq.s32.totalorder 0, 0
  // Predicated region
  $region14: #{transformer_decoder_wrapper_forward.19} parent=0 // pred_check
    %p15 = pneg %p14
  $region15: #{transformer_decoder_wrapper_forward.19} parent=0 // pred_check_branch
    %17 = sbr.rel (%p15) target = $region17
  $region16: #{transformer_decoder_wrapper_forward.19} parent=0 // pred_region
    %vm18 = vcmask 785408
    %19 = vst.msk [vmem:[#allocation2] sm:$0xff] %vm18, 0.0
    %20 = vst.msk [vmem:[#allocation2 + $0x8] sm:$0xff] %vm18, 0.0
  $region17: #{transformer_decoder_wrapper_forward.19} parent=0 // pred_fallthru
    _
  %v21 = vld [vmem:[#allocation2] sm:$0xff]
  %v22 = vld [vmem:[#allocation2 + $0x8] sm:$0xff]
  %v23 = vld [vmem:[%s0] sm:$0xff]
  %v24 = vld [vmem:[%s0 + $0x8] sm:$0xff]
  %v25 = vld [vmem:[%s1] sm:$0xff]
  %v26 = vld [vmem:[%s1 + $0x8] sm:$0xff]
  %v27 = vld [vmem:[%s1 + $0x10] sm:$0xff]
  %v28 = vld [vmem:[%s1 + $0x18] sm:$0xff]
  %vm29 = vcmask 261120
  %v31 = vsel %vm29, %v23, 0
  %v34 = vsel %vm29, %v24, 0
  %36 = vmatpush.msra.mxu0 0.0
  %37 = vmatpush.msra.mxu0 0.0
  %38 = vmatpush.msra.mxu0 0.0
  %39 = vmatpush.msra.mxu0 0.0
  %40 = vmatpush.msra.mxu0 0.0
  %41 = vmatpush.msra.mxu0 0.0
  %42 = vmatpush.msra.mxu0 0.0
  %43 = vmatpush.msra.mxu0 0.0
  %44 = vmatpush.msra.mxu0 0.0
  %45 = vmatpush.msra.mxu0 0.0
  %46 = vmatpush.msra.mxu0 0.0
  %47 = vmatpush.msra.mxu0 0.0
  %48 = vmatpush.msra.mxu0 %v28
  %49 = vmatpush.msra.mxu0 %v27
  %50 = vmatpush.msra.mxu0 %v26
  %51 = vmatpush.msra.mxu0 %v25
  %52 = vmatmul.f32.gmra.mxu0 %v31
  %v53 = vpop.f32.mrf.mxu0
  %v54 = vadd.f32 0.0, %v53
  %55 = vmatmul.f32.gmra.mxu0 %v34
  %v56 = vpop.f32.mrf.mxu0
  %v57 = vadd.f32 0.0, %v56
  %58 = vdwg.mxu0
  %v59 = vadd.f32 %v21, %v54
  %v60 = vadd.f32 %v22, %v57
  %vm61 = vcmask 785408
  %62 = vst.msk [vmem:[#allocation2] sm:$0xff] %vm61, %v59
  %63 = vst.msk [vmem:[#allocation2 + $0x8] sm:$0xff] %vm61, %v60
  // Predicated region
  $region18: #{transformer_decoder_wrapper_forward.19} parent=0 // pred_check
    %p64 = pneg %p14
  $region19: #{transformer_decoder_wrapper_forward.19} parent=0 // pred_check_branch
    %66 = sbr.rel (%p64) target = $region21
  $region20: #{transformer_decoder_wrapper_forward.19} parent=0 // pred_region
    %v67 = vld [vmem:[#allocation2] sm:$0xff]
    %v68 = vld [vmem:[#allocation2 + $0x8] sm:$0xff]
    %v69 = vld [vmem:[%s2] sm:$0x1]
    %v71 = vperm.slane %v69, 0
    %v73 = vadd.f32 %v67, %v71
    %v74 = vadd.f32 %v68, %v71
    %75 = vst.msk [vmem:[%s3] sm:$0xff] %vm61, %v73
    %76 = vst.msk [vmem:[%s3 + $0x8] sm:$0xff] %vm61, %v74
  $region21: #{transformer_decoder_wrapper_forward.19} parent=0 // pred_fallthru
    _
  // Predicated region
  $region22: #{transformer_decoder_wrapper_forward.19} parent=0 // pred_check
    _
  $region23: #{transformer_decoder_wrapper_forward.19} parent=0 // pred_check_branch
    %78 = sbr.rel (0) target = $region25
  $region24: #{transformer_decoder_wrapper_forward.19} parent=0 // pred_region
    _
  $region25: #{transformer_decoder_wrapper_forward.19} parent=0 // pred_fallthru
    _
  // Predicated region
  $region26: #{transformer_decoder_wrapper_forward.19} parent=0 // pred_check
    _
  $region27: #{transformer_decoder_wrapper_forward.19} parent=0 // pred_check_branch
    %80 = sbr.rel (0) target = $region29
  $region28: #{transformer_decoder_wrapper_forward.19} parent=0 // pred_region
    _
  $region29: #{transformer_decoder_wrapper_forward.19} parent=0 // pred_fallthru
    _

// kernel: transformer_decoder_wrapper_forward.18
$region0: #{transformer_decoder_wrapper_forward.18}
  #allocation0 [shape = 'u32[]', space=smem, size = 0x4, offset = 0x4, fixed_abs, tag = 'smem constant byte address 0x4 - core index']
  #allocation1 [shape = 'u32[72,128]{1,0:T(1,128)}', space=vmem, size = 0x9000, scoped, tag = 'internal scratch']
  %s0 = inlined_call_operand.vmem [shape: f32[16,32], index: 0, kind: input, shape index: {}]
  %s1 = inlined_call_operand.hbm [shape: f32[32,64], index: 1, kind: input, shape index: {}]
  %s2 = inlined_call_operand.vmem [shape: f32[1,64], index: 2, kind: input, shape index: {}]
  %s3 = inlined_call_operand.vmem [shape: f32[64,32], index: 3, kind: input, shape index: {}]
  %s4 = inlined_call_operand.vmem [shape: f32[1,32], index: 4, kind: input, shape index: {}, may-alias: {4,6}]
  %s5 = inlined_call_operand.vmem [shape: f32[1,32], index: 5, kind: input, shape index: {}]
  %s6 = inlined_call_operand.vmem [shape: f32[1,32], index: 6, kind: input, shape index: {}, may-alias: {4,6}]
  %s7 = inlined_call_operand.vmem [shape: f32[16,32], index: 7, kind: output, shape index: {}]
  %s8 = sld [smem:[#allocation0]]
  $region42: #{transformer_decoder_wrapper_forward.18} parent=0
    _
  %s10 = ssub.s32 1, %s8
  %s11 = scalar_select 0, %s10, %s8
  $region1: #{transformer_decoder_wrapper_forward.18} parent=0
    #allocation2 [shape = 'u8[16384]{0}', space=vmem, size = 0x4000, scoped, tag = 'input window, operand 1, single buffered']
    #allocation3 [shape = 's32[1]{0}', space=sflag, size = 0x4, scoped, tag = 'scoped memory for transformer_decoder_wrapper_forward.18']
    %12 = vsyncpa [#allocation3], 0
    // Predicated region
    $region2: #{transformer_decoder_wrapper_forward.18} parent=1 // pred_check
      _
    $region3: #{transformer_decoder_wrapper_forward.18} parent=1 // pred_check_branch
      %14 = sbr.rel (0) target = $region5
    $region4: #{transformer_decoder_wrapper_forward.18} parent=1 // pred_region
      _
    $region5: #{transformer_decoder_wrapper_forward.18} parent=1 // pred_fallthru
      _
    // Predicated region
    $region6: #{transformer_decoder_wrapper_forward.18} parent=1 // pred_check
      _
    $region7: #{transformer_decoder_wrapper_forward.18} parent=1 // pred_check_branch
      %16 = sbr.rel (0) target = $region9
    $region8: #{transformer_decoder_wrapper_forward.18} parent=1 // pred_region
      %18 = vsyncadd [#allocation3], 0
      %s19 = sshll.u32 %s1, 4
      %s20 = int_to_ptr.hbm [resolvable:$true] %s19
      %s21 = sshll.u32 [#allocation2], 4
      %s22 = int_to_ptr.vmem [resolvable:$true] %s21
      %27 = dma.hbm_to_vmem [thread:$0]  %s20, 512, %s22, [#allocation3], 128, 128, 8
    $region9: #{transformer_decoder_wrapper_forward.18} parent=1 // pred_fallthru
      _
    // Predicated region
    $region10: #{transformer_decoder_wrapper_forward.18} parent=1 // pred_check
      _
    $region11: #{transformer_decoder_wrapper_forward.18} parent=1 // pred_check_branch
      %29 = sbr.rel (0) target = $region13
    $region12: #{transformer_decoder_wrapper_forward.18} parent=1 // pred_region
      _
    $region13: #{transformer_decoder_wrapper_forward.18} parent=1 // pred_fallthru
      _
    // Predicated region
    $region14: #{transformer_decoder_wrapper_forward.18} parent=1 // pred_check
      _
    $region15: #{transformer_decoder_wrapper_forward.18} parent=1 // pred_check_branch
      %31 = sbr.rel (0) target = $region17
    $region16: #{transformer_decoder_wrapper_forward.18} parent=1 // pred_region
      _
    $region17: #{transformer_decoder_wrapper_forward.18} parent=1 // pred_fallthru
      _
    // Predicated region
    $region18: #{transformer_decoder_wrapper_forward.18} parent=1 // pred_check
      _
    $region19: #{transformer_decoder_wrapper_forward.18} parent=1 // pred_check_branch
      %33 = sbr.rel (0) target = $region21
    $region20: #{transformer_decoder_wrapper_forward.18} parent=1 // pred_region
      _
    $region21: #{transformer_decoder_wrapper_forward.18} parent=1 // pred_fallthru
      _
    // Predicated region
    $region22: #{transformer_decoder_wrapper_forward.18} parent=1 // pred_check
      _
    $region23: #{transformer_decoder_wrapper_forward.18} parent=1 // pred_check_branch
      %35 = sbr.rel (0) target = $region25
    $region24: #{transformer_decoder_wrapper_forward.18} parent=1 // pred_region
      _
    $region25: #{transformer_decoder_wrapper_forward.18} parent=1 // pred_fallthru
      _
    // Predicated region
    $region26: #{transformer_decoder_wrapper_forward.18} parent=1 // pred_check
      _
    $region27: #{transformer_decoder_wrapper_forward.18} parent=1 // pred_check_branch
      %37 = sbr.rel (0) target = $region29
    $region28: #{transformer_decoder_wrapper_forward.18} parent=1 // pred_region
      _
    $region29: #{transformer_decoder_wrapper_forward.18} parent=1 // pred_fallthru
      _
    // Predicated region
    $region30: #{transformer_decoder_wrapper_forward.18} parent=1 // pred_check
      _
    $region31: #{transformer_decoder_wrapper_forward.18} parent=1 // pred_check_branch
      %39 = sbr.rel (0) target = $region33
    $region32: #{transformer_decoder_wrapper_forward.18} parent=1 // pred_region
      %41 = dma.done [#allocation3], 512
    $region33: #{transformer_decoder_wrapper_forward.18} parent=1 // pred_fallthru
      _
    %v42 = vld [vmem:[%s0] sm:$0xff]
    %v43 = vld [vmem:[%s0 + $0x8] sm:$0xff]
    %v44 = vld [vmem:[#allocation2] sm:$0xff]
    %v45 = vld [vmem:[#allocation2 + $0x8] sm:$0xff]
    %v46 = vld [vmem:[#allocation2 + $0x10] sm:$0xff]
    %v47 = vld [vmem:[#allocation2 + $0x18] sm:$0xff]
    %v48 = vld [vmem:[%s2] sm:$0x1]
    %v50 = vperm.slane %v48, 0
    %vm52 = vcmask 261120
    %v54 = vsel %vm52, %v42, 0
    %v57 = vsel %vm52, %v43, 0
    %59 = vmatpush.msra.mxu0 0.0
    %60 = vmatpush.msra.mxu0 0.0
    %61 = vmatpush.msra.mxu0 0.0
    %62 = vmatpush.msra.mxu0 0.0
    %63 = vmatpush.msra.mxu0 0.0
    %64 = vmatpush.msra.mxu0 0.0
    %65 = vmatpush.msra.mxu0 0.0
    %66 = vmatpush.msra.mxu0 0.0
    %67 = vmatpush.msra.mxu0 0.0
    %68 = vmatpush.msra.mxu0 0.0
    %69 = vmatpush.msra.mxu0 0.0
    %70 = vmatpush.msra.mxu0 0.0
    %71 = vmatpush.msra.mxu0 %v47
    %72 = vmatpush.msra.mxu0 %v46
    %73 = vmatpush.msra.mxu0 %v45
    %74 = vmatpush.msra.mxu0 %v44
    %75 = vmatmul.f32.gmra.mxu0 %v54
    %v76 = vpop.f32.mrf.mxu0
    %v77 = vadd.f32 %v50, %v76
    %78 = vmatmul.f32.gmra.mxu0 %v57
    %v79 = vpop.f32.mrf.mxu0
    %v80 = vadd.f32 %v50, %v79
    %81 = vdwg.mxu0
    %v82 = vmax.f32 %v77, 0.0
    %v83 = vmax.f32 %v80, 0.0
    %v84 = vld [vmem:[%s3] sm:$0xff]
    %v85 = vld [vmem:[%s3 + $0x8] sm:$0xff]
    %v86 = vld [vmem:[%s3 + $0x10] sm:$0xff]
    %v87 = vld [vmem:[%s3 + $0x18] sm:$0xff]
    %v88 = vld [vmem:[%s3 + $0x20] sm:$0xff]
    %v89 = vld [vmem:[%s3 + $0x28] sm:$0xff]
    %v90 = vld [vmem:[%s3 + $0x30] sm:$0xff]
    %v91 = vld [vmem:[%s3 + $0x38] sm:$0xff]
    %vm92 = vcmask 523264
    %v94 = vsel %vm92, %v82, 0
    %v97 = vsel %vm92, %v83, 0
    %99 = vmatpush.msra.mxu0 0.0
    %100 = vmatpush.msra.mxu0 0.0
    %101 = vmatpush.msra.mxu0 0.0
    %102 = vmatpush.msra.mxu0 0.0
    %103 = vmatpush.msra.mxu0 0.0
    %104 = vmatpush.msra.mxu0 0.0
    %105 = vmatpush.msra.mxu0 0.0
    %106 = vmatpush.msra.mxu0 0.0
    %107 = vmatpush.msra.mxu0 %v91
    %108 = vmatpush.msra.mxu0 %v90
    %109 = vmatpush.msra.mxu0 %v89
    %110 = vmatpush.msra.mxu0 %v88
    %111 = vmatpush.msra.mxu0 %v87
    %112 = vmatpush.msra.mxu0 %v86
    %113 = vmatpush.msra.mxu0 %v85
    %114 = vmatpush.msra.mxu0 %v84
    %115 = vmatmul.f32.gmra.mxu0 %v94
    %v116 = vpop.f32.mrf.mxu0
    %v117 = vadd.f32 0.0, %v116
    %118 = vmatmul.f32.gmra.mxu0 %v97
    %v119 = vpop.f32.mrf.mxu0
    %v120 = vadd.f32 0.0, %v119
    %121 = vdwg.mxu0
    %v122 = vadd.f32 %v42, %v117
    %v123 = vadd.f32 %v43, %v120
    %v124 = vld [vmem:[%s4] sm:$0x1]
    %v126 = vperm.slane %v124, 0
    %v128 = vadd.f32 %v122, %v126
    %v129 = vadd.f32 %v123, %v126
    %v130 = vsel %vm52, %v128, 0.0
    %131 = vadd.xlane.f32.xlu0 %v130
    %v132 = vpop.xlane.xlu0 %131
    %v133 = vsel %vm52, %v129, 0.0
    %134 = vadd.xlane.f32.xlu0 %v133
    %v135 = vpop.xlane.xlu0 %134
    %v136 = vrcp.pop 32.0
    %v137 = vmul.f32 32.0, %v136
    %v138 = vsub.f32 1.0, %v137
    %v139 = vmul.f32 %v136, %v138
    %v140 = vadd.f32 %v136, %v139
    %vm141 = vweird.f32 %v136
    %v142 = vsel %vm141, %v136, %v140
    %v143 = vmul.f32 %v132, %v142
    %v144 = vmul.f32 %v135, %v142
    %v145 = vsub.f32 %v128, %v143
    %v146 = vsub.f32 %v129, %v144
    %v147 = vmul.f32 %v145, %v145
    %v148 = vmul.f32 %v146, %v146
    %v149 = vsel %vm52, %v147, 0.0
    %150 = vadd.xlane.f32.xlu0 %v149
    %v151 = vpop.xlane.xlu0 %150
    %v152 = vsel %vm52, %v148, 0.0
    %153 = vadd.xlane.f32.xlu0 %v152
    %v154 = vpop.xlane.xlu0 %153
    %v155 = vmul.f32 %v151, %v142
    %v156 = vmul.f32 %v154, %v142
    %v157 = vadd.f32 %v155, 1e-05
    %v158 = vadd.f32 %v156, 1e-05
    %v159 = vrsqrt.pop %v157
    %v160 = vmul.f32 %v159, %v157
    %v161 = vmul.f32 %v160, %v159
    %v162 = vmul.f32 0.5, %v161
    %v163 = vsub.f32 1.5, %v162
    %v164 = vmul.f32 %v159, %v163
    %vm165 = vweird.f32 %v157
    %vm166 = vweird.f32 %v159
    %vm167 = vmor %vm165, %vm166
    %v168 = vsel %vm167, %v159, %v164
    %v169 = vrsqrt.pop %v158
    %v170 = vmul.f32 %v169, %v158
    %v171 = vmul.f32 %v170, %v169
    %v172 = vmul.f32 0.5, %v171
    %v173 = vsub.f32 1.5, %v172
    %v174 = vmul.f32 %v169, %v173
    %vm175 = vweird.f32 %v158
    %vm176 = vweird.f32 %v169
    %vm177 = vmor %vm175, %vm176
    %v178 = vsel %vm177, %v169, %v174
    %v179 = vmul.f32 %v145, %v168
    %v180 = vmul.f32 %v146, %v178
    %v181 = vld [vmem:[%s5] sm:$0x1]
    %v183 = vperm.slane %v181, 0
    %v185 = vmul.f32 %v179, %v183
    %v186 = vmul.f32 %v180, %v183
    %v187 = vld [vmem:[%s6] sm:$0x1]
    %v189 = vperm.slane %v187, 0
    %v191 = vadd.f32 %v185, %v189
    %v192 = vadd.f32 %v186, %v189
    %193 = vst.msk [vmem:[%s7] sm:$0xff] %vm52, %v191
    %194 = vst.msk [vmem:[%s7 + $0x8] sm:$0xff] %vm52, %v192
    // Predicated region
    $region34: #{transformer_decoder_wrapper_forward.18} parent=1 // pred_check
      _
    $region35: #{transformer_decoder_wrapper_forward.18} parent=1 // pred_check_branch
      %196 = sbr.rel (0) target = $region37
    $region36: #{transformer_decoder_wrapper_forward.18} parent=1 // pred_region
      _
    $region37: #{transformer_decoder_wrapper_forward.18} parent=1 // pred_fallthru
      _
    // Predicated region
    $region38: #{transformer_decoder_wrapper_forward.18} parent=1 // pred_check
      _
    $region39: #{transformer_decoder_wrapper_forward.18} parent=1 // pred_check_branch
      %198 = sbr.rel (0) target = $region41
    $region40: #{transformer_decoder_wrapper_forward.18} parent=1 // pred_region
      _
    $region41: #{transformer_decoder_wrapper_forward.18} parent=1 // pred_fallthru
      _
    %199 = vsyncpa [#allocation3], 1

// kernel: transformer_decoder_wrapper_forward.21
$region0: #{transformer_decoder_wrapper_forward.21}
  #allocation0 [shape = 'u32[]', space=smem, size = 0x4, offset = 0x4, fixed_abs, tag = 'smem constant byte address 0x4 - core index']
  #allocation1 [shape = 'u32[72,128]{1,0:T(1,128)}', space=vmem, size = 0x9000, scoped, tag = 'internal scratch']
  #allocation2 [shape = 'f32[16,32]{1,0:T(8,128)}', space=vmem, size = 0x2000, scoped, tag = 'scratch operand']
  %s0 = inlined_call_operand.vmem [shape: f32[16,32], index: 0, kind: input, shape index: {}]
  %s1 = inlined_call_operand.vmem [shape: f32[32,32], index: 1, kind: input, shape index: {}]
  %s2 = inlined_call_operand.vmem [shape: f32[1,32], index: 2, kind: input, shape index: {}]
  %s3 = inlined_call_operand.vmem [shape: f32[16,32], index: 3, kind: output, shape index: {}]
  %s4 = sld [smem:[#allocation0]]
  $region30: #{transformer_decoder_wrapper_forward.21} parent=0
    _
  %s6 = ssub.s32 1, %s4
  %s7 = scalar_select 0, %s6, %s4
  // Predicated region
  $region2: #{transformer_decoder_wrapper_forward.21} parent=0 // pred_check
    _
  $region3: #{transformer_decoder_wrapper_forward.21} parent=0 // pred_check_branch
    %9 = sbr.rel (0) target = $region5
  $region4: #{transformer_decoder_wrapper_forward.21} parent=0 // pred_region
    _
  $region5: #{transformer_decoder_wrapper_forward.21} parent=0 // pred_fallthru
    _
  // Predicated region
  $region6: #{transformer_decoder_wrapper_forward.21} parent=0 // pred_check
    _
  $region7: #{transformer_decoder_wrapper_forward.21} parent=0 // pred_check_branch
    %11 = sbr.rel (0) target = $region9
  $region8: #{transformer_decoder_wrapper_forward.21} parent=0 // pred_region
    _
  $region9: #{transformer_decoder_wrapper_forward.21} parent=0 // pred_fallthru
    _
  // Predicated region
  $region10: #{transformer_decoder_wrapper_forward.21} parent=0 // pred_check
    _
  $region11: #{transformer_decoder_wrapper_forward.21} parent=0 // pred_check_branch
    %13 = sbr.rel (0) target = $region13
  $region12: #{transformer_decoder_wrapper_forward.21} parent=0 // pred_region
    _
  $region13: #{transformer_decoder_wrapper_forward.21} parent=0 // pred_fallthru
    _
  %p14 = scmp.eq.s32.totalorder 0, 0
  // Predicated region
  $region14: #{transformer_decoder_wrapper_forward.21} parent=0 // pred_check
    %p15 = pneg %p14
  $region15: #{transformer_decoder_wrapper_forward.21} parent=0 // pred_check_branch
    %17 = sbr.rel (%p15) target = $region17
  $region16: #{transformer_decoder_wrapper_forward.21} parent=0 // pred_region
    %vm18 = vcmask 261120
    %19 = vst.msk [vmem:[#allocation2] sm:$0xff] %vm18, 0.0
    %20 = vst.msk [vmem:[#allocation2 + $0x8] sm:$0xff] %vm18, 0.0
  $region17: #{transformer_decoder_wrapper_forward.21} parent=0 // pred_fallthru
    _
  %v21 = vld [vmem:[#allocation2] sm:$0xff]
  %v22 = vld [vmem:[#allocation2 + $0x8] sm:$0xff]
  %v23 = vld [vmem:[%s0] sm:$0xff]
  %v24 = vld [vmem:[%s0 + $0x8] sm:$0xff]
  %v25 = vld [vmem:[%s1] sm:$0xff]
  %v26 = vld [vmem:[%s1 + $0x8] sm:$0xff]
  %v27 = vld [vmem:[%s1 + $0x10] sm:$0xff]
  %v28 = vld [vmem:[%s1 + $0x18] sm:$0xff]
  %vm29 = vcmask 261120
  %v31 = vsel %vm29, %v23, 0
  %v34 = vsel %vm29, %v24, 0
  %36 = vmatpush.msra.mxu0 0.0
  %37 = vmatpush.msra.mxu0 0.0
  %38 = vmatpush.msra.mxu0 0.0
  %39 = vmatpush.msra.mxu0 0.0
  %40 = vmatpush.msra.mxu0 0.0
  %41 = vmatpush.msra.mxu0 0.0
  %42 = vmatpush.msra.mxu0 0.0
  %43 = vmatpush.msra.mxu0 0.0
  %44 = vmatpush.msra.mxu0 0.0
  %45 = vmatpush.msra.mxu0 0.0
  %46 = vmatpush.msra.mxu0 0.0
  %47 = vmatpush.msra.mxu0 0.0
  %48 = vmatpush.msra.mxu0 %v28
  %49 = vmatpush.msra.mxu0 %v27
  %50 = vmatpush.msra.mxu0 %v26
  %51 = vmatpush.msra.mxu0 %v25
  %52 = vmatmul.f32.gmra.mxu0 %v31
  %v53 = vpop.f32.mrf.mxu0
  %v54 = vadd.f32 0.0, %v53
  %55 = vmatmul.f32.gmra.mxu0 %v34
  %v56 = vpop.f32.mrf.mxu0
  %v57 = vadd.f32 0.0, %v56
  %58 = vdwg.mxu0
  %v59 = vadd.f32 %v21, %v54
  %v60 = vadd.f32 %v22, %v57
  %61 = vst.msk [vmem:[#allocation2] sm:$0xff] %vm29, %v59
  %62 = vst.msk [vmem:[#allocation2 + $0x8] sm:$0xff] %vm29, %v60
  // Predicated region
  $region18: #{transformer_decoder_wrapper_forward.21} parent=0 // pred_check
    %p63 = pneg %p14
  $region19: #{transformer_decoder_wrapper_forward.21} parent=0 // pred_check_branch
    %65 = sbr.rel (%p63) target = $region21
  $region20: #{transformer_decoder_wrapper_forward.21} parent=0 // pred_region
    %v66 = vld [vmem:[#allocation2] sm:$0xff]
    %v67 = vld [vmem:[#allocation2 + $0x8] sm:$0xff]
    %v68 = vld [vmem:[%s2] sm:$0x1]
    %v70 = vperm.slane %v68, 0
    %v72 = vadd.f32 %v66, %v70
    %v73 = vadd.f32 %v67, %v70
    %74 = vst.msk [vmem:[%s3] sm:$0xff] %vm29, %v72
    %75 = vst.msk [vmem:[%s3 + $0x8] sm:$0xff] %vm29, %v73
  $region21: #{transformer_decoder_wrapper_forward.21} parent=0 // pred_fallthru
    _
  // Predicated region
  $region22: #{transformer_decoder_wrapper_forward.21} parent=0 // pred_check
    _
  $region23: #{transformer_decoder_wrapper_forward.21} parent=0 // pred_check_branch
    %77 = sbr.rel (0) target = $region25
  $region24: #{transformer_decoder_wrapper_forward.21} parent=0 // pred_region
    _
  $region25: #{transformer_decoder_wrapper_forward.21} parent=0 // pred_fallthru
    _
  // Predicated region
  $region26: #{transformer_decoder_wrapper_forward.21} parent=0 // pred_check
    _
  $region27: #{transformer_decoder_wrapper_forward.21} parent=0 // pred_check_branch
    %79 = sbr.rel (0) target = $region29
  $region28: #{transformer_decoder_wrapper_forward.21} parent=0 // pred_region
    _
  $region29: #{transformer_decoder_wrapper_forward.21} parent=0 // pred_fallthru
    _

// kernel: transformer_decoder_wrapper_forward.22
$region0: #{transformer_decoder_wrapper_forward.22}
  #allocation0 [shape = 'u32[]', space=smem, size = 0x4, offset = 0x4, fixed_abs, tag = 'smem constant byte address 0x4 - core index']
  #allocation1 [shape = 'u32[72,128]{1,0:T(1,128)}', space=vmem, size = 0x9000, scoped, tag = 'internal scratch']
  #allocation2 [shape = 'f32[32,64]{1,0:T(8,128)}', space=vmem, size = 0x4000, scoped, tag = 'scratch operand']
  %s0 = inlined_call_operand.vmem [shape: f32[32,32], index: 0, kind: input, shape index: {}]
  %s1 = inlined_call_operand.vmem [shape: f32[32,64], index: 1, kind: input, shape index: {}]
  %s2 = inlined_call_operand.vmem [shape: f32[1,64], index: 2, kind: input, shape index: {}]
  %s3 = inlined_call_operand.vmem [shape: f32[32,64], index: 3, kind: output, shape index: {}]
  %s4 = sld [smem:[#allocation0]]
  $region30: #{transformer_decoder_wrapper_forward.22} parent=0
    _
  %s6 = ssub.s32 1, %s4
  %s7 = scalar_select 0, %s6, %s4
  // Predicated region
  $region2: #{transformer_decoder_wrapper_forward.22} parent=0 // pred_check
    _
  $region3: #{transformer_decoder_wrapper_forward.22} parent=0 // pred_check_branch
    %9 = sbr.rel (0) target = $region5
  $region4: #{transformer_decoder_wrapper_forward.22} parent=0 // pred_region
    _
  $region5: #{transformer_decoder_wrapper_forward.22} parent=0 // pred_fallthru
    _
  // Predicated region
  $region6: #{transformer_decoder_wrapper_forward.22} parent=0 // pred_check
    _
  $region7: #{transformer_decoder_wrapper_forward.22} parent=0 // pred_check_branch
    %11 = sbr.rel (0) target = $region9
  $region8: #{transformer_decoder_wrapper_forward.22} parent=0 // pred_region
    _
  $region9: #{transformer_decoder_wrapper_forward.22} parent=0 // pred_fallthru
    _
  // Predicated region
  $region10: #{transformer_decoder_wrapper_forward.22} parent=0 // pred_check
    _
  $region11: #{transformer_decoder_wrapper_forward.22} parent=0 // pred_check_branch
    %13 = sbr.rel (0) target = $region13
  $region12: #{transformer_decoder_wrapper_forward.22} parent=0 // pred_region
    _
  $region13: #{transformer_decoder_wrapper_forward.22} parent=0 // pred_fallthru
    _
  %p14 = scmp.eq.s32.totalorder 0, 0
  // Predicated region
  $region14: #{transformer_decoder_wrapper_forward.22} parent=0 // pred_check
    %p15 = pneg %p14
  $region15: #{transformer_decoder_wrapper_forward.22} parent=0 // pred_check_branch
    %17 = sbr.rel (%p15) target = $region17
  $region16: #{transformer_decoder_wrapper_forward.22} parent=0 // pred_region
    %vm18 = vcmask 523264
    %19 = vst.msk [vmem:[#allocation2] sm:$0xff] %vm18, 0.0
    %20 = vst.msk [vmem:[#allocation2 + $0x8] sm:$0xff] %vm18, 0.0
    %21 = vst.msk [vmem:[#allocation2 + $0x10] sm:$0xff] %vm18, 0.0
    %22 = vst.msk [vmem:[#allocation2 + $0x18] sm:$0xff] %vm18, 0.0
  $region17: #{transformer_decoder_wrapper_forward.22} parent=0 // pred_fallthru
    _
  %v23 = vld [vmem:[#allocation2] sm:$0xff]
  %v24 = vld [vmem:[#allocation2 + $0x8] sm:$0xff]
  %v25 = vld [vmem:[#allocation2 + $0x10] sm:$0xff]
  %v26 = vld [vmem:[#allocation2 + $0x18] sm:$0xff]
  %v27 = vld [vmem:[%s0] sm:$0xff]
  %v28 = vld [vmem:[%s0 + $0x8] sm:$0xff]
  %v29 = vld [vmem:[%s0 + $0x10] sm:$0xff]
  %v30 = vld [vmem:[%s0 + $0x18] sm:$0xff]
  %v31 = vld [vmem:[%s1] sm:$0xff]
  %v32 = vld [vmem:[%s1 + $0x8] sm:$0xff]
  %v33 = vld [vmem:[%s1 + $0x10] sm:$0xff]
  %v34 = vld [vmem:[%s1 + $0x18] sm:$0xff]
  %vm35 = vcmask 261120
  %v37 = vsel %vm35, %v27, 0
  %v40 = vsel %vm35, %v28, 0
  %v43 = vsel %vm35, %v29, 0
  %v46 = vsel %vm35, %v30, 0
  %48 = vmatpush.msra.mxu0 0.0
  %49 = vmatpush.msra.mxu0 0.0
  %50 = vmatpush.msra.mxu0 0.0
  %51 = vmatpush.msra.mxu0 0.0
  %52 = vmatpush.msra.mxu0 0.0
  %53 = vmatpush.msra.mxu0 0.0
  %54 = vmatpush.msra.mxu0 0.0
  %55 = vmatpush.msra.mxu0 0.0
  %56 = vmatpush.msra.mxu0 0.0
  %57 = vmatpush.msra.mxu0 0.0
  %58 = vmatpush.msra.mxu0 0.0
  %59 = vmatpush.msra.mxu0 0.0
  %60 = vmatpush.msra.mxu0 %v34
  %61 = vmatpush.msra.mxu0 %v33
  %62 = vmatpush.msra.mxu0 %v32
  %63 = vmatpush.msra.mxu0 %v31
  %64 = vmatmul.f32.gmra.mxu0 %v37
  %v65 = vpop.f32.mrf.mxu0
  %v66 = vadd.f32 0.0, %v65
  %67 = vmatmul.f32.gmra.mxu0 %v40
  %v68 = vpop.f32.mrf.mxu0
  %v69 = vadd.f32 0.0, %v68
  %70 = vmatmul.f32.gmra.mxu0 %v43
  %v71 = vpop.f32.mrf.mxu0
  %v72 = vadd.f32 0.0, %v71
  %73 = vmatmul.f32.gmra.mxu0 %v46
  %v74 = vpop.f32.mrf.mxu0
  %v75 = vadd.f32 0.0, %v74
  %76 = vdwg.mxu0
  %v77 = vadd.f32 %v23, %v66
  %v78 = vadd.f32 %v24, %v69
  %v79 = vadd.f32 %v25, %v72
  %v80 = vadd.f32 %v26, %v75
  %vm81 = vcmask 523264
  %82 = vst.msk [vmem:[#allocation2] sm:$0xff] %vm81, %v77
  %83 = vst.msk [vmem:[#allocation2 + $0x8] sm:$0xff] %vm81, %v78
  %84 = vst.msk [vmem:[#allocation2 + $0x10] sm:$0xff] %vm81, %v79
  %85 = vst.msk [vmem:[#allocation2 + $0x18] sm:$0xff] %vm81, %v80
  // Predicated region
  $region18: #{transformer_decoder_wrapper_forward.22} parent=0 // pred_check
    %p86 = pneg %p14
  $region19: #{transformer_decoder_wrapper_forward.22} parent=0 // pred_check_branch
    %88 = sbr.rel (%p86) target = $region21
  $region20: #{transformer_decoder_wrapper_forward.22} parent=0 // pred_region
    %v89 = vld [vmem:[#allocation2] sm:$0xff]
    %v90 = vld [vmem:[#allocation2 + $0x8] sm:$0xff]
    %v91 = vld [vmem:[#allocation2 + $0x10] sm:$0xff]
    %v92 = vld [vmem:[#allocation2 + $0x18] sm:$0xff]
    %v93 = vld [vmem:[%s2] sm:$0x1]
    %v95 = vperm.slane %v93, 0
    %v97 = vadd.f32 %v89, %v95
    %v98 = vadd.f32 %v90, %v95
    %v99 = vadd.f32 %v91, %v95
    %v100 = vadd.f32 %v92, %v95
    %101 = vst.msk [vmem:[%s3] sm:$0xff] %vm81, %v97
    %102 = vst.msk [vmem:[%s3 + $0x8] sm:$0xff] %vm81, %v98
    %103 = vst.msk [vmem:[%s3 + $0x10] sm:$0xff] %vm81, %v99
    %104 = vst.msk [vmem:[%s3 + $0x18] sm:$0xff] %vm81, %v100
  $region21: #{transformer_decoder_wrapper_forward.22} parent=0 // pred_fallthru
    _
  // Predicated region
  $region22: #{transformer_decoder_wrapper_forward.22} parent=0 // pred_check
    _
  $region23: #{transformer_decoder_wrapper_forward.22} parent=0 // pred_check_branch
    %106 = sbr.rel (0) target = $region25
  $region24: #{transformer_decoder_wrapper_forward.22} parent=0 // pred_region
    _
  $region25: #{transformer_decoder_wrapper_forward.22} parent=0 // pred_fallthru
    _
  // Predicated region
  $region26: #{transformer_decoder_wrapper_forward.22} parent=0 // pred_check
    _
  $region27: #{transformer_decoder_wrapper_forward.22} parent=0 // pred_check_branch
    %108 = sbr.rel (0) target = $region29
  $region28: #{transformer_decoder_wrapper_forward.22} parent=0 // pred_region
    _
  $region29: #{transformer_decoder_wrapper_forward.22} parent=0 // pred_fallthru
    _

// kernel: transformer_decoder_wrapper_forward.17
$region0: #{transformer_decoder_wrapper_forward.17}
  #allocation0 [shape = 'u32[]', space=smem, size = 0x4, offset = 0x4, fixed_abs, tag = 'smem constant byte address 0x4 - core index']
  #allocation1 [shape = 'u32[72,128]{1,0:T(1,128)}', space=vmem, size = 0x9000, scoped, tag = 'internal scratch']
  %s0 = inlined_call_operand.vmem [shape: f32[8,2,1,32], index: 0, kind: input, shape index: {}]
  %s1 = inlined_call_operand.vmem [shape: f32[16,2,1,64], index: 1, kind: input, shape index: {}]
  %s2 = inlined_call_operand.vmem [shape: f32[8,2,1,32], index: 2, kind: input, shape index: {}]
  %s3 = inlined_call_operand.hbm [shape: f32[32,32], index: 3, kind: input, shape index: {}]
  %s4 = inlined_call_operand.vmem [shape: f32[1,32], index: 4, kind: input, shape index: {}, may-alias: {4,6}]
  %s5 = inlined_call_operand.vmem [shape: f32[1,32], index: 5, kind: input, shape index: {}]
  %s6 = inlined_call_operand.vmem [shape: f32[1,32], index: 6, kind: input, shape index: {}, may-alias: {4,6}]
  %s7 = inlined_call_operand.vmem [shape: f32[8,2,1,32], index: 7, kind: output, shape index: {}]
  %s8 = sld [smem:[#allocation0]]
  $region225: #{transformer_decoder_wrapper_forward.17} parent=0
    _
  %s10 = ssub.s32 1, %s8
  %s11 = scalar_select 0, %s10, %s8
  $region1: #{transformer_decoder_wrapper_forward.17} parent=0
    #allocation2 [shape = 'u8[8192]{0}', space=vmem, size = 0x2000, scoped, tag = 'input window, operand 0']
    #allocation3 [shape = 'u8[16384]{0}', space=vmem, size = 0x4000, scoped, tag = 'input window, operand 1']
    #allocation4 [shape = 'u8[8192]{0}', space=vmem, size = 0x2000, scoped, tag = 'input window, operand 2']
    #allocation5 [shape = 'u8[16384]{0}', space=vmem, size = 0x4000, scoped, tag = 'input window, operand 3, single buffered']
    #allocation6 [shape = 's32[2]{0}', space=sflag, size = 0x8, scoped, tag = 'scoped memory for transformer_decoder_wrapper_forward.17']
    #allocation7 [shape = 'u8[8192]{0}', space=vmem, size = 0x2000, scoped, tag = 'output window, operand 0']
    %12 = vsyncpa [#allocation6], 0
    loop: start=0, step=1, limit=4
    $region2: #{transformer_decoder_wrapper_forward.17} parent=1 // loop_pre_header
      _
    $region3: #{transformer_decoder_wrapper_forward.17} parent=1 // loop_header
      %s14 = sphi 0, %s18
      %p15 = scmp.ge.s32.totalorder %s14, 4
      %s24 = sphi 0, %s26
      %s27 = sphi 0, %s24
      %s28 = sphi 0, %s27
      %s44 = sphi 0, %s28
      %s50 = sphi 0, %s52
      %s53 = sphi 0, %s50
      %s54 = sphi 0, %s53
      %s70 = sphi 0, %s54
      %s76 = sphi 0, %s78
      %s79 = sphi 0, %s76
      %s80 = sphi 0, %s79
      %s96 = sphi 0, %s80
      %s100 = sphi 0, %s100
      %s102 = sphi 0, %s100
      %s103 = sphi 0, %s102
      %s117 = sphi 0, %s103
      %s121 = sphi 0, %s121
      %s123 = sphi 0, %s121
      %s124 = sphi 0, %s123
      %s138 = sphi 0, %s124
      %s142 = sphi 0, %s142
      %s144 = sphi 0, %s142
      %s145 = sphi 0, %s144
      %s159 = sphi 0, %s145
      %s163 = sphi 0, %s163
      %s165 = sphi 0, %s163
      %s166 = sphi 0, %s165
      %s180 = sphi 0, %s166
      %s186 = sphi 0, %s188
      %s189 = sphi 0, %s186
      %s190 = sphi 0, %s189
      %s206 = sphi 0, %s190
    $region4: #{transformer_decoder_wrapper_forward.17} parent=1 // loop_header_branch
      %17 = sbr.rel (%p15) target = $region8
    $region5: #{transformer_decoder_wrapper_forward.17} parent=1 // loop_body
      %s19 = ssub.s32 %s14, 1
      %s20 = ssub.s32 %s14, 2
      %s21 = sadd.s32 %s14, 1
      %s22 = ssub.s32 %s14, %s21
      %p23 = scmp.eq.s32.totalorder %s22, 0
      %s25 = sadd.s32 %s24, 1
      %s26 = scalar_select %p23, %s24, %s25
      %p29 = pneg %p23
      %p30 = scmp.eq.s32.totalorder %s14, 1
      %p31 = por %p29, %p30
      %p32 = scmp.ne.s32.totalorder %s24, %s27
      %p33 = scmp.eq.s32.totalorder %s14, 0
      %p34 = por %p32, %p33
      %p35 = scmp.ne.s32.totalorder %s24, %s27
      %p36 = scmp.eq.s32.totalorder %s19, 1
      %p37 = por %p35, %p36
      %p38 = scmp.ne.s32.totalorder %s27, %s28
      %p39 = scmp.eq.s32.totalorder %s19, 0
      %p40 = por %p38, %p39
      %p41 = scmp.ne.s32.totalorder %s27, %s28
      %p42 = scmp.eq.s32.totalorder %s20, 1
      %p43 = por %p41, %p42
      %p45 = scmp.ne.s32.totalorder %s28, %s44
      %p46 = scmp.eq.s32.totalorder %s20, 0
      %p47 = por %p45, %p46
      %s48 = ssub.s32 %s14, %s21
      %p49 = scmp.eq.s32.totalorder %s48, 0
      %s51 = sadd.s32 %s50, 1
      %s52 = scalar_select %p49, %s50, %s51
      %p55 = pneg %p49
      %p56 = scmp.eq.s32.totalorder %s14, 1
      %p57 = por %p55, %p56
      %p58 = scmp.ne.s32.totalorder %s50, %s53
      %p59 = scmp.eq.s32.totalorder %s14, 0
      %p60 = por %p58, %p59
      %p61 = scmp.ne.s32.totalorder %s50, %s53
      %p62 = scmp.eq.s32.totalorder %s19, 1
      %p63 = por %p61, %p62
      %p64 = scmp.ne.s32.totalorder %s53, %s54
      %p65 = scmp.eq.s32.totalorder %s19, 0
      %p66 = por %p64, %p65
      %p67 = scmp.ne.s32.totalorder %s53, %s54
      %p68 = scmp.eq.s32.totalorder %s20, 1
      %p69 = por %p67, %p68
      %p71 = scmp.ne.s32.totalorder %s54, %s70
      %p72 = scmp.eq.s32.totalorder %s20, 0
      %p73 = por %p71, %p72
      %s74 = ssub.s32 %s14, %s21
      %p75 = scmp.eq.s32.totalorder %s74, 0
      %s77 = sadd.s32 %s76, 1
      %s78 = scalar_select %p75, %s76, %s77
      %p81 = pneg %p75
      %p82 = scmp.eq.s32.totalorder %s14, 1
      %p83 = por %p81, %p82
      %p84 = scmp.ne.s32.totalorder %s76, %s79
      %p85 = scmp.eq.s32.totalorder %s14, 0
      %p86 = por %p84, %p85
      %p87 = scmp.ne.s32.totalorder %s76, %s79
      %p88 = scmp.eq.s32.totalorder %s19, 1
      %p89 = por %p87, %p88
      %p90 = scmp.ne.s32.totalorder %s79, %s80
      %p91 = scmp.eq.s32.totalorder %s19, 0
      %p92 = por %p90, %p91
      %p93 = scmp.ne.s32.totalorder %s79, %s80
      %p94 = scmp.eq.s32.totalorder %s20, 1
      %p95 = por %p93, %p94
      %p97 = scmp.ne.s32.totalorder %s80, %s96
      %p98 = scmp.eq.s32.totalorder %s20, 0
      %p99 = por %p97, %p98
      %s101 = sadd.s32 %s100, 1
      %p104 = scmp.eq.s32.totalorder %s14, 1
      %p105 = scmp.ne.s32.totalorder %s100, %s102
      %p106 = scmp.eq.s32.totalorder %s14, 0
      %p107 = por %p105, %p106
      %p108 = scmp.ne.s32.totalorder %s100, %s102
      %p109 = scmp.eq.s32.totalorder %s19, 1
      %p110 = por %p108, %p109
      %p111 = scmp.ne.s32.totalorder %s102, %s103
      %p112 = scmp.eq.s32.totalorder %s19, 0
      %p113 = por %p111, %p112
      %p114 = scmp.ne.s32.totalorder %s102, %s103
      %p115 = scmp.eq.s32.totalorder %s20, 1
      %p116 = por %p114, %p115
      %p118 = scmp.ne.s32.totalorder %s103, %s117
      %p119 = scmp.eq.s32.totalorder %s20, 0
      %p120 = por %p118, %p119
      %s122 = sadd.s32 %s121, 1
      %p125 = scmp.eq.s32.totalorder %s14, 1
      %p126 = scmp.ne.s32.totalorder %s121, %s123
      %p127 = scmp.eq.s32.totalorder %s14, 0
      %p128 = por %p126, %p127
      %p129 = scmp.ne.s32.totalorder %s121, %s123
      %p130 = scmp.eq.s32.totalorder %s19, 1
      %p131 = por %p129, %p130
      %p132 = scmp.ne.s32.totalorder %s123, %s124
      %p133 = scmp.eq.s32.totalorder %s19, 0
      %p134 = por %p132, %p133
      %p135 = scmp.ne.s32.totalorder %s123, %s124
      %p136 = scmp.eq.s32.totalorder %s20, 1
      %p137 = por %p135, %p136
      %p139 = scmp.ne.s32.totalorder %s124, %s138
      %p140 = scmp.eq.s32.totalorder %s20, 0
      %p141 = por %p139, %p140
      %s143 = sadd.s32 %s142, 1
      %p146 = scmp.eq.s32.totalorder %s14, 1
      %p147 = scmp.ne.s32.totalorder %s142, %s144
      %p148 = scmp.eq.s32.totalorder %s14, 0
      %p149 = por %p147, %p148
      %p150 = scmp.ne.s32.totalorder %s142, %s144
      %p151 = scmp.eq.s32.totalorder %s19, 1
      %p152 = por %p150, %p151
      %p153 = scmp.ne.s32.totalorder %s144, %s145
      %p154 = scmp.eq.s32.totalorder %s19, 0
      %p155 = por %p153, %p154
      %p156 = scmp.ne.s32.totalorder %s144, %s145
      %p157 = scmp.eq.s32.totalorder %s20, 1
      %p158 = por %p156, %p157
      %p160 = scmp.ne.s32.totalorder %s145, %s159
      %p161 = scmp.eq.s32.totalorder %s20, 0
      %p162 = por %p160, %p161
      %s164 = sadd.s32 %s163, 1
      %p167 = scmp.eq.s32.totalorder %s14, 1
      %p168 = scmp.ne.s32.totalorder %s163, %s165
      %p169 = scmp.eq.s32.totalorder %s14, 0
      %p170 = por %p168, %p169
      %p171 = scmp.ne.s32.totalorder %s163, %s165
      %p172 = scmp.eq.s32.totalorder %s19, 1
      %p173 = por %p171, %p172
      %p174 = scmp.ne.s32.totalorder %s165, %s166
      %p175 = scmp.eq.s32.totalorder %s19, 0
      %p176 = por %p174, %p175
      %p177 = scmp.ne.s32.totalorder %s165, %s166
      %p178 = scmp.eq.s32.totalorder %s20, 1
      %p179 = por %p177, %p178
      %p181 = scmp.ne.s32.totalorder %s166, %s180
      %p182 = scmp.eq.s32.totalorder %s20, 0
      %p183 = por %p181, %p182
      %s184 = ssub.s32 %s14, %s21
      %p185 = scmp.eq.s32.totalorder %s184, 0
      %s187 = sadd.s32 %s186, 1
      %s188 = scalar_select %p185, %s186, %s187
      %p191 = pneg %p185
      %p192 = scmp.eq.s32.totalorder %s14, 1
      %p193 = por %p191, %p192
      %p194 = scmp.ne.s32.totalorder %s186, %s189
      %p195 = scmp.eq.s32.totalorder %s14, 0
      %p196 = por %p194, %p195
      %p197 = scmp.ne.s32.totalorder %s186, %s189
      %p198 = scmp.eq.s32.totalorder %s19, 1
      %p199 = por %p197, %p198
      %p200 = scmp.ne.s32.totalorder %s189, %s190
      %p201 = scmp.eq.s32.totalorder %s19, 0
      %p202 = por %p200, %p201
      %p203 = scmp.ne.s32.totalorder %s189, %s190
      %p204 = scmp.eq.s32.totalorder %s20, 1
      %p205 = por %p203, %p204
      %p207 = scmp.ne.s32.totalorder %s190, %s206
      %p208 = scmp.eq.s32.totalorder %s20, 0
      %p209 = por %p207, %p208
      %p210 = scmp.le.s32.totalorder 1, %s14
      %p211 = scmp.lt.s32.totalorder %s14, 3
      %p212 = pnand %p210, %p211
      %p213 = pneg %p212
      // Predicated region
      $region9: #{transformer_decoder_wrapper_forward.17} parent=5 // pred_check
        _
      $region10: #{transformer_decoder_wrapper_forward.17} parent=5 // pred_check_branch
        %215 = sbr.rel (%p212) target = $region12
      $region11: #{transformer_decoder_wrapper_forward.17} parent=5 // pred_region
        %s216 = ssub.s32 %s14, 1
        // Predicated region
        $region13: #{transformer_decoder_wrapper_forward.17} parent=11 // pred_check
          %p217 = pneg %p113
        $region14: #{transformer_decoder_wrapper_forward.17} parent=11 // pred_check_branch
          %219 = sbr.rel (%p217) target = $region16
        $region15: #{transformer_decoder_wrapper_forward.17} parent=11 // pred_region
          %221 = vsyncadd [#allocation6], 0
          %s222 = sshll.u32 %s3, 4
          %s223 = int_to_ptr.hbm [resolvable:$true] %s222
          %s224 = sshll.u32 [#allocation5], 4
          %s225 = int_to_ptr.vmem [resolvable:$true] %s224
          %230 = dma.hbm_to_vmem [thread:$0]  %s223, 512, %s225, [#allocation6], 128, 128, 8
        $region16: #{transformer_decoder_wrapper_forward.17} parent=11 // pred_fallthru
          _
        // Predicated region
        $region17: #{transformer_decoder_wrapper_forward.17} parent=11 // pred_check
          %p231 = pneg %p134
        $region18: #{transformer_decoder_wrapper_forward.17} parent=11 // pred_check_branch
          %233 = sbr.rel (%p231) target = $region20
        $region19: #{transformer_decoder_wrapper_forward.17} parent=11 // pred_region
          _
        $region20: #{transformer_decoder_wrapper_forward.17} parent=11 // pred_fallthru
          _
        // Predicated region
        $region21: #{transformer_decoder_wrapper_forward.17} parent=11 // pred_check
          %p234 = pneg %p155
        $region22: #{transformer_decoder_wrapper_forward.17} parent=11 // pred_check_branch
          %236 = sbr.rel (%p234) target = $region24
        $region23: #{transformer_decoder_wrapper_forward.17} parent=11 // pred_region
          _
        $region24: #{transformer_decoder_wrapper_forward.17} parent=11 // pred_fallthru
          _
        // Predicated region
        $region25: #{transformer_decoder_wrapper_forward.17} parent=11 // pred_check
          %p237 = pneg %p176
        $region26: #{transformer_decoder_wrapper_forward.17} parent=11 // pred_check_branch
          %239 = sbr.rel (%p237) target = $region28
        $region27: #{transformer_decoder_wrapper_forward.17} parent=11 // pred_region
          _
        $region28: #{transformer_decoder_wrapper_forward.17} parent=11 // pred_fallthru
          _
      $region12: #{transformer_decoder_wrapper_forward.17} parent=5 // pred_fallthru
        _
      %p240 = scmp.lt.s32.totalorder %s14, 2
      // Predicated region
      $region29: #{transformer_decoder_wrapper_forward.17} parent=5 // pred_check
        %p241 = pneg %p240
      $region30: #{transformer_decoder_wrapper_forward.17} parent=5 // pred_check_branch
        %243 = sbr.rel (%p241) target = $region32
      $region31: #{transformer_decoder_wrapper_forward.17} parent=5 // pred_region
        // Predicated region
        $region33: #{transformer_decoder_wrapper_forward.17} parent=31 // pred_check
          %p244 = pneg %p34
        $region34: #{transformer_decoder_wrapper_forward.17} parent=31 // pred_check_branch
          %246 = sbr.rel (%p244) target = $region36
        $region35: #{transformer_decoder_wrapper_forward.17} parent=31 // pred_region
          %s247 = sand.u32 %s24, 1
          %s248 = sand.u32 %s24, 1
          %s249 = smul.addr %s248, 8
          %s250 = scalar_lea.vmem [#allocation2], %s249
          %s251 = scalar_lea.vmem %s0, %s14
          // Predicated region
          $region37: #{transformer_decoder_wrapper_forward.17} parent=35 // pred_check
            _
          $region38: #{transformer_decoder_wrapper_forward.17} parent=35 // pred_check_branch
            %253 = sbr.rel (0) target = $region40
          $region39: #{transformer_decoder_wrapper_forward.17} parent=35 // pred_region
            // Predicated region
            $region41: #{transformer_decoder_wrapper_forward.17} parent=39 // pred_check
              _
            $region42: #{transformer_decoder_wrapper_forward.17} parent=39 // pred_check_branch
              %255 = sbr.rel target = $region44
            $region43: #{transformer_decoder_wrapper_forward.17} parent=39 // pred_region
              // Predicated region
              $region56: #{transformer_decoder_wrapper_forward.17} parent=43 // pred_check
                _
              $region57: #{transformer_decoder_wrapper_forward.17} parent=43 // pred_check_branch
                %285 = sbr.rel (0) target = $region59
              $region58: #{transformer_decoder_wrapper_forward.17} parent=43 // pred_region
                loop: start=0, step=1, limit=1
                $region60: #{transformer_decoder_wrapper_forward.17} parent=58 // loop_pre_header
                  _
                $region61: #{transformer_decoder_wrapper_forward.17} parent=58 // loop_header
                  %s287 = sphi 0, %s291
                  %p288 = scmp.ge.s32.totalorder %s287, 1
                  %s292 = sphi %s251, %s251
                  %s293 = sphi %s250, %s250
                $region62: #{transformer_decoder_wrapper_forward.17} parent=58 // loop_header_branch
                  %290 = sbr.rel (%p288) target = $region66
                $region63: #{transformer_decoder_wrapper_forward.17} parent=58 // loop_body
                  _
                $region64: #{transformer_decoder_wrapper_forward.17} parent=58 // loop_footer
                  %s291 = sadd.s32 1, %s287
                $region65: #{transformer_decoder_wrapper_forward.17} parent=58 // loop_footer_branch
                  %286 = sbr.rel target = $region61
                $region66: #{transformer_decoder_wrapper_forward.17} parent=58 // loop_exit
                  _
                %s295 = ssub.s32 2, 1
                loop: start=0, step=1, limit=1
                $region67: #{transformer_decoder_wrapper_forward.17} parent=58 // loop_pre_header
                  _
                $region68: #{transformer_decoder_wrapper_forward.17} parent=58 // loop_header
                  %s297 = sphi 0, %s301
                  %p298 = scmp.ge.s32.totalorder %s297, 1
                  %s302 = sphi %s251, %s251
                  %s303 = sphi %s250, %s250
                $region69: #{transformer_decoder_wrapper_forward.17} parent=58 // loop_header_branch
                  %300 = sbr.rel (%p298) target = $region73
                $region70: #{transformer_decoder_wrapper_forward.17} parent=58 // loop_body
                  %v304 = vld [vmem:[%s302] sm:%s295]
                  %305 = vst [vmem:[%s303] sm:%s295] %v304
                  %v306 = vld [vmem:[%s302 + $0x2] sm:%s295]
                  %307 = vst [vmem:[%s303 + $0x1] sm:%s295] %v306
                  %v308 = vld [vmem:[%s302 + $0x4] sm:%s295]
                  %309 = vst [vmem:[%s303 + $0x2] sm:%s295] %v308
                  %v310 = vld [vmem:[%s302 + $0x6] sm:%s295]
                  %311 = vst [vmem:[%s303 + $0x3] sm:%s295] %v310
                  %v312 = vld [vmem:[%s302 + $0x8] sm:%s295]
                  %313 = vst [vmem:[%s303 + $0x4] sm:%s295] %v312
                  %v314 = vld [vmem:[%s302 + $0xa] sm:%s295]
                  %315 = vst [vmem:[%s303 + $0x5] sm:%s295] %v314
                  %v316 = vld [vmem:[%s302 + $0xc] sm:%s295]
                  %317 = vst [vmem:[%s303 + $0x6] sm:%s295] %v316
                  %v318 = vld [vmem:[%s302 + $0xe] sm:%s295]
                  %319 = vst [vmem:[%s303 + $0x7] sm:%s295] %v318
                $region71: #{transformer_decoder_wrapper_forward.17} parent=58 // loop_footer
                  %s301 = sadd.s32 1, %s297
                $region72: #{transformer_decoder_wrapper_forward.17} parent=58 // loop_footer_branch
                  %296 = sbr.rel target = $region68
                $region73: #{transformer_decoder_wrapper_forward.17} parent=58 // loop_exit
                  _
              $region59: #{transformer_decoder_wrapper_forward.17} parent=43 // pred_fallthru
                _
            $region44: #{transformer_decoder_wrapper_forward.17} parent=39 // pred_fallthru
              _
            // Predicated region
            $region45: #{transformer_decoder_wrapper_forward.17} parent=39 // pred_check
              _
            $region46: #{transformer_decoder_wrapper_forward.17} parent=39 // pred_check_branch
              %257 = sbr.rel (0) target = $region48
            $region47: #{transformer_decoder_wrapper_forward.17} parent=39 // pred_region
              %s259 = ssub.s32 2, 1
              loop: start=0, step=1, limit=1
              $region49: #{transformer_decoder_wrapper_forward.17} parent=47 // loop_pre_header
                _
              $region50: #{transformer_decoder_wrapper_forward.17} parent=47 // loop_header
                %s261 = sphi 0, %s265
                %p262 = scmp.ge.s32.totalorder %s261, 1
                %s266 = sphi %s251, %s251
                %s267 = sphi %s250, %s250
              $region51: #{transformer_decoder_wrapper_forward.17} parent=47 // loop_header_branch
                %264 = sbr.rel (%p262) target = $region55
              $region52: #{transformer_decoder_wrapper_forward.17} parent=47 // loop_body
                %v268 = vld [vmem:[%s266] sm:%s259]
                %269 = vst [vmem:[%s267] sm:%s259] %v268
                %v270 = vld [vmem:[%s266 + $0x2] sm:%s259]
                %271 = vst [vmem:[%s267 + $0x1] sm:%s259] %v270
                %v272 = vld [vmem:[%s266 + $0x4] sm:%s259]
                %273 = vst [vmem:[%s267 + $0x2] sm:%s259] %v272
                %v274 = vld [vmem:[%s266 + $0x6] sm:%s259]
                %275 = vst [vmem:[%s267 + $0x3] sm:%s259] %v274
                %v276 = vld [vmem:[%s266 + $0x8] sm:%s259]
                %277 = vst [vmem:[%s267 + $0x4] sm:%s259] %v276
                %v278 = vld [vmem:[%s266 + $0xa] sm:%s259]
                %279 = vst [vmem:[%s267 + $0x5] sm:%s259] %v278
                %v280 = vld [vmem:[%s266 + $0xc] sm:%s259]
                %281 = vst [vmem:[%s267 + $0x6] sm:%s259] %v280
                %v282 = vld [vmem:[%s266 + $0xe] sm:%s259]
                %283 = vst [vmem:[%s267 + $0x7] sm:%s259] %v282
              $region53: #{transformer_decoder_wrapper_forward.17} parent=47 // loop_footer
                %s265 = sadd.s32 1, %s261
              $region54: #{transformer_decoder_wrapper_forward.17} parent=47 // loop_footer_branch
                %260 = sbr.rel target = $region50
              $region55: #{transformer_decoder_wrapper_forward.17} parent=47 // loop_exit
                _
            $region48: #{transformer_decoder_wrapper_forward.17} parent=39 // pred_fallthru
              _
          $region40: #{transformer_decoder_wrapper_forward.17} parent=35 // pred_fallthru
            _
          %320 = vnop
        $region36: #{transformer_decoder_wrapper_forward.17} parent=31 // pred_fallthru
          _
        // Predicated region
        $region74: #{transformer_decoder_wrapper_forward.17} parent=31 // pred_check
          %p321 = pneg %p60
        $region75: #{transformer_decoder_wrapper_forward.17} parent=31 // pred_check_branch
          %323 = sbr.rel (%p321) target = $region77
        $region76: #{transformer_decoder_wrapper_forward.17} parent=31 // pred_region
          %s324 = sand.u32 %s50, 1
          %s325 = sand.u32 %s50, 1
          %s326 = smul.addr %s325, 16
          %s327 = scalar_lea.vmem [#allocation3], %s326
          %s328 = scalar_lea.vmem %s1, %s14
          // Predicated region
          $region78: #{transformer_decoder_wrapper_forward.17} parent=76 // pred_check
            _
          $region79: #{transformer_decoder_wrapper_forward.17} parent=76 // pred_check_branch
            %330 = sbr.rel (0) target = $region81
          $region80: #{transformer_decoder_wrapper_forward.17} parent=76 // pred_region
            // Predicated region
            $region82: #{transformer_decoder_wrapper_forward.17} parent=80 // pred_check
              _
            $region83: #{transformer_decoder_wrapper_forward.17} parent=80 // pred_check_branch
              %332 = sbr.rel target = $region85
            $region84: #{transformer_decoder_wrapper_forward.17} parent=80 // pred_region
              // Predicated region
              $region97: #{transformer_decoder_wrapper_forward.17} parent=84 // pred_check
                _
              $region98: #{transformer_decoder_wrapper_forward.17} parent=84 // pred_check_branch
                %378 = sbr.rel (0) target = $region100
              $region99: #{transformer_decoder_wrapper_forward.17} parent=84 // pred_region
                loop: start=0, step=1, limit=1
                $region101: #{transformer_decoder_wrapper_forward.17} parent=99 // loop_pre_header
                  _
                $region102: #{transformer_decoder_wrapper_forward.17} parent=99 // loop_header
                  %s380 = sphi 0, %s384
                  %p381 = scmp.ge.s32.totalorder %s380, 1
                  %s385 = sphi %s328, %s328
                  %s386 = sphi %s327, %s327
                $region103: #{transformer_decoder_wrapper_forward.17} parent=99 // loop_header_branch
                  %383 = sbr.rel (%p381) target = $region107
                $region104: #{transformer_decoder_wrapper_forward.17} parent=99 // loop_body
                  _
                $region105: #{transformer_decoder_wrapper_forward.17} parent=99 // loop_footer
                  %s384 = sadd.s32 1, %s380
                $region106: #{transformer_decoder_wrapper_forward.17} parent=99 // loop_footer_branch
                  %379 = sbr.rel target = $region102
                $region107: #{transformer_decoder_wrapper_forward.17} parent=99 // loop_exit
                  _
                %s388 = ssub.s32 2, 1
                loop: start=0, step=1, limit=1
                $region108: #{transformer_decoder_wrapper_forward.17} parent=99 // loop_pre_header
                  _
                $region109: #{transformer_decoder_wrapper_forward.17} parent=99 // loop_header
                  %s390 = sphi 0, %s394
                  %p391 = scmp.ge.s32.totalorder %s390, 1
                  %s395 = sphi %s328, %s328
                  %s396 = sphi %s327, %s327
                $region110: #{transformer_decoder_wrapper_forward.17} parent=99 // loop_header_branch
                  %393 = sbr.rel (%p391) target = $region114
                $region111: #{transformer_decoder_wrapper_forward.17} parent=99 // loop_body
                  %v397 = vld [vmem:[%s395] sm:%s388]
                  %398 = vst [vmem:[%s396] sm:%s388] %v397
                  %v399 = vld [vmem:[%s395 + $0x2] sm:%s388]
                  %400 = vst [vmem:[%s396 + $0x1] sm:%s388] %v399
                  %v401 = vld [vmem:[%s395 + $0x4] sm:%s388]
                  %402 = vst [vmem:[%s396 + $0x2] sm:%s388] %v401
                  %v403 = vld [vmem:[%s395 + $0x6] sm:%s388]
                  %404 = vst [vmem:[%s396 + $0x3] sm:%s388] %v403
                  %v405 = vld [vmem:[%s395 + $0x8] sm:%s388]
                  %406 = vst [vmem:[%s396 + $0x4] sm:%s388] %v405
                  %v407 = vld [vmem:[%s395 + $0xa] sm:%s388]
                  %408 = vst [vmem:[%s396 + $0x5] sm:%s388] %v407
                  %v409 = vld [vmem:[%s395 + $0xc] sm:%s388]
                  %410 = vst [vmem:[%s396 + $0x6] sm:%s388] %v409
                  %v411 = vld [vmem:[%s395 + $0xe] sm:%s388]
                  %412 = vst [vmem:[%s396 + $0x7] sm:%s388] %v411
                  %v413 = vld [vmem:[%s395 + $0x10] sm:%s388]
                  %414 = vst [vmem:[%s396 + $0x8] sm:%s388] %v413
                  %v415 = vld [vmem:[%s395 + $0x12] sm:%s388]
                  %416 = vst [vmem:[%s396 + $0x9] sm:%s388] %v415
                  %v417 = vld [vmem:[%s395 + $0x14] sm:%s388]
                  %418 = vst [vmem:[%s396 + $0xa] sm:%s388] %v417
                  %v419 = vld [vmem:[%s395 + $0x16] sm:%s388]
                  %420 = vst [vmem:[%s396 + $0xb] sm:%s388] %v419
                  %v421 = vld [vmem:[%s395 + $0x18] sm:%s388]
                  %422 = vst [vmem:[%s396 + $0xc] sm:%s388] %v421
                  %v423 = vld [vmem:[%s395 + $0x1a] sm:%s388]
                  %424 = vst [vmem:[%s396 + $0xd] sm:%s388] %v423
                  %v425 = vld [vmem:[%s395 + $0x1c] sm:%s388]
                  %426 = vst [vmem:[%s396 + $0xe] sm:%s388] %v425
                  %v427 = vld [vmem:[%s395 + $0x1e] sm:%s388]
                  %428 = vst [vmem:[%s396 + $0xf] sm:%s388] %v427
                $region112: #{transformer_decoder_wrapper_forward.17} parent=99 // loop_footer
                  %s394 = sadd.s32 1, %s390
                $region113: #{transformer_decoder_wrapper_forward.17} parent=99 // loop_footer_branch
                  %389 = sbr.rel target = $region109
                $region114: #{transformer_decoder_wrapper_forward.17} parent=99 // loop_exit
                  _
              $region100: #{transformer_decoder_wrapper_forward.17} parent=84 // pred_fallthru
                _
            $region85: #{transformer_decoder_wrapper_forward.17} parent=80 // pred_fallthru
              _
            // Predicated region
            $region86: #{transformer_decoder_wrapper_forward.17} parent=80 // pred_check
              _
            $region87: #{transformer_decoder_wrapper_forward.17} parent=80 // pred_check_branch
              %334 = sbr.rel (0) target = $region89
            $region88: #{transformer_decoder_wrapper_forward.17} parent=80 // pred_region
              %s336 = ssub.s32 2, 1
              loop: start=0, step=1, limit=1
              $region90: #{transformer_decoder_wrapper_forward.17} parent=88 // loop_pre_header
                _
              $region91: #{transformer_decoder_wrapper_forward.17} parent=88 // loop_header
                %s338 = sphi 0, %s342
                %p339 = scmp.ge.s32.totalorder %s338, 1
                %s343 = sphi %s328, %s328
                %s344 = sphi %s327, %s327
              $region92: #{transformer_decoder_wrapper_forward.17} parent=88 // loop_header_branch
                %341 = sbr.rel (%p339) target = $region96
              $region93: #{transformer_decoder_wrapper_forward.17} parent=88 // loop_body
                %v345 = vld [vmem:[%s343] sm:%s336]
                %346 = vst [vmem:[%s344] sm:%s336] %v345
                %v347 = vld [vmem:[%s343 + $0x2] sm:%s336]
                %348 = vst [vmem:[%s344 + $0x1] sm:%s336] %v347
                %v349 = vld [vmem:[%s343 + $0x4] sm:%s336]
                %350 = vst [vmem:[%s344 + $0x2] sm:%s336] %v349
                %v351 = vld [vmem:[%s343 + $0x6] sm:%s336]
                %352 = vst [vmem:[%s344 + $0x3] sm:%s336] %v351
                %v353 = vld [vmem:[%s343 + $0x8] sm:%s336]
                %354 = vst [vmem:[%s344 + $0x4] sm:%s336] %v353
                %v355 = vld [vmem:[%s343 + $0xa] sm:%s336]
                %356 = vst [vmem:[%s344 + $0x5] sm:%s336] %v355
                %v357 = vld [vmem:[%s343 + $0xc] sm:%s336]
                %358 = vst [vmem:[%s344 + $0x6] sm:%s336] %v357
                %v359 = vld [vmem:[%s343 + $0xe] sm:%s336]
                %360 = vst [vmem:[%s344 + $0x7] sm:%s336] %v359
                %v361 = vld [vmem:[%s343 + $0x10] sm:%s336]
                %362 = vst [vmem:[%s344 + $0x8] sm:%s336] %v361
                %v363 = vld [vmem:[%s343 + $0x12] sm:%s336]
                %364 = vst [vmem:[%s344 + $0x9] sm:%s336] %v363
                %v365 = vld [vmem:[%s343 + $0x14] sm:%s336]
                %366 = vst [vmem:[%s344 + $0xa] sm:%s336] %v365
                %v367 = vld [vmem:[%s343 + $0x16] sm:%s336]
                %368 = vst [vmem:[%s344 + $0xb] sm:%s336] %v367
                %v369 = vld [vmem:[%s343 + $0x18] sm:%s336]
                %370 = vst [vmem:[%s344 + $0xc] sm:%s336] %v369
                %v371 = vld [vmem:[%s343 + $0x1a] sm:%s336]
                %372 = vst [vmem:[%s344 + $0xd] sm:%s336] %v371
                %v373 = vld [vmem:[%s343 + $0x1c] sm:%s336]
                %374 = vst [vmem:[%s344 + $0xe] sm:%s336] %v373
                %v375 = vld [vmem:[%s343 + $0x1e] sm:%s336]
                %376 = vst [vmem:[%s344 + $0xf] sm:%s336] %v375
              $region94: #{transformer_decoder_wrapper_forward.17} parent=88 // loop_footer
                %s342 = sadd.s32 1, %s338
              $region95: #{transformer_decoder_wrapper_forward.17} parent=88 // loop_footer_branch
                %337 = sbr.rel target = $region91
              $region96: #{transformer_decoder_wrapper_forward.17} parent=88 // loop_exit
                _
            $region89: #{transformer_decoder_wrapper_forward.17} parent=80 // pred_fallthru
              _
          $region81: #{transformer_decoder_wrapper_forward.17} parent=76 // pred_fallthru
            _
          %429 = vnop
        $region77: #{transformer_decoder_wrapper_forward.17} parent=31 // pred_fallthru
          _
        // Predicated region
        $region115: #{transformer_decoder_wrapper_forward.17} parent=31 // pred_check
          %p430 = pneg %p86
        $region116: #{transformer_decoder_wrapper_forward.17} parent=31 // pred_check_branch
          %432 = sbr.rel (%p430) target = $region118
        $region117: #{transformer_decoder_wrapper_forward.17} parent=31 // pred_region
          %s433 = sand.u32 %s76, 1
          %s434 = sand.u32 %s76, 1
          %s435 = smul.addr %s434, 8
          %s436 = scalar_lea.vmem [#allocation4], %s435
          %s437 = scalar_lea.vmem %s2, %s14
          // Predicated region
          $region119: #{transformer_decoder_wrapper_forward.17} parent=117 // pred_check
            _
          $region120: #{transformer_decoder_wrapper_forward.17} parent=117 // pred_check_branch
            %439 = sbr.rel (0) target = $region122
          $region121: #{transformer_decoder_wrapper_forward.17} parent=117 // pred_region
            // Predicated region
            $region123: #{transformer_decoder_wrapper_forward.17} parent=121 // pred_check
              _
            $region124: #{transformer_decoder_wrapper_forward.17} parent=121 // pred_check_branch
              %441 = sbr.rel target = $region126
            $region125: #{transformer_decoder_wrapper_forward.17} parent=121 // pred_region
              // Predicated region
              $region138: #{transformer_decoder_wrapper_forward.17} parent=125 // pred_check
                _
              $region139: #{transformer_decoder_wrapper_forward.17} parent=125 // pred_check_branch
                %471 = sbr.rel (0) target = $region141
              $region140: #{transformer_decoder_wrapper_forward.17} parent=125 // pred_region
                loop: start=0, step=1, limit=1
                $region142: #{transformer_decoder_wrapper_forward.17} parent=140 // loop_pre_header
                  _
                $region143: #{transformer_decoder_wrapper_forward.17} parent=140 // loop_header
                  %s473 = sphi 0, %s477
                  %p474 = scmp.ge.s32.totalorder %s473, 1
                  %s478 = sphi %s437, %s437
                  %s479 = sphi %s436, %s436
                $region144: #{transformer_decoder_wrapper_forward.17} parent=140 // loop_header_branch
                  %476 = sbr.rel (%p474) target = $region148
                $region145: #{transformer_decoder_wrapper_forward.17} parent=140 // loop_body
                  _
                $region146: #{transformer_decoder_wrapper_forward.17} parent=140 // loop_footer
                  %s477 = sadd.s32 1, %s473
                $region147: #{transformer_decoder_wrapper_forward.17} parent=140 // loop_footer_branch
                  %472 = sbr.rel target = $region143
                $region148: #{transformer_decoder_wrapper_forward.17} parent=140 // loop_exit
                  _
                %s481 = ssub.s32 2, 1
                loop: start=0, step=1, limit=1
                $region149: #{transformer_decoder_wrapper_forward.17} parent=140 // loop_pre_header
                  _
                $region150: #{transformer_decoder_wrapper_forward.17} parent=140 // loop_header
                  %s483 = sphi 0, %s487
                  %p484 = scmp.ge.s32.totalorder %s483, 1
                  %s488 = sphi %s437, %s437
                  %s489 = sphi %s436, %s436
                $region151: #{transformer_decoder_wrapper_forward.17} parent=140 // loop_header_branch
                  %486 = sbr.rel (%p484) target = $region155
                $region152: #{transformer_decoder_wrapper_forward.17} parent=140 // loop_body
                  %v490 = vld [vmem:[%s488] sm:%s481]
                  %491 = vst [vmem:[%s489] sm:%s481] %v490
                  %v492 = vld [vmem:[%s488 + $0x2] sm:%s481]
                  %493 = vst [vmem:[%s489 + $0x1] sm:%s481] %v492
                  %v494 = vld [vmem:[%s488 + $0x4] sm:%s481]
                  %495 = vst [vmem:[%s489 + $0x2] sm:%s481] %v494
                  %v496 = vld [vmem:[%s488 + $0x6] sm:%s481]
                  %497 = vst [vmem:[%s489 + $0x3] sm:%s481] %v496
                  %v498 = vld [vmem:[%s488 + $0x8] sm:%s481]
                  %499 = vst [vmem:[%s489 + $0x4] sm:%s481] %v498
                  %v500 = vld [vmem:[%s488 + $0xa] sm:%s481]
                  %501 = vst [vmem:[%s489 + $0x5] sm:%s481] %v500
                  %v502 = vld [vmem:[%s488 + $0xc] sm:%s481]
                  %503 = vst [vmem:[%s489 + $0x6] sm:%s481] %v502
                  %v504 = vld [vmem:[%s488 + $0xe] sm:%s481]
                  %505 = vst [vmem:[%s489 + $0x7] sm:%s481] %v504
                $region153: #{transformer_decoder_wrapper_forward.17} parent=140 // loop_footer
                  %s487 = sadd.s32 1, %s483
                $region154: #{transformer_decoder_wrapper_forward.17} parent=140 // loop_footer_branch
                  %482 = sbr.rel target = $region150
                $region155: #{transformer_decoder_wrapper_forward.17} parent=140 // loop_exit
                  _
              $region141: #{transformer_decoder_wrapper_forward.17} parent=125 // pred_fallthru
                _
            $region126: #{transformer_decoder_wrapper_forward.17} parent=121 // pred_fallthru
              _
            // Predicated region
            $region127: #{transformer_decoder_wrapper_forward.17} parent=121 // pred_check
              _
            $region128: #{transformer_decoder_wrapper_forward.17} parent=121 // pred_check_branch
              %443 = sbr.rel (0) target = $region130
            $region129: #{transformer_decoder_wrapper_forward.17} parent=121 // pred_region
              %s445 = ssub.s32 2, 1
              loop: start=0, step=1, limit=1
              $region131: #{transformer_decoder_wrapper_forward.17} parent=129 // loop_pre_header
                _
              $region132: #{transformer_decoder_wrapper_forward.17} parent=129 // loop_header
                %s447 = sphi 0, %s451
                %p448 = scmp.ge.s32.totalorder %s447, 1
                %s452 = sphi %s437, %s437
                %s453 = sphi %s436, %s436
              $region133: #{transformer_decoder_wrapper_forward.17} parent=129 // loop_header_branch
                %450 = sbr.rel (%p448) target = $region137
              $region134: #{transformer_decoder_wrapper_forward.17} parent=129 // loop_body
                %v454 = vld [vmem:[%s452] sm:%s445]
                %455 = vst [vmem:[%s453] sm:%s445] %v454
                %v456 = vld [vmem:[%s452 + $0x2] sm:%s445]
                %457 = vst [vmem:[%s453 + $0x1] sm:%s445] %v456
                %v458 = vld [vmem:[%s452 + $0x4] sm:%s445]
                %459 = vst [vmem:[%s453 + $0x2] sm:%s445] %v458
                %v460 = vld [vmem:[%s452 + $0x6] sm:%s445]
                %461 = vst [vmem:[%s453 + $0x3] sm:%s445] %v460
                %v462 = vld [vmem:[%s452 + $0x8] sm:%s445]
                %463 = vst [vmem:[%s453 + $0x4] sm:%s445] %v462
                %v464 = vld [vmem:[%s452 + $0xa] sm:%s445]
                %465 = vst [vmem:[%s453 + $0x5] sm:%s445] %v464
                %v466 = vld [vmem:[%s452 + $0xc] sm:%s445]
                %467 = vst [vmem:[%s453 + $0x6] sm:%s445] %v466
                %v468 = vld [vmem:[%s452 + $0xe] sm:%s445]
                %469 = vst [vmem:[%s453 + $0x7] sm:%s445] %v468
              $region135: #{transformer_decoder_wrapper_forward.17} parent=129 // loop_footer
                %s451 = sadd.s32 1, %s447
              $region136: #{transformer_decoder_wrapper_forward.17} parent=129 // loop_footer_branch
                %446 = sbr.rel target = $region132
              $region137: #{transformer_decoder_wrapper_forward.17} parent=129 // loop_exit
                _
            $region130: #{transformer_decoder_wrapper_forward.17} parent=121 // pred_fallthru
              _
          $region122: #{transformer_decoder_wrapper_forward.17} parent=117 // pred_fallthru
            _
          %506 = vnop
        $region118: #{transformer_decoder_wrapper_forward.17} parent=31 // pred_fallthru
          _
      $region32: #{transformer_decoder_wrapper_forward.17} parent=5 // pred_fallthru
        _
      %p507 = scmp.le.s32.totalorder 1, %s14
      %p508 = scmp.lt.s32.totalorder %s14, 3
      %p509 = pnand %p507, %p508
      %p510 = pneg %p509
      // Predicated region
      $region156: #{transformer_decoder_wrapper_forward.17} parent=5 // pred_check
        _
      $region157: #{transformer_decoder_wrapper_forward.17} parent=5 // pred_check_branch
        %512 = sbr.rel (%p509) target = $region159
      $region158: #{transformer_decoder_wrapper_forward.17} parent=5 // pred_region
        %s513 = ssub.s32 %s14, 1
        %s514 = sand.u32 %s27, 1
        %s515 = sand.u32 %s27, 1
        %s516 = smul.addr %s515, 8
        %s517 = scalar_lea.vmem [#allocation2], %s516
        // Predicated region
        $region160: #{transformer_decoder_wrapper_forward.17} parent=158 // pred_check
          %p518 = pneg %p40
        $region161: #{transformer_decoder_wrapper_forward.17} parent=158 // pred_check_branch
          %520 = sbr.rel (%p518) target = $region163
        $region162: #{transformer_decoder_wrapper_forward.17} parent=158 // pred_region
          _
        $region163: #{transformer_decoder_wrapper_forward.17} parent=158 // pred_fallthru
          _
        %s521 = sand.u32 %s53, 1
        %s522 = sand.u32 %s53, 1
        %s523 = smul.addr %s522, 16
        %s524 = scalar_lea.vmem [#allocation3], %s523
        // Predicated region
        $region164: #{transformer_decoder_wrapper_forward.17} parent=158 // pred_check
          %p525 = pneg %p66
        $region165: #{transformer_decoder_wrapper_forward.17} parent=158 // pred_check_branch
          %527 = sbr.rel (%p525) target = $region167
        $region166: #{transformer_decoder_wrapper_forward.17} parent=158 // pred_region
          _
        $region167: #{transformer_decoder_wrapper_forward.17} parent=158 // pred_fallthru
          _
        %s528 = sand.u32 %s79, 1
        %s529 = sand.u32 %s79, 1
        %s530 = smul.addr %s529, 8
        %s531 = scalar_lea.vmem [#allocation4], %s530
        // Predicated region
        $region168: #{transformer_decoder_wrapper_forward.17} parent=158 // pred_check
          %p532 = pneg %p92
        $region169: #{transformer_decoder_wrapper_forward.17} parent=158 // pred_check_branch
          %534 = sbr.rel (%p532) target = $region171
        $region170: #{transformer_decoder_wrapper_forward.17} parent=158 // pred_region
          _
        $region171: #{transformer_decoder_wrapper_forward.17} parent=158 // pred_fallthru
          _
        // Predicated region
        $region172: #{transformer_decoder_wrapper_forward.17} parent=158 // pred_check
          %p535 = pneg %p113
        $region173: #{transformer_decoder_wrapper_forward.17} parent=158 // pred_check_branch
          %537 = sbr.rel (%p535) target = $region175
        $region174: #{transformer_decoder_wrapper_forward.17} parent=158 // pred_region
          %539 = dma.done [#allocation6], 512
        $region175: #{transformer_decoder_wrapper_forward.17} parent=158 // pred_fallthru
          _
        %s540 = sand.u32 %s27, 1
        %s541 = sand.u32 %s27, 1
        %s542 = smul.addr %s541, 8
        %s543 = scalar_lea.vmem [#allocation2], %s542
        %p544 = pneg %p40
        %p545 = pneg %p37
        %s546 = sand.u32 %s53, 1
        %s547 = sand.u32 %s53, 1
        %s548 = smul.addr %s547, 16
        %s549 = scalar_lea.vmem [#allocation3], %s548
        %p550 = pneg %p66
        %p551 = pneg %p63
        %s552 = sand.u32 %s79, 1
        %s553 = sand.u32 %s79, 1
        %s554 = smul.addr %s553, 8
        %s555 = scalar_lea.vmem [#allocation4], %s554
        %p556 = pneg %p92
        %p557 = pneg %p89
        %p558 = pneg %p113
        %p559 = pneg %p110
        %p560 = pneg %p134
        %p561 = pneg %p131
        %p562 = pneg %p155
        %p563 = pneg %p152
        %p564 = pneg %p176
        %p565 = pneg %p173
        %p566 = pneg %p202
        %p567 = pneg %p199
        %s568 = sand.u32 %s189, 1
        %s569 = sand.u32 %s189, 1
        %s570 = smul.addr %s569, 8
        %s571 = scalar_lea.vmem [#allocation7], %s570
        %v572 = vld [vmem:[%s517] sm:$0x1]
        %v573 = vld [vmem:[%s517 + $0x1] sm:$0x1]
        %v574 = vld [vmem:[%s517 + $0x2] sm:$0x1]
        %v575 = vld [vmem:[%s517 + $0x3] sm:$0x1]
        %v576 = vld [vmem:[%s517 + $0x4] sm:$0x1]
        %v577 = vld [vmem:[%s517 + $0x5] sm:$0x1]
        %v578 = vld [vmem:[%s517 + $0x6] sm:$0x1]
        %v579 = vld [vmem:[%s517 + $0x7] sm:$0x1]
        %v580 = vld [vmem:[%s524] sm:$0x1]
        %v581 = vld [vmem:[%s524 + $0x1] sm:$0x1]
        %v582 = vld [vmem:[%s524 + $0x2] sm:$0x1]
        %v583 = vld [vmem:[%s524 + $0x3] sm:$0x1]
        %v584 = vld [vmem:[%s524 + $0x4] sm:$0x1]
        %v585 = vld [vmem:[%s524 + $0x5] sm:$0x1]
        %v586 = vld [vmem:[%s524 + $0x6] sm:$0x1]
        %v587 = vld [vmem:[%s524 + $0x7] sm:$0x1]
        %v588 = vld [vmem:[%s524 + $0x8] sm:$0x1]
        %v589 = vld [vmem:[%s524 + $0x9] sm:$0x1]
        %v590 = vld [vmem:[%s524 + $0xa] sm:$0x1]
        %v591 = vld [vmem:[%s524 + $0xb] sm:$0x1]
        %v592 = vld [vmem:[%s524 + $0xc] sm:$0x1]
        %v593 = vld [vmem:[%s524 + $0xd] sm:$0x1]
        %v594 = vld [vmem:[%s524 + $0xe] sm:$0x1]
        %v595 = vld [vmem:[%s524 + $0xf] sm:$0x1]
        %v596 = vld [vmem:[%s531] sm:$0x1]
        %v597 = vld [vmem:[%s531 + $0x1] sm:$0x1]
        %v598 = vld [vmem:[%s531 + $0x2] sm:$0x1]
        %v599 = vld [vmem:[%s531 + $0x3] sm:$0x1]
        %v600 = vld [vmem:[%s531 + $0x4] sm:$0x1]
        %v601 = vld [vmem:[%s531 + $0x5] sm:$0x1]
        %v602 = vld [vmem:[%s531 + $0x6] sm:$0x1]
        %v603 = vld [vmem:[%s531 + $0x7] sm:$0x1]
        %v604 = vld [vmem:[#allocation5] sm:$0xff]
        %v605 = vld [vmem:[#allocation5 + $0x8] sm:$0xff]
        %v606 = vld [vmem:[#allocation5 + $0x10] sm:$0xff]
        %v607 = vld [vmem:[#allocation5 + $0x18] sm:$0xff]
        %v608 = vld [vmem:[%s4] sm:$0x1]
        %v609 = vld [vmem:[%s5] sm:$0x1]
        %v610 = vld [vmem:[%s6] sm:$0x1]
        %v611 = vmul.f32 %v572, 0.35355338
        %v612 = vmul.f32 %v573, 0.35355338
        %v613 = vmul.f32 %v574, 0.35355338
        %v614 = vmul.f32 %v575, 0.35355338
        %v615 = vmul.f32 %v576, 0.35355338
        %v616 = vmul.f32 %v577, 0.35355338
        %v617 = vmul.f32 %v578, 0.35355338
        %v618 = vmul.f32 %v579, 0.35355338
        %627 = vst [vmem:[#allocation1] ss:$9 sm:$0xff] %v611
        %s628 = scalar_lea.vmem [#allocation1], 1
        %629 = vst [vmem:[%s628] ss:$9 sm:$0xff] %v612
        %s630 = scalar_lea.vmem [#allocation1], 2
        %631 = vst [vmem:[%s630] ss:$9 sm:$0xff] %v613
        %s632 = scalar_lea.vmem [#allocation1], 3
        %633 = vst [vmem:[%s632] ss:$9 sm:$0xff] %v614
        %s634 = scalar_lea.vmem [#allocation1], 4
        %635 = vst [vmem:[%s634] ss:$9 sm:$0xff] %v615
        %s636 = scalar_lea.vmem [#allocation1], 5
        %637 = vst [vmem:[%s636] ss:$9 sm:$0xff] %v616
        %s638 = scalar_lea.vmem [#allocation1], 6
        %639 = vst [vmem:[%s638] ss:$9 sm:$0xff] %v617
        %s640 = scalar_lea.vmem [#allocation1], 7
        %641 = vst [vmem:[%s640] ss:$9 sm:$0xff] %v618
        %v642 = vld [vmem:[#allocation1] sm:$0xff]
        %659 = vst [vmem:[#allocation1] ss:$9 sm:$0xff] %v580
        %s660 = scalar_lea.vmem [#allocation1], 1
        %661 = vst [vmem:[%s660] ss:$9 sm:$0xff] %v581
        %s662 = scalar_lea.vmem [#allocation1], 2
        %663 = vst [vmem:[%s662] ss:$9 sm:$0xff] %v582
        %s664 = scalar_lea.vmem [#allocation1], 3
        %665 = vst [vmem:[%s664] ss:$9 sm:$0xff] %v583
        %s666 = scalar_lea.vmem [#allocation1], 4
        %667 = vst [vmem:[%s666] ss:$9 sm:$0xff] %v584
        %s668 = scalar_lea.vmem [#allocation1], 5
        %669 = vst [vmem:[%s668] ss:$9 sm:$0xff] %v585
        %s670 = scalar_lea.vmem [#allocation1], 6
        %671 = vst [vmem:[%s670] ss:$9 sm:$0xff] %v586
        %s672 = scalar_lea.vmem [#allocation1], 7
        %673 = vst [vmem:[%s672] ss:$9 sm:$0xff] %v587
        %v674 = vld [vmem:[#allocation1] sm:$0xff]
        %675 = vst [vmem:[#allocation1] ss:$9 sm:$0xff] %v588
        %676 = vst [vmem:[%s660] ss:$9 sm:$0xff] %v589
        %677 = vst [vmem:[%s662] ss:$9 sm:$0xff] %v590
        %678 = vst [vmem:[%s664] ss:$9 sm:$0xff] %v591
        %679 = vst [vmem:[%s666] ss:$9 sm:$0xff] %v592
        %680 = vst [vmem:[%s668] ss:$9 sm:$0xff] %v593
        %681 = vst [vmem:[%s670] ss:$9 sm:$0xff] %v594
        %682 = vst [vmem:[%s672] ss:$9 sm:$0xff] %v595
        %v683 = vld [vmem:[#allocation1] sm:$0xff]
        %vm684 = vcmask 64512
        %v685 = vsel %vm684, %v642, 0
        %v687 = vsel %vm684, %v674, 0
        %v689 = vsel %vm684, %v683, 0
        %691 = vmatpush.xpose.msra.mxu0 0.0
        %692 = vmatpush.xpose.msra.mxu0 0.0
        %693 = vmatpush.xpose.msra.mxu0 0.0
        %694 = vmatpush.xpose.msra.mxu0 0.0
        %695 = vmatpush.xpose.msra.mxu0 0.0
        %696 = vmatpush.xpose.msra.mxu0 0.0
        %697 = vmatpush.xpose.msra.mxu0 0.0
        %698 = vmatpush.xpose.msra.mxu0 0.0
        %699 = vmatpush.xpose.msra.mxu0 0.0
        %700 = vmatpush.xpose.msra.mxu0 0.0
        %701 = vmatpush.xpose.msra.mxu0 0.0
        %702 = vmatpush.xpose.msra.mxu0 0.0
        %703 = vmatpush.xpose.msra.mxu0 0.0
        %704 = vmatpush.xpose.msra.mxu0 0.0
        %705 = vmatpush.xpose.msra.mxu0 %v689
        %706 = vmatpush.xpose.msra.mxu0 %v687
        %707 = vmatmul.f32.gmra.mxu0 %v685
        %v708 = vpop.f32.mrf.mxu0
        %v709 = vadd.f32 0.0, %v708
        %710 = vdwg.mxu0
        %vm711 = vcmask 130048
        %v712 = vsel %vm711, %v709, -inf
        %713 = vmax.xlane.f32.xlu0 %v712
        %v714 = vpop.xlane.xlu0 %713
        %v715 = vsub.f32 %v709, %v714
        %v716 = vmul.f32 %v715, 1.442695
        %v717 = vpow.pop %v716
        %v718 = vsel %vm711, %v717, 0.0
        %719 = vadd.xlane.f32.xlu0 %v718
        %v720 = vpop.xlane.xlu0 %719
        %v721 = vrcp.pop %v720
        %v722 = vmul.f32 %v717, %v721
        %723 = vst [vmem:[#allocation1] ss:$9 sm:$0xff] %v580
        %s724 = scalar_lea.vmem [#allocation1], 1
        %725 = vst [vmem:[%s724] ss:$9 sm:$0xff] %v581
        %s726 = scalar_lea.vmem [#allocation1], 2
        %727 = vst [vmem:[%s726] ss:$9 sm:$0xff] %v582
        %s728 = scalar_lea.vmem [#allocation1], 3
        %729 = vst [vmem:[%s728] ss:$9 sm:$0xff] %v583
        %s730 = scalar_lea.vmem [#allocation1], 4
        %731 = vst [vmem:[%s730] ss:$9 sm:$0xff] %v584
        %s732 = scalar_lea.vmem [#allocation1], 5
        %733 = vst [vmem:[%s732] ss:$9 sm:$0xff] %v585
        %s734 = scalar_lea.vmem [#allocation1], 6
        %735 = vst [vmem:[%s734] ss:$9 sm:$0xff] %v586
        %s736 = scalar_lea.vmem [#allocation1], 7
        %737 = vst [vmem:[%s736] ss:$9 sm:$0xff] %v587
        %v738 = vld [vmem:[#allocation1] sm:$0xff]
        %739 = vst [vmem:[#allocation1] ss:$9 sm:$0xff] %v588
        %740 = vst [vmem:[%s724] ss:$9 sm:$0xff] %v589
        %741 = vst [vmem:[%s726] ss:$9 sm:$0xff] %v590
        %742 = vst [vmem:[%s728] ss:$9 sm:$0xff] %v591
        %743 = vst [vmem:[%s730] ss:$9 sm:$0xff] %v592
        %744 = vst [vmem:[%s732] ss:$9 sm:$0xff] %v593
        %745 = vst [vmem:[%s734] ss:$9 sm:$0xff] %v594
        %746 = vst [vmem:[%s736] ss:$9 sm:$0xff] %v595
        %v747 = vld [vmem:[#allocation1] sm:$0xff]
        %748 = vrot.lane.b32.xlu0 %v738, 96
        %v749 = vpop.permute.xlu0 %748
        %750 = vrot.lane.b32.xlu0 %v747, 96
        %v751 = vpop.permute.xlu0 %750
        %v755 = vsel %vm711, %v722, 0
        %757 = vmatpush.msra.mxu0 0.0
        %758 = vmatpush.msra.mxu0 0.0
        %759 = vmatpush.msra.mxu0 0.0
        %760 = vmatpush.msra.mxu0 0.0
        %761 = vmatpush.msra.mxu0 0.0
        %762 = vmatpush.msra.mxu0 0.0
        %763 = vmatpush.msra.mxu0 0.0
        %764 = vmatpush.msra.mxu0 0.0
        %765 = vmatpush.msra.mxu0 0.0
        %766 = vmatpush.msra.mxu0 0.0
        %767 = vmatpush.msra.mxu0 0.0
        %768 = vmatpush.msra.mxu0 0.0
        %769 = vmatpush.msra.mxu0 0.0
        %770 = vmatpush.msra.mxu0 0.0
        %771 = vmatpush.msra.mxu0 %v751
        %772 = vmatpush.msra.mxu0 %v749
        %773 = vmatmul.f32.gmra.mxu0 %v755
        %v774 = vpop.f32.mrf.mxu0
        %v775 = vadd.f32 0.0, %v774
        %776 = vdwg.mxu0
        %777 = vst [vmem:[#allocation1] ss:$9 sm:$0xff] %v611
        %s778 = scalar_lea.vmem [#allocation1], 1
        %779 = vst [vmem:[%s778] ss:$9 sm:$0xff] %v612
        %s780 = scalar_lea.vmem [#allocation1], 2
        %781 = vst [vmem:[%s780] ss:$9 sm:$0xff] %v613
        %s782 = scalar_lea.vmem [#allocation1], 3
        %783 = vst [vmem:[%s782] ss:$9 sm:$0xff] %v614
        %s784 = scalar_lea.vmem [#allocation1], 4
        %785 = vst [vmem:[%s784] ss:$9 sm:$0xff] %v615
        %s786 = scalar_lea.vmem [#allocation1], 5
        %787 = vst [vmem:[%s786] ss:$9 sm:$0xff] %v616
        %s788 = scalar_lea.vmem [#allocation1], 6
        %789 = vst [vmem:[%s788] ss:$9 sm:$0xff] %v617
        %s790 = scalar_lea.vmem [#allocation1], 7
        %791 = vst [vmem:[%s790] ss:$9 sm:$0xff] %v618
        %v792 = vld [vmem:[#allocation1] sm:$0xff]
        %793 = vrot.lane.b32.xlu0 %v792, 120
        %v794 = vpop.permute.xlu0 %793
        %795 = vst [vmem:[#allocation1] ss:$9 sm:$0xff] %v580
        %s796 = scalar_lea.vmem [#allocation1], 1
        %797 = vst [vmem:[%s796] ss:$9 sm:$0xff] %v581
        %s798 = scalar_lea.vmem [#allocation1], 2
        %799 = vst [vmem:[%s798] ss:$9 sm:$0xff] %v582
        %s800 = scalar_lea.vmem [#allocation1], 3
        %801 = vst [vmem:[%s800] ss:$9 sm:$0xff] %v583
        %s802 = scalar_lea.vmem [#allocation1], 4
        %803 = vst [vmem:[%s802] ss:$9 sm:$0xff] %v584
        %s804 = scalar_lea.vmem [#allocation1], 5
        %805 = vst [vmem:[%s804] ss:$9 sm:$0xff] %v585
        %s806 = scalar_lea.vmem [#allocation1], 6
        %807 = vst [vmem:[%s806] ss:$9 sm:$0xff] %v586
        %s808 = scalar_lea.vmem [#allocation1], 7
        %809 = vst [vmem:[%s808] ss:$9 sm:$0xff] %v587
        %v810 = vld [vmem:[#allocation1] sm:$0xff]
        %811 = vst [vmem:[#allocation1] ss:$9 sm:$0xff] %v588
        %812 = vst [vmem:[%s796] ss:$9 sm:$0xff] %v589
        %813 = vst [vmem:[%s798] ss:$9 sm:$0xff] %v590
        %814 = vst [vmem:[%s800] ss:$9 sm:$0xff] %v591
        %815 = vst [vmem:[%s802] ss:$9 sm:$0xff] %v592
        %816 = vst [vmem:[%s804] ss:$9 sm:$0xff] %v593
        %817 = vst [vmem:[%s806] ss:$9 sm:$0xff] %v594
        %818 = vst [vmem:[%s808] ss:$9 sm:$0xff] %v595
        %v819 = vld [vmem:[#allocation1] sm:$0xff]
        %820 = vrot.lane.b32.xlu0 %v810, 120
        %v821 = vpop.permute.xlu0 %820
        %822 = vrot.lane.b32.xlu0 %v819, 120
        %v823 = vpop.permute.xlu0 %822
        %v824 = vsel %vm684, %v794, 0
        %v826 = vsel %vm684, %v821, 0
        %v828 = vsel %vm684, %v823, 0
        %830 = vmatpush.xpose.msra.mxu0 0.0
        %831 = vmatpush.xpose.msra.mxu0 0.0
        %832 = vmatpush.xpose.msra.mxu0 0.0
        %833 = vmatpush.xpose.msra.mxu0 0.0
        %834 = vmatpush.xpose.msra.mxu0 0.0
        %835 = vmatpush.xpose.msra.mxu0 0.0
        %836 = vmatpush.xpose.msra.mxu0 0.0
        %837 = vmatpush.xpose.msra.mxu0 0.0
        %838 = vmatpush.xpose.msra.mxu0 0.0
        %839 = vmatpush.xpose.msra.mxu0 0.0
        %840 = vmatpush.xpose.msra.mxu0 0.0
        %841 = vmatpush.xpose.msra.mxu0 0.0
        %842 = vmatpush.xpose.msra.mxu0 0.0
        %843 = vmatpush.xpose.msra.mxu0 0.0
        %844 = vmatpush.xpose.msra.mxu0 %v828
        %845 = vmatpush.xpose.msra.mxu0 %v826
        %846 = vmatmul.f32.gmra.mxu0 %v824
        %v847 = vpop.f32.mrf.mxu0
        %v848 = vadd.f32 0.0, %v847
        %849 = vdwg.mxu0
        %v850 = vsel %vm711, %v848, -inf
        %851 = vmax.xlane.f32.xlu0 %v850
        %v852 = vpop.xlane.xlu0 %851
        %v853 = vsub.f32 %v848, %v852
        %v854 = vmul.f32 %v853, 1.442695
        %v855 = vpow.pop %v854
        %v856 = vsel %vm711, %v855, 0.0
        %857 = vadd.xlane.f32.xlu0 %v856
        %v858 = vpop.xlane.xlu0 %857
        %v859 = vrcp.pop %v858
        %v860 = vmul.f32 %v855, %v859
        %861 = vst [vmem:[#allocation1] ss:$9 sm:$0xff] %v580
        %s862 = scalar_lea.vmem [#allocation1], 1
        %863 = vst [vmem:[%s862] ss:$9 sm:$0xff] %v581
        %s864 = scalar_lea.vmem [#allocation1], 2
        %865 = vst [vmem:[%s864] ss:$9 sm:$0xff] %v582
        %s866 = scalar_lea.vmem [#allocation1], 3
        %867 = vst [vmem:[%s866] ss:$9 sm:$0xff] %v583
        %s868 = scalar_lea.vmem [#allocation1], 4
        %869 = vst [vmem:[%s868] ss:$9 sm:$0xff] %v584
        %s870 = scalar_lea.vmem [#allocation1], 5
        %871 = vst [vmem:[%s870] ss:$9 sm:$0xff] %v585
        %s872 = scalar_lea.vmem [#allocation1], 6
        %873 = vst [vmem:[%s872] ss:$9 sm:$0xff] %v586
        %s874 = scalar_lea.vmem [#allocation1], 7
        %875 = vst [vmem:[%s874] ss:$9 sm:$0xff] %v587
        %v876 = vld [vmem:[#allocation1] sm:$0xff]
        %877 = vst [vmem:[#allocation1] ss:$9 sm:$0xff] %v588
        %878 = vst [vmem:[%s862] ss:$9 sm:$0xff] %v589
        %879 = vst [vmem:[%s864] ss:$9 sm:$0xff] %v590
        %880 = vst [vmem:[%s866] ss:$9 sm:$0xff] %v591
        %881 = vst [vmem:[%s868] ss:$9 sm:$0xff] %v592
        %882 = vst [vmem:[%s870] ss:$9 sm:$0xff] %v593
        %883 = vst [vmem:[%s872] ss:$9 sm:$0xff] %v594
        %884 = vst [vmem:[%s874] ss:$9 sm:$0xff] %v595
        %v885 = vld [vmem:[#allocation1] sm:$0xff]
        %886 = vrot.lane.b32.xlu0 %v876, 88
        %v887 = vpop.permute.xlu0 %886
        %888 = vrot.lane.b32.xlu0 %v885, 88
        %v889 = vpop.permute.xlu0 %888
        %v893 = vsel %vm711, %v860, 0
        %895 = vmatpush.msra.mxu0 0.0
        %896 = vmatpush.msra.mxu0 0.0
        %897 = vmatpush.msra.mxu0 0.0
        %898 = vmatpush.msra.mxu0 0.0
        %899 = vmatpush.msra.mxu0 0.0
        %900 = vmatpush.msra.mxu0 0.0
        %901 = vmatpush.msra.mxu0 0.0
        %902 = vmatpush.msra.mxu0 0.0
        %903 = vmatpush.msra.mxu0 0.0
        %904 = vmatpush.msra.mxu0 0.0
        %905 = vmatpush.msra.mxu0 0.0
        %906 = vmatpush.msra.mxu0 0.0
        %907 = vmatpush.msra.mxu0 0.0
        %908 = vmatpush.msra.mxu0 0.0
        %909 = vmatpush.msra.mxu0 %v889
        %910 = vmatpush.msra.mxu0 %v887
        %911 = vmatmul.f32.gmra.mxu0 %v893
        %v912 = vpop.f32.mrf.mxu0
        %v913 = vadd.f32 0.0, %v912
        %914 = vdwg.mxu0
        %915 = vst [vmem:[#allocation1] ss:$9 sm:$0xff] %v611
        %s916 = scalar_lea.vmem [#allocation1], 1
        %917 = vst [vmem:[%s916] ss:$9 sm:$0xff] %v612
        %s918 = scalar_lea.vmem [#allocation1], 2
        %919 = vst [vmem:[%s918] ss:$9 sm:$0xff] %v613
        %s920 = scalar_lea.vmem [#allocation1], 3
        %921 = vst [vmem:[%s920] ss:$9 sm:$0xff] %v614
        %s922 = scalar_lea.vmem [#allocation1], 4
        %923 = vst [vmem:[%s922] ss:$9 sm:$0xff] %v615
        %s924 = scalar_lea.vmem [#allocation1], 5
        %925 = vst [vmem:[%s924] ss:$9 sm:$0xff] %v616
        %s926 = scalar_lea.vmem [#allocation1], 6
        %927 = vst [vmem:[%s926] ss:$9 sm:$0xff] %v617
        %s928 = scalar_lea.vmem [#allocation1], 7
        %929 = vst [vmem:[%s928] ss:$9 sm:$0xff] %v618
        %v930 = vld [vmem:[#allocation1] sm:$0xff]
        %931 = vrot.lane.b32.xlu0 %v930, 112
        %v932 = vpop.permute.xlu0 %931
        %933 = vst [vmem:[#allocation1] ss:$9 sm:$0xff] %v580
        %s934 = scalar_lea.vmem [#allocation1], 1
        %935 = vst [vmem:[%s934] ss:$9 sm:$0xff] %v581
        %s936 = scalar_lea.vmem [#allocation1], 2
        %937 = vst [vmem:[%s936] ss:$9 sm:$0xff] %v582
        %s938 = scalar_lea.vmem [#allocation1], 3
        %939 = vst [vmem:[%s938] ss:$9 sm:$0xff] %v583
        %s940 = scalar_lea.vmem [#allocation1], 4
        %941 = vst [vmem:[%s940] ss:$9 sm:$0xff] %v584
        %s942 = scalar_lea.vmem [#allocation1], 5
        %943 = vst [vmem:[%s942] ss:$9 sm:$0xff] %v585
        %s944 = scalar_lea.vmem [#allocation1], 6
        %945 = vst [vmem:[%s944] ss:$9 sm:$0xff] %v586
        %s946 = scalar_lea.vmem [#allocation1], 7
        %947 = vst [vmem:[%s946] ss:$9 sm:$0xff] %v587
        %v948 = vld [vmem:[#allocation1] sm:$0xff]
        %949 = vst [vmem:[#allocation1] ss:$9 sm:$0xff] %v588
        %950 = vst [vmem:[%s934] ss:$9 sm:$0xff] %v589
        %951 = vst [vmem:[%s936] ss:$9 sm:$0xff] %v590
        %952 = vst [vmem:[%s938] ss:$9 sm:$0xff] %v591
        %953 = vst [vmem:[%s940] ss:$9 sm:$0xff] %v592
        %954 = vst [vmem:[%s942] ss:$9 sm:$0xff] %v593
        %955 = vst [vmem:[%s944] ss:$9 sm:$0xff] %v594
        %956 = vst [vmem:[%s946] ss:$9 sm:$0xff] %v595
        %v957 = vld [vmem:[#allocation1] sm:$0xff]
        %958 = vrot.lane.b32.xlu0 %v948, 112
        %v959 = vpop.permute.xlu0 %958
        %960 = vrot.lane.b32.xlu0 %v957, 112
        %v961 = vpop.permute.xlu0 %960
        %v962 = vsel %vm684, %v932, 0
        %v964 = vsel %vm684, %v959, 0
        %v966 = vsel %vm684, %v961, 0
        %968 = vmatpush.xpose.msra.mxu0 0.0
        %969 = vmatpush.xpose.msra.mxu0 0.0
        %970 = vmatpush.xpose.msra.mxu0 0.0
        %971 = vmatpush.xpose.msra.mxu0 0.0
        %972 = vmatpush.xpose.msra.mxu0 0.0
        %973 = vmatpush.xpose.msra.mxu0 0.0
        %974 = vmatpush.xpose.msra.mxu0 0.0
        %975 = vmatpush.xpose.msra.mxu0 0.0
        %976 = vmatpush.xpose.msra.mxu0 0.0
        %977 = vmatpush.xpose.msra.mxu0 0.0
        %978 = vmatpush.xpose.msra.mxu0 0.0
        %979 = vmatpush.xpose.msra.mxu0 0.0
        %980 = vmatpush.xpose.msra.mxu0 0.0
        %981 = vmatpush.xpose.msra.mxu0 0.0
        %982 = vmatpush.xpose.msra.mxu0 %v966
        %983 = vmatpush.xpose.msra.mxu0 %v964
        %984 = vmatmul.f32.gmra.mxu0 %v962
        %v985 = vpop.f32.mrf.mxu0
        %v986 = vadd.f32 0.0, %v985
        %987 = vdwg.mxu0
        %v988 = vsel %vm711, %v986, -inf
        %989 = vmax.xlane.f32.xlu0 %v988
        %v990 = vpop.xlane.xlu0 %989
        %v991 = vsub.f32 %v986, %v990
        %v992 = vmul.f32 %v991, 1.442695
        %v993 = vpow.pop %v992
        %v994 = vsel %vm711, %v993, 0.0
        %995 = vadd.xlane.f32.xlu0 %v994
        %v996 = vpop.xlane.xlu0 %995
        %v997 = vrcp.pop %v996
        %v998 = vmul.f32 %v993, %v997
        %999 = vst [vmem:[#allocation1] ss:$9 sm:$0xff] %v580
        %s1000 = scalar_lea.vmem [#allocation1], 1
        %1001 = vst [vmem:[%s1000] ss:$9 sm:$0xff] %v581
        %s1002 = scalar_lea.vmem [#allocation1], 2
        %1003 = vst [vmem:[%s1002] ss:$9 sm:$0xff] %v582
        %s1004 = scalar_lea.vmem [#allocation1], 3
        %1005 = vst [vmem:[%s1004] ss:$9 sm:$0xff] %v583
        %s1006 = scalar_lea.vmem [#allocation1], 4
        %1007 = vst [vmem:[%s1006] ss:$9 sm:$0xff] %v584
        %s1008 = scalar_lea.vmem [#allocation1], 5
        %1009 = vst [vmem:[%s1008] ss:$9 sm:$0xff] %v585
        %s1010 = scalar_lea.vmem [#allocation1], 6
        %1011 = vst [vmem:[%s1010] ss:$9 sm:$0xff] %v586
        %s1012 = scalar_lea.vmem [#allocation1], 7
        %1013 = vst [vmem:[%s1012] ss:$9 sm:$0xff] %v587
        %v1014 = vld [vmem:[#allocation1] sm:$0xff]
        %1015 = vst [vmem:[#allocation1] ss:$9 sm:$0xff] %v588
        %1016 = vst [vmem:[%s1000] ss:$9 sm:$0xff] %v589
        %1017 = vst [vmem:[%s1002] ss:$9 sm:$0xff] %v590
        %1018 = vst [vmem:[%s1004] ss:$9 sm:$0xff] %v591
        %1019 = vst [vmem:[%s1006] ss:$9 sm:$0xff] %v592
        %1020 = vst [vmem:[%s1008] ss:$9 sm:$0xff] %v593
        %1021 = vst [vmem:[%s1010] ss:$9 sm:$0xff] %v594
        %1022 = vst [vmem:[%s1012] ss:$9 sm:$0xff] %v595
        %v1023 = vld [vmem:[#allocation1] sm:$0xff]
        %1024 = vrot.lane.b32.xlu0 %v1014, 80
        %v1025 = vpop.permute.xlu0 %1024
        %1026 = vrot.lane.b32.xlu0 %v1023, 80
        %v1027 = vpop.permute.xlu0 %1026
        %v1031 = vsel %vm711, %v998, 0
        %1033 = vmatpush.msra.mxu0 0.0
        %1034 = vmatpush.msra.mxu0 0.0
        %1035 = vmatpush.msra.mxu0 0.0
        %1036 = vmatpush.msra.mxu0 0.0
        %1037 = vmatpush.msra.mxu0 0.0
        %1038 = vmatpush.msra.mxu0 0.0
        %1039 = vmatpush.msra.mxu0 0.0
        %1040 = vmatpush.msra.mxu0 0.0
        %1041 = vmatpush.msra.mxu0 0.0
        %1042 = vmatpush.msra.mxu0 0.0
        %1043 = vmatpush.msra.mxu0 0.0
        %1044 = vmatpush.msra.mxu0 0.0
        %1045 = vmatpush.msra.mxu0 0.0
        %1046 = vmatpush.msra.mxu0 0.0
        %1047 = vmatpush.msra.mxu0 %v1027
        %1048 = vmatpush.msra.mxu0 %v1025
        %1049 = vmatmul.f32.gmra.mxu0 %v1031
        %v1050 = vpop.f32.mrf.mxu0
        %v1051 = vadd.f32 0.0, %v1050
        %1052 = vdwg.mxu0
        %1053 = vst [vmem:[#allocation1] ss:$9 sm:$0xff] %v611
        %s1054 = scalar_lea.vmem [#allocation1], 1
        %1055 = vst [vmem:[%s1054] ss:$9 sm:$0xff] %v612
        %s1056 = scalar_lea.vmem [#allocation1], 2
        %1057 = vst [vmem:[%s1056] ss:$9 sm:$0xff] %v613
        %s1058 = scalar_lea.vmem [#allocation1], 3
        %1059 = vst [vmem:[%s1058] ss:$9 sm:$0xff] %v614
        %s1060 = scalar_lea.vmem [#allocation1], 4
        %1061 = vst [vmem:[%s1060] ss:$9 sm:$0xff] %v615
        %s1062 = scalar_lea.vmem [#allocation1], 5
        %1063 = vst [vmem:[%s1062] ss:$9 sm:$0xff] %v616
        %s1064 = scalar_lea.vmem [#allocation1], 6
        %1065 = vst [vmem:[%s1064] ss:$9 sm:$0xff] %v617
        %s1066 = scalar_lea.vmem [#allocation1], 7
        %1067 = vst [vmem:[%s1066] ss:$9 sm:$0xff] %v618
        %v1068 = vld [vmem:[#allocation1] sm:$0xff]
        %1069 = vrot.lane.b32.xlu0 %v1068, 104
        %v1070 = vpop.permute.xlu0 %1069
        %1071 = vst [vmem:[#allocation1] ss:$9 sm:$0xff] %v580
        %s1072 = scalar_lea.vmem [#allocation1], 1
        %1073 = vst [vmem:[%s1072] ss:$9 sm:$0xff] %v581
        %s1074 = scalar_lea.vmem [#allocation1], 2
        %1075 = vst [vmem:[%s1074] ss:$9 sm:$0xff] %v582
        %s1076 = scalar_lea.vmem [#allocation1], 3
        %1077 = vst [vmem:[%s1076] ss:$9 sm:$0xff] %v583
        %s1078 = scalar_lea.vmem [#allocation1], 4
        %1079 = vst [vmem:[%s1078] ss:$9 sm:$0xff] %v584
        %s1080 = scalar_lea.vmem [#allocation1], 5
        %1081 = vst [vmem:[%s1080] ss:$9 sm:$0xff] %v585
        %s1082 = scalar_lea.vmem [#allocation1], 6
        %1083 = vst [vmem:[%s1082] ss:$9 sm:$0xff] %v586
        %s1084 = scalar_lea.vmem [#allocation1], 7
        %1085 = vst [vmem:[%s1084] ss:$9 sm:$0xff] %v587
        %v1086 = vld [vmem:[#allocation1] sm:$0xff]
        %1087 = vst [vmem:[#allocation1] ss:$9 sm:$0xff] %v588
        %1088 = vst [vmem:[%s1072] ss:$9 sm:$0xff] %v589
        %1089 = vst [vmem:[%s1074] ss:$9 sm:$0xff] %v590
        %1090 = vst [vmem:[%s1076] ss:$9 sm:$0xff] %v591
        %1091 = vst [vmem:[%s1078] ss:$9 sm:$0xff] %v592
        %1092 = vst [vmem:[%s1080] ss:$9 sm:$0xff] %v593
        %1093 = vst [vmem:[%s1082] ss:$9 sm:$0xff] %v594
        %1094 = vst [vmem:[%s1084] ss:$9 sm:$0xff] %v595
        %v1095 = vld [vmem:[#allocation1] sm:$0xff]
        %1096 = vrot.lane.b32.xlu0 %v1086, 104
        %v1097 = vpop.permute.xlu0 %1096
        %1098 = vrot.lane.b32.xlu0 %v1095, 104
        %v1099 = vpop.permute.xlu0 %1098
        %v1100 = vsel %vm684, %v1070, 0
        %v1102 = vsel %vm684, %v1097, 0
        %v1104 = vsel %vm684, %v1099, 0
        %1106 = vmatpush.xpose.msra.mxu0 0.0
        %1107 = vmatpush.xpose.msra.mxu0 0.0
        %1108 = vmatpush.xpose.msra.mxu0 0.0
        %1109 = vmatpush.xpose.msra.mxu0 0.0
        %1110 = vmatpush.xpose.msra.mxu0 0.0
        %1111 = vmatpush.xpose.msra.mxu0 0.0
        %1112 = vmatpush.xpose.msra.mxu0 0.0
        %1113 = vmatpush.xpose.msra.mxu0 0.0
        %1114 = vmatpush.xpose.msra.mxu0 0.0
        %1115 = vmatpush.xpose.msra.mxu0 0.0
        %1116 = vmatpush.xpose.msra.mxu0 0.0
        %1117 = vmatpush.xpose.msra.mxu0 0.0
        %1118 = vmatpush.xpose.msra.mxu0 0.0
        %1119 = vmatpush.xpose.msra.mxu0 0.0
        %1120 = vmatpush.xpose.msra.mxu0 %v1104
        %1121 = vmatpush.xpose.msra.mxu0 %v1102
        %1122 = vmatmul.f32.gmra.mxu0 %v1100
        %v1123 = vpop.f32.mrf.mxu0
        %v1124 = vadd.f32 0.0, %v1123
        %1125 = vdwg.mxu0
        %v1126 = vsel %vm711, %v1124, -inf
        %1127 = vmax.xlane.f32.xlu0 %v1126
        %v1128 = vpop.xlane.xlu0 %1127
        %v1129 = vsub.f32 %v1124, %v1128
        %v1130 = vmul.f32 %v1129, 1.442695
        %v1131 = vpow.pop %v1130
        %v1132 = vsel %vm711, %v1131, 0.0
        %1133 = vadd.xlane.f32.xlu0 %v1132
        %v1134 = vpop.xlane.xlu0 %1133
        %v1135 = vrcp.pop %v1134
        %v1136 = vmul.f32 %v1131, %v1135
        %1137 = vst [vmem:[#allocation1] ss:$9 sm:$0xff] %v580
        %s1138 = scalar_lea.vmem [#allocation1], 1
        %1139 = vst [vmem:[%s1138] ss:$9 sm:$0xff] %v581
        %s1140 = scalar_lea.vmem [#allocation1], 2
        %1141 = vst [vmem:[%s1140] ss:$9 sm:$0xff] %v582
        %s1142 = scalar_lea.vmem [#allocation1], 3
        %1143 = vst [vmem:[%s1142] ss:$9 sm:$0xff] %v583
        %s1144 = scalar_lea.vmem [#allocation1], 4
        %1145 = vst [vmem:[%s1144] ss:$9 sm:$0xff] %v584
        %s1146 = scalar_lea.vmem [#allocation1], 5
        %1147 = vst [vmem:[%s1146] ss:$9 sm:$0xff] %v585
        %s1148 = scalar_lea.vmem [#allocation1], 6
        %1149 = vst [vmem:[%s1148] ss:$9 sm:$0xff] %v586
        %s1150 = scalar_lea.vmem [#allocation1], 7
        %1151 = vst [vmem:[%s1150] ss:$9 sm:$0xff] %v587
        %v1152 = vld [vmem:[#allocation1] sm:$0xff]
        %1153 = vst [vmem:[#allocation1] ss:$9 sm:$0xff] %v588
        %1154 = vst [vmem:[%s1138] ss:$9 sm:$0xff] %v589
        %1155 = vst [vmem:[%s1140] ss:$9 sm:$0xff] %v590
        %1156 = vst [vmem:[%s1142] ss:$9 sm:$0xff] %v591
        %1157 = vst [vmem:[%s1144] ss:$9 sm:$0xff] %v592
        %1158 = vst [vmem:[%s1146] ss:$9 sm:$0xff] %v593
        %1159 = vst [vmem:[%s1148] ss:$9 sm:$0xff] %v594
        %1160 = vst [vmem:[%s1150] ss:$9 sm:$0xff] %v595
        %v1161 = vld [vmem:[#allocation1] sm:$0xff]
        %1162 = vrot.lane.b32.xlu0 %v1152, 72
        %v1163 = vpop.permute.xlu0 %1162
        %1164 = vrot.lane.b32.xlu0 %v1161, 72
        %v1165 = vpop.permute.xlu0 %1164
        %v1169 = vsel %vm711, %v1136, 0
        %1171 = vmatpush.msra.mxu0 0.0
        %1172 = vmatpush.msra.mxu0 0.0
        %1173 = vmatpush.msra.mxu0 0.0
        %1174 = vmatpush.msra.mxu0 0.0
        %1175 = vmatpush.msra.mxu0 0.0
        %1176 = vmatpush.msra.mxu0 0.0
        %1177 = vmatpush.msra.mxu0 0.0
        %1178 = vmatpush.msra.mxu0 0.0
        %1179 = vmatpush.msra.mxu0 0.0
        %1180 = vmatpush.msra.mxu0 0.0
        %1181 = vmatpush.msra.mxu0 0.0
        %1182 = vmatpush.msra.mxu0 0.0
        %1183 = vmatpush.msra.mxu0 0.0
        %1184 = vmatpush.msra.mxu0 0.0
        %1185 = vmatpush.msra.mxu0 %v1165
        %1186 = vmatpush.msra.mxu0 %v1163
        %1187 = vmatmul.f32.gmra.mxu0 %v1169
        %v1188 = vpop.f32.mrf.mxu0
        %v1189 = vadd.f32 0.0, %v1188
        %1190 = vdwg.mxu0
        %1192 = vrot.lane.b32.xlu0 %v913, 8
        %v1193 = vpop.permute.xlu0 %1192
        %1196 = vrot.lane.b32.xlu0 %v1051, 16
        %v1197 = vpop.permute.xlu0 %1196
        %1200 = vrot.lane.b32.xlu0 %v1189, 24
        %v1201 = vpop.permute.xlu0 %1200
        %v1203 = vsel %vm684, %v775, %v1193
        %v1204 = vsel %vm711, %v1203, %v1197
        %vm1205 = vcmask 195584
        %v1206 = vsel %vm1205, %v1204, %v1201
        %v1208 = vperm.slane %v608, 0
        %vm1210 = vcmask 261120
        %v1212 = vsel %vm1210, %v1206, 0
        %1214 = vmatpush.msra.mxu0 0.0
        %1215 = vmatpush.msra.mxu0 0.0
        %1216 = vmatpush.msra.mxu0 0.0
        %1217 = vmatpush.msra.mxu0 0.0
        %1218 = vmatpush.msra.mxu0 0.0
        %1219 = vmatpush.msra.mxu0 0.0
        %1220 = vmatpush.msra.mxu0 0.0
        %1221 = vmatpush.msra.mxu0 0.0
        %1222 = vmatpush.msra.mxu0 0.0
        %1223 = vmatpush.msra.mxu0 0.0
        %1224 = vmatpush.msra.mxu0 0.0
        %1225 = vmatpush.msra.mxu0 0.0
        %1226 = vmatpush.msra.mxu0 %v607
        %1227 = vmatpush.msra.mxu0 %v606
        %1228 = vmatpush.msra.mxu0 %v605
        %1229 = vmatpush.msra.mxu0 %v604
        %1230 = vmatmul.f32.gmra.mxu0 %v1212
        %v1231 = vpop.f32.mrf.mxu0
        %v1232 = vadd.f32 %v1208, %v1231
        %1233 = vdwg.mxu0
        %1242 = vst [vmem:[#allocation1] ss:$9 sm:$0xff] %v596
        %s1243 = scalar_lea.vmem [#allocation1], 1
        %1244 = vst [vmem:[%s1243] ss:$9 sm:$0xff] %v597
        %s1245 = scalar_lea.vmem [#allocation1], 2
        %1246 = vst [vmem:[%s1245] ss:$9 sm:$0xff] %v598
        %s1247 = scalar_lea.vmem [#allocation1], 3
        %1248 = vst [vmem:[%s1247] ss:$9 sm:$0xff] %v599
        %s1249 = scalar_lea.vmem [#allocation1], 4
        %1250 = vst [vmem:[%s1249] ss:$9 sm:$0xff] %v600
        %s1251 = scalar_lea.vmem [#allocation1], 5
        %1252 = vst [vmem:[%s1251] ss:$9 sm:$0xff] %v601
        %s1253 = scalar_lea.vmem [#allocation1], 6
        %1254 = vst [vmem:[%s1253] ss:$9 sm:$0xff] %v602
        %s1255 = scalar_lea.vmem [#allocation1], 7
        %1256 = vst [vmem:[%s1255] ss:$9 sm:$0xff] %v603
        %v1257 = vld [vmem:[#allocation1] sm:$0xff]
        %v1259 = vadd.f32 %v1232, %v1257
        %v1260 = vsel %vm1210, %v1259, 0.0
        %1261 = vadd.xlane.f32.xlu0 %v1260
        %v1262 = vpop.xlane.xlu0 %1261
        %v1263 = vrcp.pop 32.0
        %v1264 = vmul.f32 32.0, %v1263
        %v1265 = vsub.f32 1.0, %v1264
        %v1266 = vmul.f32 %v1263, %v1265
        %v1267 = vadd.f32 %v1263, %v1266
        %vm1268 = vweird.f32 %v1263
        %v1269 = vsel %vm1268, %v1263, %v1267
        %v1270 = vmul.f32 %v1262, %v1269
        %v1271 = vsub.f32 %v1259, %v1270
        %v1272 = vmul.f32 %v1271, %v1271
        %v1273 = vsel %vm1210, %v1272, 0.0
        %1274 = vadd.xlane.f32.xlu0 %v1273
        %v1275 = vpop.xlane.xlu0 %1274
        %v1276 = vmul.f32 %v1275, %v1269
        %v1277 = vadd.f32 %v1276, 1e-05
        %v1278 = vrsqrt.pop %v1277
        %v1279 = vmul.f32 %v1278, %v1277
        %v1280 = vmul.f32 %v1279, %v1278
        %v1281 = vmul.f32 0.5, %v1280
        %v1282 = vsub.f32 1.5, %v1281
        %v1283 = vmul.f32 %v1278, %v1282
        %vm1284 = vweird.f32 %v1277
        %vm1285 = vweird.f32 %v1278
        %vm1286 = vmor %vm1284, %vm1285
        %v1287 = vsel %vm1286, %v1278, %v1283
        %v1288 = vmul.f32 %v1271, %v1287
        %v1290 = vperm.slane %v609, 0
        %v1292 = vmul.f32 %v1288, %v1290
        %v1294 = vperm.slane %v610, 0
        %v1296 = vadd.f32 %v1292, %v1294
        %v1298 = vrot.slane %v1296, 1
        %v1299 = vrot.slane %v1296, 2
        %v1300 = vrot.slane %v1296, 3
        %v1301 = vrot.slane %v1296, 4
        %v1302 = vrot.slane %v1296, 5
        %v1303 = vrot.slane %v1296, 6
        %v1304 = vrot.slane %v1296, 7
        %vm1312 = vcmask 253952
        %1313 = vst.msk [vmem:[%s571] sm:$0x1] %vm1312, %v1296
        %1314 = vst.msk [vmem:[%s571 + $0x1] sm:$0x1] %vm1312, %v1298
        %1315 = vst.msk [vmem:[%s571 + $0x2] sm:$0x1] %vm1312, %v1299
        %1316 = vst.msk [vmem:[%s571 + $0x3] sm:$0x1] %vm1312, %v1300
        %1317 = vst.msk [vmem:[%s571 + $0x4] sm:$0x1] %vm1312, %v1301
        %1318 = vst.msk [vmem:[%s571 + $0x5] sm:$0x1] %vm1312, %v1302
        %1319 = vst.msk [vmem:[%s571 + $0x6] sm:$0x1] %vm1312, %v1303
        %1320 = vst.msk [vmem:[%s571 + $0x7] sm:$0x1] %vm1312, %v1304
        %s1321 = sand.u32 %s189, 1
        %s1322 = sand.u32 %s189, 1
        %s1323 = smul.addr %s1322, 8
        %s1324 = scalar_lea.vmem [#allocation7], %s1323
        // Predicated region
        $region176: #{transformer_decoder_wrapper_forward.17} parent=158 // pred_check
          %p1325 = pneg %p199
        $region177: #{transformer_decoder_wrapper_forward.17} parent=158 // pred_check_branch
          %1327 = sbr.rel (%p1325) target = $region179
        $region178: #{transformer_decoder_wrapper_forward.17} parent=158 // pred_region
          %s1328 = scalar_lea.vmem %s7, %s19
          // Predicated region
          $region180: #{transformer_decoder_wrapper_forward.17} parent=178 // pred_check
            _
          $region181: #{transformer_decoder_wrapper_forward.17} parent=178 // pred_check_branch
            %1330 = sbr.rel (0) target = $region183
          $region182: #{transformer_decoder_wrapper_forward.17} parent=178 // pred_region
            // Predicated region
            $region184: #{transformer_decoder_wrapper_forward.17} parent=182 // pred_check
              _
            $region185: #{transformer_decoder_wrapper_forward.17} parent=182 // pred_check_branch
              %1332 = sbr.rel target = $region187
            $region186: #{transformer_decoder_wrapper_forward.17} parent=182 // pred_region
              // Predicated region
              $region199: #{transformer_decoder_wrapper_forward.17} parent=186 // pred_check
                _
              $region200: #{transformer_decoder_wrapper_forward.17} parent=186 // pred_check_branch
                %1362 = sbr.rel (0) target = $region202
              $region201: #{transformer_decoder_wrapper_forward.17} parent=186 // pred_region
                loop: start=0, step=1, limit=1
                $region203: #{transformer_decoder_wrapper_forward.17} parent=201 // loop_pre_header
                  _
                $region204: #{transformer_decoder_wrapper_forward.17} parent=201 // loop_header
                  %s1364 = sphi 0, %s1368
                  %p1365 = scmp.ge.s32.totalorder %s1364, 1
                  %s1369 = sphi %s1324, %s1324
                  %s1370 = sphi %s1328, %s1328
                $region205: #{transformer_decoder_wrapper_forward.17} parent=201 // loop_header_branch
                  %1367 = sbr.rel (%p1365) target = $region209
                $region206: #{transformer_decoder_wrapper_forward.17} parent=201 // loop_body
                  _
                $region207: #{transformer_decoder_wrapper_forward.17} parent=201 // loop_footer
                  %s1368 = sadd.s32 1, %s1364
                $region208: #{transformer_decoder_wrapper_forward.17} parent=201 // loop_footer_branch
                  %1363 = sbr.rel target = $region204
                $region209: #{transformer_decoder_wrapper_forward.17} parent=201 // loop_exit
                  _
                %s1372 = ssub.s32 2, 1
                loop: start=0, step=1, limit=1
                $region210: #{transformer_decoder_wrapper_forward.17} parent=201 // loop_pre_header
                  _
                $region211: #{transformer_decoder_wrapper_forward.17} parent=201 // loop_header
                  %s1374 = sphi 0, %s1378
                  %p1375 = scmp.ge.s32.totalorder %s1374, 1
                  %s1379 = sphi %s1324, %s1324
                  %s1380 = sphi %s1328, %s1328
                $region212: #{transformer_decoder_wrapper_forward.17} parent=201 // loop_header_branch
                  %1377 = sbr.rel (%p1375) target = $region216
                $region213: #{transformer_decoder_wrapper_forward.17} parent=201 // loop_body
                  %v1381 = vld [vmem:[%s1379] sm:%s1372]
                  %1382 = vst [vmem:[%s1380] sm:%s1372] %v1381
                  %v1383 = vld [vmem:[%s1379 + $0x1] sm:%s1372]
                  %1384 = vst [vmem:[%s1380 + $0x2] sm:%s1372] %v1383
                  %v1385 = vld [vmem:[%s1379 + $0x2] sm:%s1372]
                  %1386 = vst [vmem:[%s1380 + $0x4] sm:%s1372] %v1385
                  %v1387 = vld [vmem:[%s1379 + $0x3] sm:%s1372]
                  %1388 = vst [vmem:[%s1380 + $0x6] sm:%s1372] %v1387
                  %v1389 = vld [vmem:[%s1379 + $0x4] sm:%s1372]
                  %1390 = vst [vmem:[%s1380 + $0x8] sm:%s1372] %v1389
                  %v1391 = vld [vmem:[%s1379 + $0x5] sm:%s1372]
                  %1392 = vst [vmem:[%s1380 + $0xa] sm:%s1372] %v1391
                  %v1393 = vld [vmem:[%s1379 + $0x6] sm:%s1372]
                  %1394 = vst [vmem:[%s1380 + $0xc] sm:%s1372] %v1393
                  %v1395 = vld [vmem:[%s1379 + $0x7] sm:%s1372]
                  %1396 = vst [vmem:[%s1380 + $0xe] sm:%s1372] %v1395
                $region214: #{transformer_decoder_wrapper_forward.17} parent=201 // loop_footer
                  %s1378 = sadd.s32 1, %s1374
                $region215: #{transformer_decoder_wrapper_forward.17} parent=201 // loop_footer_branch
                  %1373 = sbr.rel target = $region211
                $region216: #{transformer_decoder_wrapper_forward.17} parent=201 // loop_exit
                  _
              $region202: #{transformer_decoder_wrapper_forward.17} parent=186 // pred_fallthru
                _
            $region187: #{transformer_decoder_wrapper_forward.17} parent=182 // pred_fallthru
              _
            // Predicated region
            $region188: #{transformer_decoder_wrapper_forward.17} parent=182 // pred_check
              _
            $region189: #{transformer_decoder_wrapper_forward.17} parent=182 // pred_check_branch
              %1334 = sbr.rel (0) target = $region191
            $region190: #{transformer_decoder_wrapper_forward.17} parent=182 // pred_region
              %s1336 = ssub.s32 2, 1
              loop: start=0, step=1, limit=1
              $region192: #{transformer_decoder_wrapper_forward.17} parent=190 // loop_pre_header
                _
              $region193: #{transformer_decoder_wrapper_forward.17} parent=190 // loop_header
                %s1338 = sphi 0, %s1342
                %p1339 = scmp.ge.s32.totalorder %s1338, 1
                %s1343 = sphi %s1324, %s1324
                %s1344 = sphi %s1328, %s1328
              $region194: #{transformer_decoder_wrapper_forward.17} parent=190 // loop_header_branch
                %1341 = sbr.rel (%p1339) target = $region198
              $region195: #{transformer_decoder_wrapper_forward.17} parent=190 // loop_body
                %v1345 = vld [vmem:[%s1343] sm:%s1336]
                %1346 = vst [vmem:[%s1344] sm:%s1336] %v1345
                %v1347 = vld [vmem:[%s1343 + $0x1] sm:%s1336]
                %1348 = vst [vmem:[%s1344 + $0x2] sm:%s1336] %v1347
                %v1349 = vld [vmem:[%s1343 + $0x2] sm:%s1336]
                %1350 = vst [vmem:[%s1344 + $0x4] sm:%s1336] %v1349
                %v1351 = vld [vmem:[%s1343 + $0x3] sm:%s1336]
                %1352 = vst [vmem:[%s1344 + $0x6] sm:%s1336] %v1351
                %v1353 = vld [vmem:[%s1343 + $0x4] sm:%s1336]
                %1354 = vst [vmem:[%s1344 + $0x8] sm:%s1336] %v1353
                %v1355 = vld [vmem:[%s1343 + $0x5] sm:%s1336]
                %1356 = vst [vmem:[%s1344 + $0xa] sm:%s1336] %v1355
                %v1357 = vld [vmem:[%s1343 + $0x6] sm:%s1336]
                %1358 = vst [vmem:[%s1344 + $0xc] sm:%s1336] %v1357
                %v1359 = vld [vmem:[%s1343 + $0x7] sm:%s1336]
                %1360 = vst [vmem:[%s1344 + $0xe] sm:%s1336] %v1359
              $region196: #{transformer_decoder_wrapper_forward.17} parent=190 // loop_footer
                %s1342 = sadd.s32 1, %s1338
              $region197: #{transformer_decoder_wrapper_forward.17} parent=190 // loop_footer_branch
                %1337 = sbr.rel target = $region193
              $region198: #{transformer_decoder_wrapper_forward.17} parent=190 // loop_exit
                _
            $region191: #{transformer_decoder_wrapper_forward.17} parent=182 // pred_fallthru
              _
          $region183: #{transformer_decoder_wrapper_forward.17} parent=178 // pred_fallthru
            _
          %1397 = vnop
        $region179: #{transformer_decoder_wrapper_forward.17} parent=158 // pred_fallthru
          _
      $region159: #{transformer_decoder_wrapper_forward.17} parent=5 // pred_fallthru
        _
      %p1398 = scmp.le.s32.totalorder 2, %s14
      // Predicated region
      $region217: #{transformer_decoder_wrapper_forward.17} parent=5 // pred_check
        %p1399 = pneg %p1398
      $region218: #{transformer_decoder_wrapper_forward.17} parent=5 // pred_check_branch
        %1401 = sbr.rel (%p1399) target = $region220
      $region219: #{transformer_decoder_wrapper_forward.17} parent=5 // pred_region
        %s1402 = ssub.s32 %s14, 2
        // Predicated region
        $region221: #{transformer_decoder_wrapper_forward.17} parent=219 // pred_check
          %p1403 = pneg %p205
        $region222: #{transformer_decoder_wrapper_forward.17} parent=219 // pred_check_branch
          %1405 = sbr.rel (%p1403) target = $region224
        $region223: #{transformer_decoder_wrapper_forward.17} parent=219 // pred_region
          %s1406 = sand.u32 %s190, 1
          %s1407 = sand.u32 %s190, 1
          %s1408 = smul.addr %s1407, 8
          %s1409 = scalar_lea.vmem [#allocation7], %s1408
        $region224: #{transformer_decoder_wrapper_forward.17} parent=219 // pred_fallthru
          _
      $region220: #{transformer_decoder_wrapper_forward.17} parent=5 // pred_fallthru
        _
    $region6: #{transformer_decoder_wrapper_forward.17} parent=1 // loop_footer
      %s18 = sadd.s32 1, %s14
    $region7: #{transformer_decoder_wrapper_forward.17} parent=1 // loop_footer_branch
      %13 = sbr.rel target = $region3
    $region8: #{transformer_decoder_wrapper_forward.17} parent=1 // loop_exit
      _
    %1410 = vsyncpa [#allocation6], 1
    %s1411 = scalar_lea.sflag [#allocation6], 1
    %1412 = vsyncpa %s1411, 1

// kernel: transformer_decoder_wrapper_forward.20
$region0: #{transformer_decoder_wrapper_forward.20}
  #allocation0 [shape = 'u32[]', space=smem, size = 0x4, offset = 0x4, fixed_abs, tag = 'smem constant byte address 0x4 - core index']
  #allocation1 [shape = 'u32[72,128]{1,0:T(1,128)}', space=vmem, size = 0x9000, scoped, tag = 'internal scratch']
  %s0 = inlined_call_operand.vmem [shape: f32[8,2,1,96], index: 0, kind: input, shape index: {}]
  %s1 = inlined_call_operand.vmem [shape: f32[8,2,1,32], index: 1, kind: input, shape index: {}]
  %s2 = inlined_call_operand.vmem [shape: f32[32,32], index: 2, kind: input, shape index: {}]
  %s3 = inlined_call_operand.vmem [shape: f32[1,32], index: 3, kind: input, shape index: {}, may-alias: {3,5}]
  %s4 = inlined_call_operand.vmem [shape: f32[1,32], index: 4, kind: input, shape index: {}]
  %s5 = inlined_call_operand.vmem [shape: f32[1,32], index: 5, kind: input, shape index: {}, may-alias: {3,5}]
  %s6 = inlined_call_operand.vmem [shape: f32[8,2,1,32], index: 6, kind: output, shape index: {}]
  %s7 = sld [smem:[#allocation0]]
  $region176: #{transformer_decoder_wrapper_forward.20} parent=0
    _
  %s9 = ssub.s32 1, %s7
  %s10 = scalar_select 0, %s9, %s7
  $region1: #{transformer_decoder_wrapper_forward.20} parent=0
    #allocation2 [shape = 'u8[8192]{0}', space=vmem, size = 0x2000, scoped, tag = 'input window, operand 0']
    #allocation3 [shape = 'u8[8192]{0}', space=vmem, size = 0x2000, scoped, tag = 'input window, operand 1']
    #allocation4 [shape = 'u8[8192]{0}', space=vmem, size = 0x2000, scoped, tag = 'output window, operand 0']
    loop: start=0, step=1, limit=4
    $region2: #{transformer_decoder_wrapper_forward.20} parent=1 // loop_pre_header
      _
    $region3: #{transformer_decoder_wrapper_forward.20} parent=1 // loop_header
      %s12 = sphi 0, %s16
      %p13 = scmp.ge.s32.totalorder %s12, 4
      %s22 = sphi 0, %s24
      %s25 = sphi 0, %s22
      %s26 = sphi 0, %s25
      %s42 = sphi 0, %s26
      %s48 = sphi 0, %s50
      %s51 = sphi 0, %s48
      %s52 = sphi 0, %s51
      %s68 = sphi 0, %s52
      %s72 = sphi 0, %s72
      %s74 = sphi 0, %s72
      %s75 = sphi 0, %s74
      %s89 = sphi 0, %s75
      %s93 = sphi 0, %s93
      %s95 = sphi 0, %s93
      %s96 = sphi 0, %s95
      %s110 = sphi 0, %s96
      %s114 = sphi 0, %s114
      %s116 = sphi 0, %s114
      %s117 = sphi 0, %s116
      %s131 = sphi 0, %s117
      %s135 = sphi 0, %s135
      %s137 = sphi 0, %s135
      %s138 = sphi 0, %s137
      %s152 = sphi 0, %s138
      %s158 = sphi 0, %s160
      %s161 = sphi 0, %s158
      %s162 = sphi 0, %s161
      %s178 = sphi 0, %s162
    $region4: #{transformer_decoder_wrapper_forward.20} parent=1 // loop_header_branch
      %15 = sbr.rel (%p13) target = $region8
    $region5: #{transformer_decoder_wrapper_forward.20} parent=1 // loop_body
      %s17 = ssub.s32 %s12, 1
      %s18 = ssub.s32 %s12, 2
      %s19 = sadd.s32 %s12, 1
      %s20 = ssub.s32 %s12, %s19
      %p21 = scmp.eq.s32.totalorder %s20, 0
      %s23 = sadd.s32 %s22, 1
      %s24 = scalar_select %p21, %s22, %s23
      %p27 = pneg %p21
      %p28 = scmp.eq.s32.totalorder %s12, 1
      %p29 = por %p27, %p28
      %p30 = scmp.ne.s32.totalorder %s22, %s25
      %p31 = scmp.eq.s32.totalorder %s12, 0
      %p32 = por %p30, %p31
      %p33 = scmp.ne.s32.totalorder %s22, %s25
      %p34 = scmp.eq.s32.totalorder %s17, 1
      %p35 = por %p33, %p34
      %p36 = scmp.ne.s32.totalorder %s25, %s26
      %p37 = scmp.eq.s32.totalorder %s17, 0
      %p38 = por %p36, %p37
      %p39 = scmp.ne.s32.totalorder %s25, %s26
      %p40 = scmp.eq.s32.totalorder %s18, 1
      %p41 = por %p39, %p40
      %p43 = scmp.ne.s32.totalorder %s26, %s42
      %p44 = scmp.eq.s32.totalorder %s18, 0
      %p45 = por %p43, %p44
      %s46 = ssub.s32 %s12, %s19
      %p47 = scmp.eq.s32.totalorder %s46, 0
      %s49 = sadd.s32 %s48, 1
      %s50 = scalar_select %p47, %s48, %s49
      %p53 = pneg %p47
      %p54 = scmp.eq.s32.totalorder %s12, 1
      %p55 = por %p53, %p54
      %p56 = scmp.ne.s32.totalorder %s48, %s51
      %p57 = scmp.eq.s32.totalorder %s12, 0
      %p58 = por %p56, %p57
      %p59 = scmp.ne.s32.totalorder %s48, %s51
      %p60 = scmp.eq.s32.totalorder %s17, 1
      %p61 = por %p59, %p60
      %p62 = scmp.ne.s32.totalorder %s51, %s52
      %p63 = scmp.eq.s32.totalorder %s17, 0
      %p64 = por %p62, %p63
      %p65 = scmp.ne.s32.totalorder %s51, %s52
      %p66 = scmp.eq.s32.totalorder %s18, 1
      %p67 = por %p65, %p66
      %p69 = scmp.ne.s32.totalorder %s52, %s68
      %p70 = scmp.eq.s32.totalorder %s18, 0
      %p71 = por %p69, %p70
      %s73 = sadd.s32 %s72, 1
      %p76 = scmp.eq.s32.totalorder %s12, 1
      %p77 = scmp.ne.s32.totalorder %s72, %s74
      %p78 = scmp.eq.s32.totalorder %s12, 0
      %p79 = por %p77, %p78
      %p80 = scmp.ne.s32.totalorder %s72, %s74
      %p81 = scmp.eq.s32.totalorder %s17, 1
      %p82 = por %p80, %p81
      %p83 = scmp.ne.s32.totalorder %s74, %s75
      %p84 = scmp.eq.s32.totalorder %s17, 0
      %p85 = por %p83, %p84
      %p86 = scmp.ne.s32.totalorder %s74, %s75
      %p87 = scmp.eq.s32.totalorder %s18, 1
      %p88 = por %p86, %p87
      %p90 = scmp.ne.s32.totalorder %s75, %s89
      %p91 = scmp.eq.s32.totalorder %s18, 0
      %p92 = por %p90, %p91
      %s94 = sadd.s32 %s93, 1
      %p97 = scmp.eq.s32.totalorder %s12, 1
      %p98 = scmp.ne.s32.totalorder %s93, %s95
      %p99 = scmp.eq.s32.totalorder %s12, 0
      %p100 = por %p98, %p99
      %p101 = scmp.ne.s32.totalorder %s93, %s95
      %p102 = scmp.eq.s32.totalorder %s17, 1
      %p103 = por %p101, %p102
      %p104 = scmp.ne.s32.totalorder %s95, %s96
      %p105 = scmp.eq.s32.totalorder %s17, 0
      %p106 = por %p104, %p105
      %p107 = scmp.ne.s32.totalorder %s95, %s96
      %p108 = scmp.eq.s32.totalorder %s18, 1
      %p109 = por %p107, %p108
      %p111 = scmp.ne.s32.totalorder %s96, %s110
      %p112 = scmp.eq.s32.totalorder %s18, 0
      %p113 = por %p111, %p112
      %s115 = sadd.s32 %s114, 1
      %p118 = scmp.eq.s32.totalorder %s12, 1
      %p119 = scmp.ne.s32.totalorder %s114, %s116
      %p120 = scmp.eq.s32.totalorder %s12, 0
      %p121 = por %p119, %p120
      %p122 = scmp.ne.s32.totalorder %s114, %s116
      %p123 = scmp.eq.s32.totalorder %s17, 1
      %p124 = por %p122, %p123
      %p125 = scmp.ne.s32.totalorder %s116, %s117
      %p126 = scmp.eq.s32.totalorder %s17, 0
      %p127 = por %p125, %p126
      %p128 = scmp.ne.s32.totalorder %s116, %s117
      %p129 = scmp.eq.s32.totalorder %s18, 1
      %p130 = por %p128, %p129
      %p132 = scmp.ne.s32.totalorder %s117, %s131
      %p133 = scmp.eq.s32.totalorder %s18, 0
      %p134 = por %p132, %p133
      %s136 = sadd.s32 %s135, 1
      %p139 = scmp.eq.s32.totalorder %s12, 1
      %p140 = scmp.ne.s32.totalorder %s135, %s137
      %p141 = scmp.eq.s32.totalorder %s12, 0
      %p142 = por %p140, %p141
      %p143 = scmp.ne.s32.totalorder %s135, %s137
      %p144 = scmp.eq.s32.totalorder %s17, 1
      %p145 = por %p143, %p144
      %p146 = scmp.ne.s32.totalorder %s137, %s138
      %p147 = scmp.eq.s32.totalorder %s17, 0
      %p148 = por %p146, %p147
      %p149 = scmp.ne.s32.totalorder %s137, %s138
      %p150 = scmp.eq.s32.totalorder %s18, 1
      %p151 = por %p149, %p150
      %p153 = scmp.ne.s32.totalorder %s138, %s152
      %p154 = scmp.eq.s32.totalorder %s18, 0
      %p155 = por %p153, %p154
      %s156 = ssub.s32 %s12, %s19
      %p157 = scmp.eq.s32.totalorder %s156, 0
      %s159 = sadd.s32 %s158, 1
      %s160 = scalar_select %p157, %s158, %s159
      %p163 = pneg %p157
      %p164 = scmp.eq.s32.totalorder %s12, 1
      %p165 = por %p163, %p164
      %p166 = scmp.ne.s32.totalorder %s158, %s161
      %p167 = scmp.eq.s32.totalorder %s12, 0
      %p168 = por %p166, %p167
      %p169 = scmp.ne.s32.totalorder %s158, %s161
      %p170 = scmp.eq.s32.totalorder %s17, 1
      %p171 = por %p169, %p170
      %p172 = scmp.ne.s32.totalorder %s161, %s162
      %p173 = scmp.eq.s32.totalorder %s17, 0
      %p174 = por %p172, %p173
      %p175 = scmp.ne.s32.totalorder %s161, %s162
      %p176 = scmp.eq.s32.totalorder %s18, 1
      %p177 = por %p175, %p176
      %p179 = scmp.ne.s32.totalorder %s162, %s178
      %p180 = scmp.eq.s32.totalorder %s18, 0
      %p181 = por %p179, %p180
      %p182 = scmp.le.s32.totalorder 1, %s12
      %p183 = scmp.lt.s32.totalorder %s12, 3
      %p184 = pnand %p182, %p183
      %p185 = pneg %p184
      // Predicated region
      $region9: #{transformer_decoder_wrapper_forward.20} parent=5 // pred_check
        _
      $region10: #{transformer_decoder_wrapper_forward.20} parent=5 // pred_check_branch
        %187 = sbr.rel (%p184) target = $region12
      $region11: #{transformer_decoder_wrapper_forward.20} parent=5 // pred_region
        %s188 = ssub.s32 %s12, 1
        // Predicated region
        $region13: #{transformer_decoder_wrapper_forward.20} parent=11 // pred_check
          %p189 = pneg %p85
        $region14: #{transformer_decoder_wrapper_forward.20} parent=11 // pred_check_branch
          %191 = sbr.rel (%p189) target = $region16
        $region15: #{transformer_decoder_wrapper_forward.20} parent=11 // pred_region
          _
        $region16: #{transformer_decoder_wrapper_forward.20} parent=11 // pred_fallthru
          _
        // Predicated region
        $region17: #{transformer_decoder_wrapper_forward.20} parent=11 // pred_check
          %p192 = pneg %p106
        $region18: #{transformer_decoder_wrapper_forward.20} parent=11 // pred_check_branch
          %194 = sbr.rel (%p192) target = $region20
        $region19: #{transformer_decoder_wrapper_forward.20} parent=11 // pred_region
          _
        $region20: #{transformer_decoder_wrapper_forward.20} parent=11 // pred_fallthru
          _
        // Predicated region
        $region21: #{transformer_decoder_wrapper_forward.20} parent=11 // pred_check
          %p195 = pneg %p127
        $region22: #{transformer_decoder_wrapper_forward.20} parent=11 // pred_check_branch
          %197 = sbr.rel (%p195) target = $region24
        $region23: #{transformer_decoder_wrapper_forward.20} parent=11 // pred_region
          _
        $region24: #{transformer_decoder_wrapper_forward.20} parent=11 // pred_fallthru
          _
        // Predicated region
        $region25: #{transformer_decoder_wrapper_forward.20} parent=11 // pred_check
          %p198 = pneg %p148
        $region26: #{transformer_decoder_wrapper_forward.20} parent=11 // pred_check_branch
          %200 = sbr.rel (%p198) target = $region28
        $region27: #{transformer_decoder_wrapper_forward.20} parent=11 // pred_region
          _
        $region28: #{transformer_decoder_wrapper_forward.20} parent=11 // pred_fallthru
          _
      $region12: #{transformer_decoder_wrapper_forward.20} parent=5 // pred_fallthru
        _
      %p201 = scmp.lt.s32.totalorder %s12, 2
      // Predicated region
      $region29: #{transformer_decoder_wrapper_forward.20} parent=5 // pred_check
        %p202 = pneg %p201
      $region30: #{transformer_decoder_wrapper_forward.20} parent=5 // pred_check_branch
        %204 = sbr.rel (%p202) target = $region32
      $region31: #{transformer_decoder_wrapper_forward.20} parent=5 // pred_region
        // Predicated region
        $region33: #{transformer_decoder_wrapper_forward.20} parent=31 // pred_check
          %p205 = pneg %p32
        $region34: #{transformer_decoder_wrapper_forward.20} parent=31 // pred_check_branch
          %207 = sbr.rel (%p205) target = $region36
        $region35: #{transformer_decoder_wrapper_forward.20} parent=31 // pred_region
          %s208 = sand.u32 %s22, 1
          %s209 = sand.u32 %s22, 1
          %s210 = smul.addr %s209, 8
          %s211 = scalar_lea.vmem [#allocation2], %s210
          %s212 = scalar_lea.vmem %s0, %s12
          // Predicated region
          $region37: #{transformer_decoder_wrapper_forward.20} parent=35 // pred_check
            _
          $region38: #{transformer_decoder_wrapper_forward.20} parent=35 // pred_check_branch
            %214 = sbr.rel (0) target = $region40
          $region39: #{transformer_decoder_wrapper_forward.20} parent=35 // pred_region
            // Predicated region
            $region41: #{transformer_decoder_wrapper_forward.20} parent=39 // pred_check
              _
            $region42: #{transformer_decoder_wrapper_forward.20} parent=39 // pred_check_branch
              %216 = sbr.rel target = $region44
            $region43: #{transformer_decoder_wrapper_forward.20} parent=39 // pred_region
              // Predicated region
              $region56: #{transformer_decoder_wrapper_forward.20} parent=43 // pred_check
                _
              $region57: #{transformer_decoder_wrapper_forward.20} parent=43 // pred_check_branch
                %246 = sbr.rel (0) target = $region59
              $region58: #{transformer_decoder_wrapper_forward.20} parent=43 // pred_region
                loop: start=0, step=1, limit=1
                $region60: #{transformer_decoder_wrapper_forward.20} parent=58 // loop_pre_header
                  _
                $region61: #{transformer_decoder_wrapper_forward.20} parent=58 // loop_header
                  %s248 = sphi 0, %s252
                  %p249 = scmp.ge.s32.totalorder %s248, 1
                  %s253 = sphi %s212, %s212
                  %s254 = sphi %s211, %s211
                $region62: #{transformer_decoder_wrapper_forward.20} parent=58 // loop_header_branch
                  %251 = sbr.rel (%p249) target = $region66
                $region63: #{transformer_decoder_wrapper_forward.20} parent=58 // loop_body
                  _
                $region64: #{transformer_decoder_wrapper_forward.20} parent=58 // loop_footer
                  %s252 = sadd.s32 1, %s248
                $region65: #{transformer_decoder_wrapper_forward.20} parent=58 // loop_footer_branch
                  %247 = sbr.rel target = $region61
                $region66: #{transformer_decoder_wrapper_forward.20} parent=58 // loop_exit
                  _
                %s256 = ssub.s32 2, 1
                loop: start=0, step=1, limit=1
                $region67: #{transformer_decoder_wrapper_forward.20} parent=58 // loop_pre_header
                  _
                $region68: #{transformer_decoder_wrapper_forward.20} parent=58 // loop_header
                  %s258 = sphi 0, %s262
                  %p259 = scmp.ge.s32.totalorder %s258, 1
                  %s263 = sphi %s212, %s212
                  %s264 = sphi %s211, %s211
                $region69: #{transformer_decoder_wrapper_forward.20} parent=58 // loop_header_branch
                  %261 = sbr.rel (%p259) target = $region73
                $region70: #{transformer_decoder_wrapper_forward.20} parent=58 // loop_body
                  %v265 = vld [vmem:[%s263] sm:%s256]
                  %266 = vst [vmem:[%s264] sm:%s256] %v265
                  %v267 = vld [vmem:[%s263 + $0x2] sm:%s256]
                  %268 = vst [vmem:[%s264 + $0x1] sm:%s256] %v267
                  %v269 = vld [vmem:[%s263 + $0x4] sm:%s256]
                  %270 = vst [vmem:[%s264 + $0x2] sm:%s256] %v269
                  %v271 = vld [vmem:[%s263 + $0x6] sm:%s256]
                  %272 = vst [vmem:[%s264 + $0x3] sm:%s256] %v271
                  %v273 = vld [vmem:[%s263 + $0x8] sm:%s256]
                  %274 = vst [vmem:[%s264 + $0x4] sm:%s256] %v273
                  %v275 = vld [vmem:[%s263 + $0xa] sm:%s256]
                  %276 = vst [vmem:[%s264 + $0x5] sm:%s256] %v275
                  %v277 = vld [vmem:[%s263 + $0xc] sm:%s256]
                  %278 = vst [vmem:[%s264 + $0x6] sm:%s256] %v277
                  %v279 = vld [vmem:[%s263 + $0xe] sm:%s256]
                  %280 = vst [vmem:[%s264 + $0x7] sm:%s256] %v279
                $region71: #{transformer_decoder_wrapper_forward.20} parent=58 // loop_footer
                  %s262 = sadd.s32 1, %s258
                $region72: #{transformer_decoder_wrapper_forward.20} parent=58 // loop_footer_branch
                  %257 = sbr.rel target = $region68
                $region73: #{transformer_decoder_wrapper_forward.20} parent=58 // loop_exit
                  _
              $region59: #{transformer_decoder_wrapper_forward.20} parent=43 // pred_fallthru
                _
            $region44: #{transformer_decoder_wrapper_forward.20} parent=39 // pred_fallthru
              _
            // Predicated region
            $region45: #{transformer_decoder_wrapper_forward.20} parent=39 // pred_check
              _
            $region46: #{transformer_decoder_wrapper_forward.20} parent=39 // pred_check_branch
              %218 = sbr.rel (0) target = $region48
            $region47: #{transformer_decoder_wrapper_forward.20} parent=39 // pred_region
              %s220 = ssub.s32 2, 1
              loop: start=0, step=1, limit=1
              $region49: #{transformer_decoder_wrapper_forward.20} parent=47 // loop_pre_header
                _
              $region50: #{transformer_decoder_wrapper_forward.20} parent=47 // loop_header
                %s222 = sphi 0, %s226
                %p223 = scmp.ge.s32.totalorder %s222, 1
                %s227 = sphi %s212, %s212
                %s228 = sphi %s211, %s211
              $region51: #{transformer_decoder_wrapper_forward.20} parent=47 // loop_header_branch
                %225 = sbr.rel (%p223) target = $region55
              $region52: #{transformer_decoder_wrapper_forward.20} parent=47 // loop_body
                %v229 = vld [vmem:[%s227] sm:%s220]
                %230 = vst [vmem:[%s228] sm:%s220] %v229
                %v231 = vld [vmem:[%s227 + $0x2] sm:%s220]
                %232 = vst [vmem:[%s228 + $0x1] sm:%s220] %v231
                %v233 = vld [vmem:[%s227 + $0x4] sm:%s220]
                %234 = vst [vmem:[%s228 + $0x2] sm:%s220] %v233
                %v235 = vld [vmem:[%s227 + $0x6] sm:%s220]
                %236 = vst [vmem:[%s228 + $0x3] sm:%s220] %v235
                %v237 = vld [vmem:[%s227 + $0x8] sm:%s220]
                %238 = vst [vmem:[%s228 + $0x4] sm:%s220] %v237
                %v239 = vld [vmem:[%s227 + $0xa] sm:%s220]
                %240 = vst [vmem:[%s228 + $0x5] sm:%s220] %v239
                %v241 = vld [vmem:[%s227 + $0xc] sm:%s220]
                %242 = vst [vmem:[%s228 + $0x6] sm:%s220] %v241
                %v243 = vld [vmem:[%s227 + $0xe] sm:%s220]
                %244 = vst [vmem:[%s228 + $0x7] sm:%s220] %v243
              $region53: #{transformer_decoder_wrapper_forward.20} parent=47 // loop_footer
                %s226 = sadd.s32 1, %s222
              $region54: #{transformer_decoder_wrapper_forward.20} parent=47 // loop_footer_branch
                %221 = sbr.rel target = $region50
              $region55: #{transformer_decoder_wrapper_forward.20} parent=47 // loop_exit
                _
            $region48: #{transformer_decoder_wrapper_forward.20} parent=39 // pred_fallthru
              _
          $region40: #{transformer_decoder_wrapper_forward.20} parent=35 // pred_fallthru
            _
          %281 = vnop
        $region36: #{transformer_decoder_wrapper_forward.20} parent=31 // pred_fallthru
          _
        // Predicated region
        $region74: #{transformer_decoder_wrapper_forward.20} parent=31 // pred_check
          %p282 = pneg %p58
        $region75: #{transformer_decoder_wrapper_forward.20} parent=31 // pred_check_branch
          %284 = sbr.rel (%p282) target = $region77
        $region76: #{transformer_decoder_wrapper_forward.20} parent=31 // pred_region
          %s285 = sand.u32 %s48, 1
          %s286 = sand.u32 %s48, 1
          %s287 = smul.addr %s286, 8
          %s288 = scalar_lea.vmem [#allocation3], %s287
          %s289 = scalar_lea.vmem %s1, %s12
          // Predicated region
          $region78: #{transformer_decoder_wrapper_forward.20} parent=76 // pred_check
            _
          $region79: #{transformer_decoder_wrapper_forward.20} parent=76 // pred_check_branch
            %291 = sbr.rel (0) target = $region81
          $region80: #{transformer_decoder_wrapper_forward.20} parent=76 // pred_region
            // Predicated region
            $region82: #{transformer_decoder_wrapper_forward.20} parent=80 // pred_check
              _
            $region83: #{transformer_decoder_wrapper_forward.20} parent=80 // pred_check_branch
              %293 = sbr.rel target = $region85
            $region84: #{transformer_decoder_wrapper_forward.20} parent=80 // pred_region
              // Predicated region
              $region97: #{transformer_decoder_wrapper_forward.20} parent=84 // pred_check
                _
              $region98: #{transformer_decoder_wrapper_forward.20} parent=84 // pred_check_branch
                %323 = sbr.rel (0) target = $region100
              $region99: #{transformer_decoder_wrapper_forward.20} parent=84 // pred_region
                loop: start=0, step=1, limit=1
                $region101: #{transformer_decoder_wrapper_forward.20} parent=99 // loop_pre_header
                  _
                $region102: #{transformer_decoder_wrapper_forward.20} parent=99 // loop_header
                  %s325 = sphi 0, %s329
                  %p326 = scmp.ge.s32.totalorder %s325, 1
                  %s330 = sphi %s289, %s289
                  %s331 = sphi %s288, %s288
                $region103: #{transformer_decoder_wrapper_forward.20} parent=99 // loop_header_branch
                  %328 = sbr.rel (%p326) target = $region107
                $region104: #{transformer_decoder_wrapper_forward.20} parent=99 // loop_body
                  _
                $region105: #{transformer_decoder_wrapper_forward.20} parent=99 // loop_footer
                  %s329 = sadd.s32 1, %s325
                $region106: #{transformer_decoder_wrapper_forward.20} parent=99 // loop_footer_branch
                  %324 = sbr.rel target = $region102
                $region107: #{transformer_decoder_wrapper_forward.20} parent=99 // loop_exit
                  _
                %s333 = ssub.s32 2, 1
                loop: start=0, step=1, limit=1
                $region108: #{transformer_decoder_wrapper_forward.20} parent=99 // loop_pre_header
                  _
                $region109: #{transformer_decoder_wrapper_forward.20} parent=99 // loop_header
                  %s335 = sphi 0, %s339
                  %p336 = scmp.ge.s32.totalorder %s335, 1
                  %s340 = sphi %s289, %s289
                  %s341 = sphi %s288, %s288
                $region110: #{transformer_decoder_wrapper_forward.20} parent=99 // loop_header_branch
                  %338 = sbr.rel (%p336) target = $region114
                $region111: #{transformer_decoder_wrapper_forward.20} parent=99 // loop_body
                  %v342 = vld [vmem:[%s340] sm:%s333]
                  %343 = vst [vmem:[%s341] sm:%s333] %v342
                  %v344 = vld [vmem:[%s340 + $0x2] sm:%s333]
                  %345 = vst [vmem:[%s341 + $0x1] sm:%s333] %v344
                  %v346 = vld [vmem:[%s340 + $0x4] sm:%s333]
                  %347 = vst [vmem:[%s341 + $0x2] sm:%s333] %v346
                  %v348 = vld [vmem:[%s340 + $0x6] sm:%s333]
                  %349 = vst [vmem:[%s341 + $0x3] sm:%s333] %v348
                  %v350 = vld [vmem:[%s340 + $0x8] sm:%s333]
                  %351 = vst [vmem:[%s341 + $0x4] sm:%s333] %v350
                  %v352 = vld [vmem:[%s340 + $0xa] sm:%s333]
                  %353 = vst [vmem:[%s341 + $0x5] sm:%s333] %v352
                  %v354 = vld [vmem:[%s340 + $0xc] sm:%s333]
                  %355 = vst [vmem:[%s341 + $0x6] sm:%s333] %v354
                  %v356 = vld [vmem:[%s340 + $0xe] sm:%s333]
                  %357 = vst [vmem:[%s341 + $0x7] sm:%s333] %v356
                $region112: #{transformer_decoder_wrapper_forward.20} parent=99 // loop_footer
                  %s339 = sadd.s32 1, %s335
                $region113: #{transformer_decoder_wrapper_forward.20} parent=99 // loop_footer_branch
                  %334 = sbr.rel target = $region109
                $region114: #{transformer_decoder_wrapper_forward.20} parent=99 // loop_exit
                  _
              $region100: #{transformer_decoder_wrapper_forward.20} parent=84 // pred_fallthru
                _
            $region85: #{transformer_decoder_wrapper_forward.20} parent=80 // pred_fallthru
              _
            // Predicated region
            $region86: #{transformer_decoder_wrapper_forward.20} parent=80 // pred_check
              _
            $region87: #{transformer_decoder_wrapper_forward.20} parent=80 // pred_check_branch
              %295 = sbr.rel (0) target = $region89
            $region88: #{transformer_decoder_wrapper_forward.20} parent=80 // pred_region
              %s297 = ssub.s32 2, 1
              loop: start=0, step=1, limit=1
              $region90: #{transformer_decoder_wrapper_forward.20} parent=88 // loop_pre_header
                _
              $region91: #{transformer_decoder_wrapper_forward.20} parent=88 // loop_header
                %s299 = sphi 0, %s303
                %p300 = scmp.ge.s32.totalorder %s299, 1
                %s304 = sphi %s289, %s289
                %s305 = sphi %s288, %s288
              $region92: #{transformer_decoder_wrapper_forward.20} parent=88 // loop_header_branch
                %302 = sbr.rel (%p300) target = $region96
              $region93: #{transformer_decoder_wrapper_forward.20} parent=88 // loop_body
                %v306 = vld [vmem:[%s304] sm:%s297]
                %307 = vst [vmem:[%s305] sm:%s297] %v306
                %v308 = vld [vmem:[%s304 + $0x2] sm:%s297]
                %309 = vst [vmem:[%s305 + $0x1] sm:%s297] %v308
                %v310 = vld [vmem:[%s304 + $0x4] sm:%s297]
                %311 = vst [vmem:[%s305 + $0x2] sm:%s297] %v310
                %v312 = vld [vmem:[%s304 + $0x6] sm:%s297]
                %313 = vst [vmem:[%s305 + $0x3] sm:%s297] %v312
                %v314 = vld [vmem:[%s304 + $0x8] sm:%s297]
                %315 = vst [vmem:[%s305 + $0x4] sm:%s297] %v314
                %v316 = vld [vmem:[%s304 + $0xa] sm:%s297]
                %317 = vst [vmem:[%s305 + $0x5] sm:%s297] %v316
                %v318 = vld [vmem:[%s304 + $0xc] sm:%s297]
                %319 = vst [vmem:[%s305 + $0x6] sm:%s297] %v318
                %v320 = vld [vmem:[%s304 + $0xe] sm:%s297]
                %321 = vst [vmem:[%s305 + $0x7] sm:%s297] %v320
              $region94: #{transformer_decoder_wrapper_forward.20} parent=88 // loop_footer
                %s303 = sadd.s32 1, %s299
              $region95: #{transformer_decoder_wrapper_forward.20} parent=88 // loop_footer_branch
                %298 = sbr.rel target = $region91
              $region96: #{transformer_decoder_wrapper_forward.20} parent=88 // loop_exit
                _
            $region89: #{transformer_decoder_wrapper_forward.20} parent=80 // pred_fallthru
              _
          $region81: #{transformer_decoder_wrapper_forward.20} parent=76 // pred_fallthru
            _
          %358 = vnop
        $region77: #{transformer_decoder_wrapper_forward.20} parent=31 // pred_fallthru
          _
      $region32: #{transformer_decoder_wrapper_forward.20} parent=5 // pred_fallthru
        _
      %p359 = scmp.le.s32.totalorder 1, %s12
      %p360 = scmp.lt.s32.totalorder %s12, 3
      %p361 = pnand %p359, %p360
      %p362 = pneg %p361
      // Predicated region
      $region115: #{transformer_decoder_wrapper_forward.20} parent=5 // pred_check
        _
      $region116: #{transformer_decoder_wrapper_forward.20} parent=5 // pred_check_branch
        %364 = sbr.rel (%p361) target = $region118
      $region117: #{transformer_decoder_wrapper_forward.20} parent=5 // pred_region
        %s365 = ssub.s32 %s12, 1
        %s366 = sand.u32 %s25, 1
        %s367 = sand.u32 %s25, 1
        %s368 = smul.addr %s367, 8
        %s369 = scalar_lea.vmem [#allocation2], %s368
        // Predicated region
        $region119: #{transformer_decoder_wrapper_forward.20} parent=117 // pred_check
          %p370 = pneg %p38
        $region120: #{transformer_decoder_wrapper_forward.20} parent=117 // pred_check_branch
          %372 = sbr.rel (%p370) target = $region122
        $region121: #{transformer_decoder_wrapper_forward.20} parent=117 // pred_region
          _
        $region122: #{transformer_decoder_wrapper_forward.20} parent=117 // pred_fallthru
          _
        %s373 = sand.u32 %s51, 1
        %s374 = sand.u32 %s51, 1
        %s375 = smul.addr %s374, 8
        %s376 = scalar_lea.vmem [#allocation3], %s375
        // Predicated region
        $region123: #{transformer_decoder_wrapper_forward.20} parent=117 // pred_check
          %p377 = pneg %p64
        $region124: #{transformer_decoder_wrapper_forward.20} parent=117 // pred_check_branch
          %379 = sbr.rel (%p377) target = $region126
        $region125: #{transformer_decoder_wrapper_forward.20} parent=117 // pred_region
          _
        $region126: #{transformer_decoder_wrapper_forward.20} parent=117 // pred_fallthru
          _
        %s380 = sand.u32 %s25, 1
        %s381 = sand.u32 %s25, 1
        %s382 = smul.addr %s381, 8
        %s383 = scalar_lea.vmem [#allocation2], %s382
        %p384 = pneg %p38
        %p385 = pneg %p35
        %s386 = sand.u32 %s51, 1
        %s387 = sand.u32 %s51, 1
        %s388 = smul.addr %s387, 8
        %s389 = scalar_lea.vmem [#allocation3], %s388
        %p390 = pneg %p64
        %p391 = pneg %p61
        %p392 = pneg %p85
        %p393 = pneg %p82
        %p394 = pneg %p106
        %p395 = pneg %p103
        %p396 = pneg %p127
        %p397 = pneg %p124
        %p398 = pneg %p148
        %p399 = pneg %p145
        %p400 = pneg %p174
        %p401 = pneg %p171
        %s402 = sand.u32 %s161, 1
        %s403 = sand.u32 %s161, 1
        %s404 = smul.addr %s403, 8
        %s405 = scalar_lea.vmem [#allocation4], %s404
        %v406 = vld [vmem:[%s369] sm:$0x1]
        %v407 = vld [vmem:[%s369 + $0x1] sm:$0x1]
        %v408 = vld [vmem:[%s369 + $0x2] sm:$0x1]
        %v409 = vld [vmem:[%s369 + $0x3] sm:$0x1]
        %v410 = vld [vmem:[%s369 + $0x4] sm:$0x1]
        %v411 = vld [vmem:[%s369 + $0x5] sm:$0x1]
        %v412 = vld [vmem:[%s369 + $0x6] sm:$0x1]
        %v413 = vld [vmem:[%s369 + $0x7] sm:$0x1]
        %v414 = vld [vmem:[%s376] sm:$0x1]
        %v415 = vld [vmem:[%s376 + $0x1] sm:$0x1]
        %v416 = vld [vmem:[%s376 + $0x2] sm:$0x1]
        %v417 = vld [vmem:[%s376 + $0x3] sm:$0x1]
        %v418 = vld [vmem:[%s376 + $0x4] sm:$0x1]
        %v419 = vld [vmem:[%s376 + $0x5] sm:$0x1]
        %v420 = vld [vmem:[%s376 + $0x6] sm:$0x1]
        %v421 = vld [vmem:[%s376 + $0x7] sm:$0x1]
        %v422 = vld [vmem:[%s2] sm:$0xff]
        %v423 = vld [vmem:[%s2 + $0x8] sm:$0xff]
        %v424 = vld [vmem:[%s2 + $0x10] sm:$0xff]
        %v425 = vld [vmem:[%s2 + $0x18] sm:$0xff]
        %v426 = vld [vmem:[%s3] sm:$0x1]
        %v427 = vld [vmem:[%s4] sm:$0x1]
        %v428 = vld [vmem:[%s5] sm:$0x1]
        %v429 = vmul.f32 %v406, 0.35355338
        %v430 = vmul.f32 %v407, 0.35355338
        %v431 = vmul.f32 %v408, 0.35355338
        %v432 = vmul.f32 %v409, 0.35355338
        %v433 = vmul.f32 %v410, 0.35355338
        %v434 = vmul.f32 %v411, 0.35355338
        %v435 = vmul.f32 %v412, 0.35355338
        %v436 = vmul.f32 %v413, 0.35355338
        %445 = vst [vmem:[#allocation1] ss:$9 sm:$0xff] %v429
        %s446 = scalar_lea.vmem [#allocation1], 1
        %447 = vst [vmem:[%s446] ss:$9 sm:$0xff] %v430
        %s448 = scalar_lea.vmem [#allocation1], 2
        %449 = vst [vmem:[%s448] ss:$9 sm:$0xff] %v431
        %s450 = scalar_lea.vmem [#allocation1], 3
        %451 = vst [vmem:[%s450] ss:$9 sm:$0xff] %v432
        %s452 = scalar_lea.vmem [#allocation1], 4
        %453 = vst [vmem:[%s452] ss:$9 sm:$0xff] %v433
        %s454 = scalar_lea.vmem [#allocation1], 5
        %455 = vst [vmem:[%s454] ss:$9 sm:$0xff] %v434
        %s456 = scalar_lea.vmem [#allocation1], 6
        %457 = vst [vmem:[%s456] ss:$9 sm:$0xff] %v435
        %s458 = scalar_lea.vmem [#allocation1], 7
        %459 = vst [vmem:[%s458] ss:$9 sm:$0xff] %v436
        %v460 = vld [vmem:[#allocation1] sm:$0xff]
        %469 = vst [vmem:[#allocation1] ss:$9 sm:$0xff] %v406
        %s470 = scalar_lea.vmem [#allocation1], 1
        %471 = vst [vmem:[%s470] ss:$9 sm:$0xff] %v407
        %s472 = scalar_lea.vmem [#allocation1], 2
        %473 = vst [vmem:[%s472] ss:$9 sm:$0xff] %v408
        %s474 = scalar_lea.vmem [#allocation1], 3
        %475 = vst [vmem:[%s474] ss:$9 sm:$0xff] %v409
        %s476 = scalar_lea.vmem [#allocation1], 4
        %477 = vst [vmem:[%s476] ss:$9 sm:$0xff] %v410
        %s478 = scalar_lea.vmem [#allocation1], 5
        %479 = vst [vmem:[%s478] ss:$9 sm:$0xff] %v411
        %s480 = scalar_lea.vmem [#allocation1], 6
        %481 = vst [vmem:[%s480] ss:$9 sm:$0xff] %v412
        %s482 = scalar_lea.vmem [#allocation1], 7
        %483 = vst [vmem:[%s482] ss:$9 sm:$0xff] %v413
        %v484 = vld [vmem:[#allocation1] sm:$0xff]
        %485 = vrot.lane.b32.xlu0 %v484, 96
        %v486 = vpop.permute.xlu0 %485
        %vm487 = vcmask 64512
        %v488 = vsel %vm487, %v460, 0
        %v490 = vsel %vm487, %v486, 0
        %492 = vmatpush.xpose.msra.mxu0 0.0
        %493 = vmatpush.xpose.msra.mxu0 0.0
        %494 = vmatpush.xpose.msra.mxu0 0.0
        %495 = vmatpush.xpose.msra.mxu0 0.0
        %496 = vmatpush.xpose.msra.mxu0 0.0
        %497 = vmatpush.xpose.msra.mxu0 0.0
        %498 = vmatpush.xpose.msra.mxu0 0.0
        %499 = vmatpush.xpose.msra.mxu0 0.0
        %500 = vmatpush.xpose.msra.mxu0 0.0
        %501 = vmatpush.xpose.msra.mxu0 0.0
        %502 = vmatpush.xpose.msra.mxu0 0.0
        %503 = vmatpush.xpose.msra.mxu0 0.0
        %504 = vmatpush.xpose.msra.mxu0 0.0
        %505 = vmatpush.xpose.msra.mxu0 0.0
        %506 = vmatpush.xpose.msra.mxu0 0.0
        %507 = vmatpush.xpose.msra.mxu0 %v490
        %508 = vmatmul.f32.gmra.mxu0 %v488
        %v509 = vpop.f32.mrf.mxu0
        %v510 = vadd.f32 0.0, %v509
        %511 = vdwg.mxu0
        %v512 = vsel %vm487, %v510, -inf
        %513 = vmax.xlane.f32.xlu0 %v512
        %v514 = vpop.xlane.xlu0 %513
        %v515 = vsub.f32 %v510, %v514
        %v516 = vmul.f32 %v515, 1.442695
        %v517 = vpow.pop %v516
        %v518 = vsel %vm487, %v517, 0.0
        %519 = vadd.xlane.f32.xlu0 %v518
        %v520 = vpop.xlane.xlu0 %519
        %v521 = vrcp.pop %v520
        %v522 = vmul.f32 %v517, %v521
        %523 = vst [vmem:[#allocation1] ss:$9 sm:$0xff] %v406
        %s524 = scalar_lea.vmem [#allocation1], 1
        %525 = vst [vmem:[%s524] ss:$9 sm:$0xff] %v407
        %s526 = scalar_lea.vmem [#allocation1], 2
        %527 = vst [vmem:[%s526] ss:$9 sm:$0xff] %v408
        %s528 = scalar_lea.vmem [#allocation1], 3
        %529 = vst [vmem:[%s528] ss:$9 sm:$0xff] %v409
        %s530 = scalar_lea.vmem [#allocation1], 4
        %531 = vst [vmem:[%s530] ss:$9 sm:$0xff] %v410
        %s532 = scalar_lea.vmem [#allocation1], 5
        %533 = vst [vmem:[%s532] ss:$9 sm:$0xff] %v411
        %s534 = scalar_lea.vmem [#allocation1], 6
        %535 = vst [vmem:[%s534] ss:$9 sm:$0xff] %v412
        %s536 = scalar_lea.vmem [#allocation1], 7
        %537 = vst [vmem:[%s536] ss:$9 sm:$0xff] %v413
        %v538 = vld [vmem:[#allocation1] sm:$0xff]
        %539 = vrot.lane.b32.xlu0 %v538, 64
        %v540 = vpop.permute.xlu0 %539
        %v543 = vsel %vm487, %v522, 0
        %545 = vmatpush.msra.mxu0 0.0
        %546 = vmatpush.msra.mxu0 0.0
        %547 = vmatpush.msra.mxu0 0.0
        %548 = vmatpush.msra.mxu0 0.0
        %549 = vmatpush.msra.mxu0 0.0
        %550 = vmatpush.msra.mxu0 0.0
        %551 = vmatpush.msra.mxu0 0.0
        %552 = vmatpush.msra.mxu0 0.0
        %553 = vmatpush.msra.mxu0 0.0
        %554 = vmatpush.msra.mxu0 0.0
        %555 = vmatpush.msra.mxu0 0.0
        %556 = vmatpush.msra.mxu0 0.0
        %557 = vmatpush.msra.mxu0 0.0
        %558 = vmatpush.msra.mxu0 0.0
        %559 = vmatpush.msra.mxu0 0.0
        %560 = vmatpush.msra.mxu0 %v540
        %561 = vmatmul.f32.gmra.mxu0 %v543
        %v562 = vpop.f32.mrf.mxu0
        %v563 = vadd.f32 0.0, %v562
        %564 = vdwg.mxu0
        %565 = vst [vmem:[#allocation1] ss:$9 sm:$0xff] %v429
        %s566 = scalar_lea.vmem [#allocation1], 1
        %567 = vst [vmem:[%s566] ss:$9 sm:$0xff] %v430
        %s568 = scalar_lea.vmem [#allocation1], 2
        %569 = vst [vmem:[%s568] ss:$9 sm:$0xff] %v431
        %s570 = scalar_lea.vmem [#allocation1], 3
        %571 = vst [vmem:[%s570] ss:$9 sm:$0xff] %v432
        %s572 = scalar_lea.vmem [#allocation1], 4
        %573 = vst [vmem:[%s572] ss:$9 sm:$0xff] %v433
        %s574 = scalar_lea.vmem [#allocation1], 5
        %575 = vst [vmem:[%s574] ss:$9 sm:$0xff] %v434
        %s576 = scalar_lea.vmem [#allocation1], 6
        %577 = vst [vmem:[%s576] ss:$9 sm:$0xff] %v435
        %s578 = scalar_lea.vmem [#allocation1], 7
        %579 = vst [vmem:[%s578] ss:$9 sm:$0xff] %v436
        %v580 = vld [vmem:[#allocation1] sm:$0xff]
        %581 = vrot.lane.b32.xlu0 %v580, 120
        %v582 = vpop.permute.xlu0 %581
        %583 = vst [vmem:[#allocation1] ss:$9 sm:$0xff] %v406
        %s584 = scalar_lea.vmem [#allocation1], 1
        %585 = vst [vmem:[%s584] ss:$9 sm:$0xff] %v407
        %s586 = scalar_lea.vmem [#allocation1], 2
        %587 = vst [vmem:[%s586] ss:$9 sm:$0xff] %v408
        %s588 = scalar_lea.vmem [#allocation1], 3
        %589 = vst [vmem:[%s588] ss:$9 sm:$0xff] %v409
        %s590 = scalar_lea.vmem [#allocation1], 4
        %591 = vst [vmem:[%s590] ss:$9 sm:$0xff] %v410
        %s592 = scalar_lea.vmem [#allocation1], 5
        %593 = vst [vmem:[%s592] ss:$9 sm:$0xff] %v411
        %s594 = scalar_lea.vmem [#allocation1], 6
        %595 = vst [vmem:[%s594] ss:$9 sm:$0xff] %v412
        %s596 = scalar_lea.vmem [#allocation1], 7
        %597 = vst [vmem:[%s596] ss:$9 sm:$0xff] %v413
        %v598 = vld [vmem:[#allocation1] sm:$0xff]
        %599 = vrot.lane.b32.xlu0 %v598, 88
        %v600 = vpop.permute.xlu0 %599
        %v601 = vsel %vm487, %v582, 0
        %v603 = vsel %vm487, %v600, 0
        %605 = vmatpush.xpose.msra.mxu0 0.0
        %606 = vmatpush.xpose.msra.mxu0 0.0
        %607 = vmatpush.xpose.msra.mxu0 0.0
        %608 = vmatpush.xpose.msra.mxu0 0.0
        %609 = vmatpush.xpose.msra.mxu0 0.0
        %610 = vmatpush.xpose.msra.mxu0 0.0
        %611 = vmatpush.xpose.msra.mxu0 0.0
        %612 = vmatpush.xpose.msra.mxu0 0.0
        %613 = vmatpush.xpose.msra.mxu0 0.0
        %614 = vmatpush.xpose.msra.mxu0 0.0
        %615 = vmatpush.xpose.msra.mxu0 0.0
        %616 = vmatpush.xpose.msra.mxu0 0.0
        %617 = vmatpush.xpose.msra.mxu0 0.0
        %618 = vmatpush.xpose.msra.mxu0 0.0
        %619 = vmatpush.xpose.msra.mxu0 0.0
        %620 = vmatpush.xpose.msra.mxu0 %v603
        %621 = vmatmul.f32.gmra.mxu0 %v601
        %v622 = vpop.f32.mrf.mxu0
        %v623 = vadd.f32 0.0, %v622
        %624 = vdwg.mxu0
        %v625 = vsel %vm487, %v623, -inf
        %626 = vmax.xlane.f32.xlu0 %v625
        %v627 = vpop.xlane.xlu0 %626
        %v628 = vsub.f32 %v623, %v627
        %v629 = vmul.f32 %v628, 1.442695
        %v630 = vpow.pop %v629
        %v631 = vsel %vm487, %v630, 0.0
        %632 = vadd.xlane.f32.xlu0 %v631
        %v633 = vpop.xlane.xlu0 %632
        %v634 = vrcp.pop %v633
        %v635 = vmul.f32 %v630, %v634
        %636 = vst [vmem:[#allocation1] ss:$9 sm:$0xff] %v406
        %s637 = scalar_lea.vmem [#allocation1], 1
        %638 = vst [vmem:[%s637] ss:$9 sm:$0xff] %v407
        %s639 = scalar_lea.vmem [#allocation1], 2
        %640 = vst [vmem:[%s639] ss:$9 sm:$0xff] %v408
        %s641 = scalar_lea.vmem [#allocation1], 3
        %642 = vst [vmem:[%s641] ss:$9 sm:$0xff] %v409
        %s643 = scalar_lea.vmem [#allocation1], 4
        %644 = vst [vmem:[%s643] ss:$9 sm:$0xff] %v410
        %s645 = scalar_lea.vmem [#allocation1], 5
        %646 = vst [vmem:[%s645] ss:$9 sm:$0xff] %v411
        %s647 = scalar_lea.vmem [#allocation1], 6
        %648 = vst [vmem:[%s647] ss:$9 sm:$0xff] %v412
        %s649 = scalar_lea.vmem [#allocation1], 7
        %650 = vst [vmem:[%s649] ss:$9 sm:$0xff] %v413
        %v651 = vld [vmem:[#allocation1] sm:$0xff]
        %652 = vrot.lane.b32.xlu0 %v651, 56
        %v653 = vpop.permute.xlu0 %652
        %v656 = vsel %vm487, %v635, 0
        %658 = vmatpush.msra.mxu0 0.0
        %659 = vmatpush.msra.mxu0 0.0
        %660 = vmatpush.msra.mxu0 0.0
        %661 = vmatpush.msra.mxu0 0.0
        %662 = vmatpush.msra.mxu0 0.0
        %663 = vmatpush.msra.mxu0 0.0
        %664 = vmatpush.msra.mxu0 0.0
        %665 = vmatpush.msra.mxu0 0.0
        %666 = vmatpush.msra.mxu0 0.0
        %667 = vmatpush.msra.mxu0 0.0
        %668 = vmatpush.msra.mxu0 0.0
        %669 = vmatpush.msra.mxu0 0.0
        %670 = vmatpush.msra.mxu0 0.0
        %671 = vmatpush.msra.mxu0 0.0
        %672 = vmatpush.msra.mxu0 0.0
        %673 = vmatpush.msra.mxu0 %v653
        %674 = vmatmul.f32.gmra.mxu0 %v656
        %v675 = vpop.f32.mrf.mxu0
        %v676 = vadd.f32 0.0, %v675
        %677 = vdwg.mxu0
        %678 = vst [vmem:[#allocation1] ss:$9 sm:$0xff] %v429
        %s679 = scalar_lea.vmem [#allocation1], 1
        %680 = vst [vmem:[%s679] ss:$9 sm:$0xff] %v430
        %s681 = scalar_lea.vmem [#allocation1], 2
        %682 = vst [vmem:[%s681] ss:$9 sm:$0xff] %v431
        %s683 = scalar_lea.vmem [#allocation1], 3
        %684 = vst [vmem:[%s683] ss:$9 sm:$0xff] %v432
        %s685 = scalar_lea.vmem [#allocation1], 4
        %686 = vst [vmem:[%s685] ss:$9 sm:$0xff] %v433
        %s687 = scalar_lea.vmem [#allocation1], 5
        %688 = vst [vmem:[%s687] ss:$9 sm:$0xff] %v434
        %s689 = scalar_lea.vmem [#allocation1], 6
        %690 = vst [vmem:[%s689] ss:$9 sm:$0xff] %v435
        %s691 = scalar_lea.vmem [#allocation1], 7
        %692 = vst [vmem:[%s691] ss:$9 sm:$0xff] %v436
        %v693 = vld [vmem:[#allocation1] sm:$0xff]
        %694 = vrot.lane.b32.xlu0 %v693, 112
        %v695 = vpop.permute.xlu0 %694
        %696 = vst [vmem:[#allocation1] ss:$9 sm:$0xff] %v406
        %s697 = scalar_lea.vmem [#allocation1], 1
        %698 = vst [vmem:[%s697] ss:$9 sm:$0xff] %v407
        %s699 = scalar_lea.vmem [#allocation1], 2
        %700 = vst [vmem:[%s699] ss:$9 sm:$0xff] %v408
        %s701 = scalar_lea.vmem [#allocation1], 3
        %702 = vst [vmem:[%s701] ss:$9 sm:$0xff] %v409
        %s703 = scalar_lea.vmem [#allocation1], 4
        %704 = vst [vmem:[%s703] ss:$9 sm:$0xff] %v410
        %s705 = scalar_lea.vmem [#allocation1], 5
        %706 = vst [vmem:[%s705] ss:$9 sm:$0xff] %v411
        %s707 = scalar_lea.vmem [#allocation1], 6
        %708 = vst [vmem:[%s707] ss:$9 sm:$0xff] %v412
        %s709 = scalar_lea.vmem [#allocation1], 7
        %710 = vst [vmem:[%s709] ss:$9 sm:$0xff] %v413
        %v711 = vld [vmem:[#allocation1] sm:$0xff]
        %712 = vrot.lane.b32.xlu0 %v711, 80
        %v713 = vpop.permute.xlu0 %712
        %v714 = vsel %vm487, %v695, 0
        %v716 = vsel %vm487, %v713, 0
        %718 = vmatpush.xpose.msra.mxu0 0.0
        %719 = vmatpush.xpose.msra.mxu0 0.0
        %720 = vmatpush.xpose.msra.mxu0 0.0
        %721 = vmatpush.xpose.msra.mxu0 0.0
        %722 = vmatpush.xpose.msra.mxu0 0.0
        %723 = vmatpush.xpose.msra.mxu0 0.0
        %724 = vmatpush.xpose.msra.mxu0 0.0
        %725 = vmatpush.xpose.msra.mxu0 0.0
        %726 = vmatpush.xpose.msra.mxu0 0.0
        %727 = vmatpush.xpose.msra.mxu0 0.0
        %728 = vmatpush.xpose.msra.mxu0 0.0
        %729 = vmatpush.xpose.msra.mxu0 0.0
        %730 = vmatpush.xpose.msra.mxu0 0.0
        %731 = vmatpush.xpose.msra.mxu0 0.0
        %732 = vmatpush.xpose.msra.mxu0 0.0
        %733 = vmatpush.xpose.msra.mxu0 %v716
        %734 = vmatmul.f32.gmra.mxu0 %v714
        %v735 = vpop.f32.mrf.mxu0
        %v736 = vadd.f32 0.0, %v735
        %737 = vdwg.mxu0
        %v738 = vsel %vm487, %v736, -inf
        %739 = vmax.xlane.f32.xlu0 %v738
        %v740 = vpop.xlane.xlu0 %739
        %v741 = vsub.f32 %v736, %v740
        %v742 = vmul.f32 %v741, 1.442695
        %v743 = vpow.pop %v742
        %v744 = vsel %vm487, %v743, 0.0
        %745 = vadd.xlane.f32.xlu0 %v744
        %v746 = vpop.xlane.xlu0 %745
        %v747 = vrcp.pop %v746
        %v748 = vmul.f32 %v743, %v747
        %749 = vst [vmem:[#allocation1] ss:$9 sm:$0xff] %v406
        %s750 = scalar_lea.vmem [#allocation1], 1
        %751 = vst [vmem:[%s750] ss:$9 sm:$0xff] %v407
        %s752 = scalar_lea.vmem [#allocation1], 2
        %753 = vst [vmem:[%s752] ss:$9 sm:$0xff] %v408
        %s754 = scalar_lea.vmem [#allocation1], 3
        %755 = vst [vmem:[%s754] ss:$9 sm:$0xff] %v409
        %s756 = scalar_lea.vmem [#allocation1], 4
        %757 = vst [vmem:[%s756] ss:$9 sm:$0xff] %v410
        %s758 = scalar_lea.vmem [#allocation1], 5
        %759 = vst [vmem:[%s758] ss:$9 sm:$0xff] %v411
        %s760 = scalar_lea.vmem [#allocation1], 6
        %761 = vst [vmem:[%s760] ss:$9 sm:$0xff] %v412
        %s762 = scalar_lea.vmem [#allocation1], 7
        %763 = vst [vmem:[%s762] ss:$9 sm:$0xff] %v413
        %v764 = vld [vmem:[#allocation1] sm:$0xff]
        %765 = vrot.lane.b32.xlu0 %v764, 48
        %v766 = vpop.permute.xlu0 %765
        %v769 = vsel %vm487, %v748, 0
        %771 = vmatpush.msra.mxu0 0.0
        %772 = vmatpush.msra.mxu0 0.0
        %773 = vmatpush.msra.mxu0 0.0
        %774 = vmatpush.msra.mxu0 0.0
        %775 = vmatpush.msra.mxu0 0.0
        %776 = vmatpush.msra.mxu0 0.0
        %777 = vmatpush.msra.mxu0 0.0
        %778 = vmatpush.msra.mxu0 0.0
        %779 = vmatpush.msra.mxu0 0.0
        %780 = vmatpush.msra.mxu0 0.0
        %781 = vmatpush.msra.mxu0 0.0
        %782 = vmatpush.msra.mxu0 0.0
        %783 = vmatpush.msra.mxu0 0.0
        %784 = vmatpush.msra.mxu0 0.0
        %785 = vmatpush.msra.mxu0 0.0
        %786 = vmatpush.msra.mxu0 %v766
        %787 = vmatmul.f32.gmra.mxu0 %v769
        %v788 = vpop.f32.mrf.mxu0
        %v789 = vadd.f32 0.0, %v788
        %790 = vdwg.mxu0
        %791 = vst [vmem:[#allocation1] ss:$9 sm:$0xff] %v429
        %s792 = scalar_lea.vmem [#allocation1], 1
        %793 = vst [vmem:[%s792] ss:$9 sm:$0xff] %v430
        %s794 = scalar_lea.vmem [#allocation1], 2
        %795 = vst [vmem:[%s794] ss:$9 sm:$0xff] %v431
        %s796 = scalar_lea.vmem [#allocation1], 3
        %797 = vst [vmem:[%s796] ss:$9 sm:$0xff] %v432
        %s798 = scalar_lea.vmem [#allocation1], 4
        %799 = vst [vmem:[%s798] ss:$9 sm:$0xff] %v433
        %s800 = scalar_lea.vmem [#allocation1], 5
        %801 = vst [vmem:[%s800] ss:$9 sm:$0xff] %v434
        %s802 = scalar_lea.vmem [#allocation1], 6
        %803 = vst [vmem:[%s802] ss:$9 sm:$0xff] %v435
        %s804 = scalar_lea.vmem [#allocation1], 7
        %805 = vst [vmem:[%s804] ss:$9 sm:$0xff] %v436
        %v806 = vld [vmem:[#allocation1] sm:$0xff]
        %807 = vrot.lane.b32.xlu0 %v806, 104
        %v808 = vpop.permute.xlu0 %807
        %809 = vst [vmem:[#allocation1] ss:$9 sm:$0xff] %v406
        %s810 = scalar_lea.vmem [#allocation1], 1
        %811 = vst [vmem:[%s810] ss:$9 sm:$0xff] %v407
        %s812 = scalar_lea.vmem [#allocation1], 2
        %813 = vst [vmem:[%s812] ss:$9 sm:$0xff] %v408
        %s814 = scalar_lea.vmem [#allocation1], 3
        %815 = vst [vmem:[%s814] ss:$9 sm:$0xff] %v409
        %s816 = scalar_lea.vmem [#allocation1], 4
        %817 = vst [vmem:[%s816] ss:$9 sm:$0xff] %v410
        %s818 = scalar_lea.vmem [#allocation1], 5
        %819 = vst [vmem:[%s818] ss:$9 sm:$0xff] %v411
        %s820 = scalar_lea.vmem [#allocation1], 6
        %821 = vst [vmem:[%s820] ss:$9 sm:$0xff] %v412
        %s822 = scalar_lea.vmem [#allocation1], 7
        %823 = vst [vmem:[%s822] ss:$9 sm:$0xff] %v413
        %v824 = vld [vmem:[#allocation1] sm:$0xff]
        %825 = vrot.lane.b32.xlu0 %v824, 72
        %v826 = vpop.permute.xlu0 %825
        %v827 = vsel %vm487, %v808, 0
        %v829 = vsel %vm487, %v826, 0
        %831 = vmatpush.xpose.msra.mxu0 0.0
        %832 = vmatpush.xpose.msra.mxu0 0.0
        %833 = vmatpush.xpose.msra.mxu0 0.0
        %834 = vmatpush.xpose.msra.mxu0 0.0
        %835 = vmatpush.xpose.msra.mxu0 0.0
        %836 = vmatpush.xpose.msra.mxu0 0.0
        %837 = vmatpush.xpose.msra.mxu0 0.0
        %838 = vmatpush.xpose.msra.mxu0 0.0
        %839 = vmatpush.xpose.msra.mxu0 0.0
        %840 = vmatpush.xpose.msra.mxu0 0.0
        %841 = vmatpush.xpose.msra.mxu0 0.0
        %842 = vmatpush.xpose.msra.mxu0 0.0
        %843 = vmatpush.xpose.msra.mxu0 0.0
        %844 = vmatpush.xpose.msra.mxu0 0.0
        %845 = vmatpush.xpose.msra.mxu0 0.0
        %846 = vmatpush.xpose.msra.mxu0 %v829
        %847 = vmatmul.f32.gmra.mxu0 %v827
        %v848 = vpop.f32.mrf.mxu0
        %v849 = vadd.f32 0.0, %v848
        %850 = vdwg.mxu0
        %v851 = vsel %vm487, %v849, -inf
        %852 = vmax.xlane.f32.xlu0 %v851
        %v853 = vpop.xlane.xlu0 %852
        %v854 = vsub.f32 %v849, %v853
        %v855 = vmul.f32 %v854, 1.442695
        %v856 = vpow.pop %v855
        %v857 = vsel %vm487, %v856, 0.0
        %858 = vadd.xlane.f32.xlu0 %v857
        %v859 = vpop.xlane.xlu0 %858
        %v860 = vrcp.pop %v859
        %v861 = vmul.f32 %v856, %v860
        %862 = vst [vmem:[#allocation1] ss:$9 sm:$0xff] %v406
        %s863 = scalar_lea.vmem [#allocation1], 1
        %864 = vst [vmem:[%s863] ss:$9 sm:$0xff] %v407
        %s865 = scalar_lea.vmem [#allocation1], 2
        %866 = vst [vmem:[%s865] ss:$9 sm:$0xff] %v408
        %s867 = scalar_lea.vmem [#allocation1], 3
        %868 = vst [vmem:[%s867] ss:$9 sm:$0xff] %v409
        %s869 = scalar_lea.vmem [#allocation1], 4
        %870 = vst [vmem:[%s869] ss:$9 sm:$0xff] %v410
        %s871 = scalar_lea.vmem [#allocation1], 5
        %872 = vst [vmem:[%s871] ss:$9 sm:$0xff] %v411
        %s873 = scalar_lea.vmem [#allocation1], 6
        %874 = vst [vmem:[%s873] ss:$9 sm:$0xff] %v412
        %s875 = scalar_lea.vmem [#allocation1], 7
        %876 = vst [vmem:[%s875] ss:$9 sm:$0xff] %v413
        %v877 = vld [vmem:[#allocation1] sm:$0xff]
        %878 = vrot.lane.b32.xlu0 %v877, 40
        %v879 = vpop.permute.xlu0 %878
        %v882 = vsel %vm487, %v861, 0
        %884 = vmatpush.msra.mxu0 0.0
        %885 = vmatpush.msra.mxu0 0.0
        %886 = vmatpush.msra.mxu0 0.0
        %887 = vmatpush.msra.mxu0 0.0
        %888 = vmatpush.msra.mxu0 0.0
        %889 = vmatpush.msra.mxu0 0.0
        %890 = vmatpush.msra.mxu0 0.0
        %891 = vmatpush.msra.mxu0 0.0
        %892 = vmatpush.msra.mxu0 0.0
        %893 = vmatpush.msra.mxu0 0.0
        %894 = vmatpush.msra.mxu0 0.0
        %895 = vmatpush.msra.mxu0 0.0
        %896 = vmatpush.msra.mxu0 0.0
        %897 = vmatpush.msra.mxu0 0.0
        %898 = vmatpush.msra.mxu0 0.0
        %899 = vmatpush.msra.mxu0 %v879
        %900 = vmatmul.f32.gmra.mxu0 %v882
        %v901 = vpop.f32.mrf.mxu0
        %v902 = vadd.f32 0.0, %v901
        %903 = vdwg.mxu0
        %905 = vrot.lane.b32.xlu0 %v676, 8
        %v906 = vpop.permute.xlu0 %905
        %909 = vrot.lane.b32.xlu0 %v789, 16
        %v910 = vpop.permute.xlu0 %909
        %913 = vrot.lane.b32.xlu0 %v902, 24
        %v914 = vpop.permute.xlu0 %913
        %v916 = vsel %vm487, %v563, %v906
        %vm917 = vcmask 130048
        %v918 = vsel %vm917, %v916, %v910
        %vm919 = vcmask 195584
        %v920 = vsel %vm919, %v918, %v914
        %v922 = vperm.slane %v426, 0
        %vm924 = vcmask 261120
        %v926 = vsel %vm924, %v920, 0
        %928 = vmatpush.msra.mxu0 0.0
        %929 = vmatpush.msra.mxu0 0.0
        %930 = vmatpush.msra.mxu0 0.0
        %931 = vmatpush.msra.mxu0 0.0
        %932 = vmatpush.msra.mxu0 0.0
        %933 = vmatpush.msra.mxu0 0.0
        %934 = vmatpush.msra.mxu0 0.0
        %935 = vmatpush.msra.mxu0 0.0
        %936 = vmatpush.msra.mxu0 0.0
        %937 = vmatpush.msra.mxu0 0.0
        %938 = vmatpush.msra.mxu0 0.0
        %939 = vmatpush.msra.mxu0 0.0
        %940 = vmatpush.msra.mxu0 %v425
        %941 = vmatpush.msra.mxu0 %v424
        %942 = vmatpush.msra.mxu0 %v423
        %943 = vmatpush.msra.mxu0 %v422
        %944 = vmatmul.f32.gmra.mxu0 %v926
        %v945 = vpop.f32.mrf.mxu0
        %v946 = vadd.f32 %v922, %v945
        %947 = vdwg.mxu0
        %956 = vst [vmem:[#allocation1] ss:$9 sm:$0xff] %v414
        %s957 = scalar_lea.vmem [#allocation1], 1
        %958 = vst [vmem:[%s957] ss:$9 sm:$0xff] %v415
        %s959 = scalar_lea.vmem [#allocation1], 2
        %960 = vst [vmem:[%s959] ss:$9 sm:$0xff] %v416
        %s961 = scalar_lea.vmem [#allocation1], 3
        %962 = vst [vmem:[%s961] ss:$9 sm:$0xff] %v417
        %s963 = scalar_lea.vmem [#allocation1], 4
        %964 = vst [vmem:[%s963] ss:$9 sm:$0xff] %v418
        %s965 = scalar_lea.vmem [#allocation1], 5
        %966 = vst [vmem:[%s965] ss:$9 sm:$0xff] %v419
        %s967 = scalar_lea.vmem [#allocation1], 6
        %968 = vst [vmem:[%s967] ss:$9 sm:$0xff] %v420
        %s969 = scalar_lea.vmem [#allocation1], 7
        %970 = vst [vmem:[%s969] ss:$9 sm:$0xff] %v421
        %v971 = vld [vmem:[#allocation1] sm:$0xff]
        %v973 = vadd.f32 %v946, %v971
        %v974 = vsel %vm924, %v973, 0.0
        %975 = vadd.xlane.f32.xlu0 %v974
        %v976 = vpop.xlane.xlu0 %975
        %v977 = vrcp.pop 32.0
        %v978 = vmul.f32 32.0, %v977
        %v979 = vsub.f32 1.0, %v978
        %v980 = vmul.f32 %v977, %v979
        %v981 = vadd.f32 %v977, %v980
        %vm982 = vweird.f32 %v977
        %v983 = vsel %vm982, %v977, %v981
        %v984 = vmul.f32 %v976, %v983
        %v985 = vsub.f32 %v973, %v984
        %v986 = vmul.f32 %v985, %v985
        %v987 = vsel %vm924, %v986, 0.0
        %988 = vadd.xlane.f32.xlu0 %v987
        %v989 = vpop.xlane.xlu0 %988
        %v990 = vmul.f32 %v989, %v983
        %v991 = vadd.f32 %v990, 1e-05
        %v992 = vrsqrt.pop %v991
        %v993 = vmul.f32 %v992, %v991
        %v994 = vmul.f32 %v993, %v992
        %v995 = vmul.f32 0.5, %v994
        %v996 = vsub.f32 1.5, %v995
        %v997 = vmul.f32 %v992, %v996
        %vm998 = vweird.f32 %v991
        %vm999 = vweird.f32 %v992
        %vm1000 = vmor %vm998, %vm999
        %v1001 = vsel %vm1000, %v992, %v997
        %v1002 = vmul.f32 %v985, %v1001
        %v1004 = vperm.slane %v427, 0
        %v1006 = vmul.f32 %v1002, %v1004
        %v1008 = vperm.slane %v428, 0
        %v1010 = vadd.f32 %v1006, %v1008
        %v1012 = vrot.slane %v1010, 1
        %v1013 = vrot.slane %v1010, 2
        %v1014 = vrot.slane %v1010, 3
        %v1015 = vrot.slane %v1010, 4
        %v1016 = vrot.slane %v1010, 5
        %v1017 = vrot.slane %v1010, 6
        %v1018 = vrot.slane %v1010, 7
        %vm1026 = vcmask 253952
        %1027 = vst.msk [vmem:[%s405] sm:$0x1] %vm1026, %v1010
        %1028 = vst.msk [vmem:[%s405 + $0x1] sm:$0x1] %vm1026, %v1012
        %1029 = vst.msk [vmem:[%s405 + $0x2] sm:$0x1] %vm1026, %v1013
        %1030 = vst.msk [vmem:[%s405 + $0x3] sm:$0x1] %vm1026, %v1014
        %1031 = vst.msk [vmem:[%s405 + $0x4] sm:$0x1] %vm1026, %v1015
        %1032 = vst.msk [vmem:[%s405 + $0x5] sm:$0x1] %vm1026, %v1016
        %1033 = vst.msk [vmem:[%s405 + $0x6] sm:$0x1] %vm1026, %v1017
        %1034 = vst.msk [vmem:[%s405 + $0x7] sm:$0x1] %vm1026, %v1018
        %s1035 = sand.u32 %s161, 1
        %s1036 = sand.u32 %s161, 1
        %s1037 = smul.addr %s1036, 8
        %s1038 = scalar_lea.vmem [#allocation4], %s1037
        // Predicated region
        $region127: #{transformer_decoder_wrapper_forward.20} parent=117 // pred_check
          %p1039 = pneg %p171
        $region128: #{transformer_decoder_wrapper_forward.20} parent=117 // pred_check_branch
          %1041 = sbr.rel (%p1039) target = $region130
        $region129: #{transformer_decoder_wrapper_forward.20} parent=117 // pred_region
          %s1042 = scalar_lea.vmem %s6, %s17
          // Predicated region
          $region131: #{transformer_decoder_wrapper_forward.20} parent=129 // pred_check
            _
          $region132: #{transformer_decoder_wrapper_forward.20} parent=129 // pred_check_branch
            %1044 = sbr.rel (0) target = $region134
          $region133: #{transformer_decoder_wrapper_forward.20} parent=129 // pred_region
            // Predicated region
            $region135: #{transformer_decoder_wrapper_forward.20} parent=133 // pred_check
              _
            $region136: #{transformer_decoder_wrapper_forward.20} parent=133 // pred_check_branch
              %1046 = sbr.rel target = $region138
            $region137: #{transformer_decoder_wrapper_forward.20} parent=133 // pred_region
              // Predicated region
              $region150: #{transformer_decoder_wrapper_forward.20} parent=137 // pred_check
                _
              $region151: #{transformer_decoder_wrapper_forward.20} parent=137 // pred_check_branch
                %1076 = sbr.rel (0) target = $region153
              $region152: #{transformer_decoder_wrapper_forward.20} parent=137 // pred_region
                loop: start=0, step=1, limit=1
                $region154: #{transformer_decoder_wrapper_forward.20} parent=152 // loop_pre_header
                  _
                $region155: #{transformer_decoder_wrapper_forward.20} parent=152 // loop_header
                  %s1078 = sphi 0, %s1082
                  %p1079 = scmp.ge.s32.totalorder %s1078, 1
                  %s1083 = sphi %s1038, %s1038
                  %s1084 = sphi %s1042, %s1042
                $region156: #{transformer_decoder_wrapper_forward.20} parent=152 // loop_header_branch
                  %1081 = sbr.rel (%p1079) target = $region160
                $region157: #{transformer_decoder_wrapper_forward.20} parent=152 // loop_body
                  _
                $region158: #{transformer_decoder_wrapper_forward.20} parent=152 // loop_footer
                  %s1082 = sadd.s32 1, %s1078
                $region159: #{transformer_decoder_wrapper_forward.20} parent=152 // loop_footer_branch
                  %1077 = sbr.rel target = $region155
                $region160: #{transformer_decoder_wrapper_forward.20} parent=152 // loop_exit
                  _
                %s1086 = ssub.s32 2, 1
                loop: start=0, step=1, limit=1
                $region161: #{transformer_decoder_wrapper_forward.20} parent=152 // loop_pre_header
                  _
                $region162: #{transformer_decoder_wrapper_forward.20} parent=152 // loop_header
                  %s1088 = sphi 0, %s1092
                  %p1089 = scmp.ge.s32.totalorder %s1088, 1
                  %s1093 = sphi %s1038, %s1038
                  %s1094 = sphi %s1042, %s1042
                $region163: #{transformer_decoder_wrapper_forward.20} parent=152 // loop_header_branch
                  %1091 = sbr.rel (%p1089) target = $region167
                $region164: #{transformer_decoder_wrapper_forward.20} parent=152 // loop_body
                  %v1095 = vld [vmem:[%s1093] sm:%s1086]
                  %1096 = vst [vmem:[%s1094] sm:%s1086] %v1095
                  %v1097 = vld [vmem:[%s1093 + $0x1] sm:%s1086]
                  %1098 = vst [vmem:[%s1094 + $0x2] sm:%s1086] %v1097
                  %v1099 = vld [vmem:[%s1093 + $0x2] sm:%s1086]
                  %1100 = vst [vmem:[%s1094 + $0x4] sm:%s1086] %v1099
                  %v1101 = vld [vmem:[%s1093 + $0x3] sm:%s1086]
                  %1102 = vst [vmem:[%s1094 + $0x6] sm:%s1086] %v1101
                  %v1103 = vld [vmem:[%s1093 + $0x4] sm:%s1086]
                  %1104 = vst [vmem:[%s1094 + $0x8] sm:%s1086] %v1103
                  %v1105 = vld [vmem:[%s1093 + $0x5] sm:%s1086]
                  %1106 = vst [vmem:[%s1094 + $0xa] sm:%s1086] %v1105
                  %v1107 = vld [vmem:[%s1093 + $0x6] sm:%s1086]
                  %1108 = vst [vmem:[%s1094 + $0xc] sm:%s1086] %v1107
                  %v1109 = vld [vmem:[%s1093 + $0x7] sm:%s1086]
                  %1110 = vst [vmem:[%s1094 + $0xe] sm:%s1086] %v1109
                $region165: #{transformer_decoder_wrapper_forward.20} parent=152 // loop_footer
                  %s1092 = sadd.s32 1, %s1088
                $region166: #{transformer_decoder_wrapper_forward.20} parent=152 // loop_footer_branch
                  %1087 = sbr.rel target = $region162
                $region167: #{transformer_decoder_wrapper_forward.20} parent=152 // loop_exit
                  _
              $region153: #{transformer_decoder_wrapper_forward.20} parent=137 // pred_fallthru
                _
            $region138: #{transformer_decoder_wrapper_forward.20} parent=133 // pred_fallthru
              _
            // Predicated region
            $region139: #{transformer_decoder_wrapper_forward.20} parent=133 // pred_check
              _
            $region140: #{transformer_decoder_wrapper_forward.20} parent=133 // pred_check_branch
              %1048 = sbr.rel (0) target = $region142
            $region141: #{transformer_decoder_wrapper_forward.20} parent=133 // pred_region
              %s1050 = ssub.s32 2, 1
              loop: start=0, step=1, limit=1
              $region143: #{transformer_decoder_wrapper_forward.20} parent=141 // loop_pre_header
                _
              $region144: #{transformer_decoder_wrapper_forward.20} parent=141 // loop_header
                %s1052 = sphi 0, %s1056
                %p1053 = scmp.ge.s32.totalorder %s1052, 1
                %s1057 = sphi %s1038, %s1038
                %s1058 = sphi %s1042, %s1042
              $region145: #{transformer_decoder_wrapper_forward.20} parent=141 // loop_header_branch
                %1055 = sbr.rel (%p1053) target = $region149
              $region146: #{transformer_decoder_wrapper_forward.20} parent=141 // loop_body
                %v1059 = vld [vmem:[%s1057] sm:%s1050]
                %1060 = vst [vmem:[%s1058] sm:%s1050] %v1059
                %v1061 = vld [vmem:[%s1057 + $0x1] sm:%s1050]
                %1062 = vst [vmem:[%s1058 + $0x2] sm:%s1050] %v1061
                %v1063 = vld [vmem:[%s1057 + $0x2] sm:%s1050]
                %1064 = vst [vmem:[%s1058 + $0x4] sm:%s1050] %v1063
                %v1065 = vld [vmem:[%s1057 + $0x3] sm:%s1050]
                %1066 = vst [vmem:[%s1058 + $0x6] sm:%s1050] %v1065
                %v1067 = vld [vmem:[%s1057 + $0x4] sm:%s1050]
                %1068 = vst [vmem:[%s1058 + $0x8] sm:%s1050] %v1067
                %v1069 = vld [vmem:[%s1057 + $0x5] sm:%s1050]
                %1070 = vst [vmem:[%s1058 + $0xa] sm:%s1050] %v1069
                %v1071 = vld [vmem:[%s1057 + $0x6] sm:%s1050]
                %1072 = vst [vmem:[%s1058 + $0xc] sm:%s1050] %v1071
                %v1073 = vld [vmem:[%s1057 + $0x7] sm:%s1050]
                %1074 = vst [vmem:[%s1058 + $0xe] sm:%s1050] %v1073
              $region147: #{transformer_decoder_wrapper_forward.20} parent=141 // loop_footer
                %s1056 = sadd.s32 1, %s1052
              $region148: #{transformer_decoder_wrapper_forward.20} parent=141 // loop_footer_branch
                %1051 = sbr.rel target = $region144
              $region149: #{transformer_decoder_wrapper_forward.20} parent=141 // loop_exit
                _
            $region142: #{transformer_decoder_wrapper_forward.20} parent=133 // pred_fallthru
              _
          $region134: #{transformer_decoder_wrapper_forward.20} parent=129 // pred_fallthru
            _
          %1111 = vnop
        $region130: #{transformer_decoder_wrapper_forward.20} parent=117 // pred_fallthru
          _
      $region118: #{transformer_decoder_wrapper_forward.20} parent=5 // pred_fallthru
        _
      %p1112 = scmp.le.s32.totalorder 2, %s12
      // Predicated region
      $region168: #{transformer_decoder_wrapper_forward.20} parent=5 // pred_check
        %p1113 = pneg %p1112
      $region169: #{transformer_decoder_wrapper_forward.20} parent=5 // pred_check_branch
        %1115 = sbr.rel (%p1113) target = $region171
      $region170: #{transformer_decoder_wrapper_forward.20} parent=5 // pred_region
        %s1116 = ssub.s32 %s12, 2
        // Predicated region
        $region172: #{transformer_decoder_wrapper_forward.20} parent=170 // pred_check
          %p1117 = pneg %p177
        $region173: #{transformer_decoder_wrapper_forward.20} parent=170 // pred_check_branch
          %1119 = sbr.rel (%p1117) target = $region175
        $region174: #{transformer_decoder_wrapper_forward.20} parent=170 // pred_region
          %s1120 = sand.u32 %s162, 1
          %s1121 = sand.u32 %s162, 1
          %s1122 = smul.addr %s1121, 8
          %s1123 = scalar_lea.vmem [#allocation4], %s1122
        $region175: #{transformer_decoder_wrapper_forward.20} parent=170 // pred_fallthru
          _
      $region171: #{transformer_decoder_wrapper_forward.20} parent=5 // pred_fallthru
        _
    $region6: #{transformer_decoder_wrapper_forward.20} parent=1 // loop_footer
      %s16 = sadd.s32 1, %s12
    $region7: #{transformer_decoder_wrapper_forward.20} parent=1 // loop_footer_branch
      %11 = sbr.rel target = $region3
    $region8: #{transformer_decoder_wrapper_forward.20} parent=1 // loop_exit
      _

// kernel: transformer_decoder_wrapper_forward.24
$region0: #{transformer_decoder_wrapper_forward.24}
  #allocation0 [shape = 'u32[]', space=smem, size = 0x4, offset = 0x4, fixed_abs, tag = 'smem constant byte address 0x4 - core index']
  #allocation1 [shape = 'u32[72,128]{1,0:T(1,128)}', space=vmem, size = 0x9000, scoped, tag = 'internal scratch']
  %s0 = inlined_call_operand.vmem [shape: f32[16,32], index: 0, kind: input, shape index: {}]
  %s1 = inlined_call_operand.vmem [shape: f32[32,64], index: 1, kind: input, shape index: {}]
  %s2 = inlined_call_operand.vmem [shape: f32[1,64], index: 2, kind: input, shape index: {}]
  %s3 = inlined_call_operand.vmem [shape: f32[64,32], index: 3, kind: input, shape index: {}]
  %s4 = inlined_call_operand.vmem [shape: f32[1,32], index: 4, kind: input, shape index: {}, may-alias: {4,6}]
  %s5 = inlined_call_operand.vmem [shape: f32[1,32], index: 5, kind: input, shape index: {}]
  %s6 = inlined_call_operand.vmem [shape: f32[1,32], index: 6, kind: input, shape index: {}, may-alias: {4,6}]
  %s7 = inlined_call_operand.vmem [shape: f32[16,32], index: 7, kind: output, shape index: {}]
  %s8 = sld [smem:[#allocation0]]
  $region38: #{transformer_decoder_wrapper_forward.24} parent=0
    _
  %s10 = ssub.s32 1, %s8
  %s11 = scalar_select 0, %s10, %s8
  // Predicated region
  $region2: #{transformer_decoder_wrapper_forward.24} parent=0 // pred_check
    _
  $region3: #{transformer_decoder_wrapper_forward.24} parent=0 // pred_check_branch
    %13 = sbr.rel (0) target = $region5
  $region4: #{transformer_decoder_wrapper_forward.24} parent=0 // pred_region
    _
  $region5: #{transformer_decoder_wrapper_forward.24} parent=0 // pred_fallthru
    _
  // Predicated region
  $region6: #{transformer_decoder_wrapper_forward.24} parent=0 // pred_check
    _
  $region7: #{transformer_decoder_wrapper_forward.24} parent=0 // pred_check_branch
    %15 = sbr.rel (0) target = $region9
  $region8: #{transformer_decoder_wrapper_forward.24} parent=0 // pred_region
    _
  $region9: #{transformer_decoder_wrapper_forward.24} parent=0 // pred_fallthru
    _
  // Predicated region
  $region10: #{transformer_decoder_wrapper_forward.24} parent=0 // pred_check
    _
  $region11: #{transformer_decoder_wrapper_forward.24} parent=0 // pred_check_branch
    %17 = sbr.rel (0) target = $region13
  $region12: #{transformer_decoder_wrapper_forward.24} parent=0 // pred_region
    _
  $region13: #{transformer_decoder_wrapper_forward.24} parent=0 // pred_fallthru
    _
  // Predicated region
  $region14: #{transformer_decoder_wrapper_forward.24} parent=0 // pred_check
    _
  $region15: #{transformer_decoder_wrapper_forward.24} parent=0 // pred_check_branch
    %19 = sbr.rel (0) target = $region17
  $region16: #{transformer_decoder_wrapper_forward.24} parent=0 // pred_region
    _
  $region17: #{transformer_decoder_wrapper_forward.24} parent=0 // pred_fallthru
    _
  // Predicated region
  $region18: #{transformer_decoder_wrapper_forward.24} parent=0 // pred_check
    _
  $region19: #{transformer_decoder_wrapper_forward.24} parent=0 // pred_check_branch
    %21 = sbr.rel (0) target = $region21
  $region20: #{transformer_decoder_wrapper_forward.24} parent=0 // pred_region
    _
  $region21: #{transformer_decoder_wrapper_forward.24} parent=0 // pred_fallthru
    _
  // Predicated region
  $region22: #{transformer_decoder_wrapper_forward.24} parent=0 // pred_check
    _
  $region23: #{transformer_decoder_wrapper_forward.24} parent=0 // pred_check_branch
    %23 = sbr.rel (0) target = $region25
  $region24: #{transformer_decoder_wrapper_forward.24} parent=0 // pred_region
    _
  $region25: #{transformer_decoder_wrapper_forward.24} parent=0 // pred_fallthru
    _
  // Predicated region
  $region26: #{transformer_decoder_wrapper_forward.24} parent=0 // pred_check
    _
  $region27: #{transformer_decoder_wrapper_forward.24} parent=0 // pred_check_branch
    %25 = sbr.rel (0) target = $region29
  $region28: #{transformer_decoder_wrapper_forward.24} parent=0 // pred_region
    _
  $region29: #{transformer_decoder_wrapper_forward.24} parent=0 // pred_fallthru
    _
  %v26 = vld [vmem:[%s0] sm:$0xff]
  %v27 = vld [vmem:[%s0 + $0x8] sm:$0xff]
  %v28 = vld [vmem:[%s1] sm:$0xff]
  %v29 = vld [vmem:[%s1 + $0x8] sm:$0xff]
  %v30 = vld [vmem:[%s1 + $0x10] sm:$0xff]
  %v31 = vld [vmem:[%s1 + $0x18] sm:$0xff]
  %v32 = vld [vmem:[%s2] sm:$0x1]
  %v34 = vperm.slane %v32, 0
  %vm36 = vcmask 261120
  %v38 = vsel %vm36, %v26, 0
  %v41 = vsel %vm36, %v27, 0
  %43 = vmatpush.msra.mxu0 0.0
  %44 = vmatpush.msra.mxu0 0.0
  %45 = vmatpush.msra.mxu0 0.0
  %46 = vmatpush.msra.mxu0 0.0
  %47 = vmatpush.msra.mxu0 0.0
  %48 = vmatpush.msra.mxu0 0.0
  %49 = vmatpush.msra.mxu0 0.0
  %50 = vmatpush.msra.mxu0 0.0
  %51 = vmatpush.msra.mxu0 0.0
  %52 = vmatpush.msra.mxu0 0.0
  %53 = vmatpush.msra.mxu0 0.0
  %54 = vmatpush.msra.mxu0 0.0
  %55 = vmatpush.msra.mxu0 %v31
  %56 = vmatpush.msra.mxu0 %v30
  %57 = vmatpush.msra.mxu0 %v29
  %58 = vmatpush.msra.mxu0 %v28
  %59 = vmatmul.f32.gmra.mxu0 %v38
  %v60 = vpop.f32.mrf.mxu0
  %v61 = vadd.f32 %v34, %v60
  %62 = vmatmul.f32.gmra.mxu0 %v41
  %v63 = vpop.f32.mrf.mxu0
  %v64 = vadd.f32 %v34, %v63
  %65 = vdwg.mxu0
  %v66 = vmax.f32 %v61, 0.0
  %v67 = vmax.f32 %v64, 0.0
  %v68 = vld [vmem:[%s3] sm:$0xff]
  %v69 = vld [vmem:[%s3 + $0x8] sm:$0xff]
  %v70 = vld [vmem:[%s3 + $0x10] sm:$0xff]
  %v71 = vld [vmem:[%s3 + $0x18] sm:$0xff]
  %v72 = vld [vmem:[%s3 + $0x20] sm:$0xff]
  %v73 = vld [vmem:[%s3 + $0x28] sm:$0xff]
  %v74 = vld [vmem:[%s3 + $0x30] sm:$0xff]
  %v75 = vld [vmem:[%s3 + $0x38] sm:$0xff]
  %vm76 = vcmask 523264
  %v78 = vsel %vm76, %v66, 0
  %v81 = vsel %vm76, %v67, 0
  %83 = vmatpush.msra.mxu0 0.0
  %84 = vmatpush.msra.mxu0 0.0
  %85 = vmatpush.msra.mxu0 0.0
  %86 = vmatpush.msra.mxu0 0.0
  %87 = vmatpush.msra.mxu0 0.0
  %88 = vmatpush.msra.mxu0 0.0
  %89 = vmatpush.msra.mxu0 0.0
  %90 = vmatpush.msra.mxu0 0.0
  %91 = vmatpush.msra.mxu0 %v75
  %92 = vmatpush.msra.mxu0 %v74
  %93 = vmatpush.msra.mxu0 %v73
  %94 = vmatpush.msra.mxu0 %v72
  %95 = vmatpush.msra.mxu0 %v71
  %96 = vmatpush.msra.mxu0 %v70
  %97 = vmatpush.msra.mxu0 %v69
  %98 = vmatpush.msra.mxu0 %v68
  %99 = vmatmul.f32.gmra.mxu0 %v78
  %v100 = vpop.f32.mrf.mxu0
  %v101 = vadd.f32 0.0, %v100
  %102 = vmatmul.f32.gmra.mxu0 %v81
  %v103 = vpop.f32.mrf.mxu0
  %v104 = vadd.f32 0.0, %v103
  %105 = vdwg.mxu0
  %v106 = vadd.f32 %v26, %v101
  %v107 = vadd.f32 %v27, %v104
  %v108 = vld [vmem:[%s4] sm:$0x1]
  %v110 = vperm.slane %v108, 0
  %v112 = vadd.f32 %v106, %v110
  %v113 = vadd.f32 %v107, %v110
  %v114 = vsel %vm36, %v112, 0.0
  %115 = vadd.xlane.f32.xlu0 %v114
  %v116 = vpop.xlane.xlu0 %115
  %v117 = vsel %vm36, %v113, 0.0
  %118 = vadd.xlane.f32.xlu0 %v117
  %v119 = vpop.xlane.xlu0 %118
  %v120 = vrcp.pop 32.0
  %v121 = vmul.f32 32.0, %v120
  %v122 = vsub.f32 1.0, %v121
  %v123 = vmul.f32 %v120, %v122
  %v124 = vadd.f32 %v120, %v123
  %vm125 = vweird.f32 %v120
  %v126 = vsel %vm125, %v120, %v124
  %v127 = vmul.f32 %v116, %v126
  %v128 = vmul.f32 %v119, %v126
  %v129 = vsub.f32 %v112, %v127
  %v130 = vsub.f32 %v113, %v128
  %v131 = vmul.f32 %v129, %v129
  %v132 = vmul.f32 %v130, %v130
  %v133 = vsel %vm36, %v131, 0.0
  %134 = vadd.xlane.f32.xlu0 %v133
  %v135 = vpop.xlane.xlu0 %134
  %v136 = vsel %vm36, %v132, 0.0
  %137 = vadd.xlane.f32.xlu0 %v136
  %v138 = vpop.xlane.xlu0 %137
  %v139 = vmul.f32 %v135, %v126
  %v140 = vmul.f32 %v138, %v126
  %v141 = vadd.f32 %v139, 1e-05
  %v142 = vadd.f32 %v140, 1e-05
  %v143 = vrsqrt.pop %v141
  %v144 = vmul.f32 %v143, %v141
  %v145 = vmul.f32 %v144, %v143
  %v146 = vmul.f32 0.5, %v145
  %v147 = vsub.f32 1.5, %v146
  %v148 = vmul.f32 %v143, %v147
  %vm149 = vweird.f32 %v141
  %vm150 = vweird.f32 %v143
  %vm151 = vmor %vm149, %vm150
  %v152 = vsel %vm151, %v143, %v148
  %v153 = vrsqrt.pop %v142
  %v154 = vmul.f32 %v153, %v142
  %v155 = vmul.f32 %v154, %v153
  %v156 = vmul.f32 0.5, %v155
  %v157 = vsub.f32 1.5, %v156
  %v158 = vmul.f32 %v153, %v157
  %vm159 = vweird.f32 %v142
  %vm160 = vweird.f32 %v153
  %vm161 = vmor %vm159, %vm160
  %v162 = vsel %vm161, %v153, %v158
  %v163 = vmul.f32 %v129, %v152
  %v164 = vmul.f32 %v130, %v162
  %v165 = vld [vmem:[%s5] sm:$0x1]
  %v167 = vperm.slane %v165, 0
  %v169 = vmul.f32 %v163, %v167
  %v170 = vmul.f32 %v164, %v167
  %v171 = vld [vmem:[%s6] sm:$0x1]
  %v173 = vperm.slane %v171, 0
  %v175 = vadd.f32 %v169, %v173
  %v176 = vadd.f32 %v170, %v173
  %177 = vst.msk [vmem:[%s7] sm:$0xff] %vm36, %v175
  %178 = vst.msk [vmem:[%s7 + $0x8] sm:$0xff] %vm36, %v176
  // Predicated region
  $region30: #{transformer_decoder_wrapper_forward.24} parent=0 // pred_check
    _
  $region31: #{transformer_decoder_wrapper_forward.24} parent=0 // pred_check_branch
    %180 = sbr.rel (0) target = $region33
  $region32: #{transformer_decoder_wrapper_forward.24} parent=0 // pred_region
    _
  $region33: #{transformer_decoder_wrapper_forward.24} parent=0 // pred_fallthru
    _
  // Predicated region
  $region34: #{transformer_decoder_wrapper_forward.24} parent=0 // pred_check
    _
  $region35: #{transformer_decoder_wrapper_forward.24} parent=0 // pred_check_branch
    %182 = sbr.rel (0) target = $region37
  $region36: #{transformer_decoder_wrapper_forward.24} parent=0 // pred_region
    _
  $region37: #{transformer_decoder_wrapper_forward.24} parent=0 // pred_fallthru
    _

// kernel: transformer_decoder_wrapper_forward.25
$region0: #{transformer_decoder_wrapper_forward.25}
  #allocation0 [shape = 'u32[]', space=smem, size = 0x4, offset = 0x4, fixed_abs, tag = 'smem constant byte address 0x4 - core index']
  #allocation1 [shape = 'u32[72,128]{1,0:T(1,128)}', space=vmem, size = 0x9000, scoped, tag = 'internal scratch']
  %s0 = inlined_call_operand.vmem [shape: f32[16,32], index: 0, kind: input, shape index: {}]
  %s1 = inlined_call_operand.vmem [shape: f32[1,32], index: 1, kind: input, shape index: {}]
  %s2 = inlined_call_operand.vmem [shape: f32[1,32], index: 2, kind: input, shape index: {}]
  %s3 = inlined_call_operand.hbm [shape: f32[16,32], index: 3, kind: output, shape index: {}]
  %s4 = sld [smem:[#allocation0]]
  $region22: #{transformer_decoder_wrapper_forward.25} parent=0
    _
  %s6 = ssub.s32 1, %s4
  %s7 = scalar_select 0, %s6, %s4
  $region1: #{transformer_decoder_wrapper_forward.25} parent=0
    #allocation2 [shape = 'u8[8192]{0}', space=vmem, size = 0x2000, scoped, tag = 'output window, operand 0, single buffered']
    #allocation3 [shape = 's32[1]{0}', space=sflag, size = 0x4, scoped, tag = 'scoped memory for transformer_decoder_wrapper_forward.25']
    %8 = vsyncpa [#allocation3], 0
    // Predicated region
    $region2: #{transformer_decoder_wrapper_forward.25} parent=1 // pred_check
      _
    $region3: #{transformer_decoder_wrapper_forward.25} parent=1 // pred_check_branch
      %10 = sbr.rel (0) target = $region5
    $region4: #{transformer_decoder_wrapper_forward.25} parent=1 // pred_region
      _
    $region5: #{transformer_decoder_wrapper_forward.25} parent=1 // pred_fallthru
      _
    // Predicated region
    $region6: #{transformer_decoder_wrapper_forward.25} parent=1 // pred_check
      _
    $region7: #{transformer_decoder_wrapper_forward.25} parent=1 // pred_check_branch
      %12 = sbr.rel (0) target = $region9
    $region8: #{transformer_decoder_wrapper_forward.25} parent=1 // pred_region
      _
    $region9: #{transformer_decoder_wrapper_forward.25} parent=1 // pred_fallthru
      _
    // Predicated region
    $region10: #{transformer_decoder_wrapper_forward.25} parent=1 // pred_check
      _
    $region11: #{transformer_decoder_wrapper_forward.25} parent=1 // pred_check_branch
      %14 = sbr.rel (0) target = $region13
    $region12: #{transformer_decoder_wrapper_forward.25} parent=1 // pred_region
      _
    $region13: #{transformer_decoder_wrapper_forward.25} parent=1 // pred_fallthru
      _
    %v15 = vld [vmem:[%s0] sm:$0xff]
    %v16 = vld [vmem:[%s0 + $0x8] sm:$0xff]
    %vm17 = vcmask 261120
    %v18 = vsel %vm17, %v15, 0.0
    %19 = vadd.xlane.f32.xlu0 %v18
    %v20 = vpop.xlane.xlu0 %19
    %v21 = vsel %vm17, %v16, 0.0
    %22 = vadd.xlane.f32.xlu0 %v21
    %v23 = vpop.xlane.xlu0 %22
    %v24 = vrcp.pop 32.0
    %v25 = vmul.f32 32.0, %v24
    %v26 = vsub.f32 1.0, %v25
    %v27 = vmul.f32 %v24, %v26
    %v28 = vadd.f32 %v24, %v27
    %vm29 = vweird.f32 %v24
    %v30 = vsel %vm29, %v24, %v28
    %v31 = vmul.f32 %v20, %v30
    %v32 = vmul.f32 %v23, %v30
    %v33 = vsub.f32 %v15, %v31
    %v34 = vsub.f32 %v16, %v32
    %v35 = vmul.f32 %v33, %v33
    %v36 = vmul.f32 %v34, %v34
    %v37 = vsel %vm17, %v35, 0.0
    %38 = vadd.xlane.f32.xlu0 %v37
    %v39 = vpop.xlane.xlu0 %38
    %v40 = vsel %vm17, %v36, 0.0
    %41 = vadd.xlane.f32.xlu0 %v40
    %v42 = vpop.xlane.xlu0 %41
    %v43 = vmul.f32 %v39, %v30
    %v44 = vmul.f32 %v42, %v30
    %v45 = vadd.f32 %v43, 1e-05
    %v46 = vadd.f32 %v44, 1e-05
    %v47 = vrsqrt.pop %v45
    %v48 = vmul.f32 %v47, %v45
    %v49 = vmul.f32 %v48, %v47
    %v50 = vmul.f32 0.5, %v49
    %v51 = vsub.f32 1.5, %v50
    %v52 = vmul.f32 %v47, %v51
    %vm53 = vweird.f32 %v45
    %vm54 = vweird.f32 %v47
    %vm55 = vmor %vm53, %vm54
    %v56 = vsel %vm55, %v47, %v52
    %v57 = vrsqrt.pop %v46
    %v58 = vmul.f32 %v57, %v46
    %v59 = vmul.f32 %v58, %v57
    %v60 = vmul.f32 0.5, %v59
    %v61 = vsub.f32 1.5, %v60
    %v62 = vmul.f32 %v57, %v61
    %vm63 = vweird.f32 %v46
    %vm64 = vweird.f32 %v57
    %vm65 = vmor %vm63, %vm64
    %v66 = vsel %vm65, %v57, %v62
    %v67 = vmul.f32 %v33, %v56
    %v68 = vmul.f32 %v34, %v66
    %v69 = vld [vmem:[%s1] sm:$0x1]
    %v71 = vperm.slane %v69, 0
    %v73 = vmul.f32 %v67, %v71
    %v74 = vmul.f32 %v68, %v71
    %v75 = vld [vmem:[%s2] sm:$0x1]
    %v77 = vperm.slane %v75, 0
    %v79 = vadd.f32 %v73, %v77
    %v80 = vadd.f32 %v74, %v77
    %81 = vst.msk [vmem:[#allocation2] sm:$0xff] %vm17, %v79
    %82 = vst.msk [vmem:[#allocation2 + $0x8] sm:$0xff] %vm17, %v80
    // Predicated region
    $region14: #{transformer_decoder_wrapper_forward.25} parent=1 // pred_check
      _
    $region15: #{transformer_decoder_wrapper_forward.25} parent=1 // pred_check_branch
      %84 = sbr.rel (0) target = $region17
    $region16: #{transformer_decoder_wrapper_forward.25} parent=1 // pred_region
      %86 = vsyncadd [#allocation3], 0
      %s87 = sshll.u32 [#allocation2], 4
      %s88 = int_to_ptr.vmem [resolvable:$true] %s87
      %s89 = sshll.u32 %s3, 4
      %s90 = int_to_ptr.hbm [resolvable:$true] %s89
      %95 = dma.vmem_to_hbm [thread:$0]  %s88, 256, %s90, [#allocation3], 128, 128, 8
    $region17: #{transformer_decoder_wrapper_forward.25} parent=1 // pred_fallthru
      _
    // Predicated region
    $region18: #{transformer_decoder_wrapper_forward.25} parent=1 // pred_check
      _
    $region19: #{transformer_decoder_wrapper_forward.25} parent=1 // pred_check_branch
      %97 = sbr.rel (0) target = $region21
    $region20: #{transformer_decoder_wrapper_forward.25} parent=1 // pred_region
      %99 = dma.done [#allocation3], 256
    $region21: #{transformer_decoder_wrapper_forward.25} parent=1 // pred_fallthru
      _
    %100 = vsyncpa [#allocation3], 1

// kernel: transformer_decoder_wrapper_forward.23
$region0: #{transformer_decoder_wrapper_forward.23}
  #allocation0 [shape = 'u32[]', space=smem, size = 0x4, offset = 0x4, fixed_abs, tag = 'smem constant byte address 0x4 - core index']
  #allocation1 [shape = 'u32[72,128]{1,0:T(1,128)}', space=vmem, size = 0x9000, scoped, tag = 'internal scratch']
  %s0 = inlined_call_operand.vmem [shape: f32[8,2,1,32], index: 0, kind: input, shape index: {}]
  %s1 = inlined_call_operand.vmem [shape: f32[16,2,1,64], index: 1, kind: input, shape index: {}]
  %s2 = inlined_call_operand.vmem [shape: f32[8,2,1,32], index: 2, kind: input, shape index: {}]
  %s3 = inlined_call_operand.vmem [shape: f32[32,32], index: 3, kind: input, shape index: {}]
  %s4 = inlined_call_operand.vmem [shape: f32[1,32], index: 4, kind: input, shape index: {}, may-alias: {4,6}]
  %s5 = inlined_call_operand.vmem [shape: f32[1,32], index: 5, kind: input, shape index: {}]
  %s6 = inlined_call_operand.vmem [shape: f32[1,32], index: 6, kind: input, shape index: {}, may-alias: {4,6}]
  %s7 = inlined_call_operand.vmem [shape: f32[8,2,1,32], index: 7, kind: output, shape index: {}]
  %s8 = sld [smem:[#allocation0]]
  $region221: #{transformer_decoder_wrapper_forward.23} parent=0
    _
  %s10 = ssub.s32 1, %s8
  %s11 = scalar_select 0, %s10, %s8
  $region1: #{transformer_decoder_wrapper_forward.23} parent=0
    #allocation2 [shape = 'u8[8192]{0}', space=vmem, size = 0x2000, scoped, tag = 'input window, operand 0']
    #allocation3 [shape = 'u8[16384]{0}', space=vmem, size = 0x4000, scoped, tag = 'input window, operand 1']
    #allocation4 [shape = 'u8[8192]{0}', space=vmem, size = 0x2000, scoped, tag = 'input window, operand 2']
    #allocation5 [shape = 'u8[8192]{0}', space=vmem, size = 0x2000, scoped, tag = 'output window, operand 0']
    loop: start=0, step=1, limit=4
    $region2: #{transformer_decoder_wrapper_forward.23} parent=1 // loop_pre_header
      _
    $region3: #{transformer_decoder_wrapper_forward.23} parent=1 // loop_header
      %s13 = sphi 0, %s17
      %p14 = scmp.ge.s32.totalorder %s13, 4
      %s23 = sphi 0, %s25
      %s26 = sphi 0, %s23
      %s27 = sphi 0, %s26
      %s43 = sphi 0, %s27
      %s49 = sphi 0, %s51
      %s52 = sphi 0, %s49
      %s53 = sphi 0, %s52
      %s69 = sphi 0, %s53
      %s75 = sphi 0, %s77
      %s78 = sphi 0, %s75
      %s79 = sphi 0, %s78
      %s95 = sphi 0, %s79
      %s99 = sphi 0, %s99
      %s101 = sphi 0, %s99
      %s102 = sphi 0, %s101
      %s116 = sphi 0, %s102
      %s120 = sphi 0, %s120
      %s122 = sphi 0, %s120
      %s123 = sphi 0, %s122
      %s137 = sphi 0, %s123
      %s141 = sphi 0, %s141
      %s143 = sphi 0, %s141
      %s144 = sphi 0, %s143
      %s158 = sphi 0, %s144
      %s162 = sphi 0, %s162
      %s164 = sphi 0, %s162
      %s165 = sphi 0, %s164
      %s179 = sphi 0, %s165
      %s185 = sphi 0, %s187
      %s188 = sphi 0, %s185
      %s189 = sphi 0, %s188
      %s205 = sphi 0, %s189
    $region4: #{transformer_decoder_wrapper_forward.23} parent=1 // loop_header_branch
      %16 = sbr.rel (%p14) target = $region8
    $region5: #{transformer_decoder_wrapper_forward.23} parent=1 // loop_body
      %s18 = ssub.s32 %s13, 1
      %s19 = ssub.s32 %s13, 2
      %s20 = sadd.s32 %s13, 1
      %s21 = ssub.s32 %s13, %s20
      %p22 = scmp.eq.s32.totalorder %s21, 0
      %s24 = sadd.s32 %s23, 1
      %s25 = scalar_select %p22, %s23, %s24
      %p28 = pneg %p22
      %p29 = scmp.eq.s32.totalorder %s13, 1
      %p30 = por %p28, %p29
      %p31 = scmp.ne.s32.totalorder %s23, %s26
      %p32 = scmp.eq.s32.totalorder %s13, 0
      %p33 = por %p31, %p32
      %p34 = scmp.ne.s32.totalorder %s23, %s26
      %p35 = scmp.eq.s32.totalorder %s18, 1
      %p36 = por %p34, %p35
      %p37 = scmp.ne.s32.totalorder %s26, %s27
      %p38 = scmp.eq.s32.totalorder %s18, 0
      %p39 = por %p37, %p38
      %p40 = scmp.ne.s32.totalorder %s26, %s27
      %p41 = scmp.eq.s32.totalorder %s19, 1
      %p42 = por %p40, %p41
      %p44 = scmp.ne.s32.totalorder %s27, %s43
      %p45 = scmp.eq.s32.totalorder %s19, 0
      %p46 = por %p44, %p45
      %s47 = ssub.s32 %s13, %s20
      %p48 = scmp.eq.s32.totalorder %s47, 0
      %s50 = sadd.s32 %s49, 1
      %s51 = scalar_select %p48, %s49, %s50
      %p54 = pneg %p48
      %p55 = scmp.eq.s32.totalorder %s13, 1
      %p56 = por %p54, %p55
      %p57 = scmp.ne.s32.totalorder %s49, %s52
      %p58 = scmp.eq.s32.totalorder %s13, 0
      %p59 = por %p57, %p58
      %p60 = scmp.ne.s32.totalorder %s49, %s52
      %p61 = scmp.eq.s32.totalorder %s18, 1
      %p62 = por %p60, %p61
      %p63 = scmp.ne.s32.totalorder %s52, %s53
      %p64 = scmp.eq.s32.totalorder %s18, 0
      %p65 = por %p63, %p64
      %p66 = scmp.ne.s32.totalorder %s52, %s53
      %p67 = scmp.eq.s32.totalorder %s19, 1
      %p68 = por %p66, %p67
      %p70 = scmp.ne.s32.totalorder %s53, %s69
      %p71 = scmp.eq.s32.totalorder %s19, 0
      %p72 = por %p70, %p71
      %s73 = ssub.s32 %s13, %s20
      %p74 = scmp.eq.s32.totalorder %s73, 0
      %s76 = sadd.s32 %s75, 1
      %s77 = scalar_select %p74, %s75, %s76
      %p80 = pneg %p74
      %p81 = scmp.eq.s32.totalorder %s13, 1
      %p82 = por %p80, %p81
      %p83 = scmp.ne.s32.totalorder %s75, %s78
      %p84 = scmp.eq.s32.totalorder %s13, 0
      %p85 = por %p83, %p84
      %p86 = scmp.ne.s32.totalorder %s75, %s78
      %p87 = scmp.eq.s32.totalorder %s18, 1
      %p88 = por %p86, %p87
      %p89 = scmp.ne.s32.totalorder %s78, %s79
      %p90 = scmp.eq.s32.totalorder %s18, 0
      %p91 = por %p89, %p90
      %p92 = scmp.ne.s32.totalorder %s78, %s79
      %p93 = scmp.eq.s32.totalorder %s19, 1
      %p94 = por %p92, %p93
      %p96 = scmp.ne.s32.totalorder %s79, %s95
      %p97 = scmp.eq.s32.totalorder %s19, 0
      %p98 = por %p96, %p97
      %s100 = sadd.s32 %s99, 1
      %p103 = scmp.eq.s32.totalorder %s13, 1
      %p104 = scmp.ne.s32.totalorder %s99, %s101
      %p105 = scmp.eq.s32.totalorder %s13, 0
      %p106 = por %p104, %p105
      %p107 = scmp.ne.s32.totalorder %s99, %s101
      %p108 = scmp.eq.s32.totalorder %s18, 1
      %p109 = por %p107, %p108
      %p110 = scmp.ne.s32.totalorder %s101, %s102
      %p111 = scmp.eq.s32.totalorder %s18, 0
      %p112 = por %p110, %p111
      %p113 = scmp.ne.s32.totalorder %s101, %s102
      %p114 = scmp.eq.s32.totalorder %s19, 1
      %p115 = por %p113, %p114
      %p117 = scmp.ne.s32.totalorder %s102, %s116
      %p118 = scmp.eq.s32.totalorder %s19, 0
      %p119 = por %p117, %p118
      %s121 = sadd.s32 %s120, 1
      %p124 = scmp.eq.s32.totalorder %s13, 1
      %p125 = scmp.ne.s32.totalorder %s120, %s122
      %p126 = scmp.eq.s32.totalorder %s13, 0
      %p127 = por %p125, %p126
      %p128 = scmp.ne.s32.totalorder %s120, %s122
      %p129 = scmp.eq.s32.totalorder %s18, 1
      %p130 = por %p128, %p129
      %p131 = scmp.ne.s32.totalorder %s122, %s123
      %p132 = scmp.eq.s32.totalorder %s18, 0
      %p133 = por %p131, %p132
      %p134 = scmp.ne.s32.totalorder %s122, %s123
      %p135 = scmp.eq.s32.totalorder %s19, 1
      %p136 = por %p134, %p135
      %p138 = scmp.ne.s32.totalorder %s123, %s137
      %p139 = scmp.eq.s32.totalorder %s19, 0
      %p140 = por %p138, %p139
      %s142 = sadd.s32 %s141, 1
      %p145 = scmp.eq.s32.totalorder %s13, 1
      %p146 = scmp.ne.s32.totalorder %s141, %s143
      %p147 = scmp.eq.s32.totalorder %s13, 0
      %p148 = por %p146, %p147
      %p149 = scmp.ne.s32.totalorder %s141, %s143
      %p150 = scmp.eq.s32.totalorder %s18, 1
      %p151 = por %p149, %p150
      %p152 = scmp.ne.s32.totalorder %s143, %s144
      %p153 = scmp.eq.s32.totalorder %s18, 0
      %p154 = por %p152, %p153
      %p155 = scmp.ne.s32.totalorder %s143, %s144
      %p156 = scmp.eq.s32.totalorder %s19, 1
      %p157 = por %p155, %p156
      %p159 = scmp.ne.s32.totalorder %s144, %s158
      %p160 = scmp.eq.s32.totalorder %s19, 0
      %p161 = por %p159, %p160
      %s163 = sadd.s32 %s162, 1
      %p166 = scmp.eq.s32.totalorder %s13, 1
      %p167 = scmp.ne.s32.totalorder %s162, %s164
      %p168 = scmp.eq.s32.totalorder %s13, 0
      %p169 = por %p167, %p168
      %p170 = scmp.ne.s32.totalorder %s162, %s164
      %p171 = scmp.eq.s32.totalorder %s18, 1
      %p172 = por %p170, %p171
      %p173 = scmp.ne.s32.totalorder %s164, %s165
      %p174 = scmp.eq.s32.totalorder %s18, 0
      %p175 = por %p173, %p174
      %p176 = scmp.ne.s32.totalorder %s164, %s165
      %p177 = scmp.eq.s32.totalorder %s19, 1
      %p178 = por %p176, %p177
      %p180 = scmp.ne.s32.totalorder %s165, %s179
      %p181 = scmp.eq.s32.totalorder %s19, 0
      %p182 = por %p180, %p181
      %s183 = ssub.s32 %s13, %s20
      %p184 = scmp.eq.s32.totalorder %s183, 0
      %s186 = sadd.s32 %s185, 1
      %s187 = scalar_select %p184, %s185, %s186
      %p190 = pneg %p184
      %p191 = scmp.eq.s32.totalorder %s13, 1
      %p192 = por %p190, %p191
      %p193 = scmp.ne.s32.totalorder %s185, %s188
      %p194 = scmp.eq.s32.totalorder %s13, 0
      %p195 = por %p193, %p194
      %p196 = scmp.ne.s32.totalorder %s185, %s188
      %p197 = scmp.eq.s32.totalorder %s18, 1
      %p198 = por %p196, %p197
      %p199 = scmp.ne.s32.totalorder %s188, %s189
      %p200 = scmp.eq.s32.totalorder %s18, 0
      %p201 = por %p199, %p200
      %p202 = scmp.ne.s32.totalorder %s188, %s189
      %p203 = scmp.eq.s32.totalorder %s19, 1
      %p204 = por %p202, %p203
      %p206 = scmp.ne.s32.totalorder %s189, %s205
      %p207 = scmp.eq.s32.totalorder %s19, 0
      %p208 = por %p206, %p207
      %p209 = scmp.le.s32.totalorder 1, %s13
      %p210 = scmp.lt.s32.totalorder %s13, 3
      %p211 = pnand %p209, %p210
      %p212 = pneg %p211
      // Predicated region
      $region9: #{transformer_decoder_wrapper_forward.23} parent=5 // pred_check
        _
      $region10: #{transformer_decoder_wrapper_forward.23} parent=5 // pred_check_branch
        %214 = sbr.rel (%p211) target = $region12
      $region11: #{transformer_decoder_wrapper_forward.23} parent=5 // pred_region
        %s215 = ssub.s32 %s13, 1
        // Predicated region
        $region13: #{transformer_decoder_wrapper_forward.23} parent=11 // pred_check
          %p216 = pneg %p112
        $region14: #{transformer_decoder_wrapper_forward.23} parent=11 // pred_check_branch
          %218 = sbr.rel (%p216) target = $region16
        $region15: #{transformer_decoder_wrapper_forward.23} parent=11 // pred_region
          _
        $region16: #{transformer_decoder_wrapper_forward.23} parent=11 // pred_fallthru
          _
        // Predicated region
        $region17: #{transformer_decoder_wrapper_forward.23} parent=11 // pred_check
          %p219 = pneg %p133
        $region18: #{transformer_decoder_wrapper_forward.23} parent=11 // pred_check_branch
          %221 = sbr.rel (%p219) target = $region20
        $region19: #{transformer_decoder_wrapper_forward.23} parent=11 // pred_region
          _
        $region20: #{transformer_decoder_wrapper_forward.23} parent=11 // pred_fallthru
          _
        // Predicated region
        $region21: #{transformer_decoder_wrapper_forward.23} parent=11 // pred_check
          %p222 = pneg %p154
        $region22: #{transformer_decoder_wrapper_forward.23} parent=11 // pred_check_branch
          %224 = sbr.rel (%p222) target = $region24
        $region23: #{transformer_decoder_wrapper_forward.23} parent=11 // pred_region
          _
        $region24: #{transformer_decoder_wrapper_forward.23} parent=11 // pred_fallthru
          _
        // Predicated region
        $region25: #{transformer_decoder_wrapper_forward.23} parent=11 // pred_check
          %p225 = pneg %p175
        $region26: #{transformer_decoder_wrapper_forward.23} parent=11 // pred_check_branch
          %227 = sbr.rel (%p225) target = $region28
        $region27: #{transformer_decoder_wrapper_forward.23} parent=11 // pred_region
          _
        $region28: #{transformer_decoder_wrapper_forward.23} parent=11 // pred_fallthru
          _
      $region12: #{transformer_decoder_wrapper_forward.23} parent=5 // pred_fallthru
        _
      %p228 = scmp.lt.s32.totalorder %s13, 2
      // Predicated region
      $region29: #{transformer_decoder_wrapper_forward.23} parent=5 // pred_check
        %p229 = pneg %p228
      $region30: #{transformer_decoder_wrapper_forward.23} parent=5 // pred_check_branch
        %231 = sbr.rel (%p229) target = $region32
      $region31: #{transformer_decoder_wrapper_forward.23} parent=5 // pred_region
        // Predicated region
        $region33: #{transformer_decoder_wrapper_forward.23} parent=31 // pred_check
          %p232 = pneg %p33
        $region34: #{transformer_decoder_wrapper_forward.23} parent=31 // pred_check_branch
          %234 = sbr.rel (%p232) target = $region36
        $region35: #{transformer_decoder_wrapper_forward.23} parent=31 // pred_region
          %s235 = sand.u32 %s23, 1
          %s236 = sand.u32 %s23, 1
          %s237 = smul.addr %s236, 8
          %s238 = scalar_lea.vmem [#allocation2], %s237
          %s239 = scalar_lea.vmem %s0, %s13
          // Predicated region
          $region37: #{transformer_decoder_wrapper_forward.23} parent=35 // pred_check
            _
          $region38: #{transformer_decoder_wrapper_forward.23} parent=35 // pred_check_branch
            %241 = sbr.rel (0) target = $region40
          $region39: #{transformer_decoder_wrapper_forward.23} parent=35 // pred_region
            // Predicated region
            $region41: #{transformer_decoder_wrapper_forward.23} parent=39 // pred_check
              _
            $region42: #{transformer_decoder_wrapper_forward.23} parent=39 // pred_check_branch
              %243 = sbr.rel target = $region44
            $region43: #{transformer_decoder_wrapper_forward.23} parent=39 // pred_region
              // Predicated region
              $region56: #{transformer_decoder_wrapper_forward.23} parent=43 // pred_check
                _
              $region57: #{transformer_decoder_wrapper_forward.23} parent=43 // pred_check_branch
                %273 = sbr.rel (0) target = $region59
              $region58: #{transformer_decoder_wrapper_forward.23} parent=43 // pred_region
                loop: start=0, step=1, limit=1
                $region60: #{transformer_decoder_wrapper_forward.23} parent=58 // loop_pre_header
                  _
                $region61: #{transformer_decoder_wrapper_forward.23} parent=58 // loop_header
                  %s275 = sphi 0, %s279
                  %p276 = scmp.ge.s32.totalorder %s275, 1
                  %s280 = sphi %s239, %s239
                  %s281 = sphi %s238, %s238
                $region62: #{transformer_decoder_wrapper_forward.23} parent=58 // loop_header_branch
                  %278 = sbr.rel (%p276) target = $region66
                $region63: #{transformer_decoder_wrapper_forward.23} parent=58 // loop_body
                  _
                $region64: #{transformer_decoder_wrapper_forward.23} parent=58 // loop_footer
                  %s279 = sadd.s32 1, %s275
                $region65: #{transformer_decoder_wrapper_forward.23} parent=58 // loop_footer_branch
                  %274 = sbr.rel target = $region61
                $region66: #{transformer_decoder_wrapper_forward.23} parent=58 // loop_exit
                  _
                %s283 = ssub.s32 2, 1
                loop: start=0, step=1, limit=1
                $region67: #{transformer_decoder_wrapper_forward.23} parent=58 // loop_pre_header
                  _
                $region68: #{transformer_decoder_wrapper_forward.23} parent=58 // loop_header
                  %s285 = sphi 0, %s289
                  %p286 = scmp.ge.s32.totalorder %s285, 1
                  %s290 = sphi %s239, %s239
                  %s291 = sphi %s238, %s238
                $region69: #{transformer_decoder_wrapper_forward.23} parent=58 // loop_header_branch
                  %288 = sbr.rel (%p286) target = $region73
                $region70: #{transformer_decoder_wrapper_forward.23} parent=58 // loop_body
                  %v292 = vld [vmem:[%s290] sm:%s283]
                  %293 = vst [vmem:[%s291] sm:%s283] %v292
                  %v294 = vld [vmem:[%s290 + $0x2] sm:%s283]
                  %295 = vst [vmem:[%s291 + $0x1] sm:%s283] %v294
                  %v296 = vld [vmem:[%s290 + $0x4] sm:%s283]
                  %297 = vst [vmem:[%s291 + $0x2] sm:%s283] %v296
                  %v298 = vld [vmem:[%s290 + $0x6] sm:%s283]
                  %299 = vst [vmem:[%s291 + $0x3] sm:%s283] %v298
                  %v300 = vld [vmem:[%s290 + $0x8] sm:%s283]
                  %301 = vst [vmem:[%s291 + $0x4] sm:%s283] %v300
                  %v302 = vld [vmem:[%s290 + $0xa] sm:%s283]
                  %303 = vst [vmem:[%s291 + $0x5] sm:%s283] %v302
                  %v304 = vld [vmem:[%s290 + $0xc] sm:%s283]
                  %305 = vst [vmem:[%s291 + $0x6] sm:%s283] %v304
                  %v306 = vld [vmem:[%s290 + $0xe] sm:%s283]
                  %307 = vst [vmem:[%s291 + $0x7] sm:%s283] %v306
                $region71: #{transformer_decoder_wrapper_forward.23} parent=58 // loop_footer
                  %s289 = sadd.s32 1, %s285
                $region72: #{transformer_decoder_wrapper_forward.23} parent=58 // loop_footer_branch
                  %284 = sbr.rel target = $region68
                $region73: #{transformer_decoder_wrapper_forward.23} parent=58 // loop_exit
                  _
              $region59: #{transformer_decoder_wrapper_forward.23} parent=43 // pred_fallthru
                _
            $region44: #{transformer_decoder_wrapper_forward.23} parent=39 // pred_fallthru
              _
            // Predicated region
            $region45: #{transformer_decoder_wrapper_forward.23} parent=39 // pred_check
              _
            $region46: #{transformer_decoder_wrapper_forward.23} parent=39 // pred_check_branch
              %245 = sbr.rel (0) target = $region48
            $region47: #{transformer_decoder_wrapper_forward.23} parent=39 // pred_region
              %s247 = ssub.s32 2, 1
              loop: start=0, step=1, limit=1
              $region49: #{transformer_decoder_wrapper_forward.23} parent=47 // loop_pre_header
                _
              $region50: #{transformer_decoder_wrapper_forward.23} parent=47 // loop_header
                %s249 = sphi 0, %s253
                %p250 = scmp.ge.s32.totalorder %s249, 1
                %s254 = sphi %s239, %s239
                %s255 = sphi %s238, %s238
              $region51: #{transformer_decoder_wrapper_forward.23} parent=47 // loop_header_branch
                %252 = sbr.rel (%p250) target = $region55
              $region52: #{transformer_decoder_wrapper_forward.23} parent=47 // loop_body
                %v256 = vld [vmem:[%s254] sm:%s247]
                %257 = vst [vmem:[%s255] sm:%s247] %v256
                %v258 = vld [vmem:[%s254 + $0x2] sm:%s247]
                %259 = vst [vmem:[%s255 + $0x1] sm:%s247] %v258
                %v260 = vld [vmem:[%s254 + $0x4] sm:%s247]
                %261 = vst [vmem:[%s255 + $0x2] sm:%s247] %v260
                %v262 = vld [vmem:[%s254 + $0x6] sm:%s247]
                %263 = vst [vmem:[%s255 + $0x3] sm:%s247] %v262
                %v264 = vld [vmem:[%s254 + $0x8] sm:%s247]
                %265 = vst [vmem:[%s255 + $0x4] sm:%s247] %v264
                %v266 = vld [vmem:[%s254 + $0xa] sm:%s247]
                %267 = vst [vmem:[%s255 + $0x5] sm:%s247] %v266
                %v268 = vld [vmem:[%s254 + $0xc] sm:%s247]
                %269 = vst [vmem:[%s255 + $0x6] sm:%s247] %v268
                %v270 = vld [vmem:[%s254 + $0xe] sm:%s247]
                %271 = vst [vmem:[%s255 + $0x7] sm:%s247] %v270
              $region53: #{transformer_decoder_wrapper_forward.23} parent=47 // loop_footer
                %s253 = sadd.s32 1, %s249
              $region54: #{transformer_decoder_wrapper_forward.23} parent=47 // loop_footer_branch
                %248 = sbr.rel target = $region50
              $region55: #{transformer_decoder_wrapper_forward.23} parent=47 // loop_exit
                _
            $region48: #{transformer_decoder_wrapper_forward.23} parent=39 // pred_fallthru
              _
          $region40: #{transformer_decoder_wrapper_forward.23} parent=35 // pred_fallthru
            _
          %308 = vnop
        $region36: #{transformer_decoder_wrapper_forward.23} parent=31 // pred_fallthru
          _
        // Predicated region
        $region74: #{transformer_decoder_wrapper_forward.23} parent=31 // pred_check
          %p309 = pneg %p59
        $region75: #{transformer_decoder_wrapper_forward.23} parent=31 // pred_check_branch
          %311 = sbr.rel (%p309) target = $region77
        $region76: #{transformer_decoder_wrapper_forward.23} parent=31 // pred_region
          %s312 = sand.u32 %s49, 1
          %s313 = sand.u32 %s49, 1
          %s314 = smul.addr %s313, 16
          %s315 = scalar_lea.vmem [#allocation3], %s314
          %s316 = scalar_lea.vmem %s1, %s13
          // Predicated region
          $region78: #{transformer_decoder_wrapper_forward.23} parent=76 // pred_check
            _
          $region79: #{transformer_decoder_wrapper_forward.23} parent=76 // pred_check_branch
            %318 = sbr.rel (0) target = $region81
          $region80: #{transformer_decoder_wrapper_forward.23} parent=76 // pred_region
            // Predicated region
            $region82: #{transformer_decoder_wrapper_forward.23} parent=80 // pred_check
              _
            $region83: #{transformer_decoder_wrapper_forward.23} parent=80 // pred_check_branch
              %320 = sbr.rel target = $region85
            $region84: #{transformer_decoder_wrapper_forward.23} parent=80 // pred_region
              // Predicated region
              $region97: #{transformer_decoder_wrapper_forward.23} parent=84 // pred_check
                _
              $region98: #{transformer_decoder_wrapper_forward.23} parent=84 // pred_check_branch
                %366 = sbr.rel (0) target = $region100
              $region99: #{transformer_decoder_wrapper_forward.23} parent=84 // pred_region
                loop: start=0, step=1, limit=1
                $region101: #{transformer_decoder_wrapper_forward.23} parent=99 // loop_pre_header
                  _
                $region102: #{transformer_decoder_wrapper_forward.23} parent=99 // loop_header
                  %s368 = sphi 0, %s372
                  %p369 = scmp.ge.s32.totalorder %s368, 1
                  %s373 = sphi %s316, %s316
                  %s374 = sphi %s315, %s315
                $region103: #{transformer_decoder_wrapper_forward.23} parent=99 // loop_header_branch
                  %371 = sbr.rel (%p369) target = $region107
                $region104: #{transformer_decoder_wrapper_forward.23} parent=99 // loop_body
                  _
                $region105: #{transformer_decoder_wrapper_forward.23} parent=99 // loop_footer
                  %s372 = sadd.s32 1, %s368
                $region106: #{transformer_decoder_wrapper_forward.23} parent=99 // loop_footer_branch
                  %367 = sbr.rel target = $region102
                $region107: #{transformer_decoder_wrapper_forward.23} parent=99 // loop_exit
                  _
                %s376 = ssub.s32 2, 1
                loop: start=0, step=1, limit=1
                $region108: #{transformer_decoder_wrapper_forward.23} parent=99 // loop_pre_header
                  _
                $region109: #{transformer_decoder_wrapper_forward.23} parent=99 // loop_header
                  %s378 = sphi 0, %s382
                  %p379 = scmp.ge.s32.totalorder %s378, 1
                  %s383 = sphi %s316, %s316
                  %s384 = sphi %s315, %s315
                $region110: #{transformer_decoder_wrapper_forward.23} parent=99 // loop_header_branch
                  %381 = sbr.rel (%p379) target = $region114
                $region111: #{transformer_decoder_wrapper_forward.23} parent=99 // loop_body
                  %v385 = vld [vmem:[%s383] sm:%s376]
                  %386 = vst [vmem:[%s384] sm:%s376] %v385
                  %v387 = vld [vmem:[%s383 + $0x2] sm:%s376]
                  %388 = vst [vmem:[%s384 + $0x1] sm:%s376] %v387
                  %v389 = vld [vmem:[%s383 + $0x4] sm:%s376]
                  %390 = vst [vmem:[%s384 + $0x2] sm:%s376] %v389
                  %v391 = vld [vmem:[%s383 + $0x6] sm:%s376]
                  %392 = vst [vmem:[%s384 + $0x3] sm:%s376] %v391
                  %v393 = vld [vmem:[%s383 + $0x8] sm:%s376]
                  %394 = vst [vmem:[%s384 + $0x4] sm:%s376] %v393
                  %v395 = vld [vmem:[%s383 + $0xa] sm:%s376]
                  %396 = vst [vmem:[%s384 + $0x5] sm:%s376] %v395
                  %v397 = vld [vmem:[%s383 + $0xc] sm:%s376]
                  %398 = vst [vmem:[%s384 + $0x6] sm:%s376] %v397
                  %v399 = vld [vmem:[%s383 + $0xe] sm:%s376]
                  %400 = vst [vmem:[%s384 + $0x7] sm:%s376] %v399
                  %v401 = vld [vmem:[%s383 + $0x10] sm:%s376]
                  %402 = vst [vmem:[%s384 + $0x8] sm:%s376] %v401
                  %v403 = vld [vmem:[%s383 + $0x12] sm:%s376]
                  %404 = vst [vmem:[%s384 + $0x9] sm:%s376] %v403
                  %v405 = vld [vmem:[%s383 + $0x14] sm:%s376]
                  %406 = vst [vmem:[%s384 + $0xa] sm:%s376] %v405
                  %v407 = vld [vmem:[%s383 + $0x16] sm:%s376]
                  %408 = vst [vmem:[%s384 + $0xb] sm:%s376] %v407
                  %v409 = vld [vmem:[%s383 + $0x18] sm:%s376]
                  %410 = vst [vmem:[%s384 + $0xc] sm:%s376] %v409
                  %v411 = vld [vmem:[%s383 + $0x1a] sm:%s376]
                  %412 = vst [vmem:[%s384 + $0xd] sm:%s376] %v411
                  %v413 = vld [vmem:[%s383 + $0x1c] sm:%s376]
                  %414 = vst [vmem:[%s384 + $0xe] sm:%s376] %v413
                  %v415 = vld [vmem:[%s383 + $0x1e] sm:%s376]
                  %416 = vst [vmem:[%s384 + $0xf] sm:%s376] %v415
                $region112: #{transformer_decoder_wrapper_forward.23} parent=99 // loop_footer
                  %s382 = sadd.s32 1, %s378
                $region113: #{transformer_decoder_wrapper_forward.23} parent=99 // loop_footer_branch
                  %377 = sbr.rel target = $region109
                $region114: #{transformer_decoder_wrapper_forward.23} parent=99 // loop_exit
                  _
              $region100: #{transformer_decoder_wrapper_forward.23} parent=84 // pred_fallthru
                _
            $region85: #{transformer_decoder_wrapper_forward.23} parent=80 // pred_fallthru
              _
            // Predicated region
            $region86: #{transformer_decoder_wrapper_forward.23} parent=80 // pred_check
              _
            $region87: #{transformer_decoder_wrapper_forward.23} parent=80 // pred_check_branch
              %322 = sbr.rel (0) target = $region89
            $region88: #{transformer_decoder_wrapper_forward.23} parent=80 // pred_region
              %s324 = ssub.s32 2, 1
              loop: start=0, step=1, limit=1
              $region90: #{transformer_decoder_wrapper_forward.23} parent=88 // loop_pre_header
                _
              $region91: #{transformer_decoder_wrapper_forward.23} parent=88 // loop_header
                %s326 = sphi 0, %s330
                %p327 = scmp.ge.s32.totalorder %s326, 1
                %s331 = sphi %s316, %s316
                %s332 = sphi %s315, %s315
              $region92: #{transformer_decoder_wrapper_forward.23} parent=88 // loop_header_branch
                %329 = sbr.rel (%p327) target = $region96
              $region93: #{transformer_decoder_wrapper_forward.23} parent=88 // loop_body
                %v333 = vld [vmem:[%s331] sm:%s324]
                %334 = vst [vmem:[%s332] sm:%s324] %v333
                %v335 = vld [vmem:[%s331 + $0x2] sm:%s324]
                %336 = vst [vmem:[%s332 + $0x1] sm:%s324] %v335
                %v337 = vld [vmem:[%s331 + $0x4] sm:%s324]
                %338 = vst [vmem:[%s332 + $0x2] sm:%s324] %v337
                %v339 = vld [vmem:[%s331 + $0x6] sm:%s324]
                %340 = vst [vmem:[%s332 + $0x3] sm:%s324] %v339
                %v341 = vld [vmem:[%s331 + $0x8] sm:%s324]
                %342 = vst [vmem:[%s332 + $0x4] sm:%s324] %v341
                %v343 = vld [vmem:[%s331 + $0xa] sm:%s324]
                %344 = vst [vmem:[%s332 + $0x5] sm:%s324] %v343
                %v345 = vld [vmem:[%s331 + $0xc] sm:%s324]
                %346 = vst [vmem:[%s332 + $0x6] sm:%s324] %v345
                %v347 = vld [vmem:[%s331 + $0xe] sm:%s324]
                %348 = vst [vmem:[%s332 + $0x7] sm:%s324] %v347
                %v349 = vld [vmem:[%s331 + $0x10] sm:%s324]
                %350 = vst [vmem:[%s332 + $0x8] sm:%s324] %v349
                %v351 = vld [vmem:[%s331 + $0x12] sm:%s324]
                %352 = vst [vmem:[%s332 + $0x9] sm:%s324] %v351
                %v353 = vld [vmem:[%s331 + $0x14] sm:%s324]
                %354 = vst [vmem:[%s332 + $0xa] sm:%s324] %v353
                %v355 = vld [vmem:[%s331 + $0x16] sm:%s324]
                %356 = vst [vmem:[%s332 + $0xb] sm:%s324] %v355
                %v357 = vld [vmem:[%s331 + $0x18] sm:%s324]
                %358 = vst [vmem:[%s332 + $0xc] sm:%s324] %v357
                %v359 = vld [vmem:[%s331 + $0x1a] sm:%s324]
                %360 = vst [vmem:[%s332 + $0xd] sm:%s324] %v359
                %v361 = vld [vmem:[%s331 + $0x1c] sm:%s324]
                %362 = vst [vmem:[%s332 + $0xe] sm:%s324] %v361
                %v363 = vld [vmem:[%s331 + $0x1e] sm:%s324]
                %364 = vst [vmem:[%s332 + $0xf] sm:%s324] %v363
              $region94: #{transformer_decoder_wrapper_forward.23} parent=88 // loop_footer
                %s330 = sadd.s32 1, %s326
              $region95: #{transformer_decoder_wrapper_forward.23} parent=88 // loop_footer_branch
                %325 = sbr.rel target = $region91
              $region96: #{transformer_decoder_wrapper_forward.23} parent=88 // loop_exit
                _
            $region89: #{transformer_decoder_wrapper_forward.23} parent=80 // pred_fallthru
              _
          $region81: #{transformer_decoder_wrapper_forward.23} parent=76 // pred_fallthru
            _
          %417 = vnop
        $region77: #{transformer_decoder_wrapper_forward.23} parent=31 // pred_fallthru
          _
        // Predicated region
        $region115: #{transformer_decoder_wrapper_forward.23} parent=31 // pred_check
          %p418 = pneg %p85
        $region116: #{transformer_decoder_wrapper_forward.23} parent=31 // pred_check_branch
          %420 = sbr.rel (%p418) target = $region118
        $region117: #{transformer_decoder_wrapper_forward.23} parent=31 // pred_region
          %s421 = sand.u32 %s75, 1
          %s422 = sand.u32 %s75, 1
          %s423 = smul.addr %s422, 8
          %s424 = scalar_lea.vmem [#allocation4], %s423
          %s425 = scalar_lea.vmem %s2, %s13
          // Predicated region
          $region119: #{transformer_decoder_wrapper_forward.23} parent=117 // pred_check
            _
          $region120: #{transformer_decoder_wrapper_forward.23} parent=117 // pred_check_branch
            %427 = sbr.rel (0) target = $region122
          $region121: #{transformer_decoder_wrapper_forward.23} parent=117 // pred_region
            // Predicated region
            $region123: #{transformer_decoder_wrapper_forward.23} parent=121 // pred_check
              _
            $region124: #{transformer_decoder_wrapper_forward.23} parent=121 // pred_check_branch
              %429 = sbr.rel target = $region126
            $region125: #{transformer_decoder_wrapper_forward.23} parent=121 // pred_region
              // Predicated region
              $region138: #{transformer_decoder_wrapper_forward.23} parent=125 // pred_check
                _
              $region139: #{transformer_decoder_wrapper_forward.23} parent=125 // pred_check_branch
                %459 = sbr.rel (0) target = $region141
              $region140: #{transformer_decoder_wrapper_forward.23} parent=125 // pred_region
                loop: start=0, step=1, limit=1
                $region142: #{transformer_decoder_wrapper_forward.23} parent=140 // loop_pre_header
                  _
                $region143: #{transformer_decoder_wrapper_forward.23} parent=140 // loop_header
                  %s461 = sphi 0, %s465
                  %p462 = scmp.ge.s32.totalorder %s461, 1
                  %s466 = sphi %s425, %s425
                  %s467 = sphi %s424, %s424
                $region144: #{transformer_decoder_wrapper_forward.23} parent=140 // loop_header_branch
                  %464 = sbr.rel (%p462) target = $region148
                $region145: #{transformer_decoder_wrapper_forward.23} parent=140 // loop_body
                  _
                $region146: #{transformer_decoder_wrapper_forward.23} parent=140 // loop_footer
                  %s465 = sadd.s32 1, %s461
                $region147: #{transformer_decoder_wrapper_forward.23} parent=140 // loop_footer_branch
                  %460 = sbr.rel target = $region143
                $region148: #{transformer_decoder_wrapper_forward.23} parent=140 // loop_exit
                  _
                %s469 = ssub.s32 2, 1
                loop: start=0, step=1, limit=1
                $region149: #{transformer_decoder_wrapper_forward.23} parent=140 // loop_pre_header
                  _
                $region150: #{transformer_decoder_wrapper_forward.23} parent=140 // loop_header
                  %s471 = sphi 0, %s475
                  %p472 = scmp.ge.s32.totalorder %s471, 1
                  %s476 = sphi %s425, %s425
                  %s477 = sphi %s424, %s424
                $region151: #{transformer_decoder_wrapper_forward.23} parent=140 // loop_header_branch
                  %474 = sbr.rel (%p472) target = $region155
                $region152: #{transformer_decoder_wrapper_forward.23} parent=140 // loop_body
                  %v478 = vld [vmem:[%s476] sm:%s469]
                  %479 = vst [vmem:[%s477] sm:%s469] %v478
                  %v480 = vld [vmem:[%s476 + $0x2] sm:%s469]
                  %481 = vst [vmem:[%s477 + $0x1] sm:%s469] %v480
                  %v482 = vld [vmem:[%s476 + $0x4] sm:%s469]
                  %483 = vst [vmem:[%s477 + $0x2] sm:%s469] %v482
                  %v484 = vld [vmem:[%s476 + $0x6] sm:%s469]
                  %485 = vst [vmem:[%s477 + $0x3] sm:%s469] %v484
                  %v486 = vld [vmem:[%s476 + $0x8] sm:%s469]
                  %487 = vst [vmem:[%s477 + $0x4] sm:%s469] %v486
                  %v488 = vld [vmem:[%s476 + $0xa] sm:%s469]
                  %489 = vst [vmem:[%s477 + $0x5] sm:%s469] %v488
                  %v490 = vld [vmem:[%s476 + $0xc] sm:%s469]
                  %491 = vst [vmem:[%s477 + $0x6] sm:%s469] %v490
                  %v492 = vld [vmem:[%s476 + $0xe] sm:%s469]
                  %493 = vst [vmem:[%s477 + $0x7] sm:%s469] %v492
                $region153: #{transformer_decoder_wrapper_forward.23} parent=140 // loop_footer
                  %s475 = sadd.s32 1, %s471
                $region154: #{transformer_decoder_wrapper_forward.23} parent=140 // loop_footer_branch
                  %470 = sbr.rel target = $region150
                $region155: #{transformer_decoder_wrapper_forward.23} parent=140 // loop_exit
                  _
              $region141: #{transformer_decoder_wrapper_forward.23} parent=125 // pred_fallthru
                _
            $region126: #{transformer_decoder_wrapper_forward.23} parent=121 // pred_fallthru
              _
            // Predicated region
            $region127: #{transformer_decoder_wrapper_forward.23} parent=121 // pred_check
              _
            $region128: #{transformer_decoder_wrapper_forward.23} parent=121 // pred_check_branch
              %431 = sbr.rel (0) target = $region130
            $region129: #{transformer_decoder_wrapper_forward.23} parent=121 // pred_region
              %s433 = ssub.s32 2, 1
              loop: start=0, step=1, limit=1
              $region131: #{transformer_decoder_wrapper_forward.23} parent=129 // loop_pre_header
                _
              $region132: #{transformer_decoder_wrapper_forward.23} parent=129 // loop_header
                %s435 = sphi 0, %s439
                %p436 = scmp.ge.s32.totalorder %s435, 1
                %s440 = sphi %s425, %s425
                %s441 = sphi %s424, %s424
              $region133: #{transformer_decoder_wrapper_forward.23} parent=129 // loop_header_branch
                %438 = sbr.rel (%p436) target = $region137
              $region134: #{transformer_decoder_wrapper_forward.23} parent=129 // loop_body
                %v442 = vld [vmem:[%s440] sm:%s433]
                %443 = vst [vmem:[%s441] sm:%s433] %v442
                %v444 = vld [vmem:[%s440 + $0x2] sm:%s433]
                %445 = vst [vmem:[%s441 + $0x1] sm:%s433] %v444
                %v446 = vld [vmem:[%s440 + $0x4] sm:%s433]
                %447 = vst [vmem:[%s441 + $0x2] sm:%s433] %v446
                %v448 = vld [vmem:[%s440 + $0x6] sm:%s433]
                %449 = vst [vmem:[%s441 + $0x3] sm:%s433] %v448
                %v450 = vld [vmem:[%s440 + $0x8] sm:%s433]
                %451 = vst [vmem:[%s441 + $0x4] sm:%s433] %v450
                %v452 = vld [vmem:[%s440 + $0xa] sm:%s433]
                %453 = vst [vmem:[%s441 + $0x5] sm:%s433] %v452
                %v454 = vld [vmem:[%s440 + $0xc] sm:%s433]
                %455 = vst [vmem:[%s441 + $0x6] sm:%s433] %v454
                %v456 = vld [vmem:[%s440 + $0xe] sm:%s433]
                %457 = vst [vmem:[%s441 + $0x7] sm:%s433] %v456
              $region135: #{transformer_decoder_wrapper_forward.23} parent=129 // loop_footer
                %s439 = sadd.s32 1, %s435
              $region136: #{transformer_decoder_wrapper_forward.23} parent=129 // loop_footer_branch
                %434 = sbr.rel target = $region132
              $region137: #{transformer_decoder_wrapper_forward.23} parent=129 // loop_exit
                _
            $region130: #{transformer_decoder_wrapper_forward.23} parent=121 // pred_fallthru
              _
          $region122: #{transformer_decoder_wrapper_forward.23} parent=117 // pred_fallthru
            _
          %494 = vnop
        $region118: #{transformer_decoder_wrapper_forward.23} parent=31 // pred_fallthru
          _
      $region32: #{transformer_decoder_wrapper_forward.23} parent=5 // pred_fallthru
        _
      %p495 = scmp.le.s32.totalorder 1, %s13
      %p496 = scmp.lt.s32.totalorder %s13, 3
      %p497 = pnand %p495, %p496
      %p498 = pneg %p497
      // Predicated region
      $region156: #{transformer_decoder_wrapper_forward.23} parent=5 // pred_check
        _
      $region157: #{transformer_decoder_wrapper_forward.23} parent=5 // pred_check_branch
        %500 = sbr.rel (%p497) target = $region159
      $region158: #{transformer_decoder_wrapper_forward.23} parent=5 // pred_region
        %s501 = ssub.s32 %s13, 1
        %s502 = sand.u32 %s26, 1
        %s503 = sand.u32 %s26, 1
        %s504 = smul.addr %s503, 8
        %s505 = scalar_lea.vmem [#allocation2], %s504
        // Predicated region
        $region160: #{transformer_decoder_wrapper_forward.23} parent=158 // pred_check
          %p506 = pneg %p39
        $region161: #{transformer_decoder_wrapper_forward.23} parent=158 // pred_check_branch
          %508 = sbr.rel (%p506) target = $region163
        $region162: #{transformer_decoder_wrapper_forward.23} parent=158 // pred_region
          _
        $region163: #{transformer_decoder_wrapper_forward.23} parent=158 // pred_fallthru
          _
        %s509 = sand.u32 %s52, 1
        %s510 = sand.u32 %s52, 1
        %s511 = smul.addr %s510, 16
        %s512 = scalar_lea.vmem [#allocation3], %s511
        // Predicated region
        $region164: #{transformer_decoder_wrapper_forward.23} parent=158 // pred_check
          %p513 = pneg %p65
        $region165: #{transformer_decoder_wrapper_forward.23} parent=158 // pred_check_branch
          %515 = sbr.rel (%p513) target = $region167
        $region166: #{transformer_decoder_wrapper_forward.23} parent=158 // pred_region
          _
        $region167: #{transformer_decoder_wrapper_forward.23} parent=158 // pred_fallthru
          _
        %s516 = sand.u32 %s78, 1
        %s517 = sand.u32 %s78, 1
        %s518 = smul.addr %s517, 8
        %s519 = scalar_lea.vmem [#allocation4], %s518
        // Predicated region
        $region168: #{transformer_decoder_wrapper_forward.23} parent=158 // pred_check
          %p520 = pneg %p91
        $region169: #{transformer_decoder_wrapper_forward.23} parent=158 // pred_check_branch
          %522 = sbr.rel (%p520) target = $region171
        $region170: #{transformer_decoder_wrapper_forward.23} parent=158 // pred_region
          _
        $region171: #{transformer_decoder_wrapper_forward.23} parent=158 // pred_fallthru
          _
        %s523 = sand.u32 %s26, 1
        %s524 = sand.u32 %s26, 1
        %s525 = smul.addr %s524, 8
        %s526 = scalar_lea.vmem [#allocation2], %s525
        %p527 = pneg %p39
        %p528 = pneg %p36
        %s529 = sand.u32 %s52, 1
        %s530 = sand.u32 %s52, 1
        %s531 = smul.addr %s530, 16
        %s532 = scalar_lea.vmem [#allocation3], %s531
        %p533 = pneg %p65
        %p534 = pneg %p62
        %s535 = sand.u32 %s78, 1
        %s536 = sand.u32 %s78, 1
        %s537 = smul.addr %s536, 8
        %s538 = scalar_lea.vmem [#allocation4], %s537
        %p539 = pneg %p91
        %p540 = pneg %p88
        %p541 = pneg %p112
        %p542 = pneg %p109
        %p543 = pneg %p133
        %p544 = pneg %p130
        %p545 = pneg %p154
        %p546 = pneg %p151
        %p547 = pneg %p175
        %p548 = pneg %p172
        %p549 = pneg %p201
        %p550 = pneg %p198
        %s551 = sand.u32 %s188, 1
        %s552 = sand.u32 %s188, 1
        %s553 = smul.addr %s552, 8
        %s554 = scalar_lea.vmem [#allocation5], %s553
        %v555 = vld [vmem:[%s505] sm:$0x1]
        %v556 = vld [vmem:[%s505 + $0x1] sm:$0x1]
        %v557 = vld [vmem:[%s505 + $0x2] sm:$0x1]
        %v558 = vld [vmem:[%s505 + $0x3] sm:$0x1]
        %v559 = vld [vmem:[%s505 + $0x4] sm:$0x1]
        %v560 = vld [vmem:[%s505 + $0x5] sm:$0x1]
        %v561 = vld [vmem:[%s505 + $0x6] sm:$0x1]
        %v562 = vld [vmem:[%s505 + $0x7] sm:$0x1]
        %v563 = vld [vmem:[%s512] sm:$0x1]
        %v564 = vld [vmem:[%s512 + $0x1] sm:$0x1]
        %v565 = vld [vmem:[%s512 + $0x2] sm:$0x1]
        %v566 = vld [vmem:[%s512 + $0x3] sm:$0x1]
        %v567 = vld [vmem:[%s512 + $0x4] sm:$0x1]
        %v568 = vld [vmem:[%s512 + $0x5] sm:$0x1]
        %v569 = vld [vmem:[%s512 + $0x6] sm:$0x1]
        %v570 = vld [vmem:[%s512 + $0x7] sm:$0x1]
        %v571 = vld [vmem:[%s512 + $0x8] sm:$0x1]
        %v572 = vld [vmem:[%s512 + $0x9] sm:$0x1]
        %v573 = vld [vmem:[%s512 + $0xa] sm:$0x1]
        %v574 = vld [vmem:[%s512 + $0xb] sm:$0x1]
        %v575 = vld [vmem:[%s512 + $0xc] sm:$0x1]
        %v576 = vld [vmem:[%s512 + $0xd] sm:$0x1]
        %v577 = vld [vmem:[%s512 + $0xe] sm:$0x1]
        %v578 = vld [vmem:[%s512 + $0xf] sm:$0x1]
        %v579 = vld [vmem:[%s519] sm:$0x1]
        %v580 = vld [vmem:[%s519 + $0x1] sm:$0x1]
        %v581 = vld [vmem:[%s519 + $0x2] sm:$0x1]
        %v582 = vld [vmem:[%s519 + $0x3] sm:$0x1]
        %v583 = vld [vmem:[%s519 + $0x4] sm:$0x1]
        %v584 = vld [vmem:[%s519 + $0x5] sm:$0x1]
        %v585 = vld [vmem:[%s519 + $0x6] sm:$0x1]
        %v586 = vld [vmem:[%s519 + $0x7] sm:$0x1]
        %v587 = vld [vmem:[%s3] sm:$0xff]
        %v588 = vld [vmem:[%s3 + $0x8] sm:$0xff]
        %v589 = vld [vmem:[%s3 + $0x10] sm:$0xff]
        %v590 = vld [vmem:[%s3 + $0x18] sm:$0xff]
        %v591 = vld [vmem:[%s4] sm:$0x1]
        %v592 = vld [vmem:[%s5] sm:$0x1]
        %v593 = vld [vmem:[%s6] sm:$0x1]
        %v594 = vmul.f32 %v555, 0.35355338
        %v595 = vmul.f32 %v556, 0.35355338
        %v596 = vmul.f32 %v557, 0.35355338
        %v597 = vmul.f32 %v558, 0.35355338
        %v598 = vmul.f32 %v559, 0.35355338
        %v599 = vmul.f32 %v560, 0.35355338
        %v600 = vmul.f32 %v561, 0.35355338
        %v601 = vmul.f32 %v562, 0.35355338
        %610 = vst [vmem:[#allocation1] ss:$9 sm:$0xff] %v594
        %s611 = scalar_lea.vmem [#allocation1], 1
        %612 = vst [vmem:[%s611] ss:$9 sm:$0xff] %v595
        %s613 = scalar_lea.vmem [#allocation1], 2
        %614 = vst [vmem:[%s613] ss:$9 sm:$0xff] %v596
        %s615 = scalar_lea.vmem [#allocation1], 3
        %616 = vst [vmem:[%s615] ss:$9 sm:$0xff] %v597
        %s617 = scalar_lea.vmem [#allocation1], 4
        %618 = vst [vmem:[%s617] ss:$9 sm:$0xff] %v598
        %s619 = scalar_lea.vmem [#allocation1], 5
        %620 = vst [vmem:[%s619] ss:$9 sm:$0xff] %v599
        %s621 = scalar_lea.vmem [#allocation1], 6
        %622 = vst [vmem:[%s621] ss:$9 sm:$0xff] %v600
        %s623 = scalar_lea.vmem [#allocation1], 7
        %624 = vst [vmem:[%s623] ss:$9 sm:$0xff] %v601
        %v625 = vld [vmem:[#allocation1] sm:$0xff]
        %642 = vst [vmem:[#allocation1] ss:$9 sm:$0xff] %v563
        %s643 = scalar_lea.vmem [#allocation1], 1
        %644 = vst [vmem:[%s643] ss:$9 sm:$0xff] %v564
        %s645 = scalar_lea.vmem [#allocation1], 2
        %646 = vst [vmem:[%s645] ss:$9 sm:$0xff] %v565
        %s647 = scalar_lea.vmem [#allocation1], 3
        %648 = vst [vmem:[%s647] ss:$9 sm:$0xff] %v566
        %s649 = scalar_lea.vmem [#allocation1], 4
        %650 = vst [vmem:[%s649] ss:$9 sm:$0xff] %v567
        %s651 = scalar_lea.vmem [#allocation1], 5
        %652 = vst [vmem:[%s651] ss:$9 sm:$0xff] %v568
        %s653 = scalar_lea.vmem [#allocation1], 6
        %654 = vst [vmem:[%s653] ss:$9 sm:$0xff] %v569
        %s655 = scalar_lea.vmem [#allocation1], 7
        %656 = vst [vmem:[%s655] ss:$9 sm:$0xff] %v570
        %v657 = vld [vmem:[#allocation1] sm:$0xff]
        %658 = vst [vmem:[#allocation1] ss:$9 sm:$0xff] %v571
        %659 = vst [vmem:[%s643] ss:$9 sm:$0xff] %v572
        %660 = vst [vmem:[%s645] ss:$9 sm:$0xff] %v573
        %661 = vst [vmem:[%s647] ss:$9 sm:$0xff] %v574
        %662 = vst [vmem:[%s649] ss:$9 sm:$0xff] %v575
        %663 = vst [vmem:[%s651] ss:$9 sm:$0xff] %v576
        %664 = vst [vmem:[%s653] ss:$9 sm:$0xff] %v577
        %665 = vst [vmem:[%s655] ss:$9 sm:$0xff] %v578
        %v666 = vld [vmem:[#allocation1] sm:$0xff]
        %vm667 = vcmask 64512
        %v668 = vsel %vm667, %v625, 0
        %v670 = vsel %vm667, %v657, 0
        %v672 = vsel %vm667, %v666, 0
        %674 = vmatpush.xpose.msra.mxu0 0.0
        %675 = vmatpush.xpose.msra.mxu0 0.0
        %676 = vmatpush.xpose.msra.mxu0 0.0
        %677 = vmatpush.xpose.msra.mxu0 0.0
        %678 = vmatpush.xpose.msra.mxu0 0.0
        %679 = vmatpush.xpose.msra.mxu0 0.0
        %680 = vmatpush.xpose.msra.mxu0 0.0
        %681 = vmatpush.xpose.msra.mxu0 0.0
        %682 = vmatpush.xpose.msra.mxu0 0.0
        %683 = vmatpush.xpose.msra.mxu0 0.0
        %684 = vmatpush.xpose.msra.mxu0 0.0
        %685 = vmatpush.xpose.msra.mxu0 0.0
        %686 = vmatpush.xpose.msra.mxu0 0.0
        %687 = vmatpush.xpose.msra.mxu0 0.0
        %688 = vmatpush.xpose.msra.mxu0 %v672
        %689 = vmatpush.xpose.msra.mxu0 %v670
        %690 = vmatmul.f32.gmra.mxu0 %v668
        %v691 = vpop.f32.mrf.mxu0
        %v692 = vadd.f32 0.0, %v691
        %693 = vdwg.mxu0
        %vm694 = vcmask 130048
        %v695 = vsel %vm694, %v692, -inf
        %696 = vmax.xlane.f32.xlu0 %v695
        %v697 = vpop.xlane.xlu0 %696
        %v698 = vsub.f32 %v692, %v697
        %v699 = vmul.f32 %v698, 1.442695
        %v700 = vpow.pop %v699
        %v701 = vsel %vm694, %v700, 0.0
        %702 = vadd.xlane.f32.xlu0 %v701
        %v703 = vpop.xlane.xlu0 %702
        %v704 = vrcp.pop %v703
        %v705 = vmul.f32 %v700, %v704
        %706 = vst [vmem:[#allocation1] ss:$9 sm:$0xff] %v563
        %s707 = scalar_lea.vmem [#allocation1], 1
        %708 = vst [vmem:[%s707] ss:$9 sm:$0xff] %v564
        %s709 = scalar_lea.vmem [#allocation1], 2
        %710 = vst [vmem:[%s709] ss:$9 sm:$0xff] %v565
        %s711 = scalar_lea.vmem [#allocation1], 3
        %712 = vst [vmem:[%s711] ss:$9 sm:$0xff] %v566
        %s713 = scalar_lea.vmem [#allocation1], 4
        %714 = vst [vmem:[%s713] ss:$9 sm:$0xff] %v567
        %s715 = scalar_lea.vmem [#allocation1], 5
        %716 = vst [vmem:[%s715] ss:$9 sm:$0xff] %v568
        %s717 = scalar_lea.vmem [#allocation1], 6
        %718 = vst [vmem:[%s717] ss:$9 sm:$0xff] %v569
        %s719 = scalar_lea.vmem [#allocation1], 7
        %720 = vst [vmem:[%s719] ss:$9 sm:$0xff] %v570
        %v721 = vld [vmem:[#allocation1] sm:$0xff]
        %722 = vst [vmem:[#allocation1] ss:$9 sm:$0xff] %v571
        %723 = vst [vmem:[%s707] ss:$9 sm:$0xff] %v572
        %724 = vst [vmem:[%s709] ss:$9 sm:$0xff] %v573
        %725 = vst [vmem:[%s711] ss:$9 sm:$0xff] %v574
        %726 = vst [vmem:[%s713] ss:$9 sm:$0xff] %v575
        %727 = vst [vmem:[%s715] ss:$9 sm:$0xff] %v576
        %728 = vst [vmem:[%s717] ss:$9 sm:$0xff] %v577
        %729 = vst [vmem:[%s719] ss:$9 sm:$0xff] %v578
        %v730 = vld [vmem:[#allocation1] sm:$0xff]
        %731 = vrot.lane.b32.xlu0 %v721, 96
        %v732 = vpop.permute.xlu0 %731
        %733 = vrot.lane.b32.xlu0 %v730, 96
        %v734 = vpop.permute.xlu0 %733
        %v738 = vsel %vm694, %v705, 0
        %740 = vmatpush.msra.mxu0 0.0
        %741 = vmatpush.msra.mxu0 0.0
        %742 = vmatpush.msra.mxu0 0.0
        %743 = vmatpush.msra.mxu0 0.0
        %744 = vmatpush.msra.mxu0 0.0
        %745 = vmatpush.msra.mxu0 0.0
        %746 = vmatpush.msra.mxu0 0.0
        %747 = vmatpush.msra.mxu0 0.0
        %748 = vmatpush.msra.mxu0 0.0
        %749 = vmatpush.msra.mxu0 0.0
        %750 = vmatpush.msra.mxu0 0.0
        %751 = vmatpush.msra.mxu0 0.0
        %752 = vmatpush.msra.mxu0 0.0
        %753 = vmatpush.msra.mxu0 0.0
        %754 = vmatpush.msra.mxu0 %v734
        %755 = vmatpush.msra.mxu0 %v732
        %756 = vmatmul.f32.gmra.mxu0 %v738
        %v757 = vpop.f32.mrf.mxu0
        %v758 = vadd.f32 0.0, %v757
        %759 = vdwg.mxu0
        %760 = vst [vmem:[#allocation1] ss:$9 sm:$0xff] %v594
        %s761 = scalar_lea.vmem [#allocation1], 1
        %762 = vst [vmem:[%s761] ss:$9 sm:$0xff] %v595
        %s763 = scalar_lea.vmem [#allocation1], 2
        %764 = vst [vmem:[%s763] ss:$9 sm:$0xff] %v596
        %s765 = scalar_lea.vmem [#allocation1], 3
        %766 = vst [vmem:[%s765] ss:$9 sm:$0xff] %v597
        %s767 = scalar_lea.vmem [#allocation1], 4
        %768 = vst [vmem:[%s767] ss:$9 sm:$0xff] %v598
        %s769 = scalar_lea.vmem [#allocation1], 5
        %770 = vst [vmem:[%s769] ss:$9 sm:$0xff] %v599
        %s771 = scalar_lea.vmem [#allocation1], 6
        %772 = vst [vmem:[%s771] ss:$9 sm:$0xff] %v600
        %s773 = scalar_lea.vmem [#allocation1], 7
        %774 = vst [vmem:[%s773] ss:$9 sm:$0xff] %v601
        %v775 = vld [vmem:[#allocation1] sm:$0xff]
        %776 = vrot.lane.b32.xlu0 %v775, 120
        %v777 = vpop.permute.xlu0 %776
        %778 = vst [vmem:[#allocation1] ss:$9 sm:$0xff] %v563
        %s779 = scalar_lea.vmem [#allocation1], 1
        %780 = vst [vmem:[%s779] ss:$9 sm:$0xff] %v564
        %s781 = scalar_lea.vmem [#allocation1], 2
        %782 = vst [vmem:[%s781] ss:$9 sm:$0xff] %v565
        %s783 = scalar_lea.vmem [#allocation1], 3
        %784 = vst [vmem:[%s783] ss:$9 sm:$0xff] %v566
        %s785 = scalar_lea.vmem [#allocation1], 4
        %786 = vst [vmem:[%s785] ss:$9 sm:$0xff] %v567
        %s787 = scalar_lea.vmem [#allocation1], 5
        %788 = vst [vmem:[%s787] ss:$9 sm:$0xff] %v568
        %s789 = scalar_lea.vmem [#allocation1], 6
        %790 = vst [vmem:[%s789] ss:$9 sm:$0xff] %v569
        %s791 = scalar_lea.vmem [#allocation1], 7
        %792 = vst [vmem:[%s791] ss:$9 sm:$0xff] %v570
        %v793 = vld [vmem:[#allocation1] sm:$0xff]
        %794 = vst [vmem:[#allocation1] ss:$9 sm:$0xff] %v571
        %795 = vst [vmem:[%s779] ss:$9 sm:$0xff] %v572
        %796 = vst [vmem:[%s781] ss:$9 sm:$0xff] %v573
        %797 = vst [vmem:[%s783] ss:$9 sm:$0xff] %v574
        %798 = vst [vmem:[%s785] ss:$9 sm:$0xff] %v575
        %799 = vst [vmem:[%s787] ss:$9 sm:$0xff] %v576
        %800 = vst [vmem:[%s789] ss:$9 sm:$0xff] %v577
        %801 = vst [vmem:[%s791] ss:$9 sm:$0xff] %v578
        %v802 = vld [vmem:[#allocation1] sm:$0xff]
        %803 = vrot.lane.b32.xlu0 %v793, 120
        %v804 = vpop.permute.xlu0 %803
        %805 = vrot.lane.b32.xlu0 %v802, 120
        %v806 = vpop.permute.xlu0 %805
        %v807 = vsel %vm667, %v777, 0
        %v809 = vsel %vm667, %v804, 0
        %v811 = vsel %vm667, %v806, 0
        %813 = vmatpush.xpose.msra.mxu0 0.0
        %814 = vmatpush.xpose.msra.mxu0 0.0
        %815 = vmatpush.xpose.msra.mxu0 0.0
        %816 = vmatpush.xpose.msra.mxu0 0.0
        %817 = vmatpush.xpose.msra.mxu0 0.0
        %818 = vmatpush.xpose.msra.mxu0 0.0
        %819 = vmatpush.xpose.msra.mxu0 0.0
        %820 = vmatpush.xpose.msra.mxu0 0.0
        %821 = vmatpush.xpose.msra.mxu0 0.0
        %822 = vmatpush.xpose.msra.mxu0 0.0
        %823 = vmatpush.xpose.msra.mxu0 0.0
        %824 = vmatpush.xpose.msra.mxu0 0.0
        %825 = vmatpush.xpose.msra.mxu0 0.0
        %826 = vmatpush.xpose.msra.mxu0 0.0
        %827 = vmatpush.xpose.msra.mxu0 %v811
        %828 = vmatpush.xpose.msra.mxu0 %v809
        %829 = vmatmul.f32.gmra.mxu0 %v807
        %v830 = vpop.f32.mrf.mxu0
        %v831 = vadd.f32 0.0, %v830
        %832 = vdwg.mxu0
        %v833 = vsel %vm694, %v831, -inf
        %834 = vmax.xlane.f32.xlu0 %v833
        %v835 = vpop.xlane.xlu0 %834
        %v836 = vsub.f32 %v831, %v835
        %v837 = vmul.f32 %v836, 1.442695
        %v838 = vpow.pop %v837
        %v839 = vsel %vm694, %v838, 0.0
        %840 = vadd.xlane.f32.xlu0 %v839
        %v841 = vpop.xlane.xlu0 %840
        %v842 = vrcp.pop %v841
        %v843 = vmul.f32 %v838, %v842
        %844 = vst [vmem:[#allocation1] ss:$9 sm:$0xff] %v563
        %s845 = scalar_lea.vmem [#allocation1], 1
        %846 = vst [vmem:[%s845] ss:$9 sm:$0xff] %v564
        %s847 = scalar_lea.vmem [#allocation1], 2
        %848 = vst [vmem:[%s847] ss:$9 sm:$0xff] %v565
        %s849 = scalar_lea.vmem [#allocation1], 3
        %850 = vst [vmem:[%s849] ss:$9 sm:$0xff] %v566
        %s851 = scalar_lea.vmem [#allocation1], 4
        %852 = vst [vmem:[%s851] ss:$9 sm:$0xff] %v567
        %s853 = scalar_lea.vmem [#allocation1], 5
        %854 = vst [vmem:[%s853] ss:$9 sm:$0xff] %v568
        %s855 = scalar_lea.vmem [#allocation1], 6
        %856 = vst [vmem:[%s855] ss:$9 sm:$0xff] %v569
        %s857 = scalar_lea.vmem [#allocation1], 7
        %858 = vst [vmem:[%s857] ss:$9 sm:$0xff] %v570
        %v859 = vld [vmem:[#allocation1] sm:$0xff]
        %860 = vst [vmem:[#allocation1] ss:$9 sm:$0xff] %v571
        %861 = vst [vmem:[%s845] ss:$9 sm:$0xff] %v572
        %862 = vst [vmem:[%s847] ss:$9 sm:$0xff] %v573
        %863 = vst [vmem:[%s849] ss:$9 sm:$0xff] %v574
        %864 = vst [vmem:[%s851] ss:$9 sm:$0xff] %v575
        %865 = vst [vmem:[%s853] ss:$9 sm:$0xff] %v576
        %866 = vst [vmem:[%s855] ss:$9 sm:$0xff] %v577
        %867 = vst [vmem:[%s857] ss:$9 sm:$0xff] %v578
        %v868 = vld [vmem:[#allocation1] sm:$0xff]
        %869 = vrot.lane.b32.xlu0 %v859, 88
        %v870 = vpop.permute.xlu0 %869
        %871 = vrot.lane.b32.xlu0 %v868, 88
        %v872 = vpop.permute.xlu0 %871
        %v876 = vsel %vm694, %v843, 0
        %878 = vmatpush.msra.mxu0 0.0
        %879 = vmatpush.msra.mxu0 0.0
        %880 = vmatpush.msra.mxu0 0.0
        %881 = vmatpush.msra.mxu0 0.0
        %882 = vmatpush.msra.mxu0 0.0
        %883 = vmatpush.msra.mxu0 0.0
        %884 = vmatpush.msra.mxu0 0.0
        %885 = vmatpush.msra.mxu0 0.0
        %886 = vmatpush.msra.mxu0 0.0
        %887 = vmatpush.msra.mxu0 0.0
        %888 = vmatpush.msra.mxu0 0.0
        %889 = vmatpush.msra.mxu0 0.0
        %890 = vmatpush.msra.mxu0 0.0
        %891 = vmatpush.msra.mxu0 0.0
        %892 = vmatpush.msra.mxu0 %v872
        %893 = vmatpush.msra.mxu0 %v870
        %894 = vmatmul.f32.gmra.mxu0 %v876
        %v895 = vpop.f32.mrf.mxu0
        %v896 = vadd.f32 0.0, %v895
        %897 = vdwg.mxu0
        %898 = vst [vmem:[#allocation1] ss:$9 sm:$0xff] %v594
        %s899 = scalar_lea.vmem [#allocation1], 1
        %900 = vst [vmem:[%s899] ss:$9 sm:$0xff] %v595
        %s901 = scalar_lea.vmem [#allocation1], 2
        %902 = vst [vmem:[%s901] ss:$9 sm:$0xff] %v596
        %s903 = scalar_lea.vmem [#allocation1], 3
        %904 = vst [vmem:[%s903] ss:$9 sm:$0xff] %v597
        %s905 = scalar_lea.vmem [#allocation1], 4
        %906 = vst [vmem:[%s905] ss:$9 sm:$0xff] %v598
        %s907 = scalar_lea.vmem [#allocation1], 5
        %908 = vst [vmem:[%s907] ss:$9 sm:$0xff] %v599
        %s909 = scalar_lea.vmem [#allocation1], 6
        %910 = vst [vmem:[%s909] ss:$9 sm:$0xff] %v600
        %s911 = scalar_lea.vmem [#allocation1], 7
        %912 = vst [vmem:[%s911] ss:$9 sm:$0xff] %v601
        %v913 = vld [vmem:[#allocation1] sm:$0xff]
        %914 = vrot.lane.b32.xlu0 %v913, 112
        %v915 = vpop.permute.xlu0 %914
        %916 = vst [vmem:[#allocation1] ss:$9 sm:$0xff] %v563
        %s917 = scalar_lea.vmem [#allocation1], 1
        %918 = vst [vmem:[%s917] ss:$9 sm:$0xff] %v564
        %s919 = scalar_lea.vmem [#allocation1], 2
        %920 = vst [vmem:[%s919] ss:$9 sm:$0xff] %v565
        %s921 = scalar_lea.vmem [#allocation1], 3
        %922 = vst [vmem:[%s921] ss:$9 sm:$0xff] %v566
        %s923 = scalar_lea.vmem [#allocation1], 4
        %924 = vst [vmem:[%s923] ss:$9 sm:$0xff] %v567
        %s925 = scalar_lea.vmem [#allocation1], 5
        %926 = vst [vmem:[%s925] ss:$9 sm:$0xff] %v568
        %s927 = scalar_lea.vmem [#allocation1], 6
        %928 = vst [vmem:[%s927] ss:$9 sm:$0xff] %v569
        %s929 = scalar_lea.vmem [#allocation1], 7
        %930 = vst [vmem:[%s929] ss:$9 sm:$0xff] %v570
        %v931 = vld [vmem:[#allocation1] sm:$0xff]
        %932 = vst [vmem:[#allocation1] ss:$9 sm:$0xff] %v571
        %933 = vst [vmem:[%s917] ss:$9 sm:$0xff] %v572
        %934 = vst [vmem:[%s919] ss:$9 sm:$0xff] %v573
        %935 = vst [vmem:[%s921] ss:$9 sm:$0xff] %v574
        %936 = vst [vmem:[%s923] ss:$9 sm:$0xff] %v575
        %937 = vst [vmem:[%s925] ss:$9 sm:$0xff] %v576
        %938 = vst [vmem:[%s927] ss:$9 sm:$0xff] %v577
        %939 = vst [vmem:[%s929] ss:$9 sm:$0xff] %v578
        %v940 = vld [vmem:[#allocation1] sm:$0xff]
        %941 = vrot.lane.b32.xlu0 %v931, 112
        %v942 = vpop.permute.xlu0 %941
        %943 = vrot.lane.b32.xlu0 %v940, 112
        %v944 = vpop.permute.xlu0 %943
        %v945 = vsel %vm667, %v915, 0
        %v947 = vsel %vm667, %v942, 0
        %v949 = vsel %vm667, %v944, 0
        %951 = vmatpush.xpose.msra.mxu0 0.0
        %952 = vmatpush.xpose.msra.mxu0 0.0
        %953 = vmatpush.xpose.msra.mxu0 0.0
        %954 = vmatpush.xpose.msra.mxu0 0.0
        %955 = vmatpush.xpose.msra.mxu0 0.0
        %956 = vmatpush.xpose.msra.mxu0 0.0
        %957 = vmatpush.xpose.msra.mxu0 0.0
        %958 = vmatpush.xpose.msra.mxu0 0.0
        %959 = vmatpush.xpose.msra.mxu0 0.0
        %960 = vmatpush.xpose.msra.mxu0 0.0
        %961 = vmatpush.xpose.msra.mxu0 0.0
        %962 = vmatpush.xpose.msra.mxu0 0.0
        %963 = vmatpush.xpose.msra.mxu0 0.0
        %964 = vmatpush.xpose.msra.mxu0 0.0
        %965 = vmatpush.xpose.msra.mxu0 %v949
        %966 = vmatpush.xpose.msra.mxu0 %v947
        %967 = vmatmul.f32.gmra.mxu0 %v945
        %v968 = vpop.f32.mrf.mxu0
        %v969 = vadd.f32 0.0, %v968
        %970 = vdwg.mxu0
        %v971 = vsel %vm694, %v969, -inf
        %972 = vmax.xlane.f32.xlu0 %v971
        %v973 = vpop.xlane.xlu0 %972
        %v974 = vsub.f32 %v969, %v973
        %v975 = vmul.f32 %v974, 1.442695
        %v976 = vpow.pop %v975
        %v977 = vsel %vm694, %v976, 0.0
        %978 = vadd.xlane.f32.xlu0 %v977
        %v979 = vpop.xlane.xlu0 %978
        %v980 = vrcp.pop %v979
        %v981 = vmul.f32 %v976, %v980
        %982 = vst [vmem:[#allocation1] ss:$9 sm:$0xff] %v563
        %s983 = scalar_lea.vmem [#allocation1], 1
        %984 = vst [vmem:[%s983] ss:$9 sm:$0xff] %v564
        %s985 = scalar_lea.vmem [#allocation1], 2
        %986 = vst [vmem:[%s985] ss:$9 sm:$0xff] %v565
        %s987 = scalar_lea.vmem [#allocation1], 3
        %988 = vst [vmem:[%s987] ss:$9 sm:$0xff] %v566
        %s989 = scalar_lea.vmem [#allocation1], 4
        %990 = vst [vmem:[%s989] ss:$9 sm:$0xff] %v567
        %s991 = scalar_lea.vmem [#allocation1], 5
        %992 = vst [vmem:[%s991] ss:$9 sm:$0xff] %v568
        %s993 = scalar_lea.vmem [#allocation1], 6
        %994 = vst [vmem:[%s993] ss:$9 sm:$0xff] %v569
        %s995 = scalar_lea.vmem [#allocation1], 7
        %996 = vst [vmem:[%s995] ss:$9 sm:$0xff] %v570
        %v997 = vld [vmem:[#allocation1] sm:$0xff]
        %998 = vst [vmem:[#allocation1] ss:$9 sm:$0xff] %v571
        %999 = vst [vmem:[%s983] ss:$9 sm:$0xff] %v572
        %1000 = vst [vmem:[%s985] ss:$9 sm:$0xff] %v573
        %1001 = vst [vmem:[%s987] ss:$9 sm:$0xff] %v574
        %1002 = vst [vmem:[%s989] ss:$9 sm:$0xff] %v575
        %1003 = vst [vmem:[%s991] ss:$9 sm:$0xff] %v576
        %1004 = vst [vmem:[%s993] ss:$9 sm:$0xff] %v577
        %1005 = vst [vmem:[%s995] ss:$9 sm:$0xff] %v578
        %v1006 = vld [vmem:[#allocation1] sm:$0xff]
        %1007 = vrot.lane.b32.xlu0 %v997, 80
        %v1008 = vpop.permute.xlu0 %1007
        %1009 = vrot.lane.b32.xlu0 %v1006, 80
        %v1010 = vpop.permute.xlu0 %1009
        %v1014 = vsel %vm694, %v981, 0
        %1016 = vmatpush.msra.mxu0 0.0
        %1017 = vmatpush.msra.mxu0 0.0
        %1018 = vmatpush.msra.mxu0 0.0
        %1019 = vmatpush.msra.mxu0 0.0
        %1020 = vmatpush.msra.mxu0 0.0
        %1021 = vmatpush.msra.mxu0 0.0
        %1022 = vmatpush.msra.mxu0 0.0
        %1023 = vmatpush.msra.mxu0 0.0
        %1024 = vmatpush.msra.mxu0 0.0
        %1025 = vmatpush.msra.mxu0 0.0
        %1026 = vmatpush.msra.mxu0 0.0
        %1027 = vmatpush.msra.mxu0 0.0
        %1028 = vmatpush.msra.mxu0 0.0
        %1029 = vmatpush.msra.mxu0 0.0
        %1030 = vmatpush.msra.mxu0 %v1010
        %1031 = vmatpush.msra.mxu0 %v1008
        %1032 = vmatmul.f32.gmra.mxu0 %v1014
        %v1033 = vpop.f32.mrf.mxu0
        %v1034 = vadd.f32 0.0, %v1033
        %1035 = vdwg.mxu0
        %1036 = vst [vmem:[#allocation1] ss:$9 sm:$0xff] %v594
        %s1037 = scalar_lea.vmem [#allocation1], 1
        %1038 = vst [vmem:[%s1037] ss:$9 sm:$0xff] %v595
        %s1039 = scalar_lea.vmem [#allocation1], 2
        %1040 = vst [vmem:[%s1039] ss:$9 sm:$0xff] %v596
        %s1041 = scalar_lea.vmem [#allocation1], 3
        %1042 = vst [vmem:[%s1041] ss:$9 sm:$0xff] %v597
        %s1043 = scalar_lea.vmem [#allocation1], 4
        %1044 = vst [vmem:[%s1043] ss:$9 sm:$0xff] %v598
        %s1045 = scalar_lea.vmem [#allocation1], 5
        %1046 = vst [vmem:[%s1045] ss:$9 sm:$0xff] %v599
        %s1047 = scalar_lea.vmem [#allocation1], 6
        %1048 = vst [vmem:[%s1047] ss:$9 sm:$0xff] %v600
        %s1049 = scalar_lea.vmem [#allocation1], 7
        %1050 = vst [vmem:[%s1049] ss:$9 sm:$0xff] %v601
        %v1051 = vld [vmem:[#allocation1] sm:$0xff]
        %1052 = vrot.lane.b32.xlu0 %v1051, 104
        %v1053 = vpop.permute.xlu0 %1052
        %1054 = vst [vmem:[#allocation1] ss:$9 sm:$0xff] %v563
        %s1055 = scalar_lea.vmem [#allocation1], 1
        %1056 = vst [vmem:[%s1055] ss:$9 sm:$0xff] %v564
        %s1057 = scalar_lea.vmem [#allocation1], 2
        %1058 = vst [vmem:[%s1057] ss:$9 sm:$0xff] %v565
        %s1059 = scalar_lea.vmem [#allocation1], 3
        %1060 = vst [vmem:[%s1059] ss:$9 sm:$0xff] %v566
        %s1061 = scalar_lea.vmem [#allocation1], 4
        %1062 = vst [vmem:[%s1061] ss:$9 sm:$0xff] %v567
        %s1063 = scalar_lea.vmem [#allocation1], 5
        %1064 = vst [vmem:[%s1063] ss:$9 sm:$0xff] %v568
        %s1065 = scalar_lea.vmem [#allocation1], 6
        %1066 = vst [vmem:[%s1065] ss:$9 sm:$0xff] %v569
        %s1067 = scalar_lea.vmem [#allocation1], 7
        %1068 = vst [vmem:[%s1067] ss:$9 sm:$0xff] %v570
        %v1069 = vld [vmem:[#allocation1] sm:$0xff]
        %1070 = vst [vmem:[#allocation1] ss:$9 sm:$0xff] %v571
        %1071 = vst [vmem:[%s1055] ss:$9 sm:$0xff] %v572
        %1072 = vst [vmem:[%s1057] ss:$9 sm:$0xff] %v573
        %1073 = vst [vmem:[%s1059] ss:$9 sm:$0xff] %v574
        %1074 = vst [vmem:[%s1061] ss:$9 sm:$0xff] %v575
        %1075 = vst [vmem:[%s1063] ss:$9 sm:$0xff] %v576
        %1076 = vst [vmem:[%s1065] ss:$9 sm:$0xff] %v577
        %1077 = vst [vmem:[%s1067] ss:$9 sm:$0xff] %v578
        %v1078 = vld [vmem:[#allocation1] sm:$0xff]
        %1079 = vrot.lane.b32.xlu0 %v1069, 104
        %v1080 = vpop.permute.xlu0 %1079
        %1081 = vrot.lane.b32.xlu0 %v1078, 104
        %v1082 = vpop.permute.xlu0 %1081
        %v1083 = vsel %vm667, %v1053, 0
        %v1085 = vsel %vm667, %v1080, 0
        %v1087 = vsel %vm667, %v1082, 0
        %1089 = vmatpush.xpose.msra.mxu0 0.0
        %1090 = vmatpush.xpose.msra.mxu0 0.0
        %1091 = vmatpush.xpose.msra.mxu0 0.0
        %1092 = vmatpush.xpose.msra.mxu0 0.0
        %1093 = vmatpush.xpose.msra.mxu0 0.0
        %1094 = vmatpush.xpose.msra.mxu0 0.0
        %1095 = vmatpush.xpose.msra.mxu0 0.0
        %1096 = vmatpush.xpose.msra.mxu0 0.0
        %1097 = vmatpush.xpose.msra.mxu0 0.0
        %1098 = vmatpush.xpose.msra.mxu0 0.0
        %1099 = vmatpush.xpose.msra.mxu0 0.0
        %1100 = vmatpush.xpose.msra.mxu0 0.0
        %1101 = vmatpush.xpose.msra.mxu0 0.0
        %1102 = vmatpush.xpose.msra.mxu0 0.0
        %1103 = vmatpush.xpose.msra.mxu0 %v1087
        %1104 = vmatpush.xpose.msra.mxu0 %v1085
        %1105 = vmatmul.f32.gmra.mxu0 %v1083
        %v1106 = vpop.f32.mrf.mxu0
        %v1107 = vadd.f32 0.0, %v1106
        %1108 = vdwg.mxu0
        %v1109 = vsel %vm694, %v1107, -inf
        %1110 = vmax.xlane.f32.xlu0 %v1109
        %v1111 = vpop.xlane.xlu0 %1110
        %v1112 = vsub.f32 %v1107, %v1111
        %v1113 = vmul.f32 %v1112, 1.442695
        %v1114 = vpow.pop %v1113
        %v1115 = vsel %vm694, %v1114, 0.0
        %1116 = vadd.xlane.f32.xlu0 %v1115
        %v1117 = vpop.xlane.xlu0 %1116
        %v1118 = vrcp.pop %v1117
        %v1119 = vmul.f32 %v1114, %v1118
        %1120 = vst [vmem:[#allocation1] ss:$9 sm:$0xff] %v563
        %s1121 = scalar_lea.vmem [#allocation1], 1
        %1122 = vst [vmem:[%s1121] ss:$9 sm:$0xff] %v564
        %s1123 = scalar_lea.vmem [#allocation1], 2
        %1124 = vst [vmem:[%s1123] ss:$9 sm:$0xff] %v565
        %s1125 = scalar_lea.vmem [#allocation1], 3
        %1126 = vst [vmem:[%s1125] ss:$9 sm:$0xff] %v566
        %s1127 = scalar_lea.vmem [#allocation1], 4
        %1128 = vst [vmem:[%s1127] ss:$9 sm:$0xff] %v567
        %s1129 = scalar_lea.vmem [#allocation1], 5
        %1130 = vst [vmem:[%s1129] ss:$9 sm:$0xff] %v568
        %s1131 = scalar_lea.vmem [#allocation1], 6
        %1132 = vst [vmem:[%s1131] ss:$9 sm:$0xff] %v569
        %s1133 = scalar_lea.vmem [#allocation1], 7
        %1134 = vst [vmem:[%s1133] ss:$9 sm:$0xff] %v570
        %v1135 = vld [vmem:[#allocation1] sm:$0xff]
        %1136 = vst [vmem:[#allocation1] ss:$9 sm:$0xff] %v571
        %1137 = vst [vmem:[%s1121] ss:$9 sm:$0xff] %v572
        %1138 = vst [vmem:[%s1123] ss:$9 sm:$0xff] %v573
        %1139 = vst [vmem:[%s1125] ss:$9 sm:$0xff] %v574
        %1140 = vst [vmem:[%s1127] ss:$9 sm:$0xff] %v575
        %1141 = vst [vmem:[%s1129] ss:$9 sm:$0xff] %v576
        %1142 = vst [vmem:[%s1131] ss:$9 sm:$0xff] %v577
        %1143 = vst [vmem:[%s1133] ss:$9 sm:$0xff] %v578
        %v1144 = vld [vmem:[#allocation1] sm:$0xff]
        %1145 = vrot.lane.b32.xlu0 %v1135, 72
        %v1146 = vpop.permute.xlu0 %1145
        %1147 = vrot.lane.b32.xlu0 %v1144, 72
        %v1148 = vpop.permute.xlu0 %1147
        %v1152 = vsel %vm694, %v1119, 0
        %1154 = vmatpush.msra.mxu0 0.0
        %1155 = vmatpush.msra.mxu0 0.0
        %1156 = vmatpush.msra.mxu0 0.0
        %1157 = vmatpush.msra.mxu0 0.0
        %1158 = vmatpush.msra.mxu0 0.0
        %1159 = vmatpush.msra.mxu0 0.0
        %1160 = vmatpush.msra.mxu0 0.0
        %1161 = vmatpush.msra.mxu0 0.0
        %1162 = vmatpush.msra.mxu0 0.0
        %1163 = vmatpush.msra.mxu0 0.0
        %1164 = vmatpush.msra.mxu0 0.0
        %1165 = vmatpush.msra.mxu0 0.0
        %1166 = vmatpush.msra.mxu0 0.0
        %1167 = vmatpush.msra.mxu0 0.0
        %1168 = vmatpush.msra.mxu0 %v1148
        %1169 = vmatpush.msra.mxu0 %v1146
        %1170 = vmatmul.f32.gmra.mxu0 %v1152
        %v1171 = vpop.f32.mrf.mxu0
        %v1172 = vadd.f32 0.0, %v1171
        %1173 = vdwg.mxu0
        %1175 = vrot.lane.b32.xlu0 %v896, 8
        %v1176 = vpop.permute.xlu0 %1175
        %1179 = vrot.lane.b32.xlu0 %v1034, 16
        %v1180 = vpop.permute.xlu0 %1179
        %1183 = vrot.lane.b32.xlu0 %v1172, 24
        %v1184 = vpop.permute.xlu0 %1183
        %v1186 = vsel %vm667, %v758, %v1176
        %v1187 = vsel %vm694, %v1186, %v1180
        %vm1188 = vcmask 195584
        %v1189 = vsel %vm1188, %v1187, %v1184
        %v1191 = vperm.slane %v591, 0
        %vm1193 = vcmask 261120
        %v1195 = vsel %vm1193, %v1189, 0
        %1197 = vmatpush.msra.mxu0 0.0
        %1198 = vmatpush.msra.mxu0 0.0
        %1199 = vmatpush.msra.mxu0 0.0
        %1200 = vmatpush.msra.mxu0 0.0
        %1201 = vmatpush.msra.mxu0 0.0
        %1202 = vmatpush.msra.mxu0 0.0
        %1203 = vmatpush.msra.mxu0 0.0
        %1204 = vmatpush.msra.mxu0 0.0
        %1205 = vmatpush.msra.mxu0 0.0
        %1206 = vmatpush.msra.mxu0 0.0
        %1207 = vmatpush.msra.mxu0 0.0
        %1208 = vmatpush.msra.mxu0 0.0
        %1209 = vmatpush.msra.mxu0 %v590
        %1210 = vmatpush.msra.mxu0 %v589
        %1211 = vmatpush.msra.mxu0 %v588
        %1212 = vmatpush.msra.mxu0 %v587
        %1213 = vmatmul.f32.gmra.mxu0 %v1195
        %v1214 = vpop.f32.mrf.mxu0
        %v1215 = vadd.f32 %v1191, %v1214
        %1216 = vdwg.mxu0
        %1225 = vst [vmem:[#allocation1] ss:$9 sm:$0xff] %v579
        %s1226 = scalar_lea.vmem [#allocation1], 1
        %1227 = vst [vmem:[%s1226] ss:$9 sm:$0xff] %v580
        %s1228 = scalar_lea.vmem [#allocation1], 2
        %1229 = vst [vmem:[%s1228] ss:$9 sm:$0xff] %v581
        %s1230 = scalar_lea.vmem [#allocation1], 3
        %1231 = vst [vmem:[%s1230] ss:$9 sm:$0xff] %v582
        %s1232 = scalar_lea.vmem [#allocation1], 4
        %1233 = vst [vmem:[%s1232] ss:$9 sm:$0xff] %v583
        %s1234 = scalar_lea.vmem [#allocation1], 5
        %1235 = vst [vmem:[%s1234] ss:$9 sm:$0xff] %v584
        %s1236 = scalar_lea.vmem [#allocation1], 6
        %1237 = vst [vmem:[%s1236] ss:$9 sm:$0xff] %v585
        %s1238 = scalar_lea.vmem [#allocation1], 7
        %1239 = vst [vmem:[%s1238] ss:$9 sm:$0xff] %v586
        %v1240 = vld [vmem:[#allocation1] sm:$0xff]
        %v1242 = vadd.f32 %v1215, %v1240
        %v1243 = vsel %vm1193, %v1242, 0.0
        %1244 = vadd.xlane.f32.xlu0 %v1243
        %v1245 = vpop.xlane.xlu0 %1244
        %v1246 = vrcp.pop 32.0
        %v1247 = vmul.f32 32.0, %v1246
        %v1248 = vsub.f32 1.0, %v1247
        %v1249 = vmul.f32 %v1246, %v1248
        %v1250 = vadd.f32 %v1246, %v1249
        %vm1251 = vweird.f32 %v1246
        %v1252 = vsel %vm1251, %v1246, %v1250
        %v1253 = vmul.f32 %v1245, %v1252
        %v1254 = vsub.f32 %v1242, %v1253
        %v1255 = vmul.f32 %v1254, %v1254
        %v1256 = vsel %vm1193, %v1255, 0.0
        %1257 = vadd.xlane.f32.xlu0 %v1256
        %v1258 = vpop.xlane.xlu0 %1257
        %v1259 = vmul.f32 %v1258, %v1252
        %v1260 = vadd.f32 %v1259, 1e-05
        %v1261 = vrsqrt.pop %v1260
        %v1262 = vmul.f32 %v1261, %v1260
        %v1263 = vmul.f32 %v1262, %v1261
        %v1264 = vmul.f32 0.5, %v1263
        %v1265 = vsub.f32 1.5, %v1264
        %v1266 = vmul.f32 %v1261, %v1265
        %vm1267 = vweird.f32 %v1260
        %vm1268 = vweird.f32 %v1261
        %vm1269 = vmor %vm1267, %vm1268
        %v1270 = vsel %vm1269, %v1261, %v1266
        %v1271 = vmul.f32 %v1254, %v1270
        %v1273 = vperm.slane %v592, 0
        %v1275 = vmul.f32 %v1271, %v1273
        %v1277 = vperm.slane %v593, 0
        %v1279 = vadd.f32 %v1275, %v1277
        %v1281 = vrot.slane %v1279, 1
        %v1282 = vrot.slane %v1279, 2
        %v1283 = vrot.slane %v1279, 3
        %v1284 = vrot.slane %v1279, 4
        %v1285 = vrot.slane %v1279, 5
        %v1286 = vrot.slane %v1279, 6
        %v1287 = vrot.slane %v1279, 7
        %vm1295 = vcmask 253952
        %1296 = vst.msk [vmem:[%s554] sm:$0x1] %vm1295, %v1279
        %1297 = vst.msk [vmem:[%s554 + $0x1] sm:$0x1] %vm1295, %v1281
        %1298 = vst.msk [vmem:[%s554 + $0x2] sm:$0x1] %vm1295, %v1282
        %1299 = vst.msk [vmem:[%s554 + $0x3] sm:$0x1] %vm1295, %v1283
        %1300 = vst.msk [vmem:[%s554 + $0x4] sm:$0x1] %vm1295, %v1284
        %1301 = vst.msk [vmem:[%s554 + $0x5] sm:$0x1] %vm1295, %v1285
        %1302 = vst.msk [vmem:[%s554 + $0x6] sm:$0x1] %vm1295, %v1286
        %1303 = vst.msk [vmem:[%s554 + $0x7] sm:$0x1] %vm1295, %v1287
        %s1304 = sand.u32 %s188, 1
        %s1305 = sand.u32 %s188, 1
        %s1306 = smul.addr %s1305, 8
        %s1307 = scalar_lea.vmem [#allocation5], %s1306
        // Predicated region
        $region172: #{transformer_decoder_wrapper_forward.23} parent=158 // pred_check
          %p1308 = pneg %p198
        $region173: #{transformer_decoder_wrapper_forward.23} parent=158 // pred_check_branch
          %1310 = sbr.rel (%p1308) target = $region175
        $region174: #{transformer_decoder_wrapper_forward.23} parent=158 // pred_region
          %s1311 = scalar_lea.vmem %s7, %s18
          // Predicated region
          $region176: #{transformer_decoder_wrapper_forward.23} parent=174 // pred_check
            _
          $region177: #{transformer_decoder_wrapper_forward.23} parent=174 // pred_check_branch
            %1313 = sbr.rel (0) target = $region179
          $region178: #{transformer_decoder_wrapper_forward.23} parent=174 // pred_region
            // Predicated region
            $region180: #{transformer_decoder_wrapper_forward.23} parent=178 // pred_check
              _
            $region181: #{transformer_decoder_wrapper_forward.23} parent=178 // pred_check_branch
              %1315 = sbr.rel target = $region183
            $region182: #{transformer_decoder_wrapper_forward.23} parent=178 // pred_region
              // Predicated region
              $region195: #{transformer_decoder_wrapper_forward.23} parent=182 // pred_check
                _
              $region196: #{transformer_decoder_wrapper_forward.23} parent=182 // pred_check_branch
                %1345 = sbr.rel (0) target = $region198
              $region197: #{transformer_decoder_wrapper_forward.23} parent=182 // pred_region
                loop: start=0, step=1, limit=1
                $region199: #{transformer_decoder_wrapper_forward.23} parent=197 // loop_pre_header
                  _
                $region200: #{transformer_decoder_wrapper_forward.23} parent=197 // loop_header
                  %s1347 = sphi 0, %s1351
                  %p1348 = scmp.ge.s32.totalorder %s1347, 1
                  %s1352 = sphi %s1307, %s1307
                  %s1353 = sphi %s1311, %s1311
                $region201: #{transformer_decoder_wrapper_forward.23} parent=197 // loop_header_branch
                  %1350 = sbr.rel (%p1348) target = $region205
                $region202: #{transformer_decoder_wrapper_forward.23} parent=197 // loop_body
                  _
                $region203: #{transformer_decoder_wrapper_forward.23} parent=197 // loop_footer
                  %s1351 = sadd.s32 1, %s1347
                $region204: #{transformer_decoder_wrapper_forward.23} parent=197 // loop_footer_branch
                  %1346 = sbr.rel target = $region200
                $region205: #{transformer_decoder_wrapper_forward.23} parent=197 // loop_exit
                  _
                %s1355 = ssub.s32 2, 1
                loop: start=0, step=1, limit=1
                $region206: #{transformer_decoder_wrapper_forward.23} parent=197 // loop_pre_header
                  _
                $region207: #{transformer_decoder_wrapper_forward.23} parent=197 // loop_header
                  %s1357 = sphi 0, %s1361
                  %p1358 = scmp.ge.s32.totalorder %s1357, 1
                  %s1362 = sphi %s1307, %s1307
                  %s1363 = sphi %s1311, %s1311
                $region208: #{transformer_decoder_wrapper_forward.23} parent=197 // loop_header_branch
                  %1360 = sbr.rel (%p1358) target = $region212
                $region209: #{transformer_decoder_wrapper_forward.23} parent=197 // loop_body
                  %v1364 = vld [vmem:[%s1362] sm:%s1355]
                  %1365 = vst [vmem:[%s1363] sm:%s1355] %v1364
                  %v1366 = vld [vmem:[%s1362 + $0x1] sm:%s1355]
                  %1367 = vst [vmem:[%s1363 + $0x2] sm:%s1355] %v1366
                  %v1368 = vld [vmem:[%s1362 + $0x2] sm:%s1355]
                  %1369 = vst [vmem:[%s1363 + $0x4] sm:%s1355] %v1368
                  %v1370 = vld [vmem:[%s1362 + $0x3] sm:%s1355]
                  %1371 = vst [vmem:[%s1363 + $0x6] sm:%s1355] %v1370
                  %v1372 = vld [vmem:[%s1362 + $0x4] sm:%s1355]
                  %1373 = vst [vmem:[%s1363 + $0x8] sm:%s1355] %v1372
                  %v1374 = vld [vmem:[%s1362 + $0x5] sm:%s1355]
                  %1375 = vst [vmem:[%s1363 + $0xa] sm:%s1355] %v1374
                  %v1376 = vld [vmem:[%s1362 + $0x6] sm:%s1355]
                  %1377 = vst [vmem:[%s1363 + $0xc] sm:%s1355] %v1376
                  %v1378 = vld [vmem:[%s1362 + $0x7] sm:%s1355]
                  %1379 = vst [vmem:[%s1363 + $0xe] sm:%s1355] %v1378
                $region210: #{transformer_decoder_wrapper_forward.23} parent=197 // loop_footer
                  %s1361 = sadd.s32 1, %s1357
                $region211: #{transformer_decoder_wrapper_forward.23} parent=197 // loop_footer_branch
                  %1356 = sbr.rel target = $region207
                $region212: #{transformer_decoder_wrapper_forward.23} parent=197 // loop_exit
                  _
              $region198: #{transformer_decoder_wrapper_forward.23} parent=182 // pred_fallthru
                _
            $region183: #{transformer_decoder_wrapper_forward.23} parent=178 // pred_fallthru
              _
            // Predicated region
            $region184: #{transformer_decoder_wrapper_forward.23} parent=178 // pred_check
              _
            $region185: #{transformer_decoder_wrapper_forward.23} parent=178 // pred_check_branch
              %1317 = sbr.rel (0) target = $region187
            $region186: #{transformer_decoder_wrapper_forward.23} parent=178 // pred_region
              %s1319 = ssub.s32 2, 1
              loop: start=0, step=1, limit=1
              $region188: #{transformer_decoder_wrapper_forward.23} parent=186 // loop_pre_header
                _
              $region189: #{transformer_decoder_wrapper_forward.23} parent=186 // loop_header
                %s1321 = sphi 0, %s1325
                %p1322 = scmp.ge.s32.totalorder %s1321, 1
                %s1326 = sphi %s1307, %s1307
                %s1327 = sphi %s1311, %s1311
              $region190: #{transformer_decoder_wrapper_forward.23} parent=186 // loop_header_branch
                %1324 = sbr.rel (%p1322) target = $region194
              $region191: #{transformer_decoder_wrapper_forward.23} parent=186 // loop_body
                %v1328 = vld [vmem:[%s1326] sm:%s1319]
                %1329 = vst [vmem:[%s1327] sm:%s1319] %v1328
                %v1330 = vld [vmem:[%s1326 + $0x1] sm:%s1319]
                %1331 = vst [vmem:[%s1327 + $0x2] sm:%s1319] %v1330
                %v1332 = vld [vmem:[%s1326 + $0x2] sm:%s1319]
                %1333 = vst [vmem:[%s1327 + $0x4] sm:%s1319] %v1332
                %v1334 = vld [vmem:[%s1326 + $0x3] sm:%s1319]
                %1335 = vst [vmem:[%s1327 + $0x6] sm:%s1319] %v1334
                %v1336 = vld [vmem:[%s1326 + $0x4] sm:%s1319]
                %1337 = vst [vmem:[%s1327 + $0x8] sm:%s1319] %v1336
                %v1338 = vld [vmem:[%s1326 + $0x5] sm:%s1319]
                %1339 = vst [vmem:[%s1327 + $0xa] sm:%s1319] %v1338
                %v1340 = vld [vmem:[%s1326 + $0x6] sm:%s1319]
                %1341 = vst [vmem:[%s1327 + $0xc] sm:%s1319] %v1340
                %v1342 = vld [vmem:[%s1326 + $0x7] sm:%s1319]
                %1343 = vst [vmem:[%s1327 + $0xe] sm:%s1319] %v1342
              $region192: #{transformer_decoder_wrapper_forward.23} parent=186 // loop_footer
                %s1325 = sadd.s32 1, %s1321
              $region193: #{transformer_decoder_wrapper_forward.23} parent=186 // loop_footer_branch
                %1320 = sbr.rel target = $region189
              $region194: #{transformer_decoder_wrapper_forward.23} parent=186 // loop_exit
                _
            $region187: #{transformer_decoder_wrapper_forward.23} parent=178 // pred_fallthru
              _
          $region179: #{transformer_decoder_wrapper_forward.23} parent=174 // pred_fallthru
            _
          %1380 = vnop
        $region175: #{transformer_decoder_wrapper_forward.23} parent=158 // pred_fallthru
          _
      $region159: #{transformer_decoder_wrapper_forward.23} parent=5 // pred_fallthru
        _
      %p1381 = scmp.le.s32.totalorder 2, %s13
      // Predicated region
      $region213: #{transformer_decoder_wrapper_forward.23} parent=5 // pred_check
        %p1382 = pneg %p1381
      $region214: #{transformer_decoder_wrapper_forward.23} parent=5 // pred_check_branch
        %1384 = sbr.rel (%p1382) target = $region216
      $region215: #{transformer_decoder_wrapper_forward.23} parent=5 // pred_region
        %s1385 = ssub.s32 %s13, 2
        // Predicated region
        $region217: #{transformer_decoder_wrapper_forward.23} parent=215 // pred_check
          %p1386 = pneg %p204
        $region218: #{transformer_decoder_wrapper_forward.23} parent=215 // pred_check_branch
          %1388 = sbr.rel (%p1386) target = $region220
        $region219: #{transformer_decoder_wrapper_forward.23} parent=215 // pred_region
          %s1389 = sand.u32 %s189, 1
          %s1390 = sand.u32 %s189, 1
          %s1391 = smul.addr %s1390, 8
          %s1392 = scalar_lea.vmem [#allocation5], %s1391
        $region220: #{transformer_decoder_wrapper_forward.23} parent=215 // pred_fallthru
          _
      $region216: #{transformer_decoder_wrapper_forward.23} parent=5 // pred_fallthru
        _
    $region6: #{transformer_decoder_wrapper_forward.23} parent=1 // loop_footer
      %s17 = sadd.s32 1, %s13
    $region7: #{transformer_decoder_wrapper_forward.23} parent=1 // loop_footer_branch
      %12 = sbr.rel target = $region3
    $region8: #{transformer_decoder_wrapper_forward.23} parent=1 // loop_exit
      _

</llo_original>
